<compile_context>
chip_gen: v6e
topology: v6e:2x2x1
jax: 0.10.0
libtpu: 0.0.40
codegen_flags: <defaults>
</compile_context>

<pallas_src>
import jax
import jax.numpy as jnp
from jax import lax
from jax.experimental import pallas as pl
from jax.experimental.pallas import tpu as pltpu


_CP = pltpu.CompilerParams(
    dimension_semantics=("parallel",),      # v7x: shard grid steps across both TCs
    vmem_limit_bytes=32 * 1024 * 1024,
)


def _round_up(x, m):
    return ((x + m - 1) // m) * m


# ----------------------------- Pallas kernels ------------------------------

def conv1_relu_pool_kernel(p_ref, w_ref, b_ref, o_ref):
    """conv1-as-GEMM + 2x2/s2 maxpool + bias + ReLU, lane-dense (Cout, M) layout.

    p_ref: (1, K, 4*TM) bf16 -- im2col patches for this M-tile; the 4 pooling
           taps are contiguous TM-wide column blocks with identical
           (n, ph, pw) column ordering.
    w_ref: (Cpad, K) bf16.   b_ref: (Cpad, 1) f32.   o_ref: (Cpad, TM) bf16.
    """
    tm = o_ref.shape[1]
    # ONE MXU dot covering all 4 pooling taps of this tile.
    y = jnp.dot(w_ref[...], p_ref[0], preferred_element_type=jnp.float32)
    # Max over taps (lane-aligned slices), THEN bias + ReLU, once.
    ymax = jnp.maximum(jnp.maximum(y[:, 0 * tm:1 * tm], y[:, 1 * tm:2 * tm]),
                       jnp.maximum(y[:, 2 * tm:3 * tm], y[:, 3 * tm:4 * tm]))
    o_ref[...] = jnp.maximum(ymax + b_ref[...], 0.0).astype(o_ref.dtype)


def conv2_fc_kernel(p_ref, wc_ref, bc_ref, w1_ref, b1_ref, w2_ref, b2_ref,
                    w3_ref, b3_ref, o_ref):
    """conv2 + pool + ReLU -> fc1+ReLU -> fc2+ReLU -> fc3, fully fused.

    p_ref:  (1, 4*TB, 3750) bf16 -- per tap / per sample, the 25 conv2 output
            positions' 150-wide patches, columns ordered (ph, pw, kh, kw, ci).
    wc_ref: (3750, 400) bf16 block-diagonal conv2 weight; the dot output's
            columns are already in fc1's (h, w, c) flatten order.
    """
    tb = o_ref.shape[0]
    p = p_ref[0]                                                   # (4*TB, 3750)
    # conv2: ONE dot for all 4 taps, max over taps, then bias + ReLU once.
    y = jnp.dot(p, wc_ref[...], preferred_element_type=jnp.float32)  # (4*TB, 400)
    ymax = jnp.maximum(jnp.maximum(y[0 * tb:1 * tb], y[1 * tb:2 * tb]),
                       jnp.maximum(y[2 * tb:3 * tb], y[3 * tb:4 * tb]))
    h = jnp.maximum(ymax + bc_ref[...], 0.0).astype(jnp.bfloat16)    # (TB, 400)
    # fc chain; weights stay resident in VMEM, a2 never leaves the core.
    h = jnp.dot(h, w1_ref[...], preferred_element_type=jnp.float32)
    h = jnp.maximum(h + b1_ref[...], 0.0).astype(jnp.bfloat16)
    h = jnp.dot(h, w2_ref[...], preferred_element_type=jnp.float32)
    h = jnp.maximum(h + b2_ref[...], 0.0).astype(jnp.bfloat16)
    h = jnp.dot(h, w3_ref[...], preferred_element_type=jnp.float32)
    o_ref[...] = h + b3_ref[...]


# ----------------------------- Pallas wrappers -----------------------------

def conv1_relu_pool(patches, w, b):
    """patches: (mtiles, K, 4*TM) bf16; w: (Cpad, K) bf16; b: (Cpad, 1) f32.
    Returns (Cpad, mtiles*TM) bf16 = relu(maxpool(conv1)), columns = (n,ph,pw)."""
    mtiles, K, four_tm = patches.shape
    tm = four_tm // 4
    cpad = w.shape[0]
    return pl.pallas_call(
        conv1_relu_pool_kernel,
        out_shape=jax.ShapeDtypeStruct((cpad, mtiles * tm), jnp.bfloat16),
        grid=(mtiles,),
        in_specs=[pl.BlockSpec((1, K, four_tm), lambda i: (i, 0, 0)),
                  pl.BlockSpec((cpad, K), lambda i: (0, 0)),
                  pl.BlockSpec((cpad, 1), lambda i: (0, 0))],
        out_specs=pl.BlockSpec((cpad, tm), lambda i: (0, i)),
        compiler_params=_CP,
    )(patches, w, b)


def conv2_fc_fused(patches, wc, bc, w1, b1, w2, b2, w3, b3):
    """patches: (ntiles, 4*TB, 3750) bf16 -> logits (ntiles*TB, 10) f32."""
    ntiles, four_tb, kbig = patches.shape
    tb = four_tb // 4
    n_out = w3.shape[1]

    def const(a):
        nd = a.ndim
        return pl.BlockSpec(tuple(a.shape), lambda i, _nd=nd: (0,) * _nd)

    return pl.pallas_call(
        conv2_fc_kernel,
        out_shape=jax.ShapeDtypeStruct((ntiles * tb, n_out), jnp.float32),
        grid=(ntiles,),
        in_specs=[pl.BlockSpec((1, four_tb, kbig), lambda i: (i, 0, 0)),
                  const(wc), const(bc), const(w1), const(b1),
                  const(w2), const(b2), const(w3), const(b3)],
        out_specs=pl.BlockSpec((tb, n_out), lambda i: (i, 0)),
        compiler_params=_CP,
    )(patches, wc, bc, w1, b1, w2, b2, w3, b3)


# ------------------------------- XLA glue -----------------------------------
# Pure data movement (strided slices / concat / pad / transpose); XLA fuses it.

def _pooled_taps(x_nhwc, KH, KW):
    """Per 2x2-pool tap (a,b), the im2col patches of the conv rows it selects.
    Returns ((4, N, PH, PW, KH*KW*C), PH, PW); tap index = 2*a + b; patch
    columns ordered (kh, kw, ci)."""
    N, H, W, C = x_nhwc.shape
    PH, PW = (H - KH + 1) // 2, (W - KW + 1) // 2
    slabs = []
    for a in range(2):
        for b in range(2):
            cols = []
            for kh in range(KH):
                for kw in range(KW):
                    r0, c0 = a + kh, b + kw
                    cols.append(x_nhwc[:, r0:r0 + 2 * PH - 1:2,
                                       c0:c0 + 2 * PW - 1:2, :])   # (N,PH,PW,C)
            slabs.append(jnp.concatenate(cols, axis=-1))           # (N,PH,PW,K*C)
    return jnp.stack(slabs, axis=0), PH, PW


def _conv1_patch_tiles(x_nhwc, tm):
    """-> ((mtiles, 75, 4*tm) bf16, M) with taps as aligned column blocks per tile."""
    p, PH, PW = _pooled_taps(x_nhwc, 5, 5)                 # (4, N, 14, 14, 75)
    N, K = x_nhwc.shape[0], p.shape[-1]
    M = N * PH * PW
    p = p.reshape(4, M, K)
    mpad = _round_up(M, tm)
    p = jnp.pad(p, ((0, 0), (0, mpad - M), (0, 0)))
    p = jnp.transpose(p, (0, 2, 1))                        # (4, K, Mpad) lane-dense
    mtiles = mpad // tm
    # Group columns as (m_tile, tap, m_within_tile): each grid step sees its
    # 4 tap slabs as contiguous, lane-aligned TM-wide blocks.
    p = p.reshape(4, K, mtiles, tm).transpose(2, 1, 0, 3).reshape(mtiles, K, 4 * tm)
    return p.astype(jnp.bfloat16), M


def _conv2_patch_tiles(a1_nhwc, tb):
    """-> (ntiles, 4*tb, 3750) bf16; rows grouped (batch_tile, tap, sample)."""
    p, PH, PW = _pooled_taps(a1_nhwc, 5, 5)                # (4, N, 5, 5, 150)
    N = a1_nhwc.shape[0]
    p = p.reshape(4, N, PH * PW * p.shape[-1])             # cols (ph,pw,kh,kw,ci)
    tb_eff = min(tb, _round_up(N, 8))
    npad = _round_up(N, tb_eff)
    p = jnp.pad(p, ((0, 0), (0, npad - N), (0, 0)))
    ntiles = npad // tb_eff
    p = (p.reshape(4, ntiles, tb_eff, -1).transpose(1, 0, 2, 3)
          .reshape(ntiles, 4 * tb_eff, -1))
    return p.astype(jnp.bfloat16)


# ------------------------------- parameters --------------------------------

def init_params(key):
    """Deterministic synthetic params (PyTorch-default-style uniform init)."""
    def uni(k, shape, fan_in):
        bound = 1.0 / float(fan_in) ** 0.5
        return jax.random.uniform(k, shape, jnp.float32, -bound, bound)

    ks = jax.random.split(key, 10)
    return {
        "conv1_w": uni(ks[0], (6, 3, 5, 5), 3 * 5 * 5),
        "conv1_b": uni(ks[1], (6,), 3 * 5 * 5),
        "conv2_w": uni(ks[2], (16, 6, 5, 5), 6 * 5 * 5),
        "conv2_b": uni(ks[3], (16,), 6 * 5 * 5),
        "fc1_w":   uni(ks[4], (120, 16 * 5 * 5), 16 * 5 * 5),
        "fc1_b":   uni(ks[5], (120,), 16 * 5 * 5),
        "fc2_w":   uni(ks[6], (84, 120), 120),
        "fc2_b":   uni(ks[7], (84,), 120),
        "fc3_w":   uni(ks[8], (10, 84), 84),
        "fc3_b":   uni(ks[9], (10,), 84),
    }


def prepare_params(params):
    """One-time weight re-layout + bf16 cast, done OUTSIDE the jitted forward."""
    # conv1: (Cout,Cin,KH,KW) -> (Cout, KH*KW*Cin); pad Cout 6 -> 8 sublanes.
    c1w = jnp.transpose(params["conv1_w"], (0, 2, 3, 1)).reshape(6, 75)
    c1w = jnp.pad(c1w, ((0, 2), (0, 0))).astype(jnp.bfloat16)          # (8, 75)
    c1b = jnp.pad(params["conv1_b"], (0, 2)).reshape(8, 1)             # (8, 1) f32

    # conv2: block-diagonal over the 25 pooled output positions so that ONE
    # GEMM yields the (ph, pw, co)-ordered flat activation fc1 consumes.
    w2mat = jnp.transpose(params["conv2_w"], (2, 3, 1, 0)).reshape(150, 16)
    eye25 = jnp.eye(25, dtype=w2mat.dtype)
    c2w = jnp.einsum("pq,kc->pkqc", eye25, w2mat).reshape(25 * 150, 25 * 16)
    c2b = jnp.tile(params["conv2_b"], 25).reshape(1, 400)              # f32

    # torch.flatten contracts fc1 over (c,h,w); our flat order is (h,w,c),
    # so permute fc1's K axis once here.
    f1w = jnp.transpose(params["fc1_w"].reshape(120, 16, 5, 5),
                        (2, 3, 1, 0)).reshape(400, 120)
    return {
        "c1w": c1w, "c1b": c1b,
        "c2w": c2w.astype(jnp.bfloat16), "c2b": c2b,
        "f1w": f1w.astype(jnp.bfloat16), "f1b": params["fc1_b"].reshape(1, -1),
        "f2w": params["fc2_w"].T.astype(jnp.bfloat16),
        "f2b": params["fc2_b"].reshape(1, -1),
        "f3w": params["fc3_w"].T.astype(jnp.bfloat16),
        "f3b": params["fc3_b"].reshape(1, -1),
    }


# -------------------------------- forward ----------------------------------

def net_forward(prep, x_nchw, tm=256, tb=128):
    n = x_nchw.shape[0]
    x = jnp.transpose(x_nchw, (0, 2, 3, 1)).astype(jnp.bfloat16)       # NHWC bf16

    # conv1 + ReLU + pool: one pallas_call, lane-dense (C, M) output.
    p1, m1 = _conv1_patch_tiles(x, tm)                                 # (mt,75,4tm)
    out1 = conv1_relu_pool(p1, prep["c1w"], prep["c1b"])               # (8, Mpad)
    a1 = out1[:6, :m1].reshape(6, n, 14, 14).transpose(1, 2, 3, 0)     # (n,14,14,6)

    # conv2 + ReLU + pool + fc1/fc2/fc3: one fused pallas_call.
    p2 = _conv2_patch_tiles(a1, tb)                                    # (nt,4tb,3750)
    logits = conv2_fc_fused(p2, prep["c2w"], prep["c2b"],
                            prep["f1w"], prep["f1b"],
                            prep["f2w"], prep["f2b"],
                            prep["f3w"], prep["f3b"])                  # (npad, 10)
    return logits[:n]


# ------------------------------- reference ----------------------------------

def reference_forward(params, x):
    """Pure-JAX f32 reference matching the PyTorch module."""
    def conv(h, w, b):
        y = lax.conv_general_dilated(h, w, (1, 1), "VALID",
                                     dimension_numbers=("NCHW", "OIHW", "NCHW"))
        return y + b.reshape(1, -1, 1, 1)

    def pool(h):
        return lax.reduce_window(h, -jnp.inf, lax.max,
                                 (1, 1, 2, 2), (1, 1, 2, 2), "VALID")

    h = pool(jnp.maximum(conv(x, params["conv1_w"], params["conv1_b"]), 0.0))
    h = pool(jnp.maximum(conv(h, params["conv2_w"], params["conv2_b"]), 0.0))
    h = h.reshape(h.shape[0], -1)
    h = jnp.maximum(h @ params["fc1_w"].T + params["fc1_b"], 0.0)
    h = jnp.maximum(h @ params["fc2_w"].T + params["fc2_b"], 0.0)
    return h @ params["fc3_w"].T + params["fc3_b"]


# ---------------------------------- main ------------------------------------

if __name__ == "__main__":
    key = jax.random.PRNGKey(0)
    pkey, xkey = jax.random.split(key)
    params = init_params(pkey)
    prep = prepare_params(params)          # weight re-layout hoisted out of jit
    # 32x32 spatial is required by the module (16*5*5 after two conv+pool).
    x = jax.random.normal(xkey, (2, 3, 32, 32), jnp.float32)

    out = jax.jit(net_forward)(prep, x)
    out = jax.block_until_ready(out)
    assert out.shape == (2, 10) and out.dtype == jnp.float32

    # Numerical check vs the f32 reference (bf16 GEMM operands -> loose tol).
    ref = reference_forward(params, x)
    err = float(jnp.max(jnp.abs(out - ref)))
    assert err < 2e-2, f"max |pallas - reference| = {err}"
    print("KERNEL_OK")
</pallas_src>

<mosaic_0001>
module attributes {stable_mosaic.version = 11 : i64} {
  func.func @conv1_relu_pool_kernel(%arg0: i32, %arg1: memref<1x75x1024xbf16, #tpu.memory_space<vmem>>, %arg2: memref<8x75xbf16, #tpu.memory_space<vmem>>, %arg3: memref<8x1xf32, #tpu.memory_space<vmem>>, %arg4: memref<8x256xbf16, #tpu.memory_space<vmem>>) attributes {dimension_semantics = [#tpu.dimension_semantics<parallel>], iteration_bounds = array<i64: 2>, scalar_prefetch = 0 : i64, scratch_operands = 0 : i64, tpu.core_type = #tpu.core_type<tc>, window_params = [{transform_indices = @transform_0, window_bounds = array<i64: 1, 75, 1024>}, {pipeline_mode = #tpu.pipeline_mode<synchronous>, transform_indices = @transform_1, window_bounds = array<i64: 8, 75>}, {pipeline_mode = #tpu.pipeline_mode<synchronous>, transform_indices = @transform_2, window_bounds = array<i64: 8, 1>}, {transform_indices = @transform_3, window_bounds = array<i64: 8, 256>}]} {
    %c0 = arith.constant 0 : index
    %c0_0 = arith.constant 0 : index
    %0 = vector.load %arg2[%c0, %c0_0] : memref<8x75xbf16, #tpu.memory_space<vmem>>, vector<8x75xbf16>
    %c0_1 = arith.constant 0 : index
    %c0_2 = arith.constant 0 : index
    %c0_3 = arith.constant 0 : index
    %1 = vector.load %arg1[%c0_1, %c0_2, %c0_3] : memref<1x75x1024xbf16, #tpu.memory_space<vmem>>, vector<1x75x1024xbf16>
    %2 = vector.shape_cast %1 : vector<1x75x1024xbf16> to vector<75x1024xbf16>
    %cst = arith.constant dense<0.000000e+00> : vector<8x1024xf32>
    %3 = tpu.matmul %0, %2, %cst {dimension_numbers = #tpu.dot_dimension_numbers<[1], [0], [0], [1], [0, 0, 1, 1], [], []>} : vector<8x75xbf16>, vector<75x1024xbf16>, vector<8x1024xf32> -> vector<8x1024xf32>
    %4 = vector.extract_strided_slice %3 {offsets = [0, 0], sizes = [8, 256], strides = [1, 1]} : vector<8x1024xf32> to vector<8x256xf32>
    %5 = vector.extract_strided_slice %3 {offsets = [0, 256], sizes = [8, 256], strides = [1, 1]} : vector<8x1024xf32> to vector<8x256xf32>
    %6 = arith.maximumf %4, %5 : vector<8x256xf32>
    %7 = vector.extract_strided_slice %3 {offsets = [0, 512], sizes = [8, 256], strides = [1, 1]} : vector<8x1024xf32> to vector<8x256xf32>
    %8 = vector.extract_strided_slice %3 {offsets = [0, 768], sizes = [8, 256], strides = [1, 1]} : vector<8x1024xf32> to vector<8x256xf32>
    %9 = arith.maximumf %7, %8 : vector<8x256xf32>
    %10 = arith.maximumf %6, %9 : vector<8x256xf32>
    %c0_4 = arith.constant 0 : index
    %c0_5 = arith.constant 0 : index
    %11 = vector.load %arg3[%c0_4, %c0_5] : memref<8x1xf32, #tpu.memory_space<vmem>>, vector<8x1xf32>
    %12 = vector.broadcast %11 : vector<8x1xf32> to vector<8x256xf32>
    %13 = arith.addf %10, %12 : vector<8x256xf32>
    %cst_6 = arith.constant 0.000000e+00 : f32
    %14 = vector.broadcast %cst_6 : f32 to vector<8x256xf32>
    %15 = arith.maximumf %13, %14 : vector<8x256xf32>
    %16 = arith.truncf %15 : vector<8x256xf32> to vector<8x256xbf16>
    %c0_7 = arith.constant 0 : index
    %c0_8 = arith.constant 0 : index
    %17 = vector.load %arg4[%c0_7, %c0_8] : memref<8x256xbf16, #tpu.memory_space<vmem>>, vector<8x256xbf16>
    tpu.vector_store %arg4[%c0_7, %c0_8], %16 {strides = array<i32>} : memref<8x256xbf16, #tpu.memory_space<vmem>>, vector<8x256xbf16>,
    return
  }
  func.func @transform_0(%arg0: i32) -> (i32, i32, i32) {
    %c0_i32 = arith.constant 0 : i32
    %c0_i32_0 = arith.constant 0 : i32
    %c0_i32_1 = arith.constant 0 : i32
    return %arg0, %c0_i32, %c0_i32_0 : i32, i32, i32
  }
  func.func @transform_1(%arg0: i32) -> (i32, i32) {
    %c0_i32 = arith.constant 0 : i32
    %c0_i32_0 = arith.constant 0 : i32
    %c0_i32_1 = arith.constant 0 : i32
    return %c0_i32, %c0_i32_0 : i32, i32
  }
  func.func @transform_2(%arg0: i32) -> (i32, i32) {
    %c0_i32 = arith.constant 0 : i32
    %c0_i32_0 = arith.constant 0 : i32
    %c0_i32_1 = arith.constant 0 : i32
    return %c0_i32, %c0_i32_0 : i32, i32
  }
  func.func @transform_3(%arg0: i32) -> (i32, i32) {
    %c0_i32 = arith.constant 0 : i32
    %c0_i32_0 = arith.constant 0 : i32
    return %c0_i32, %arg0 : i32, i32
  }
}

module attributes {stable_mosaic.version = 11 : i64} {
  func.func @conv2_fc_kernel(%arg0: i32, %arg1: memref<1x32x3750xbf16, #tpu.memory_space<vmem>>, %arg2: memref<3750x400xbf16, #tpu.memory_space<vmem>>, %arg3: memref<1x400xf32, #tpu.memory_space<vmem>>, %arg4: memref<400x120xbf16, #tpu.memory_space<vmem>>, %arg5: memref<1x120xf32, #tpu.memory_space<vmem>>, %arg6: memref<120x84xbf16, #tpu.memory_space<vmem>>, %arg7: memref<1x84xf32, #tpu.memory_space<vmem>>, %arg8: memref<84x10xbf16, #tpu.memory_space<vmem>>, %arg9: memref<1x10xf32, #tpu.memory_space<vmem>>, %arg10: memref<8x10xf32, #tpu.memory_space<vmem>>) attributes {dimension_semantics = [#tpu.dimension_semantics<parallel>], iteration_bounds = array<i64: 1>, scalar_prefetch = 0 : i64, scratch_operands = 0 : i64, tpu.core_type = #tpu.core_type<tc>, window_params = [{transform_indices = @transform_0, window_bounds = array<i64: 1, 32, 3750>}, {pipeline_mode = #tpu.pipeline_mode<synchronous>, transform_indices = @transform_1, window_bounds = array<i64: 3750, 400>}, {pipeline_mode = #tpu.pipeline_mode<synchronous>, transform_indices = @transform_2, window_bounds = array<i64: 1, 400>}, {pipeline_mode = #tpu.pipeline_mode<synchronous>, transform_indices = @transform_3, window_bounds = array<i64: 400, 120>}, {pipeline_mode = #tpu.pipeline_mode<synchronous>, transform_indices = @transform_4, window_bounds = array<i64: 1, 120>}, {pipeline_mode = #tpu.pipeline_mode<synchronous>, transform_indices = @transform_5, window_bounds = array<i64: 120, 84>}, {pipeline_mode = #tpu.pipeline_mode<synchronous>, transform_indices = @transform_6, window_bounds = array<i64: 1, 84>}, {pipeline_mode = #tpu.pipeline_mode<synchronous>, transform_indices = @transform_7, window_bounds = array<i64: 84, 10>}, {pipeline_mode = #tpu.pipeline_mode<synchronous>, transform_indices = @transform_8, window_bounds = array<i64: 1, 10>}, {transform_indices = @transform_9, window_bounds = array<i64: 8, 10>}]} {
    %c0 = arith.constant 0 : index
    %c0_0 = arith.constant 0 : index
    %c0_1 = arith.constant 0 : index
    %0 = vector.load %arg1[%c0, %c0_0, %c0_1] : memref<1x32x3750xbf16, #tpu.memory_space<vmem>>, vector<1x32x3750xbf16>
    %1 = vector.shape_cast %0 : vector<1x32x3750xbf16> to vector<32x3750xbf16>
    %c0_2 = arith.constant 0 : index
    %c0_3 = arith.constant 0 : index
    %2 = vector.load %arg2[%c0_2, %c0_3] : memref<3750x400xbf16, #tpu.memory_space<vmem>>, vector<3750x400xbf16>
    %cst = arith.constant dense<0.000000e+00> : vector<32x400xf32>
    %3 = tpu.matmul %1, %2, %cst {dimension_numbers = #tpu.dot_dimension_numbers<[1], [0], [0], [1], [0, 0, 1, 1], [], []>} : vector<32x3750xbf16>, vector<3750x400xbf16>, vector<32x400xf32> -> vector<32x400xf32>
    %4 = vector.extract_strided_slice %3 {offsets = [0, 0], sizes = [8, 400], strides = [1, 1]} : vector<32x400xf32> to vector<8x400xf32>
    %5 = vector.extract_strided_slice %3 {offsets = [8, 0], sizes = [8, 400], strides = [1, 1]} : vector<32x400xf32> to vector<8x400xf32>
    %6 = arith.maximumf %4, %5 : vector<8x400xf32>
    %7 = vector.extract_strided_slice %3 {offsets = [16, 0], sizes = [8, 400], strides = [1, 1]} : vector<32x400xf32> to vector<8x400xf32>
    %8 = vector.extract_strided_slice %3 {offsets = [24, 0], sizes = [8, 400], strides = [1, 1]} : vector<32x400xf32> to vector<8x400xf32>
    %9 = arith.maximumf %7, %8 : vector<8x400xf32>
    %10 = arith.maximumf %6, %9 : vector<8x400xf32>
    %c0_4 = arith.constant 0 : index
    %c0_5 = arith.constant 0 : index
    %11 = vector.load %arg3[%c0_4, %c0_5] : memref<1x400xf32, #tpu.memory_space<vmem>>, vector<1x400xf32>
    %12 = vector.broadcast %11 : vector<1x400xf32> to vector<8x400xf32>
    %13 = arith.addf %10, %12 : vector<8x400xf32>
    %cst_6 = arith.constant 0.000000e+00 : f32
    %14 = vector.broadcast %cst_6 : f32 to vector<8x400xf32>
    %15 = arith.maximumf %13, %14 : vector<8x400xf32>
    %16 = arith.truncf %15 : vector<8x400xf32> to vector<8x400xbf16>
    %c0_7 = arith.constant 0 : index
    %c0_8 = arith.constant 0 : index
    %17 = vector.load %arg4[%c0_7, %c0_8] : memref<400x120xbf16, #tpu.memory_space<vmem>>, vector<400x120xbf16>
    %cst_9 = arith.constant dense<0.000000e+00> : vector<8x120xf32>
    %18 = tpu.matmul %16, %17, %cst_9 {dimension_numbers = #tpu.dot_dimension_numbers<[1], [0], [0], [1], [0, 0, 1, 1], [], []>} : vector<8x400xbf16>, vector<400x120xbf16>, vector<8x120xf32> -> vector<8x120xf32>
    %c0_10 = arith.constant 0 : index
    %c0_11 = arith.constant 0 : index
    %19 = vector.load %arg5[%c0_10, %c0_11] : memref<1x120xf32, #tpu.memory_space<vmem>>, vector<1x120xf32>
    %20 = vector.broadcast %19 : vector<1x120xf32> to vector<8x120xf32>
    %21 = arith.addf %18, %20 : vector<8x120xf32>
    %cst_12 = arith.constant 0.000000e+00 : f32
    %22 = vector.broadcast %cst_12 : f32 to vector<8x120xf32>
    %23 = arith.maximumf %21, %22 : vector<8x120xf32>
    %24 = arith.truncf %23 : vector<8x120xf32> to vector<8x120xbf16>
    %c0_13 = arith.constant 0 : index
    %c0_14 = arith.constant 0 : index
    %25 = vector.load %arg6[%c0_13, %c0_14] : memref<120x84xbf16, #tpu.memory_space<vmem>>, vector<120x84xbf16>
    %cst_15 = arith.constant dense<0.000000e+00> : vector<8x84xf32>
    %26 = tpu.matmul %24, %25, %cst_15 {dimension_numbers = #tpu.dot_dimension_numbers<[1], [0], [0], [1], [0, 0, 1, 1], [], []>} : vector<8x120xbf16>, vector<120x84xbf16>, vector<8x84xf32> -> vector<8x84xf32>
    %c0_16 = arith.constant 0 : index
    %c0_17 = arith.constant 0 : index
    %27 = vector.load %arg7[%c0_16, %c0_17] : memref<1x84xf32, #tpu.memory_space<vmem>>, vector<1x84xf32>
    %28 = vector.broadcast %27 : vector<1x84xf32> to vector<8x84xf32>
    %29 = arith.addf %26, %28 : vector<8x84xf32>
    %cst_18 = arith.constant 0.000000e+00 : f32
    %30 = vector.broadcast %cst_18 : f32 to vector<8x84xf32>
    %31 = arith.maximumf %29, %30 : vector<8x84xf32>
    %32 = arith.truncf %31 : vector<8x84xf32> to vector<8x84xbf16>
    %c0_19 = arith.constant 0 : index
    %c0_20 = arith.constant 0 : index
    %33 = vector.load %arg8[%c0_19, %c0_20] : memref<84x10xbf16, #tpu.memory_space<vmem>>, vector<84x10xbf16>
    %cst_21 = arith.constant dense<0.000000e+00> : vector<8x10xf32>
    %34 = tpu.matmul %32, %33, %cst_21 {dimension_numbers = #tpu.dot_dimension_numbers<[1], [0], [0], [1], [0, 0, 1, 1], [], []>} : vector<8x84xbf16>, vector<84x10xbf16>, vector<8x10xf32> -> vector<8x10xf32>
    %c0_22 = arith.constant 0 : index
    %c0_23 = arith.constant 0 : index
    %35 = vector.load %arg9[%c0_22, %c0_23] : memref<1x10xf32, #tpu.memory_space<vmem>>, vector<1x10xf32>
    %36 = vector.broadcast %35 : vector<1x10xf32> to vector<8x10xf32>
    %37 = arith.addf %34, %36 : vector<8x10xf32>
    %c0_24 = arith.constant 0 : index
    %c0_25 = arith.constant 0 : index
    %38 = vector.load %arg10[%c0_24, %c0_25] : memref<8x10xf32, #tpu.memory_space<vmem>>, vector<8x10xf32>
    tpu.vector_store %arg10[%c0_24, %c0_25], %37 {strides = array<i32>} : memref<8x10xf32, #tpu.memory_space<vmem>>, vector<8x10xf32>,
    return
  }
  func.func @transform_0(%arg0: i32) -> (i32, i32, i32) {
    %c0_i32 = arith.constant 0 : i32
    %c0_i32_0 = arith.constant 0 : i32
    %c0_i32_1 = arith.constant 0 : i32
    return %arg0, %c0_i32, %c0_i32_0 : i32, i32, i32
  }
  func.func @transform_1(%arg0: i32) -> (i32, i32) {
    %c0_i32 = arith.constant 0 : i32
    %c0_i32_0 = arith.constant 0 : i32
    %c0_i32_1 = arith.constant 0 : i32
    return %c0_i32, %c0_i32_0 : i32, i32
  }
  func.func @transform_2(%arg0: i32) -> (i32, i32) {
    %c0_i32 = arith.constant 0 : i32
    %c0_i32_0 = arith.constant 0 : i32
    %c0_i32_1 = arith.constant 0 : i32
    return %c0_i32, %c0_i32_0 : i32, i32
  }
  func.func @transform_3(%arg0: i32) -> (i32, i32) {
    %c0_i32 = arith.constant 0 : i32
    %c0_i32_0 = arith.constant 0 : i32
    %c0_i32_1 = arith.constant 0 : i32
    return %c0_i32, %c0_i32_0 : i32, i32
  }
  func.func @transform_4(%arg0: i32) -> (i32, i32) {
    %c0_i32 = arith.constant 0 : i32
    %c0_i32_0 = arith.constant 0 : i32
    %c0_i32_1 = arith.constant 0 : i32
    return %c0_i32, %c0_i32_0 : i32, i32
  }
  func.func @transform_5(%arg0: i32) -> (i32, i32) {
    %c0_i32 = arith.constant 0 : i32
    %c0_i32_0 = arith.constant 0 : i32
    %c0_i32_1 = arith.constant 0 : i32
    return %c0_i32, %c0_i32_0 : i32, i32
  }
  func.func @transform_6(%arg0: i32) -> (i32, i32) {
    %c0_i32 = arith.constant 0 : i32
    %c0_i32_0 = arith.constant 0 : i32
    %c0_i32_1 = arith.constant 0 : i32
    return %c0_i32, %c0_i32_0 : i32, i32
  }
  func.func @transform_7(%arg0: i32) -> (i32, i32) {
    %c0_i32 = arith.constant 0 : i32
    %c0_i32_0 = arith.constant 0 : i32
    %c0_i32_1 = arith.constant 0 : i32
    return %c0_i32, %c0_i32_0 : i32, i32
  }
  func.func @transform_8(%arg0: i32) -> (i32, i32) {
    %c0_i32 = arith.constant 0 : i32
    %c0_i32_0 = arith.constant 0 : i32
    %c0_i32_1 = arith.constant 0 : i32
    return %c0_i32, %c0_i32_0 : i32, i32
  }
  func.func @transform_9(%arg0: i32) -> (i32, i32) {
    %c0_i32 = arith.constant 0 : i32
    %c0_i32_0 = arith.constant 0 : i32
    return %arg0, %c0_i32 : i32, i32
  }
}

</mosaic_0001>

<llo_original>
// kernel: net_forward.2
$region0: #{net_forward.2}
  #allocation0 [shape = 'u32[]', space=smem, size = 0x4, offset = 0x4, fixed_abs, tag = 'smem constant byte address 0x4 - core index']
  #allocation1 [shape = 'u32[144,128]{1,0:T(1,128)}', space=vmem, size = 0x12000, scoped, tag = 'internal scratch']
  %s0 = inlined_call_operand.vmem [shape: bf16[2,75,1024], index: 0, kind: input, shape index: {}]
  %s1 = inlined_call_operand.vmem [shape: bf16[8,75], index: 1, kind: input, shape index: {}]
  %s2 = inlined_call_operand.vmem [shape: f32[8,1], index: 2, kind: input, shape index: {}]
  %s3 = inlined_call_operand.vmem [shape: bf16[8,512], index: 3, kind: output, shape index: {}]
  %s4 = sld [smem:[#allocation0]]
  $region45: #{net_forward.2} parent=0
    _
  %s6 = ssub.s32 1, %s4
  %s7 = scalar_select 0, %s6, %s4
  loop: start=0, step=1, limit=4
  $region2: #{net_forward.2} parent=0 // loop_pre_header
    _
  $region3: #{net_forward.2} parent=0 // loop_header
    %s9 = sphi 0, %s13
    %p10 = scmp.ge.s32.totalorder %s9, 4
    %s19 = sphi 0, %s21
    %s22 = sphi 0, %s19
    %s23 = sphi 0, %s22
    %s39 = sphi 0, %s23
    %s43 = sphi 0, %s43
    %s45 = sphi 0, %s43
    %s46 = sphi 0, %s45
    %s60 = sphi 0, %s46
    %s64 = sphi 0, %s64
    %s66 = sphi 0, %s64
    %s67 = sphi 0, %s66
    %s81 = sphi 0, %s67
    %s87 = sphi 0, %s89
    %s90 = sphi 0, %s87
    %s91 = sphi 0, %s90
    %s107 = sphi 0, %s91
  $region4: #{net_forward.2} parent=0 // loop_header_branch
    %12 = sbr.rel (%p10) target = $region8
  $region5: #{net_forward.2} parent=0 // loop_body
    %s14 = ssub.s32 %s9, 1
    %s15 = ssub.s32 %s9, 2
    %s16 = sadd.s32 %s9, 1
    %s17 = ssub.s32 %s9, %s16
    %p18 = scmp.eq.s32.totalorder %s17, 0
    %s20 = sadd.s32 %s19, 1
    %s21 = scalar_select %p18, %s19, %s20
    %p24 = pneg %p18
    %p25 = scmp.eq.s32.totalorder %s9, 1
    %p26 = por %p24, %p25
    %p27 = scmp.ne.s32.totalorder %s19, %s22
    %p28 = scmp.eq.s32.totalorder %s9, 0
    %p29 = por %p27, %p28
    %p30 = scmp.ne.s32.totalorder %s19, %s22
    %p31 = scmp.eq.s32.totalorder %s14, 1
    %p32 = por %p30, %p31
    %p33 = scmp.ne.s32.totalorder %s22, %s23
    %p34 = scmp.eq.s32.totalorder %s14, 0
    %p35 = por %p33, %p34
    %p36 = scmp.ne.s32.totalorder %s22, %s23
    %p37 = scmp.eq.s32.totalorder %s15, 1
    %p38 = por %p36, %p37
    %p40 = scmp.ne.s32.totalorder %s23, %s39
    %p41 = scmp.eq.s32.totalorder %s15, 0
    %p42 = por %p40, %p41
    %s44 = sadd.s32 %s43, 1
    %p47 = scmp.eq.s32.totalorder %s9, 1
    %p48 = scmp.ne.s32.totalorder %s43, %s45
    %p49 = scmp.eq.s32.totalorder %s9, 0
    %p50 = por %p48, %p49
    %p51 = scmp.ne.s32.totalorder %s43, %s45
    %p52 = scmp.eq.s32.totalorder %s14, 1
    %p53 = por %p51, %p52
    %p54 = scmp.ne.s32.totalorder %s45, %s46
    %p55 = scmp.eq.s32.totalorder %s14, 0
    %p56 = por %p54, %p55
    %p57 = scmp.ne.s32.totalorder %s45, %s46
    %p58 = scmp.eq.s32.totalorder %s15, 1
    %p59 = por %p57, %p58
    %p61 = scmp.ne.s32.totalorder %s46, %s60
    %p62 = scmp.eq.s32.totalorder %s15, 0
    %p63 = por %p61, %p62
    %s65 = sadd.s32 %s64, 1
    %p68 = scmp.eq.s32.totalorder %s9, 1
    %p69 = scmp.ne.s32.totalorder %s64, %s66
    %p70 = scmp.eq.s32.totalorder %s9, 0
    %p71 = por %p69, %p70
    %p72 = scmp.ne.s32.totalorder %s64, %s66
    %p73 = scmp.eq.s32.totalorder %s14, 1
    %p74 = por %p72, %p73
    %p75 = scmp.ne.s32.totalorder %s66, %s67
    %p76 = scmp.eq.s32.totalorder %s14, 0
    %p77 = por %p75, %p76
    %p78 = scmp.ne.s32.totalorder %s66, %s67
    %p79 = scmp.eq.s32.totalorder %s15, 1
    %p80 = por %p78, %p79
    %p82 = scmp.ne.s32.totalorder %s67, %s81
    %p83 = scmp.eq.s32.totalorder %s15, 0
    %p84 = por %p82, %p83
    %s85 = ssub.s32 %s9, %s16
    %p86 = scmp.eq.s32.totalorder %s85, 0
    %s88 = sadd.s32 %s87, 1
    %s89 = scalar_select %p86, %s87, %s88
    %p92 = pneg %p86
    %p93 = scmp.eq.s32.totalorder %s9, 1
    %p94 = por %p92, %p93
    %p95 = scmp.ne.s32.totalorder %s87, %s90
    %p96 = scmp.eq.s32.totalorder %s9, 0
    %p97 = por %p95, %p96
    %p98 = scmp.ne.s32.totalorder %s87, %s90
    %p99 = scmp.eq.s32.totalorder %s14, 1
    %p100 = por %p98, %p99
    %p101 = scmp.ne.s32.totalorder %s90, %s91
    %p102 = scmp.eq.s32.totalorder %s14, 0
    %p103 = por %p101, %p102
    %p104 = scmp.ne.s32.totalorder %s90, %s91
    %p105 = scmp.eq.s32.totalorder %s15, 1
    %p106 = por %p104, %p105
    %p108 = scmp.ne.s32.totalorder %s91, %s107
    %p109 = scmp.eq.s32.totalorder %s15, 0
    %p110 = por %p108, %p109
    %p111 = scmp.le.s32.totalorder 1, %s9
    %p112 = scmp.lt.s32.totalorder %s9, 3
    %p113 = pnand %p111, %p112
    %p114 = pneg %p113
    // Predicated region
    $region9: #{net_forward.2} parent=5 // pred_check
      _
    $region10: #{net_forward.2} parent=5 // pred_check_branch
      %116 = sbr.rel (%p113) target = $region12
    $region11: #{net_forward.2} parent=5 // pred_region
      %s117 = ssub.s32 %s9, 1
      // Predicated region
      $region13: #{net_forward.2} parent=11 // pred_check
        %p118 = pneg %p56
      $region14: #{net_forward.2} parent=11 // pred_check_branch
        %120 = sbr.rel (%p118) target = $region16
      $region15: #{net_forward.2} parent=11 // pred_region
        _
      $region16: #{net_forward.2} parent=11 // pred_fallthru
        _
      // Predicated region
      $region17: #{net_forward.2} parent=11 // pred_check
        %p121 = pneg %p77
      $region18: #{net_forward.2} parent=11 // pred_check_branch
        %123 = sbr.rel (%p121) target = $region20
      $region19: #{net_forward.2} parent=11 // pred_region
        _
      $region20: #{net_forward.2} parent=11 // pred_fallthru
        _
    $region12: #{net_forward.2} parent=5 // pred_fallthru
      _
    %p124 = scmp.lt.s32.totalorder %s9, 2
    // Predicated region
    $region21: #{net_forward.2} parent=5 // pred_check
      %p125 = pneg %p124
    $region22: #{net_forward.2} parent=5 // pred_check_branch
      %127 = sbr.rel (%p125) target = $region24
    $region23: #{net_forward.2} parent=5 // pred_region
      // Predicated region
      $region25: #{net_forward.2} parent=23 // pred_check
        %p128 = pneg %p29
      $region26: #{net_forward.2} parent=23 // pred_check_branch
        %130 = sbr.rel (%p128) target = $region28
      $region27: #{net_forward.2} parent=23 // pred_region
        %p131 = scmp.lt.s32.totalorder %s9, 1
        %s132 = scalar_select %p131, %s9, 1
        %s133 = smul.addr %s132, 80
        %s134 = smul.addr %s133, 4
        %s135 = scalar_lea.vmem %s0, %s134
      $region28: #{net_forward.2} parent=23 // pred_fallthru
        _
    $region24: #{net_forward.2} parent=5 // pred_fallthru
      _
    %p136 = scmp.le.s32.totalorder 1, %s9
    %p137 = scmp.lt.s32.totalorder %s9, 3
    %p138 = pnand %p136, %p137
    %p139 = pneg %p138
    // Predicated region
    $region29: #{net_forward.2} parent=5 // pred_check
      _
    $region30: #{net_forward.2} parent=5 // pred_check_branch
      %141 = sbr.rel (%p138) target = $region32
    $region31: #{net_forward.2} parent=5 // pred_region
      %s142 = ssub.s32 %s9, 1
      %p143 = scmp.lt.s32.totalorder %s14, 1
      %s144 = scalar_select %p143, %s14, 1
      %s145 = smul.addr %s144, 80
      %s146 = smul.addr %s145, 4
      %s147 = scalar_lea.vmem %s0, %s146
      %p148 = pneg %p35
      %p149 = pneg %p32
      %p150 = pneg %p56
      %p151 = pneg %p53
      %p152 = pneg %p77
      %p153 = pneg %p74
      %p154 = pneg %p103
      %p155 = pneg %p100
      %s156 = smul.u32 2, %s14
      %p157 = scmp.lt.s32.totalorder %s156, 3
      %s158 = scalar_select %p157, %s156, 3
      %s159 = smul.addr %s158, 4
      %s160 = scalar_lea.vmem %s3, %s159
      %p161 = scmp.lt.s32.totalorder %s14, 1
      %s162 = scalar_select %p161, %s14, 1
      %s163 = smul.addr %s162, 80
      %s164 = smul.addr %s163, 4
      %s165 = scalar_lea.vmem %s0, %s164
      %s166 = smul.u32 2, %s14
      %p167 = scmp.lt.s32.totalorder %s166, 3
      %s168 = scalar_select %p167, %s166, 3
      %s169 = smul.addr %s168, 4
      %s170 = scalar_lea.vmem %s3, %s169
      %s171 = smul.u32 2, %s14
      %v173 = vld [vmem:[%s1] sm:$0xf]
      %v174 = vld [vmem:[%s165] sm:$0xff]
      %v175 = vld [vmem:[%s165 + $0x8] sm:$0xff]
      %v176 = vld [vmem:[%s165 + $0x10] sm:$0xff]
      %v177 = vld [vmem:[%s165 + $0x18] sm:$0xff]
      %v178 = vld [vmem:[%s165 + $0x20] sm:$0xff]
      %v179 = vld [vmem:[%s165 + $0x28] sm:$0xff]
      %v180 = vld [vmem:[%s165 + $0x30] sm:$0xff]
      %v181 = vld [vmem:[%s165 + $0x38] sm:$0xff]
      %v182 = vld [vmem:[%s165 + $0x40] sm:$0xff]
      %v183 = vld [vmem:[%s165 + $0x48] sm:$0xff]
      %v184 = vld [vmem:[%s165 + $0x50] sm:$0xff]
      %v185 = vld [vmem:[%s165 + $0x58] sm:$0xff]
      %v186 = vld [vmem:[%s165 + $0x60] sm:$0xff]
      %v187 = vld [vmem:[%s165 + $0x68] sm:$0xff]
      %v188 = vld [vmem:[%s165 + $0x70] sm:$0xff]
      %v189 = vld [vmem:[%s165 + $0x78] sm:$0xff]
      %v190 = vld [vmem:[%s165 + $0x80] sm:$0xff]
      %v191 = vld [vmem:[%s165 + $0x88] sm:$0xff]
      %v192 = vld [vmem:[%s165 + $0x90] sm:$0xff]
      %v193 = vld [vmem:[%s165 + $0x98] sm:$0xff]
      %v194 = vld [vmem:[%s165 + $0xa0] sm:$0xff]
      %v195 = vld [vmem:[%s165 + $0xa8] sm:$0xff]
      %v196 = vld [vmem:[%s165 + $0xb0] sm:$0xff]
      %v197 = vld [vmem:[%s165 + $0xb8] sm:$0xff]
      %v198 = vld [vmem:[%s165 + $0xc0] sm:$0xff]
      %v199 = vld [vmem:[%s165 + $0xc8] sm:$0xff]
      %v200 = vld [vmem:[%s165 + $0xd0] sm:$0xff]
      %v201 = vld [vmem:[%s165 + $0xd8] sm:$0xff]
      %v202 = vld [vmem:[%s165 + $0xe0] sm:$0xff]
      %v203 = vld [vmem:[%s165 + $0xe8] sm:$0xff]
      %v204 = vld [vmem:[%s165 + $0xf0] sm:$0xff]
      %v205 = vld [vmem:[%s165 + $0xf8] sm:$0xff]
      %v206 = vld [vmem:[%s165 + $0x100] sm:$0xff]
      %v207 = vld [vmem:[%s165 + $0x108] sm:$0xff]
      %v208 = vld [vmem:[%s165 + $0x110] sm:$0xff]
      %v209 = vld [vmem:[%s165 + $0x118] sm:$0xff]
      %v210 = vld [vmem:[%s165 + $0x120] sm:$0x33]
      %v211 = vld [vmem:[%s165 + $0x128] sm:$0x33]
      %v212 = vld [vmem:[%s165 + $0x130] sm:$0x33]
      %v213 = vld [vmem:[%s165 + $0x138] sm:$0x33]
      %v254 = vunpack.c.l.b16 %v174
      %v255 = vunpack.c.h.b16 %v174
      %v256 = vunpack.c.l.b16 %v175
      %v257 = vunpack.c.h.b16 %v175
      %v258 = vunpack.c.l.b16 %v176
      %v259 = vunpack.c.h.b16 %v176
      %v260 = vunpack.c.l.b16 %v177
      %v261 = vunpack.c.h.b16 %v177
      %v262 = vunpack.c.l.b16 %v178
      %v263 = vunpack.c.h.b16 %v178
      %v264 = vunpack.c.l.b16 %v179
      %v265 = vunpack.c.h.b16 %v179
      %v266 = vunpack.c.l.b16 %v180
      %v267 = vunpack.c.h.b16 %v180
      %v268 = vunpack.c.l.b16 %v181
      %v269 = vunpack.c.h.b16 %v181
      %v270 = vunpack.c.l.b16 %v182
      %v271 = vunpack.c.h.b16 %v182
      %v272 = vunpack.c.l.b16 %v183
      %v273 = vunpack.c.h.b16 %v183
      %v274 = vunpack.c.l.b16 %v184
      %v275 = vunpack.c.h.b16 %v184
      %v276 = vunpack.c.l.b16 %v185
      %v277 = vunpack.c.h.b16 %v185
      %v278 = vunpack.c.l.b16 %v186
      %v279 = vunpack.c.h.b16 %v186
      %v280 = vunpack.c.l.b16 %v187
      %v281 = vunpack.c.h.b16 %v187
      %v282 = vunpack.c.l.b16 %v188
      %v283 = vunpack.c.h.b16 %v188
      %v284 = vunpack.c.l.b16 %v189
      %v285 = vunpack.c.h.b16 %v189
      %v286 = vunpack.c.l.b16 %v190
      %v287 = vunpack.c.h.b16 %v190
      %v288 = vunpack.c.l.b16 %v191
      %v289 = vunpack.c.h.b16 %v191
      %v290 = vunpack.c.l.b16 %v192
      %v291 = vunpack.c.h.b16 %v192
      %v292 = vunpack.c.l.b16 %v193
      %v293 = vunpack.c.h.b16 %v193
      %v294 = vunpack.c.l.b16 %v194
      %v295 = vunpack.c.h.b16 %v194
      %v296 = vunpack.c.l.b16 %v195
      %v297 = vunpack.c.h.b16 %v195
      %v298 = vunpack.c.l.b16 %v196
      %v299 = vunpack.c.h.b16 %v196
      %v300 = vunpack.c.l.b16 %v197
      %v301 = vunpack.c.h.b16 %v197
      %v302 = vunpack.c.l.b16 %v198
      %v303 = vunpack.c.h.b16 %v198
      %v304 = vunpack.c.l.b16 %v199
      %v305 = vunpack.c.h.b16 %v199
      %v306 = vunpack.c.l.b16 %v200
      %v307 = vunpack.c.h.b16 %v200
      %v308 = vunpack.c.l.b16 %v201
      %v309 = vunpack.c.h.b16 %v201
      %v310 = vunpack.c.l.b16 %v202
      %v311 = vunpack.c.h.b16 %v202
      %v312 = vunpack.c.l.b16 %v203
      %v313 = vunpack.c.h.b16 %v203
      %v314 = vunpack.c.l.b16 %v204
      %v315 = vunpack.c.h.b16 %v204
      %v316 = vunpack.c.l.b16 %v205
      %v317 = vunpack.c.h.b16 %v205
      %v318 = vunpack.c.l.b16 %v206
      %v319 = vunpack.c.h.b16 %v206
      %v320 = vunpack.c.l.b16 %v207
      %v321 = vunpack.c.h.b16 %v207
      %v322 = vunpack.c.l.b16 %v208
      %v323 = vunpack.c.h.b16 %v208
      %v324 = vunpack.c.l.b16 %v209
      %v325 = vunpack.c.h.b16 %v209
      %v326 = vunpack.c.l.b16 %v210
      %v327 = vunpack.c.h.b16 %v210
      %v328 = vunpack.c.l.b16 %v211
      %v329 = vunpack.c.h.b16 %v211
      %v330 = vunpack.c.l.b16 %v212
      %v331 = vunpack.c.h.b16 %v212
      %v332 = vunpack.c.l.b16 %v213
      %v333 = vunpack.c.h.b16 %v213
      %v334 = vpack.c.b16 %v262, %v254
      %v335 = vpack.c.b16 %v263, %v255
      %v336 = vpack.c.b16 %v264, %v256
      %v337 = vpack.c.b16 %v265, %v257
      %v338 = vpack.c.b16 %v266, %v258
      %v339 = vpack.c.b16 %v267, %v259
      %v340 = vpack.c.b16 %v268, %v260
      %v341 = vpack.c.b16 %v269, %v261
      %v342 = vpack.c.b16 %v278, %v270
      %v343 = vpack.c.b16 %v279, %v271
      %v344 = vpack.c.b16 %v280, %v272
      %v345 = vpack.c.b16 %v281, %v273
      %v346 = vpack.c.b16 %v282, %v274
      %v347 = vpack.c.b16 %v283, %v275
      %v348 = vpack.c.b16 %v284, %v276
      %v349 = vpack.c.b16 %v285, %v277
      %v350 = vpack.c.b16 %v294, %v286
      %v351 = vpack.c.b16 %v295, %v287
      %v352 = vpack.c.b16 %v296, %v288
      %v353 = vpack.c.b16 %v297, %v289
      %v354 = vpack.c.b16 %v298, %v290
      %v355 = vpack.c.b16 %v299, %v291
      %v356 = vpack.c.b16 %v300, %v292
      %v357 = vpack.c.b16 %v301, %v293
      %v358 = vpack.c.b16 %v310, %v302
      %v359 = vpack.c.b16 %v311, %v303
      %v360 = vpack.c.b16 %v312, %v304
      %v361 = vpack.c.b16 %v313, %v305
      %v362 = vpack.c.b16 %v314, %v306
      %v363 = vpack.c.b16 %v315, %v307
      %v364 = vpack.c.b16 %v316, %v308
      %v365 = vpack.c.b16 %v317, %v309
      %v366 = vpack.c.b16 %v326, %v318
      %v367 = vpack.c.b16 %v327, %v319
      %v368 = vpack.c.b16 %v328, %v320
      %v369 = vpack.c.b16 %v329, %v321
      %v370 = vpack.c.b16 %v330, %v322
      %v371 = vpack.c.b16 %v331, %v323
      %v372 = vpack.c.b16 %v332, %v324
      %v373 = vpack.c.b16 %v333, %v325
      %vm406 = vcmask 613376
      %v408 = vsel %vm406, %v173, 0
      %vm410 = vcmask 1044480
      %vm411 = vcmask 1045504
      %v412 = vsel %vm410, 4294967295, 65535
      %v413 = vsel %vm411, %v412, 0
      %v415 = vand.u32 %v366, %v413
      %v418 = vand.u32 %v367, %v413
      %v421 = vand.u32 %v368, %v413
      %v424 = vand.u32 %v369, %v413
      %v427 = vand.u32 %v370, %v413
      %v430 = vand.u32 %v371, %v413
      %v433 = vand.u32 %v372, %v413
      %v436 = vand.u32 %v373, %v413
      %438 = vmatprep.subr.bf16.mxu0 0
      %439 = vmatpush1.bf16.msra.mxu0 0
      %440 = vmatprep.subr.bf16.mxu0 0
      %441 = vmatpush1.bf16.msra.mxu0 0
      %442 = vmatprep.subr.bf16.mxu0 0
      %443 = vmatpush1.bf16.msra.mxu0 0
      %444 = vmatprep.subr.bf16.mxu0 %v418
      %445 = vmatpush1.bf16.msra.mxu0 %v415
      %446 = vmatprep.subr.bf16.mxu0 %v359
      %447 = vmatpush1.bf16.msra.mxu0 %v358
      %448 = vmatprep.subr.bf16.mxu0 %v351
      %449 = vmatpush1.bf16.msra.mxu0 %v350
      %450 = vmatprep.subr.bf16.mxu0 %v343
      %451 = vmatpush1.bf16.msra.mxu0 %v342
      %452 = vmatprep.subr.bf16.mxu0 %v335
      %453 = vmatpush1.bf16.msra.mxu0 %v334
      %454 = vmatprep.subr.bf16.mxu0 0
      %455 = vmatpush2.bf16.msra.mxu0 0
      %456 = vmatprep.subr.bf16.mxu0 0
      %457 = vmatpush2.bf16.msra.mxu0 0
      %458 = vmatprep.subr.bf16.mxu0 0
      %459 = vmatpush2.bf16.msra.mxu0 0
      %460 = vmatprep.subr.bf16.mxu0 0
      %461 = vmatpush2.bf16.msra.mxu0 0
      %462 = vmatprep.subr.bf16.mxu0 0
      %463 = vmatpush2.bf16.msra.mxu0 0
      %464 = vmatprep.subr.bf16.mxu0 0
      %465 = vmatpush2.bf16.msra.mxu0 0
      %466 = vmatprep.subr.bf16.mxu0 0
      %467 = vmatpush2.bf16.msra.mxu0 0
      %468 = vmatprep.subr.bf16.mxu0 0
      %469 = vmatpush2.bf16.msra.mxu0 0
      %470 = vmatprep.mubr.bf16.mxu0 0
      %471 = vmatmul.mubr.bf16.gmra.mxu0 %v408
      %v472 = vpop.f32.mrf.mxu0
      %v473 = vadd.f32 0.0, %v472
      %v474 = vpop.f32.mrf.mxu0
      %v475 = vadd.f32 0.0, %v474
      %v476 = vpop.f32.mrf.mxu0
      %v477 = vpop.f32.mrf.mxu0
      %478 = vdwg.mxu0
      %479 = vmatprep.subr.bf16.mxu0 0
      %480 = vmatpush1.bf16.msra.mxu0 0
      %481 = vmatprep.subr.bf16.mxu0 0
      %482 = vmatpush1.bf16.msra.mxu0 0
      %483 = vmatprep.subr.bf16.mxu0 0
      %484 = vmatpush1.bf16.msra.mxu0 0
      %485 = vmatprep.subr.bf16.mxu0 %v424
      %486 = vmatpush1.bf16.msra.mxu0 %v421
      %487 = vmatprep.subr.bf16.mxu0 %v361
      %488 = vmatpush1.bf16.msra.mxu0 %v360
      %489 = vmatprep.subr.bf16.mxu0 %v353
      %490 = vmatpush1.bf16.msra.mxu0 %v352
      %491 = vmatprep.subr.bf16.mxu0 %v345
      %492 = vmatpush1.bf16.msra.mxu0 %v344
      %493 = vmatprep.subr.bf16.mxu0 %v337
      %494 = vmatpush1.bf16.msra.mxu0 %v336
      %495 = vmatprep.subr.bf16.mxu0 0
      %496 = vmatpush2.bf16.msra.mxu0 0
      %497 = vmatprep.subr.bf16.mxu0 0
      %498 = vmatpush2.bf16.msra.mxu0 0
      %499 = vmatprep.subr.bf16.mxu0 0
      %500 = vmatpush2.bf16.msra.mxu0 0
      %501 = vmatprep.subr.bf16.mxu0 0
      %502 = vmatpush2.bf16.msra.mxu0 0
      %503 = vmatprep.subr.bf16.mxu0 0
      %504 = vmatpush2.bf16.msra.mxu0 0
      %505 = vmatprep.subr.bf16.mxu0 0
      %506 = vmatpush2.bf16.msra.mxu0 0
      %507 = vmatprep.subr.bf16.mxu0 0
      %508 = vmatpush2.bf16.msra.mxu0 0
      %509 = vmatprep.subr.bf16.mxu0 0
      %510 = vmatpush2.bf16.msra.mxu0 0
      %511 = vmatprep.mubr.bf16.mxu0 0
      %512 = vmatmul.mubr.bf16.gmra.mxu0 %v408
      %v513 = vpop.f32.mrf.mxu0
      %v514 = vadd.f32 0.0, %v513
      %v515 = vpop.f32.mrf.mxu0
      %v516 = vadd.f32 0.0, %v515
      %v517 = vpop.f32.mrf.mxu0
      %v518 = vpop.f32.mrf.mxu0
      %519 = vdwg.mxu0
      %520 = vmatprep.subr.bf16.mxu0 0
      %521 = vmatpush1.bf16.msra.mxu0 0
      %522 = vmatprep.subr.bf16.mxu0 0
      %523 = vmatpush1.bf16.msra.mxu0 0
      %524 = vmatprep.subr.bf16.mxu0 0
      %525 = vmatpush1.bf16.msra.mxu0 0
      %526 = vmatprep.subr.bf16.mxu0 %v430
      %527 = vmatpush1.bf16.msra.mxu0 %v427
      %528 = vmatprep.subr.bf16.mxu0 %v363
      %529 = vmatpush1.bf16.msra.mxu0 %v362
      %530 = vmatprep.subr.bf16.mxu0 %v355
      %531 = vmatpush1.bf16.msra.mxu0 %v354
      %532 = vmatprep.subr.bf16.mxu0 %v347
      %533 = vmatpush1.bf16.msra.mxu0 %v346
      %534 = vmatprep.subr.bf16.mxu0 %v339
      %535 = vmatpush1.bf16.msra.mxu0 %v338
      %536 = vmatprep.subr.bf16.mxu0 0
      %537 = vmatpush2.bf16.msra.mxu0 0
      %538 = vmatprep.subr.bf16.mxu0 0
      %539 = vmatpush2.bf16.msra.mxu0 0
      %540 = vmatprep.subr.bf16.mxu0 0
      %541 = vmatpush2.bf16.msra.mxu0 0
      %542 = vmatprep.subr.bf16.mxu0 0
      %543 = vmatpush2.bf16.msra.mxu0 0
      %544 = vmatprep.subr.bf16.mxu0 0
      %545 = vmatpush2.bf16.msra.mxu0 0
      %546 = vmatprep.subr.bf16.mxu0 0
      %547 = vmatpush2.bf16.msra.mxu0 0
      %548 = vmatprep.subr.bf16.mxu0 0
      %549 = vmatpush2.bf16.msra.mxu0 0
      %550 = vmatprep.subr.bf16.mxu0 0
      %551 = vmatpush2.bf16.msra.mxu0 0
      %552 = vmatprep.mubr.bf16.mxu0 0
      %553 = vmatmul.mubr.bf16.gmra.mxu0 %v408
      %v554 = vpop.f32.mrf.mxu0
      %v555 = vadd.f32 0.0, %v554
      %v556 = vpop.f32.mrf.mxu0
      %v557 = vadd.f32 0.0, %v556
      %v558 = vpop.f32.mrf.mxu0
      %v559 = vpop.f32.mrf.mxu0
      %560 = vdwg.mxu0
      %561 = vmatprep.subr.bf16.mxu0 0
      %562 = vmatpush1.bf16.msra.mxu0 0
      %563 = vmatprep.subr.bf16.mxu0 0
      %564 = vmatpush1.bf16.msra.mxu0 0
      %565 = vmatprep.subr.bf16.mxu0 0
      %566 = vmatpush1.bf16.msra.mxu0 0
      %567 = vmatprep.subr.bf16.mxu0 %v436
      %568 = vmatpush1.bf16.msra.mxu0 %v433
      %569 = vmatprep.subr.bf16.mxu0 %v365
      %570 = vmatpush1.bf16.msra.mxu0 %v364
      %571 = vmatprep.subr.bf16.mxu0 %v357
      %572 = vmatpush1.bf16.msra.mxu0 %v356
      %573 = vmatprep.subr.bf16.mxu0 %v349
      %574 = vmatpush1.bf16.msra.mxu0 %v348
      %575 = vmatprep.subr.bf16.mxu0 %v341
      %576 = vmatpush1.bf16.msra.mxu0 %v340
      %577 = vmatprep.subr.bf16.mxu0 0
      %578 = vmatpush2.bf16.msra.mxu0 0
      %579 = vmatprep.subr.bf16.mxu0 0
      %580 = vmatpush2.bf16.msra.mxu0 0
      %581 = vmatprep.subr.bf16.mxu0 0
      %582 = vmatpush2.bf16.msra.mxu0 0
      %583 = vmatprep.subr.bf16.mxu0 0
      %584 = vmatpush2.bf16.msra.mxu0 0
      %585 = vmatprep.subr.bf16.mxu0 0
      %586 = vmatpush2.bf16.msra.mxu0 0
      %587 = vmatprep.subr.bf16.mxu0 0
      %588 = vmatpush2.bf16.msra.mxu0 0
      %589 = vmatprep.subr.bf16.mxu0 0
      %590 = vmatpush2.bf16.msra.mxu0 0
      %591 = vmatprep.subr.bf16.mxu0 0
      %592 = vmatpush2.bf16.msra.mxu0 0
      %593 = vmatprep.mubr.bf16.mxu0 0
      %594 = vmatmul.mubr.bf16.gmra.mxu0 %v408
      %v595 = vpop.f32.mrf.mxu0
      %v596 = vadd.f32 0.0, %v595
      %v597 = vpop.f32.mrf.mxu0
      %v598 = vadd.f32 0.0, %v597
      %v599 = vpop.f32.mrf.mxu0
      %v600 = vpop.f32.mrf.mxu0
      %601 = vdwg.mxu0
      %v602 = vmax.f32 %v473, %v514
      %v603 = vmax.f32 %v475, %v516
      %v604 = vmax.f32 %v555, %v596
      %v605 = vmax.f32 %v557, %v598
      %v606 = vmax.f32 %v602, %v604
      %v607 = vmax.f32 %v603, %v605
      %v608 = vld [vmem:[%s2] sm:$0xff]
      %610 = vset.pattern.permute.xlu0 0
      %611 = vperm.xlu0 %610, %v608
      %v612 = vpop.permute.xlu0 %611
      %v614 = vadd.f32 %v606, %v612
      %v615 = vadd.f32 %v607, %v612
      %v616 = vmax.f32 %v614, 0.0
      %v617 = vmax.f32 %v615, 0.0
      %v618 = vpack.c.bf16 %v616, %v616
      %v619 = vpack.c.bf16 %v617, %v617
      %v622 = vunpack.c.l.b16 %v618
      %v623 = vunpack.c.l.b16 %v619
      %v624 = vpack.c.b16 %v623, %v622
      %626 = vst [vmem:[%s170] sm:$0xff] %v624
      %s627 = smul.u32 2, %s14
      %p628 = scmp.lt.s32.totalorder %s627, 3
      %s629 = scalar_select %p628, %s627, 3
      %s630 = smul.addr %s629, 4
      %s631 = scalar_lea.vmem %s3, %s630
      // Predicated region
      $region33: #{net_forward.2} parent=31 // pred_check
        %p632 = pneg %p100
      $region34: #{net_forward.2} parent=31 // pred_check_branch
        %634 = sbr.rel (%p632) target = $region36
      $region35: #{net_forward.2} parent=31 // pred_region
        %s635 = smul.u32 2, %s14
      $region36: #{net_forward.2} parent=31 // pred_fallthru
        _
    $region32: #{net_forward.2} parent=5 // pred_fallthru
      _
    %p636 = scmp.le.s32.totalorder 2, %s9
    // Predicated region
    $region37: #{net_forward.2} parent=5 // pred_check
      %p637 = pneg %p636
    $region38: #{net_forward.2} parent=5 // pred_check_branch
      %639 = sbr.rel (%p637) target = $region40
    $region39: #{net_forward.2} parent=5 // pred_region
      %s640 = ssub.s32 %s9, 2
      // Predicated region
      $region41: #{net_forward.2} parent=39 // pred_check
        %p641 = pneg %p106
      $region42: #{net_forward.2} parent=39 // pred_check_branch
        %643 = sbr.rel (%p641) target = $region44
      $region43: #{net_forward.2} parent=39 // pred_region
        %s644 = smul.u32 2, %s15
        %p645 = scmp.lt.s32.totalorder %s644, 3
        %s646 = scalar_select %p645, %s644, 3
        %s647 = smul.addr %s646, 4
        %s648 = scalar_lea.vmem %s3, %s647
      $region44: #{net_forward.2} parent=39 // pred_fallthru
        _
    $region40: #{net_forward.2} parent=5 // pred_fallthru
      _
  $region6: #{net_forward.2} parent=0 // loop_footer
    %s13 = sadd.s32 1, %s9
  $region7: #{net_forward.2} parent=0 // loop_footer_branch
    %8 = sbr.rel target = $region3
  $region8: #{net_forward.2} parent=0 // loop_exit
    _

// kernel: net_forward.3
$region0: #{net_forward.3}
  #allocation0 [shape = 'u32[]', space=smem, size = 0x4, offset = 0x4, fixed_abs, tag = 'smem constant byte address 0x4 - core index']
  #allocation1 [shape = 'u32[144,128]{1,0:T(1,128)}', space=vmem, size = 0x12000, scoped, tag = 'internal scratch']
  %s0 = inlined_call_operand.vmem [shape: bf16[1,32,3750], index: 0, kind: input, shape index: {}]
  %s1 = inlined_call_operand.vmem [shape: bf16[3750,400], index: 1, kind: input, shape index: {}]
  %s2 = inlined_call_operand.vmem [shape: f32[1,400], index: 2, kind: input, shape index: {}]
  %s3 = inlined_call_operand.vmem [shape: bf16[400,120], index: 3, kind: input, shape index: {}]
  %s4 = inlined_call_operand.vmem [shape: f32[1,120], index: 4, kind: input, shape index: {}]
  %s5 = inlined_call_operand.vmem [shape: bf16[120,84], index: 5, kind: input, shape index: {}]
  %s6 = inlined_call_operand.vmem [shape: f32[1,84], index: 6, kind: input, shape index: {}]
  %s7 = inlined_call_operand.vmem [shape: bf16[84,10], index: 7, kind: input, shape index: {}]
  %s8 = inlined_call_operand.vmem [shape: f32[1,10], index: 8, kind: input, shape index: {}]
  %s9 = inlined_call_operand.vmem [shape: f32[8,10], index: 9, kind: output, shape index: {}]
  %s10 = sld [smem:[#allocation0]]
  $region46: #{net_forward.3} parent=0
    _
  %s12 = ssub.s32 1, %s10
  %s13 = scalar_select 0, %s12, %s10
  // Predicated region
  $region2: #{net_forward.3} parent=0 // pred_check
    _
  $region3: #{net_forward.3} parent=0 // pred_check_branch
    %15 = sbr.rel (0) target = $region5
  $region4: #{net_forward.3} parent=0 // pred_region
    _
  $region5: #{net_forward.3} parent=0 // pred_fallthru
    _
  // Predicated region
  $region6: #{net_forward.3} parent=0 // pred_check
    _
  $region7: #{net_forward.3} parent=0 // pred_check_branch
    %17 = sbr.rel (0) target = $region9
  $region8: #{net_forward.3} parent=0 // pred_region
    _
  $region9: #{net_forward.3} parent=0 // pred_fallthru
    _
  // Predicated region
  $region10: #{net_forward.3} parent=0 // pred_check
    _
  $region11: #{net_forward.3} parent=0 // pred_check_branch
    %19 = sbr.rel (0) target = $region13
  $region12: #{net_forward.3} parent=0 // pred_region
    _
  $region13: #{net_forward.3} parent=0 // pred_fallthru
    _
  // Predicated region
  $region14: #{net_forward.3} parent=0 // pred_check
    _
  $region15: #{net_forward.3} parent=0 // pred_check_branch
    %21 = sbr.rel (0) target = $region17
  $region16: #{net_forward.3} parent=0 // pred_region
    _
  $region17: #{net_forward.3} parent=0 // pred_fallthru
    _
  // Predicated region
  $region18: #{net_forward.3} parent=0 // pred_check
    _
  $region19: #{net_forward.3} parent=0 // pred_check_branch
    %23 = sbr.rel (0) target = $region21
  $region20: #{net_forward.3} parent=0 // pred_region
    _
  $region21: #{net_forward.3} parent=0 // pred_fallthru
    _
  // Predicated region
  $region22: #{net_forward.3} parent=0 // pred_check
    _
  $region23: #{net_forward.3} parent=0 // pred_check_branch
    %25 = sbr.rel (0) target = $region25
  $region24: #{net_forward.3} parent=0 // pred_region
    _
  $region25: #{net_forward.3} parent=0 // pred_fallthru
    _
  // Predicated region
  $region26: #{net_forward.3} parent=0 // pred_check
    _
  $region27: #{net_forward.3} parent=0 // pred_check_branch
    %27 = sbr.rel (0) target = $region29
  $region28: #{net_forward.3} parent=0 // pred_region
    _
  $region29: #{net_forward.3} parent=0 // pred_fallthru
    _
  // Predicated region
  $region30: #{net_forward.3} parent=0 // pred_check
    _
  $region31: #{net_forward.3} parent=0 // pred_check_branch
    %29 = sbr.rel (0) target = $region33
  $region32: #{net_forward.3} parent=0 // pred_region
    _
  $region33: #{net_forward.3} parent=0 // pred_fallthru
    _
  // Predicated region
  $region34: #{net_forward.3} parent=0 // pred_check
    _
  $region35: #{net_forward.3} parent=0 // pred_check_branch
    %31 = sbr.rel (0) target = $region37
  $region36: #{net_forward.3} parent=0 // pred_region
    _
  $region37: #{net_forward.3} parent=0 // pred_fallthru
    _
  %v33 = vld [vmem:[%s0] sm:$0xff]
  %v34 = vld [vmem:[%s0 + $0x8] sm:$0xff]
  %v35 = vld [vmem:[%s0 + $0x10] sm:$0xff]
  %v36 = vld [vmem:[%s0 + $0x18] sm:$0xff]
  %v37 = vld [vmem:[%s0 + $0x20] sm:$0xff]
  %v38 = vld [vmem:[%s0 + $0x28] sm:$0xff]
  %v39 = vld [vmem:[%s0 + $0x30] sm:$0xff]
  %v40 = vld [vmem:[%s0 + $0x38] sm:$0xff]
  %v41 = vld [vmem:[%s0 + $0x40] sm:$0xff]
  %v42 = vld [vmem:[%s0 + $0x48] sm:$0xff]
  %v43 = vld [vmem:[%s0 + $0x50] sm:$0xff]
  %v44 = vld [vmem:[%s0 + $0x58] sm:$0xff]
  %v45 = vld [vmem:[%s0 + $0x60] sm:$0xff]
  %v46 = vld [vmem:[%s0 + $0x68] sm:$0xff]
  %v47 = vld [vmem:[%s0 + $0x70] sm:$0xff]
  %v48 = vld [vmem:[%s0 + $0x78] sm:$0xff]
  %v49 = vld [vmem:[%s0 + $0x80] sm:$0xff]
  %v50 = vld [vmem:[%s0 + $0x88] sm:$0xff]
  %v51 = vld [vmem:[%s0 + $0x90] sm:$0xff]
  %v52 = vld [vmem:[%s0 + $0x98] sm:$0xff]
  %v53 = vld [vmem:[%s0 + $0xa0] sm:$0xff]
  %v54 = vld [vmem:[%s0 + $0xa8] sm:$0xff]
  %v55 = vld [vmem:[%s0 + $0xb0] sm:$0xff]
  %v56 = vld [vmem:[%s0 + $0xb8] sm:$0xff]
  %v57 = vld [vmem:[%s0 + $0xc0] sm:$0xff]
  %v58 = vld [vmem:[%s0 + $0xc8] sm:$0xff]
  %v59 = vld [vmem:[%s0 + $0xd0] sm:$0xff]
  %v60 = vld [vmem:[%s0 + $0xd8] sm:$0xff]
  %v61 = vld [vmem:[%s0 + $0xe0] sm:$0xff]
  %v62 = vld [vmem:[%s0 + $0xe8] sm:$0xff]
  %v63 = vld [vmem:[%s0 + $0xf0] sm:$0xff]
  %v64 = vld [vmem:[%s0 + $0xf8] sm:$0xff]
  %v65 = vld [vmem:[%s0 + $0x100] sm:$0xff]
  %v66 = vld [vmem:[%s0 + $0x108] sm:$0xff]
  %v67 = vld [vmem:[%s0 + $0x110] sm:$0xff]
  %v68 = vld [vmem:[%s0 + $0x118] sm:$0xff]
  %v69 = vld [vmem:[%s0 + $0x120] sm:$0xff]
  %v70 = vld [vmem:[%s0 + $0x128] sm:$0xff]
  %v71 = vld [vmem:[%s0 + $0x130] sm:$0xff]
  %v72 = vld [vmem:[%s0 + $0x138] sm:$0xff]
  %v73 = vld [vmem:[%s0 + $0x140] sm:$0xff]
  %v74 = vld [vmem:[%s0 + $0x148] sm:$0xff]
  %v75 = vld [vmem:[%s0 + $0x150] sm:$0xff]
  %v76 = vld [vmem:[%s0 + $0x158] sm:$0xff]
  %v77 = vld [vmem:[%s0 + $0x160] sm:$0xff]
  %v78 = vld [vmem:[%s0 + $0x168] sm:$0xff]
  %v79 = vld [vmem:[%s0 + $0x170] sm:$0xff]
  %v80 = vld [vmem:[%s0 + $0x178] sm:$0xff]
  %v81 = vld [vmem:[%s0 + $0x180] sm:$0xff]
  %v82 = vld [vmem:[%s0 + $0x188] sm:$0xff]
  %v83 = vld [vmem:[%s0 + $0x190] sm:$0xff]
  %v84 = vld [vmem:[%s0 + $0x198] sm:$0xff]
  %v85 = vld [vmem:[%s0 + $0x1a0] sm:$0xff]
  %v86 = vld [vmem:[%s0 + $0x1a8] sm:$0xff]
  %v87 = vld [vmem:[%s0 + $0x1b0] sm:$0xff]
  %v88 = vld [vmem:[%s0 + $0x1b8] sm:$0xff]
  %v89 = vld [vmem:[%s0 + $0x1c0] sm:$0xff]
  %v90 = vld [vmem:[%s0 + $0x1c8] sm:$0xff]
  %v91 = vld [vmem:[%s0 + $0x1d0] sm:$0xff]
  %v92 = vld [vmem:[%s0 + $0x1d8] sm:$0xff]
  %v93 = vld [vmem:[%s1] sm:$0xff]
  %v94 = vld [vmem:[%s1 + $0x8] sm:$0xff]
  %v95 = vld [vmem:[%s1 + $0x10] sm:$0xff]
  %v96 = vld [vmem:[%s1 + $0x18] sm:$0xff]
  %v97 = vld [vmem:[%s1 + $0x20] sm:$0xff]
  %v98 = vld [vmem:[%s1 + $0x28] sm:$0xff]
  %v99 = vld [vmem:[%s1 + $0x30] sm:$0xff]
  %v100 = vld [vmem:[%s1 + $0x38] sm:$0xff]
  %v101 = vld [vmem:[%s1 + $0x40] sm:$0xff]
  %v102 = vld [vmem:[%s1 + $0x48] sm:$0xff]
  %v103 = vld [vmem:[%s1 + $0x50] sm:$0xff]
  %v104 = vld [vmem:[%s1 + $0x58] sm:$0xff]
  %v105 = vld [vmem:[%s1 + $0x60] sm:$0xff]
  %v106 = vld [vmem:[%s1 + $0x68] sm:$0xff]
  %v107 = vld [vmem:[%s1 + $0x70] sm:$0xff]
  %v108 = vld [vmem:[%s1 + $0x78] sm:$0xff]
  %v109 = vld [vmem:[%s1 + $0x80] sm:$0xff]
  %v110 = vld [vmem:[%s1 + $0x88] sm:$0xff]
  %v111 = vld [vmem:[%s1 + $0x90] sm:$0xff]
  %v112 = vld [vmem:[%s1 + $0x98] sm:$0xff]
  %v113 = vld [vmem:[%s1 + $0xa0] sm:$0xff]
  %v114 = vld [vmem:[%s1 + $0xa8] sm:$0xff]
  %v115 = vld [vmem:[%s1 + $0xb0] sm:$0xff]
  %v116 = vld [vmem:[%s1 + $0xb8] sm:$0xff]
  %v117 = vld [vmem:[%s1 + $0xc0] sm:$0xff]
  %v118 = vld [vmem:[%s1 + $0xc8] sm:$0xff]
  %v119 = vld [vmem:[%s1 + $0xd0] sm:$0xff]
  %v120 = vld [vmem:[%s1 + $0xd8] sm:$0xff]
  %v121 = vld [vmem:[%s1 + $0xe0] sm:$0xff]
  %v122 = vld [vmem:[%s1 + $0xe8] sm:$0xff]
  %v123 = vld [vmem:[%s1 + $0xf0] sm:$0xff]
  %v124 = vld [vmem:[%s1 + $0xf8] sm:$0xff]
  %v125 = vld [vmem:[%s1 + $0x100] sm:$0xff]
  %v126 = vld [vmem:[%s1 + $0x108] sm:$0xff]
  %v127 = vld [vmem:[%s1 + $0x110] sm:$0xff]
  %v128 = vld [vmem:[%s1 + $0x118] sm:$0xff]
  %v129 = vld [vmem:[%s1 + $0x120] sm:$0xff]
  %v130 = vld [vmem:[%s1 + $0x128] sm:$0xff]
  %v131 = vld [vmem:[%s1 + $0x130] sm:$0xff]
  %v132 = vld [vmem:[%s1 + $0x138] sm:$0xff]
  %v133 = vld [vmem:[%s1 + $0x140] sm:$0xff]
  %v134 = vld [vmem:[%s1 + $0x148] sm:$0xff]
  %v135 = vld [vmem:[%s1 + $0x150] sm:$0xff]
  %v136 = vld [vmem:[%s1 + $0x158] sm:$0xff]
  %v137 = vld [vmem:[%s1 + $0x160] sm:$0xff]
  %v138 = vld [vmem:[%s1 + $0x168] sm:$0xff]
  %v139 = vld [vmem:[%s1 + $0x170] sm:$0xff]
  %v140 = vld [vmem:[%s1 + $0x178] sm:$0xff]
  %v141 = vld [vmem:[%s1 + $0x180] sm:$0xff]
  %v142 = vld [vmem:[%s1 + $0x188] sm:$0xff]
  %v143 = vld [vmem:[%s1 + $0x190] sm:$0xff]
  %v144 = vld [vmem:[%s1 + $0x198] sm:$0xff]
  %v145 = vld [vmem:[%s1 + $0x1a0] sm:$0xff]
  %v146 = vld [vmem:[%s1 + $0x1a8] sm:$0xff]
  %v147 = vld [vmem:[%s1 + $0x1b0] sm:$0xff]
  %v148 = vld [vmem:[%s1 + $0x1b8] sm:$0xff]
  %v149 = vld [vmem:[%s1 + $0x1c0] sm:$0xff]
  %v150 = vld [vmem:[%s1 + $0x1c8] sm:$0xff]
  %v151 = vld [vmem:[%s1 + $0x1d0] sm:$0xff]
  %v152 = vld [vmem:[%s1 + $0x1d8] sm:$0xff]
  %v153 = vld [vmem:[%s1 + $0x1e0] sm:$0xff]
  %v154 = vld [vmem:[%s1 + $0x1e8] sm:$0xff]
  %v155 = vld [vmem:[%s1 + $0x1f0] sm:$0xff]
  %v156 = vld [vmem:[%s1 + $0x1f8] sm:$0xff]
  %v157 = vld [vmem:[%s1 + $0x200] sm:$0xff]
  %v158 = vld [vmem:[%s1 + $0x208] sm:$0xff]
  %v159 = vld [vmem:[%s1 + $0x210] sm:$0xff]
  %v160 = vld [vmem:[%s1 + $0x218] sm:$0xff]
  %v161 = vld [vmem:[%s1 + $0x220] sm:$0xff]
  %v162 = vld [vmem:[%s1 + $0x228] sm:$0xff]
  %v163 = vld [vmem:[%s1 + $0x230] sm:$0xff]
  %v164 = vld [vmem:[%s1 + $0x238] sm:$0xff]
  %v165 = vld [vmem:[%s1 + $0x240] sm:$0xff]
  %v166 = vld [vmem:[%s1 + $0x248] sm:$0xff]
  %v167 = vld [vmem:[%s1 + $0x250] sm:$0xff]
  %v168 = vld [vmem:[%s1 + $0x258] sm:$0xff]
  %v169 = vld [vmem:[%s1 + $0x260] sm:$0xff]
  %v170 = vld [vmem:[%s1 + $0x268] sm:$0xff]
  %v171 = vld [vmem:[%s1 + $0x270] sm:$0xff]
  %v172 = vld [vmem:[%s1 + $0x278] sm:$0xff]
  %v173 = vld [vmem:[%s1 + $0x280] sm:$0xff]
  %v174 = vld [vmem:[%s1 + $0x288] sm:$0xff]
  %v175 = vld [vmem:[%s1 + $0x290] sm:$0xff]
  %v176 = vld [vmem:[%s1 + $0x298] sm:$0xff]
  %v177 = vld [vmem:[%s1 + $0x2a0] sm:$0xff]
  %v178 = vld [vmem:[%s1 + $0x2a8] sm:$0xff]
  %v179 = vld [vmem:[%s1 + $0x2b0] sm:$0xff]
  %v180 = vld [vmem:[%s1 + $0x2b8] sm:$0xff]
  %v181 = vld [vmem:[%s1 + $0x2c0] sm:$0xff]
  %v182 = vld [vmem:[%s1 + $0x2c8] sm:$0xff]
  %v183 = vld [vmem:[%s1 + $0x2d0] sm:$0xff]
  %v184 = vld [vmem:[%s1 + $0x2d8] sm:$0xff]
  %v185 = vld [vmem:[%s1 + $0x2e0] sm:$0xff]
  %v186 = vld [vmem:[%s1 + $0x2e8] sm:$0xff]
  %v187 = vld [vmem:[%s1 + $0x2f0] sm:$0xff]
  %v188 = vld [vmem:[%s1 + $0x2f8] sm:$0xff]
  %v189 = vld [vmem:[%s1 + $0x300] sm:$0xff]
  %v190 = vld [vmem:[%s1 + $0x308] sm:$0xff]
  %v191 = vld [vmem:[%s1 + $0x310] sm:$0xff]
  %v192 = vld [vmem:[%s1 + $0x318] sm:$0xff]
  %v193 = vld [vmem:[%s1 + $0x320] sm:$0xff]
  %v194 = vld [vmem:[%s1 + $0x328] sm:$0xff]
  %v195 = vld [vmem:[%s1 + $0x330] sm:$0xff]
  %v196 = vld [vmem:[%s1 + $0x338] sm:$0xff]
  %v197 = vld [vmem:[%s1 + $0x340] sm:$0xff]
  %v198 = vld [vmem:[%s1 + $0x348] sm:$0xff]
  %v199 = vld [vmem:[%s1 + $0x350] sm:$0xff]
  %v200 = vld [vmem:[%s1 + $0x358] sm:$0xff]
  %v201 = vld [vmem:[%s1 + $0x360] sm:$0xff]
  %v202 = vld [vmem:[%s1 + $0x368] sm:$0xff]
  %v203 = vld [vmem:[%s1 + $0x370] sm:$0xff]
  %v204 = vld [vmem:[%s1 + $0x378] sm:$0xff]
  %v205 = vld [vmem:[%s1 + $0x380] sm:$0xff]
  %v206 = vld [vmem:[%s1 + $0x388] sm:$0xff]
  %v207 = vld [vmem:[%s1 + $0x390] sm:$0xff]
  %v208 = vld [vmem:[%s1 + $0x398] sm:$0xff]
  %v209 = vld [vmem:[%s1 + $0x3a0] sm:$0xff]
  %v210 = vld [vmem:[%s1 + $0x3a8] sm:$0xff]
  %v211 = vld [vmem:[%s1 + $0x3b0] sm:$0xff]
  %v212 = vld [vmem:[%s1 + $0x3b8] sm:$0xff]
  %v213 = vld [vmem:[%s1 + $0x3c0] sm:$0xff]
  %v214 = vld [vmem:[%s1 + $0x3c8] sm:$0xff]
  %v215 = vld [vmem:[%s1 + $0x3d0] sm:$0xff]
  %v216 = vld [vmem:[%s1 + $0x3d8] sm:$0xff]
  %v217 = vld [vmem:[%s1 + $0x3e0] sm:$0xff]
  %v218 = vld [vmem:[%s1 + $0x3e8] sm:$0xff]
  %v219 = vld [vmem:[%s1 + $0x3f0] sm:$0xff]
  %v220 = vld [vmem:[%s1 + $0x3f8] sm:$0xff]
  %v221 = vld [vmem:[%s1 + $0x400] sm:$0xff]
  %v222 = vld [vmem:[%s1 + $0x408] sm:$0xff]
  %v223 = vld [vmem:[%s1 + $0x410] sm:$0xff]
  %v224 = vld [vmem:[%s1 + $0x418] sm:$0xff]
  %v225 = vld [vmem:[%s1 + $0x420] sm:$0xff]
  %v226 = vld [vmem:[%s1 + $0x428] sm:$0xff]
  %v227 = vld [vmem:[%s1 + $0x430] sm:$0xff]
  %v228 = vld [vmem:[%s1 + $0x438] sm:$0xff]
  %v229 = vld [vmem:[%s1 + $0x440] sm:$0xff]
  %v230 = vld [vmem:[%s1 + $0x448] sm:$0xff]
  %v231 = vld [vmem:[%s1 + $0x450] sm:$0xff]
  %v232 = vld [vmem:[%s1 + $0x458] sm:$0xff]
  %v233 = vld [vmem:[%s1 + $0x460] sm:$0xff]
  %v234 = vld [vmem:[%s1 + $0x468] sm:$0xff]
  %v235 = vld [vmem:[%s1 + $0x470] sm:$0xff]
  %v236 = vld [vmem:[%s1 + $0x478] sm:$0xff]
  %v237 = vld [vmem:[%s1 + $0x480] sm:$0xff]
  %v238 = vld [vmem:[%s1 + $0x488] sm:$0xff]
  %v239 = vld [vmem:[%s1 + $0x490] sm:$0xff]
  %v240 = vld [vmem:[%s1 + $0x498] sm:$0xff]
  %v241 = vld [vmem:[%s1 + $0x4a0] sm:$0xff]
  %v242 = vld [vmem:[%s1 + $0x4a8] sm:$0xff]
  %v243 = vld [vmem:[%s1 + $0x4b0] sm:$0xff]
  %v244 = vld [vmem:[%s1 + $0x4b8] sm:$0xff]
  %v245 = vld [vmem:[%s1 + $0x4c0] sm:$0xff]
  %v246 = vld [vmem:[%s1 + $0x4c8] sm:$0xff]
  %v247 = vld [vmem:[%s1 + $0x4d0] sm:$0xff]
  %v248 = vld [vmem:[%s1 + $0x4d8] sm:$0xff]
  %v249 = vld [vmem:[%s1 + $0x4e0] sm:$0xff]
  %v250 = vld [vmem:[%s1 + $0x4e8] sm:$0xff]
  %v251 = vld [vmem:[%s1 + $0x4f0] sm:$0xff]
  %v252 = vld [vmem:[%s1 + $0x4f8] sm:$0xff]
  %v253 = vld [vmem:[%s1 + $0x500] sm:$0xff]
  %v254 = vld [vmem:[%s1 + $0x508] sm:$0xff]
  %v255 = vld [vmem:[%s1 + $0x510] sm:$0xff]
  %v256 = vld [vmem:[%s1 + $0x518] sm:$0xff]
  %v257 = vld [vmem:[%s1 + $0x520] sm:$0xff]
  %v258 = vld [vmem:[%s1 + $0x528] sm:$0xff]
  %v259 = vld [vmem:[%s1 + $0x530] sm:$0xff]
  %v260 = vld [vmem:[%s1 + $0x538] sm:$0xff]
  %v261 = vld [vmem:[%s1 + $0x540] sm:$0xff]
  %v262 = vld [vmem:[%s1 + $0x548] sm:$0xff]
  %v263 = vld [vmem:[%s1 + $0x550] sm:$0xff]
  %v264 = vld [vmem:[%s1 + $0x558] sm:$0xff]
  %v265 = vld [vmem:[%s1 + $0x560] sm:$0xff]
  %v266 = vld [vmem:[%s1 + $0x568] sm:$0xff]
  %v267 = vld [vmem:[%s1 + $0x570] sm:$0xff]
  %v268 = vld [vmem:[%s1 + $0x578] sm:$0xff]
  %v269 = vld [vmem:[%s1 + $0x580] sm:$0xff]
  %v270 = vld [vmem:[%s1 + $0x588] sm:$0xff]
  %v271 = vld [vmem:[%s1 + $0x590] sm:$0xff]
  %v272 = vld [vmem:[%s1 + $0x598] sm:$0xff]
  %v273 = vld [vmem:[%s1 + $0x5a0] sm:$0xff]
  %v274 = vld [vmem:[%s1 + $0x5a8] sm:$0xff]
  %v275 = vld [vmem:[%s1 + $0x5b0] sm:$0xff]
  %v276 = vld [vmem:[%s1 + $0x5b8] sm:$0xff]
  %v277 = vld [vmem:[%s1 + $0x5c0] sm:$0xff]
  %v278 = vld [vmem:[%s1 + $0x5c8] sm:$0xff]
  %v279 = vld [vmem:[%s1 + $0x5d0] sm:$0xff]
  %v280 = vld [vmem:[%s1 + $0x5d8] sm:$0xff]
  %v281 = vld [vmem:[%s1 + $0x5e0] sm:$0xff]
  %v282 = vld [vmem:[%s1 + $0x5e8] sm:$0xff]
  %v283 = vld [vmem:[%s1 + $0x5f0] sm:$0xff]
  %v284 = vld [vmem:[%s1 + $0x5f8] sm:$0xff]
  %v285 = vld [vmem:[%s1 + $0x600] sm:$0xff]
  %v286 = vld [vmem:[%s1 + $0x608] sm:$0xff]
  %v287 = vld [vmem:[%s1 + $0x610] sm:$0xff]
  %v288 = vld [vmem:[%s1 + $0x618] sm:$0xff]
  %v289 = vld [vmem:[%s1 + $0x620] sm:$0xff]
  %v290 = vld [vmem:[%s1 + $0x628] sm:$0xff]
  %v291 = vld [vmem:[%s1 + $0x630] sm:$0xff]
  %v292 = vld [vmem:[%s1 + $0x638] sm:$0xff]
  %v293 = vld [vmem:[%s1 + $0x640] sm:$0xff]
  %v294 = vld [vmem:[%s1 + $0x648] sm:$0xff]
  %v295 = vld [vmem:[%s1 + $0x650] sm:$0xff]
  %v296 = vld [vmem:[%s1 + $0x658] sm:$0xff]
  %v297 = vld [vmem:[%s1 + $0x660] sm:$0xff]
  %v298 = vld [vmem:[%s1 + $0x668] sm:$0xff]
  %v299 = vld [vmem:[%s1 + $0x670] sm:$0xff]
  %v300 = vld [vmem:[%s1 + $0x678] sm:$0xff]
  %v301 = vld [vmem:[%s1 + $0x680] sm:$0xff]
  %v302 = vld [vmem:[%s1 + $0x688] sm:$0xff]
  %v303 = vld [vmem:[%s1 + $0x690] sm:$0xff]
  %v304 = vld [vmem:[%s1 + $0x698] sm:$0xff]
  %v305 = vld [vmem:[%s1 + $0x6a0] sm:$0xff]
  %v306 = vld [vmem:[%s1 + $0x6a8] sm:$0xff]
  %v307 = vld [vmem:[%s1 + $0x6b0] sm:$0xff]
  %v308 = vld [vmem:[%s1 + $0x6b8] sm:$0xff]
  %v309 = vld [vmem:[%s1 + $0x6c0] sm:$0xff]
  %v310 = vld [vmem:[%s1 + $0x6c8] sm:$0xff]
  %v311 = vld [vmem:[%s1 + $0x6d0] sm:$0xff]
  %v312 = vld [vmem:[%s1 + $0x6d8] sm:$0xff]
  %v313 = vld [vmem:[%s1 + $0x6e0] sm:$0xff]
  %v314 = vld [vmem:[%s1 + $0x6e8] sm:$0xff]
  %v315 = vld [vmem:[%s1 + $0x6f0] sm:$0xff]
  %v316 = vld [vmem:[%s1 + $0x6f8] sm:$0xff]
  %v317 = vld [vmem:[%s1 + $0x700] sm:$0xff]
  %v318 = vld [vmem:[%s1 + $0x708] sm:$0xff]
  %v319 = vld [vmem:[%s1 + $0x710] sm:$0xff]
  %v320 = vld [vmem:[%s1 + $0x718] sm:$0xff]
  %v321 = vld [vmem:[%s1 + $0x720] sm:$0xff]
  %v322 = vld [vmem:[%s1 + $0x728] sm:$0xff]
  %v323 = vld [vmem:[%s1 + $0x730] sm:$0xff]
  %v324 = vld [vmem:[%s1 + $0x738] sm:$0xff]
  %v325 = vld [vmem:[%s1 + $0x740] sm:$0xff]
  %v326 = vld [vmem:[%s1 + $0x748] sm:$0xff]
  %v327 = vld [vmem:[%s1 + $0x750] sm:$0xff]
  %v328 = vld [vmem:[%s1 + $0x758] sm:$0xff]
  %v329 = vld [vmem:[%s1 + $0x760] sm:$0xff]
  %v330 = vld [vmem:[%s1 + $0x768] sm:$0xff]
  %v331 = vld [vmem:[%s1 + $0x770] sm:$0xff]
  %v332 = vld [vmem:[%s1 + $0x778] sm:$0xff]
  %v333 = vld [vmem:[%s1 + $0x780] sm:$0xff]
  %v334 = vld [vmem:[%s1 + $0x788] sm:$0xff]
  %v335 = vld [vmem:[%s1 + $0x790] sm:$0xff]
  %v336 = vld [vmem:[%s1 + $0x798] sm:$0xff]
  %v337 = vld [vmem:[%s1 + $0x7a0] sm:$0xff]
  %v338 = vld [vmem:[%s1 + $0x7a8] sm:$0xff]
  %v339 = vld [vmem:[%s1 + $0x7b0] sm:$0xff]
  %v340 = vld [vmem:[%s1 + $0x7b8] sm:$0xff]
  %v341 = vld [vmem:[%s1 + $0x7c0] sm:$0xff]
  %v342 = vld [vmem:[%s1 + $0x7c8] sm:$0xff]
  %v343 = vld [vmem:[%s1 + $0x7d0] sm:$0xff]
  %v344 = vld [vmem:[%s1 + $0x7d8] sm:$0xff]
  %v345 = vld [vmem:[%s1 + $0x7e0] sm:$0xff]
  %v346 = vld [vmem:[%s1 + $0x7e8] sm:$0xff]
  %v347 = vld [vmem:[%s1 + $0x7f0] sm:$0xff]
  %v348 = vld [vmem:[%s1 + $0x7f8] sm:$0xff]
  %v349 = vld [vmem:[%s1 + $0x800] sm:$0xff]
  %v350 = vld [vmem:[%s1 + $0x808] sm:$0xff]
  %v351 = vld [vmem:[%s1 + $0x810] sm:$0xff]
  %v352 = vld [vmem:[%s1 + $0x818] sm:$0xff]
  %v353 = vld [vmem:[%s1 + $0x820] sm:$0xff]
  %v354 = vld [vmem:[%s1 + $0x828] sm:$0xff]
  %v355 = vld [vmem:[%s1 + $0x830] sm:$0xff]
  %v356 = vld [vmem:[%s1 + $0x838] sm:$0xff]
  %v357 = vld [vmem:[%s1 + $0x840] sm:$0xff]
  %v358 = vld [vmem:[%s1 + $0x848] sm:$0xff]
  %v359 = vld [vmem:[%s1 + $0x850] sm:$0xff]
  %v360 = vld [vmem:[%s1 + $0x858] sm:$0xff]
  %v361 = vld [vmem:[%s1 + $0x860] sm:$0xff]
  %v362 = vld [vmem:[%s1 + $0x868] sm:$0xff]
  %v363 = vld [vmem:[%s1 + $0x870] sm:$0xff]
  %v364 = vld [vmem:[%s1 + $0x878] sm:$0xff]
  %v365 = vld [vmem:[%s1 + $0x880] sm:$0xff]
  %v366 = vld [vmem:[%s1 + $0x888] sm:$0xff]
  %v367 = vld [vmem:[%s1 + $0x890] sm:$0xff]
  %v368 = vld [vmem:[%s1 + $0x898] sm:$0xff]
  %v369 = vld [vmem:[%s1 + $0x8a0] sm:$0xff]
  %v370 = vld [vmem:[%s1 + $0x8a8] sm:$0xff]
  %v371 = vld [vmem:[%s1 + $0x8b0] sm:$0xff]
  %v372 = vld [vmem:[%s1 + $0x8b8] sm:$0xff]
  %v373 = vld [vmem:[%s1 + $0x8c0] sm:$0xff]
  %v374 = vld [vmem:[%s1 + $0x8c8] sm:$0xff]
  %v375 = vld [vmem:[%s1 + $0x8d0] sm:$0xff]
  %v376 = vld [vmem:[%s1 + $0x8d8] sm:$0xff]
  %v377 = vld [vmem:[%s1 + $0x8e0] sm:$0xff]
  %v378 = vld [vmem:[%s1 + $0x8e8] sm:$0xff]
  %v379 = vld [vmem:[%s1 + $0x8f0] sm:$0xff]
  %v380 = vld [vmem:[%s1 + $0x8f8] sm:$0xff]
  %v381 = vld [vmem:[%s1 + $0x900] sm:$0xff]
  %v382 = vld [vmem:[%s1 + $0x908] sm:$0xff]
  %v383 = vld [vmem:[%s1 + $0x910] sm:$0xff]
  %v384 = vld [vmem:[%s1 + $0x918] sm:$0xff]
  %v385 = vld [vmem:[%s1 + $0x920] sm:$0xff]
  %v386 = vld [vmem:[%s1 + $0x928] sm:$0xff]
  %v387 = vld [vmem:[%s1 + $0x930] sm:$0xff]
  %v388 = vld [vmem:[%s1 + $0x938] sm:$0xff]
  %v389 = vld [vmem:[%s1 + $0x940] sm:$0xff]
  %v390 = vld [vmem:[%s1 + $0x948] sm:$0xff]
  %v391 = vld [vmem:[%s1 + $0x950] sm:$0xff]
  %v392 = vld [vmem:[%s1 + $0x958] sm:$0xff]
  %v393 = vld [vmem:[%s1 + $0x960] sm:$0xff]
  %v394 = vld [vmem:[%s1 + $0x968] sm:$0xff]
  %v395 = vld [vmem:[%s1 + $0x970] sm:$0xff]
  %v396 = vld [vmem:[%s1 + $0x978] sm:$0xff]
  %v397 = vld [vmem:[%s1 + $0x980] sm:$0xff]
  %v398 = vld [vmem:[%s1 + $0x988] sm:$0xff]
  %v399 = vld [vmem:[%s1 + $0x990] sm:$0xff]
  %v400 = vld [vmem:[%s1 + $0x998] sm:$0xff]
  %v401 = vld [vmem:[%s1 + $0x9a0] sm:$0xff]
  %v402 = vld [vmem:[%s1 + $0x9a8] sm:$0xff]
  %v403 = vld [vmem:[%s1 + $0x9b0] sm:$0xff]
  %v404 = vld [vmem:[%s1 + $0x9b8] sm:$0xff]
  %v405 = vld [vmem:[%s1 + $0x9c0] sm:$0xff]
  %v406 = vld [vmem:[%s1 + $0x9c8] sm:$0xff]
  %v407 = vld [vmem:[%s1 + $0x9d0] sm:$0xff]
  %v408 = vld [vmem:[%s1 + $0x9d8] sm:$0xff]
  %v409 = vld [vmem:[%s1 + $0x9e0] sm:$0xff]
  %v410 = vld [vmem:[%s1 + $0x9e8] sm:$0xff]
  %v411 = vld [vmem:[%s1 + $0x9f0] sm:$0xff]
  %v412 = vld [vmem:[%s1 + $0x9f8] sm:$0xff]
  %v413 = vld [vmem:[%s1 + $0xa00] sm:$0xff]
  %v414 = vld [vmem:[%s1 + $0xa08] sm:$0xff]
  %v415 = vld [vmem:[%s1 + $0xa10] sm:$0xff]
  %v416 = vld [vmem:[%s1 + $0xa18] sm:$0xff]
  %v417 = vld [vmem:[%s1 + $0xa20] sm:$0xff]
  %v418 = vld [vmem:[%s1 + $0xa28] sm:$0xff]
  %v419 = vld [vmem:[%s1 + $0xa30] sm:$0xff]
  %v420 = vld [vmem:[%s1 + $0xa38] sm:$0xff]
  %v421 = vld [vmem:[%s1 + $0xa40] sm:$0xff]
  %v422 = vld [vmem:[%s1 + $0xa48] sm:$0xff]
  %v423 = vld [vmem:[%s1 + $0xa50] sm:$0xff]
  %v424 = vld [vmem:[%s1 + $0xa58] sm:$0xff]
  %v425 = vld [vmem:[%s1 + $0xa60] sm:$0xff]
  %v426 = vld [vmem:[%s1 + $0xa68] sm:$0xff]
  %v427 = vld [vmem:[%s1 + $0xa70] sm:$0xff]
  %v428 = vld [vmem:[%s1 + $0xa78] sm:$0xff]
  %v429 = vld [vmem:[%s1 + $0xa80] sm:$0xff]
  %v430 = vld [vmem:[%s1 + $0xa88] sm:$0xff]
  %v431 = vld [vmem:[%s1 + $0xa90] sm:$0xff]
  %v432 = vld [vmem:[%s1 + $0xa98] sm:$0xff]
  %v433 = vld [vmem:[%s1 + $0xaa0] sm:$0xff]
  %v434 = vld [vmem:[%s1 + $0xaa8] sm:$0xff]
  %v435 = vld [vmem:[%s1 + $0xab0] sm:$0xff]
  %v436 = vld [vmem:[%s1 + $0xab8] sm:$0xff]
  %v437 = vld [vmem:[%s1 + $0xac0] sm:$0xff]
  %v438 = vld [vmem:[%s1 + $0xac8] sm:$0xff]
  %v439 = vld [vmem:[%s1 + $0xad0] sm:$0xff]
  %v440 = vld [vmem:[%s1 + $0xad8] sm:$0xff]
  %v441 = vld [vmem:[%s1 + $0xae0] sm:$0xff]
  %v442 = vld [vmem:[%s1 + $0xae8] sm:$0xff]
  %v443 = vld [vmem:[%s1 + $0xaf0] sm:$0xff]
  %v444 = vld [vmem:[%s1 + $0xaf8] sm:$0xff]
  %v445 = vld [vmem:[%s1 + $0xb00] sm:$0xff]
  %v446 = vld [vmem:[%s1 + $0xb08] sm:$0xff]
  %v447 = vld [vmem:[%s1 + $0xb10] sm:$0xff]
  %v448 = vld [vmem:[%s1 + $0xb18] sm:$0xff]
  %v449 = vld [vmem:[%s1 + $0xb20] sm:$0xff]
  %v450 = vld [vmem:[%s1 + $0xb28] sm:$0xff]
  %v451 = vld [vmem:[%s1 + $0xb30] sm:$0xff]
  %v452 = vld [vmem:[%s1 + $0xb38] sm:$0xff]
  %v453 = vld [vmem:[%s1 + $0xb40] sm:$0xff]
  %v454 = vld [vmem:[%s1 + $0xb48] sm:$0xff]
  %v455 = vld [vmem:[%s1 + $0xb50] sm:$0xff]
  %v456 = vld [vmem:[%s1 + $0xb58] sm:$0xff]
  %v457 = vld [vmem:[%s1 + $0xb60] sm:$0xff]
  %v458 = vld [vmem:[%s1 + $0xb68] sm:$0xff]
  %v459 = vld [vmem:[%s1 + $0xb70] sm:$0xff]
  %v460 = vld [vmem:[%s1 + $0xb78] sm:$0xff]
  %v461 = vld [vmem:[%s1 + $0xb80] sm:$0xff]
  %v462 = vld [vmem:[%s1 + $0xb88] sm:$0xff]
  %v463 = vld [vmem:[%s1 + $0xb90] sm:$0xff]
  %v464 = vld [vmem:[%s1 + $0xb98] sm:$0xff]
  %v465 = vld [vmem:[%s1 + $0xba0] sm:$0xff]
  %v466 = vld [vmem:[%s1 + $0xba8] sm:$0xff]
  %v467 = vld [vmem:[%s1 + $0xbb0] sm:$0xff]
  %v468 = vld [vmem:[%s1 + $0xbb8] sm:$0xff]
  %v469 = vld [vmem:[%s1 + $0xbc0] sm:$0xff]
  %v470 = vld [vmem:[%s1 + $0xbc8] sm:$0xff]
  %v471 = vld [vmem:[%s1 + $0xbd0] sm:$0xff]
  %v472 = vld [vmem:[%s1 + $0xbd8] sm:$0xff]
  %v473 = vld [vmem:[%s1 + $0xbe0] sm:$0xff]
  %v474 = vld [vmem:[%s1 + $0xbe8] sm:$0xff]
  %v475 = vld [vmem:[%s1 + $0xbf0] sm:$0xff]
  %v476 = vld [vmem:[%s1 + $0xbf8] sm:$0xff]
  %v477 = vld [vmem:[%s1 + $0xc00] sm:$0xff]
  %v478 = vld [vmem:[%s1 + $0xc08] sm:$0xff]
  %v479 = vld [vmem:[%s1 + $0xc10] sm:$0xff]
  %v480 = vld [vmem:[%s1 + $0xc18] sm:$0xff]
  %v481 = vld [vmem:[%s1 + $0xc20] sm:$0xff]
  %v482 = vld [vmem:[%s1 + $0xc28] sm:$0xff]
  %v483 = vld [vmem:[%s1 + $0xc30] sm:$0xff]
  %v484 = vld [vmem:[%s1 + $0xc38] sm:$0xff]
  %v485 = vld [vmem:[%s1 + $0xc40] sm:$0xff]
  %v486 = vld [vmem:[%s1 + $0xc48] sm:$0xff]
  %v487 = vld [vmem:[%s1 + $0xc50] sm:$0xff]
  %v488 = vld [vmem:[%s1 + $0xc58] sm:$0xff]
  %v489 = vld [vmem:[%s1 + $0xc60] sm:$0xff]
  %v490 = vld [vmem:[%s1 + $0xc68] sm:$0xff]
  %v491 = vld [vmem:[%s1 + $0xc70] sm:$0xff]
  %v492 = vld [vmem:[%s1 + $0xc78] sm:$0xff]
  %v493 = vld [vmem:[%s1 + $0xc80] sm:$0xff]
  %v494 = vld [vmem:[%s1 + $0xc88] sm:$0xff]
  %v495 = vld [vmem:[%s1 + $0xc90] sm:$0xff]
  %v496 = vld [vmem:[%s1 + $0xc98] sm:$0xff]
  %v497 = vld [vmem:[%s1 + $0xca0] sm:$0xff]
  %v498 = vld [vmem:[%s1 + $0xca8] sm:$0xff]
  %v499 = vld [vmem:[%s1 + $0xcb0] sm:$0xff]
  %v500 = vld [vmem:[%s1 + $0xcb8] sm:$0xff]
  %v501 = vld [vmem:[%s1 + $0xcc0] sm:$0xff]
  %v502 = vld [vmem:[%s1 + $0xcc8] sm:$0xff]
  %v503 = vld [vmem:[%s1 + $0xcd0] sm:$0xff]
  %v504 = vld [vmem:[%s1 + $0xcd8] sm:$0xff]
  %v505 = vld [vmem:[%s1 + $0xce0] sm:$0xff]
  %v506 = vld [vmem:[%s1 + $0xce8] sm:$0xff]
  %v507 = vld [vmem:[%s1 + $0xcf0] sm:$0xff]
  %v508 = vld [vmem:[%s1 + $0xcf8] sm:$0xff]
  %v509 = vld [vmem:[%s1 + $0xd00] sm:$0xff]
  %v510 = vld [vmem:[%s1 + $0xd08] sm:$0xff]
  %v511 = vld [vmem:[%s1 + $0xd10] sm:$0xff]
  %v512 = vld [vmem:[%s1 + $0xd18] sm:$0xff]
  %v513 = vld [vmem:[%s1 + $0xd20] sm:$0xff]
  %v514 = vld [vmem:[%s1 + $0xd28] sm:$0xff]
  %v515 = vld [vmem:[%s1 + $0xd30] sm:$0xff]
  %v516 = vld [vmem:[%s1 + $0xd38] sm:$0xff]
  %v517 = vld [vmem:[%s1 + $0xd40] sm:$0xff]
  %v518 = vld [vmem:[%s1 + $0xd48] sm:$0xff]
  %v519 = vld [vmem:[%s1 + $0xd50] sm:$0xff]
  %v520 = vld [vmem:[%s1 + $0xd58] sm:$0xff]
  %v521 = vld [vmem:[%s1 + $0xd60] sm:$0xff]
  %v522 = vld [vmem:[%s1 + $0xd68] sm:$0xff]
  %v523 = vld [vmem:[%s1 + $0xd70] sm:$0xff]
  %v524 = vld [vmem:[%s1 + $0xd78] sm:$0xff]
  %v525 = vld [vmem:[%s1 + $0xd80] sm:$0xff]
  %v526 = vld [vmem:[%s1 + $0xd88] sm:$0xff]
  %v527 = vld [vmem:[%s1 + $0xd90] sm:$0xff]
  %v528 = vld [vmem:[%s1 + $0xd98] sm:$0xff]
  %v529 = vld [vmem:[%s1 + $0xda0] sm:$0xff]
  %v530 = vld [vmem:[%s1 + $0xda8] sm:$0xff]
  %v531 = vld [vmem:[%s1 + $0xdb0] sm:$0xff]
  %v532 = vld [vmem:[%s1 + $0xdb8] sm:$0xff]
  %v533 = vld [vmem:[%s1 + $0xdc0] sm:$0xff]
  %v534 = vld [vmem:[%s1 + $0xdc8] sm:$0xff]
  %v535 = vld [vmem:[%s1 + $0xdd0] sm:$0xff]
  %v536 = vld [vmem:[%s1 + $0xdd8] sm:$0xff]
  %v537 = vld [vmem:[%s1 + $0xde0] sm:$0xff]
  %v538 = vld [vmem:[%s1 + $0xde8] sm:$0xff]
  %v539 = vld [vmem:[%s1 + $0xdf0] sm:$0xff]
  %v540 = vld [vmem:[%s1 + $0xdf8] sm:$0xff]
  %v541 = vld [vmem:[%s1 + $0xe00] sm:$0xff]
  %v542 = vld [vmem:[%s1 + $0xe08] sm:$0xff]
  %v543 = vld [vmem:[%s1 + $0xe10] sm:$0xff]
  %v544 = vld [vmem:[%s1 + $0xe18] sm:$0xff]
  %v545 = vld [vmem:[%s1 + $0xe20] sm:$0xff]
  %v546 = vld [vmem:[%s1 + $0xe28] sm:$0xff]
  %v547 = vld [vmem:[%s1 + $0xe30] sm:$0xff]
  %v548 = vld [vmem:[%s1 + $0xe38] sm:$0xff]
  %v549 = vld [vmem:[%s1 + $0xe40] sm:$0xff]
  %v550 = vld [vmem:[%s1 + $0xe48] sm:$0xff]
  %v551 = vld [vmem:[%s1 + $0xe50] sm:$0xff]
  %v552 = vld [vmem:[%s1 + $0xe58] sm:$0xff]
  %v553 = vld [vmem:[%s1 + $0xe60] sm:$0xff]
  %v554 = vld [vmem:[%s1 + $0xe68] sm:$0xff]
  %v555 = vld [vmem:[%s1 + $0xe70] sm:$0xff]
  %v556 = vld [vmem:[%s1 + $0xe78] sm:$0xff]
  %v557 = vld [vmem:[%s1 + $0xe80] sm:$0xff]
  %v558 = vld [vmem:[%s1 + $0xe88] sm:$0xff]
  %v559 = vld [vmem:[%s1 + $0xe90] sm:$0xff]
  %v560 = vld [vmem:[%s1 + $0xe98] sm:$0xff]
  %v561 = vld [vmem:[%s1 + $0xea0] sm:$0xff]
  %v562 = vld [vmem:[%s1 + $0xea8] sm:$0xff]
  %v563 = vld [vmem:[%s1 + $0xeb0] sm:$0xff]
  %v564 = vld [vmem:[%s1 + $0xeb8] sm:$0xff]
  %v565 = vld [vmem:[%s1 + $0xec0] sm:$0xff]
  %v566 = vld [vmem:[%s1 + $0xec8] sm:$0xff]
  %v567 = vld [vmem:[%s1 + $0xed0] sm:$0xff]
  %v568 = vld [vmem:[%s1 + $0xed8] sm:$0xff]
  %v569 = vld [vmem:[%s1 + $0xee0] sm:$0xff]
  %v570 = vld [vmem:[%s1 + $0xee8] sm:$0xff]
  %v571 = vld [vmem:[%s1 + $0xef0] sm:$0xff]
  %v572 = vld [vmem:[%s1 + $0xef8] sm:$0xff]
  %v573 = vld [vmem:[%s1 + $0xf00] sm:$0xff]
  %v574 = vld [vmem:[%s1 + $0xf08] sm:$0xff]
  %v575 = vld [vmem:[%s1 + $0xf10] sm:$0xff]
  %v576 = vld [vmem:[%s1 + $0xf18] sm:$0xff]
  %v577 = vld [vmem:[%s1 + $0xf20] sm:$0xff]
  %v578 = vld [vmem:[%s1 + $0xf28] sm:$0xff]
  %v579 = vld [vmem:[%s1 + $0xf30] sm:$0xff]
  %v580 = vld [vmem:[%s1 + $0xf38] sm:$0xff]
  %v581 = vld [vmem:[%s1 + $0xf40] sm:$0xff]
  %v582 = vld [vmem:[%s1 + $0xf48] sm:$0xff]
  %v583 = vld [vmem:[%s1 + $0xf50] sm:$0xff]
  %v584 = vld [vmem:[%s1 + $0xf58] sm:$0xff]
  %v585 = vld [vmem:[%s1 + $0xf60] sm:$0xff]
  %v586 = vld [vmem:[%s1 + $0xf68] sm:$0xff]
  %v587 = vld [vmem:[%s1 + $0xf70] sm:$0xff]
  %v588 = vld [vmem:[%s1 + $0xf78] sm:$0xff]
  %v589 = vld [vmem:[%s1 + $0xf80] sm:$0xff]
  %v590 = vld [vmem:[%s1 + $0xf88] sm:$0xff]
  %v591 = vld [vmem:[%s1 + $0xf90] sm:$0xff]
  %v592 = vld [vmem:[%s1 + $0xf98] sm:$0xff]
  %v593 = vld [vmem:[%s1 + $0xfa0] sm:$0xff]
  %v594 = vld [vmem:[%s1 + $0xfa8] sm:$0xff]
  %v595 = vld [vmem:[%s1 + $0xfb0] sm:$0xff]
  %v596 = vld [vmem:[%s1 + $0xfb8] sm:$0xff]
  %v597 = vld [vmem:[%s1 + $0xfc0] sm:$0xff]
  %v598 = vld [vmem:[%s1 + $0xfc8] sm:$0xff]
  %v599 = vld [vmem:[%s1 + $0xfd0] sm:$0xff]
  %v600 = vld [vmem:[%s1 + $0xfd8] sm:$0xff]
  %v601 = vld [vmem:[%s1 + $0xfe0] sm:$0xff]
  %v602 = vld [vmem:[%s1 + $0xfe8] sm:$0xff]
  %v603 = vld [vmem:[%s1 + $0xff0] sm:$0xff]
  %v604 = vld [vmem:[%s1 + $0xff8] sm:$0xff]
  %v605 = vld [vmem:[%s1 + $0x1000] sm:$0xff]
  %v606 = vld [vmem:[%s1 + $0x1008] sm:$0xff]
  %v607 = vld [vmem:[%s1 + $0x1010] sm:$0xff]
  %v608 = vld [vmem:[%s1 + $0x1018] sm:$0xff]
  %v609 = vld [vmem:[%s1 + $0x1020] sm:$0xff]
  %v610 = vld [vmem:[%s1 + $0x1028] sm:$0xff]
  %v611 = vld [vmem:[%s1 + $0x1030] sm:$0xff]
  %v612 = vld [vmem:[%s1 + $0x1038] sm:$0xff]
  %v613 = vld [vmem:[%s1 + $0x1040] sm:$0xff]
  %v614 = vld [vmem:[%s1 + $0x1048] sm:$0xff]
  %v615 = vld [vmem:[%s1 + $0x1050] sm:$0xff]
  %v616 = vld [vmem:[%s1 + $0x1058] sm:$0xff]
  %v617 = vld [vmem:[%s1 + $0x1060] sm:$0xff]
  %v618 = vld [vmem:[%s1 + $0x1068] sm:$0xff]
  %v619 = vld [vmem:[%s1 + $0x1070] sm:$0xff]
  %v620 = vld [vmem:[%s1 + $0x1078] sm:$0xff]
  %v621 = vld [vmem:[%s1 + $0x1080] sm:$0xff]
  %v622 = vld [vmem:[%s1 + $0x1088] sm:$0xff]
  %v623 = vld [vmem:[%s1 + $0x1090] sm:$0xff]
  %v624 = vld [vmem:[%s1 + $0x1098] sm:$0xff]
  %v625 = vld [vmem:[%s1 + $0x10a0] sm:$0xff]
  %v626 = vld [vmem:[%s1 + $0x10a8] sm:$0xff]
  %v627 = vld [vmem:[%s1 + $0x10b0] sm:$0xff]
  %v628 = vld [vmem:[%s1 + $0x10b8] sm:$0xff]
  %v629 = vld [vmem:[%s1 + $0x10c0] sm:$0xff]
  %v630 = vld [vmem:[%s1 + $0x10c8] sm:$0xff]
  %v631 = vld [vmem:[%s1 + $0x10d0] sm:$0xff]
  %v632 = vld [vmem:[%s1 + $0x10d8] sm:$0xff]
  %v633 = vld [vmem:[%s1 + $0x10e0] sm:$0xff]
  %v634 = vld [vmem:[%s1 + $0x10e8] sm:$0xff]
  %v635 = vld [vmem:[%s1 + $0x10f0] sm:$0xff]
  %v636 = vld [vmem:[%s1 + $0x10f8] sm:$0xff]
  %v637 = vld [vmem:[%s1 + $0x1100] sm:$0xff]
  %v638 = vld [vmem:[%s1 + $0x1108] sm:$0xff]
  %v639 = vld [vmem:[%s1 + $0x1110] sm:$0xff]
  %v640 = vld [vmem:[%s1 + $0x1118] sm:$0xff]
  %v641 = vld [vmem:[%s1 + $0x1120] sm:$0xff]
  %v642 = vld [vmem:[%s1 + $0x1128] sm:$0xff]
  %v643 = vld [vmem:[%s1 + $0x1130] sm:$0xff]
  %v644 = vld [vmem:[%s1 + $0x1138] sm:$0xff]
  %v645 = vld [vmem:[%s1 + $0x1140] sm:$0xff]
  %v646 = vld [vmem:[%s1 + $0x1148] sm:$0xff]
  %v647 = vld [vmem:[%s1 + $0x1150] sm:$0xff]
  %v648 = vld [vmem:[%s1 + $0x1158] sm:$0xff]
  %v649 = vld [vmem:[%s1 + $0x1160] sm:$0xff]
  %v650 = vld [vmem:[%s1 + $0x1168] sm:$0xff]
  %v651 = vld [vmem:[%s1 + $0x1170] sm:$0xff]
  %v652 = vld [vmem:[%s1 + $0x1178] sm:$0xff]
  %v653 = vld [vmem:[%s1 + $0x1180] sm:$0xff]
  %v654 = vld [vmem:[%s1 + $0x1188] sm:$0xff]
  %v655 = vld [vmem:[%s1 + $0x1190] sm:$0xff]
  %v656 = vld [vmem:[%s1 + $0x1198] sm:$0xff]
  %v657 = vld [vmem:[%s1 + $0x11a0] sm:$0xff]
  %v658 = vld [vmem:[%s1 + $0x11a8] sm:$0xff]
  %v659 = vld [vmem:[%s1 + $0x11b0] sm:$0xff]
  %v660 = vld [vmem:[%s1 + $0x11b8] sm:$0xff]
  %v661 = vld [vmem:[%s1 + $0x11c0] sm:$0xff]
  %v662 = vld [vmem:[%s1 + $0x11c8] sm:$0xff]
  %v663 = vld [vmem:[%s1 + $0x11d0] sm:$0xff]
  %v664 = vld [vmem:[%s1 + $0x11d8] sm:$0xff]
  %v665 = vld [vmem:[%s1 + $0x11e0] sm:$0xff]
  %v666 = vld [vmem:[%s1 + $0x11e8] sm:$0xff]
  %v667 = vld [vmem:[%s1 + $0x11f0] sm:$0xff]
  %v668 = vld [vmem:[%s1 + $0x11f8] sm:$0xff]
  %v669 = vld [vmem:[%s1 + $0x1200] sm:$0xff]
  %v670 = vld [vmem:[%s1 + $0x1208] sm:$0xff]
  %v671 = vld [vmem:[%s1 + $0x1210] sm:$0xff]
  %v672 = vld [vmem:[%s1 + $0x1218] sm:$0xff]
  %v673 = vld [vmem:[%s1 + $0x1220] sm:$0xff]
  %v674 = vld [vmem:[%s1 + $0x1228] sm:$0xff]
  %v675 = vld [vmem:[%s1 + $0x1230] sm:$0xff]
  %v676 = vld [vmem:[%s1 + $0x1238] sm:$0xff]
  %v677 = vld [vmem:[%s1 + $0x1240] sm:$0xff]
  %v678 = vld [vmem:[%s1 + $0x1248] sm:$0xff]
  %v679 = vld [vmem:[%s1 + $0x1250] sm:$0xff]
  %v680 = vld [vmem:[%s1 + $0x1258] sm:$0xff]
  %v681 = vld [vmem:[%s1 + $0x1260] sm:$0xff]
  %v682 = vld [vmem:[%s1 + $0x1268] sm:$0xff]
  %v683 = vld [vmem:[%s1 + $0x1270] sm:$0xff]
  %v684 = vld [vmem:[%s1 + $0x1278] sm:$0xff]
  %v685 = vld [vmem:[%s1 + $0x1280] sm:$0xff]
  %v686 = vld [vmem:[%s1 + $0x1288] sm:$0xff]
  %v687 = vld [vmem:[%s1 + $0x1290] sm:$0xff]
  %v688 = vld [vmem:[%s1 + $0x1298] sm:$0xff]
  %v689 = vld [vmem:[%s1 + $0x12a0] sm:$0xff]
  %v690 = vld [vmem:[%s1 + $0x12a8] sm:$0xff]
  %v691 = vld [vmem:[%s1 + $0x12b0] sm:$0xff]
  %v692 = vld [vmem:[%s1 + $0x12b8] sm:$0xff]
  %v693 = vld [vmem:[%s1 + $0x12c0] sm:$0xff]
  %v694 = vld [vmem:[%s1 + $0x12c8] sm:$0xff]
  %v695 = vld [vmem:[%s1 + $0x12d0] sm:$0xff]
  %v696 = vld [vmem:[%s1 + $0x12d8] sm:$0xff]
  %v697 = vld [vmem:[%s1 + $0x12e0] sm:$0xff]
  %v698 = vld [vmem:[%s1 + $0x12e8] sm:$0xff]
  %v699 = vld [vmem:[%s1 + $0x12f0] sm:$0xff]
  %v700 = vld [vmem:[%s1 + $0x12f8] sm:$0xff]
  %v701 = vld [vmem:[%s1 + $0x1300] sm:$0xff]
  %v702 = vld [vmem:[%s1 + $0x1308] sm:$0xff]
  %v703 = vld [vmem:[%s1 + $0x1310] sm:$0xff]
  %v704 = vld [vmem:[%s1 + $0x1318] sm:$0xff]
  %v705 = vld [vmem:[%s1 + $0x1320] sm:$0xff]
  %v706 = vld [vmem:[%s1 + $0x1328] sm:$0xff]
  %v707 = vld [vmem:[%s1 + $0x1330] sm:$0xff]
  %v708 = vld [vmem:[%s1 + $0x1338] sm:$0xff]
  %v709 = vld [vmem:[%s1 + $0x1340] sm:$0xff]
  %v710 = vld [vmem:[%s1 + $0x1348] sm:$0xff]
  %v711 = vld [vmem:[%s1 + $0x1350] sm:$0xff]
  %v712 = vld [vmem:[%s1 + $0x1358] sm:$0xff]
  %v713 = vld [vmem:[%s1 + $0x1360] sm:$0xff]
  %v714 = vld [vmem:[%s1 + $0x1368] sm:$0xff]
  %v715 = vld [vmem:[%s1 + $0x1370] sm:$0xff]
  %v716 = vld [vmem:[%s1 + $0x1378] sm:$0xff]
  %v717 = vld [vmem:[%s1 + $0x1380] sm:$0xff]
  %v718 = vld [vmem:[%s1 + $0x1388] sm:$0xff]
  %v719 = vld [vmem:[%s1 + $0x1390] sm:$0xff]
  %v720 = vld [vmem:[%s1 + $0x1398] sm:$0xff]
  %v721 = vld [vmem:[%s1 + $0x13a0] sm:$0xff]
  %v722 = vld [vmem:[%s1 + $0x13a8] sm:$0xff]
  %v723 = vld [vmem:[%s1 + $0x13b0] sm:$0xff]
  %v724 = vld [vmem:[%s1 + $0x13b8] sm:$0xff]
  %v725 = vld [vmem:[%s1 + $0x13c0] sm:$0xff]
  %v726 = vld [vmem:[%s1 + $0x13c8] sm:$0xff]
  %v727 = vld [vmem:[%s1 + $0x13d0] sm:$0xff]
  %v728 = vld [vmem:[%s1 + $0x13d8] sm:$0xff]
  %v729 = vld [vmem:[%s1 + $0x13e0] sm:$0xff]
  %v730 = vld [vmem:[%s1 + $0x13e8] sm:$0xff]
  %v731 = vld [vmem:[%s1 + $0x13f0] sm:$0xff]
  %v732 = vld [vmem:[%s1 + $0x13f8] sm:$0xff]
  %v733 = vld [vmem:[%s1 + $0x1400] sm:$0xff]
  %v734 = vld [vmem:[%s1 + $0x1408] sm:$0xff]
  %v735 = vld [vmem:[%s1 + $0x1410] sm:$0xff]
  %v736 = vld [vmem:[%s1 + $0x1418] sm:$0xff]
  %v737 = vld [vmem:[%s1 + $0x1420] sm:$0xff]
  %v738 = vld [vmem:[%s1 + $0x1428] sm:$0xff]
  %v739 = vld [vmem:[%s1 + $0x1430] sm:$0xff]
  %v740 = vld [vmem:[%s1 + $0x1438] sm:$0xff]
  %v741 = vld [vmem:[%s1 + $0x1440] sm:$0xff]
  %v742 = vld [vmem:[%s1 + $0x1448] sm:$0xff]
  %v743 = vld [vmem:[%s1 + $0x1450] sm:$0xff]
  %v744 = vld [vmem:[%s1 + $0x1458] sm:$0xff]
  %v745 = vld [vmem:[%s1 + $0x1460] sm:$0xff]
  %v746 = vld [vmem:[%s1 + $0x1468] sm:$0xff]
  %v747 = vld [vmem:[%s1 + $0x1470] sm:$0xff]
  %v748 = vld [vmem:[%s1 + $0x1478] sm:$0xff]
  %v749 = vld [vmem:[%s1 + $0x1480] sm:$0xff]
  %v750 = vld [vmem:[%s1 + $0x1488] sm:$0xff]
  %v751 = vld [vmem:[%s1 + $0x1490] sm:$0xff]
  %v752 = vld [vmem:[%s1 + $0x1498] sm:$0xff]
  %v753 = vld [vmem:[%s1 + $0x14a0] sm:$0xff]
  %v754 = vld [vmem:[%s1 + $0x14a8] sm:$0xff]
  %v755 = vld [vmem:[%s1 + $0x14b0] sm:$0xff]
  %v756 = vld [vmem:[%s1 + $0x14b8] sm:$0xff]
  %v757 = vld [vmem:[%s1 + $0x14c0] sm:$0xff]
  %v758 = vld [vmem:[%s1 + $0x14c8] sm:$0xff]
  %v759 = vld [vmem:[%s1 + $0x14d0] sm:$0xff]
  %v760 = vld [vmem:[%s1 + $0x14d8] sm:$0xff]
  %v761 = vld [vmem:[%s1 + $0x14e0] sm:$0xff]
  %v762 = vld [vmem:[%s1 + $0x14e8] sm:$0xff]
  %v763 = vld [vmem:[%s1 + $0x14f0] sm:$0xff]
  %v764 = vld [vmem:[%s1 + $0x14f8] sm:$0xff]
  %v765 = vld [vmem:[%s1 + $0x1500] sm:$0xff]
  %v766 = vld [vmem:[%s1 + $0x1508] sm:$0xff]
  %v767 = vld [vmem:[%s1 + $0x1510] sm:$0xff]
  %v768 = vld [vmem:[%s1 + $0x1518] sm:$0xff]
  %v769 = vld [vmem:[%s1 + $0x1520] sm:$0xff]
  %v770 = vld [vmem:[%s1 + $0x1528] sm:$0xff]
  %v771 = vld [vmem:[%s1 + $0x1530] sm:$0xff]
  %v772 = vld [vmem:[%s1 + $0x1538] sm:$0xff]
  %v773 = vld [vmem:[%s1 + $0x1540] sm:$0xff]
  %v774 = vld [vmem:[%s1 + $0x1548] sm:$0xff]
  %v775 = vld [vmem:[%s1 + $0x1550] sm:$0xff]
  %v776 = vld [vmem:[%s1 + $0x1558] sm:$0xff]
  %v777 = vld [vmem:[%s1 + $0x1560] sm:$0xff]
  %v778 = vld [vmem:[%s1 + $0x1568] sm:$0xff]
  %v779 = vld [vmem:[%s1 + $0x1570] sm:$0xff]
  %v780 = vld [vmem:[%s1 + $0x1578] sm:$0xff]
  %v781 = vld [vmem:[%s1 + $0x1580] sm:$0xff]
  %v782 = vld [vmem:[%s1 + $0x1588] sm:$0xff]
  %v783 = vld [vmem:[%s1 + $0x1590] sm:$0xff]
  %v784 = vld [vmem:[%s1 + $0x1598] sm:$0xff]
  %v785 = vld [vmem:[%s1 + $0x15a0] sm:$0xff]
  %v786 = vld [vmem:[%s1 + $0x15a8] sm:$0xff]
  %v787 = vld [vmem:[%s1 + $0x15b0] sm:$0xff]
  %v788 = vld [vmem:[%s1 + $0x15b8] sm:$0xff]
  %v789 = vld [vmem:[%s1 + $0x15c0] sm:$0xff]
  %v790 = vld [vmem:[%s1 + $0x15c8] sm:$0xff]
  %v791 = vld [vmem:[%s1 + $0x15d0] sm:$0xff]
  %v792 = vld [vmem:[%s1 + $0x15d8] sm:$0xff]
  %v793 = vld [vmem:[%s1 + $0x15e0] sm:$0xff]
  %v794 = vld [vmem:[%s1 + $0x15e8] sm:$0xff]
  %v795 = vld [vmem:[%s1 + $0x15f0] sm:$0xff]
  %v796 = vld [vmem:[%s1 + $0x15f8] sm:$0xff]
  %v797 = vld [vmem:[%s1 + $0x1600] sm:$0xff]
  %v798 = vld [vmem:[%s1 + $0x1608] sm:$0xff]
  %v799 = vld [vmem:[%s1 + $0x1610] sm:$0xff]
  %v800 = vld [vmem:[%s1 + $0x1618] sm:$0xff]
  %v801 = vld [vmem:[%s1 + $0x1620] sm:$0xff]
  %v802 = vld [vmem:[%s1 + $0x1628] sm:$0xff]
  %v803 = vld [vmem:[%s1 + $0x1630] sm:$0xff]
  %v804 = vld [vmem:[%s1 + $0x1638] sm:$0xff]
  %v805 = vld [vmem:[%s1 + $0x1640] sm:$0xff]
  %v806 = vld [vmem:[%s1 + $0x1648] sm:$0xff]
  %v807 = vld [vmem:[%s1 + $0x1650] sm:$0xff]
  %v808 = vld [vmem:[%s1 + $0x1658] sm:$0xff]
  %v809 = vld [vmem:[%s1 + $0x1660] sm:$0xff]
  %v810 = vld [vmem:[%s1 + $0x1668] sm:$0xff]
  %v811 = vld [vmem:[%s1 + $0x1670] sm:$0xff]
  %v812 = vld [vmem:[%s1 + $0x1678] sm:$0xff]
  %v813 = vld [vmem:[%s1 + $0x1680] sm:$0xff]
  %v814 = vld [vmem:[%s1 + $0x1688] sm:$0xff]
  %v815 = vld [vmem:[%s1 + $0x1690] sm:$0xff]
  %v816 = vld [vmem:[%s1 + $0x1698] sm:$0xff]
  %v817 = vld [vmem:[%s1 + $0x16a0] sm:$0xff]
  %v818 = vld [vmem:[%s1 + $0x16a8] sm:$0xff]
  %v819 = vld [vmem:[%s1 + $0x16b0] sm:$0xff]
  %v820 = vld [vmem:[%s1 + $0x16b8] sm:$0xff]
  %v821 = vld [vmem:[%s1 + $0x16c0] sm:$0xff]
  %v822 = vld [vmem:[%s1 + $0x16c8] sm:$0xff]
  %v823 = vld [vmem:[%s1 + $0x16d0] sm:$0xff]
  %v824 = vld [vmem:[%s1 + $0x16d8] sm:$0xff]
  %v825 = vld [vmem:[%s1 + $0x16e0] sm:$0xff]
  %v826 = vld [vmem:[%s1 + $0x16e8] sm:$0xff]
  %v827 = vld [vmem:[%s1 + $0x16f0] sm:$0xff]
  %v828 = vld [vmem:[%s1 + $0x16f8] sm:$0xff]
  %v829 = vld [vmem:[%s1 + $0x1700] sm:$0xff]
  %v830 = vld [vmem:[%s1 + $0x1708] sm:$0xff]
  %v831 = vld [vmem:[%s1 + $0x1710] sm:$0xff]
  %v832 = vld [vmem:[%s1 + $0x1718] sm:$0xff]
  %v833 = vld [vmem:[%s1 + $0x1720] sm:$0xff]
  %v834 = vld [vmem:[%s1 + $0x1728] sm:$0xff]
  %v835 = vld [vmem:[%s1 + $0x1730] sm:$0xff]
  %v836 = vld [vmem:[%s1 + $0x1738] sm:$0xff]
  %v837 = vld [vmem:[%s1 + $0x1740] sm:$0xff]
  %v838 = vld [vmem:[%s1 + $0x1748] sm:$0xff]
  %v839 = vld [vmem:[%s1 + $0x1750] sm:$0xff]
  %v840 = vld [vmem:[%s1 + $0x1758] sm:$0xff]
  %v841 = vld [vmem:[%s1 + $0x1760] sm:$0xff]
  %v842 = vld [vmem:[%s1 + $0x1768] sm:$0xff]
  %v843 = vld [vmem:[%s1 + $0x1770] sm:$0xff]
  %v844 = vld [vmem:[%s1 + $0x1778] sm:$0xff]
  %v845 = vld [vmem:[%s1 + $0x1780] sm:$0xff]
  %v846 = vld [vmem:[%s1 + $0x1788] sm:$0xff]
  %v847 = vld [vmem:[%s1 + $0x1790] sm:$0xff]
  %v848 = vld [vmem:[%s1 + $0x1798] sm:$0xff]
  %v849 = vld [vmem:[%s1 + $0x17a0] sm:$0xff]
  %v850 = vld [vmem:[%s1 + $0x17a8] sm:$0xff]
  %v851 = vld [vmem:[%s1 + $0x17b0] sm:$0xff]
  %v852 = vld [vmem:[%s1 + $0x17b8] sm:$0xff]
  %v853 = vld [vmem:[%s1 + $0x17c0] sm:$0xff]
  %v854 = vld [vmem:[%s1 + $0x17c8] sm:$0xff]
  %v855 = vld [vmem:[%s1 + $0x17d0] sm:$0xff]
  %v856 = vld [vmem:[%s1 + $0x17d8] sm:$0xff]
  %v857 = vld [vmem:[%s1 + $0x17e0] sm:$0xff]
  %v858 = vld [vmem:[%s1 + $0x17e8] sm:$0xff]
  %v859 = vld [vmem:[%s1 + $0x17f0] sm:$0xff]
  %v860 = vld [vmem:[%s1 + $0x17f8] sm:$0xff]
  %v861 = vld [vmem:[%s1 + $0x1800] sm:$0xff]
  %v862 = vld [vmem:[%s1 + $0x1808] sm:$0xff]
  %v863 = vld [vmem:[%s1 + $0x1810] sm:$0xff]
  %v864 = vld [vmem:[%s1 + $0x1818] sm:$0xff]
  %v865 = vld [vmem:[%s1 + $0x1820] sm:$0xff]
  %v866 = vld [vmem:[%s1 + $0x1828] sm:$0xff]
  %v867 = vld [vmem:[%s1 + $0x1830] sm:$0xff]
  %v868 = vld [vmem:[%s1 + $0x1838] sm:$0xff]
  %v869 = vld [vmem:[%s1 + $0x1840] sm:$0xff]
  %v870 = vld [vmem:[%s1 + $0x1848] sm:$0xff]
  %v871 = vld [vmem:[%s1 + $0x1850] sm:$0xff]
  %v872 = vld [vmem:[%s1 + $0x1858] sm:$0xff]
  %v873 = vld [vmem:[%s1 + $0x1860] sm:$0xff]
  %v874 = vld [vmem:[%s1 + $0x1868] sm:$0xff]
  %v875 = vld [vmem:[%s1 + $0x1870] sm:$0xff]
  %v876 = vld [vmem:[%s1 + $0x1878] sm:$0xff]
  %v877 = vld [vmem:[%s1 + $0x1880] sm:$0xff]
  %v878 = vld [vmem:[%s1 + $0x1888] sm:$0xff]
  %v879 = vld [vmem:[%s1 + $0x1890] sm:$0xff]
  %v880 = vld [vmem:[%s1 + $0x1898] sm:$0xff]
  %v881 = vld [vmem:[%s1 + $0x18a0] sm:$0xff]
  %v882 = vld [vmem:[%s1 + $0x18a8] sm:$0xff]
  %v883 = vld [vmem:[%s1 + $0x18b0] sm:$0xff]
  %v884 = vld [vmem:[%s1 + $0x18b8] sm:$0xff]
  %v885 = vld [vmem:[%s1 + $0x18c0] sm:$0xff]
  %v886 = vld [vmem:[%s1 + $0x18c8] sm:$0xff]
  %v887 = vld [vmem:[%s1 + $0x18d0] sm:$0xff]
  %v888 = vld [vmem:[%s1 + $0x18d8] sm:$0xff]
  %v889 = vld [vmem:[%s1 + $0x18e0] sm:$0xff]
  %v890 = vld [vmem:[%s1 + $0x18e8] sm:$0xff]
  %v891 = vld [vmem:[%s1 + $0x18f0] sm:$0xff]
  %v892 = vld [vmem:[%s1 + $0x18f8] sm:$0xff]
  %v893 = vld [vmem:[%s1 + $0x1900] sm:$0xff]
  %v894 = vld [vmem:[%s1 + $0x1908] sm:$0xff]
  %v895 = vld [vmem:[%s1 + $0x1910] sm:$0xff]
  %v896 = vld [vmem:[%s1 + $0x1918] sm:$0xff]
  %v897 = vld [vmem:[%s1 + $0x1920] sm:$0xff]
  %v898 = vld [vmem:[%s1 + $0x1928] sm:$0xff]
  %v899 = vld [vmem:[%s1 + $0x1930] sm:$0xff]
  %v900 = vld [vmem:[%s1 + $0x1938] sm:$0xff]
  %v901 = vld [vmem:[%s1 + $0x1940] sm:$0xff]
  %v902 = vld [vmem:[%s1 + $0x1948] sm:$0xff]
  %v903 = vld [vmem:[%s1 + $0x1950] sm:$0xff]
  %v904 = vld [vmem:[%s1 + $0x1958] sm:$0xff]
  %v905 = vld [vmem:[%s1 + $0x1960] sm:$0xff]
  %v906 = vld [vmem:[%s1 + $0x1968] sm:$0xff]
  %v907 = vld [vmem:[%s1 + $0x1970] sm:$0xff]
  %v908 = vld [vmem:[%s1 + $0x1978] sm:$0xff]
  %v909 = vld [vmem:[%s1 + $0x1980] sm:$0xff]
  %v910 = vld [vmem:[%s1 + $0x1988] sm:$0xff]
  %v911 = vld [vmem:[%s1 + $0x1990] sm:$0xff]
  %v912 = vld [vmem:[%s1 + $0x1998] sm:$0xff]
  %v913 = vld [vmem:[%s1 + $0x19a0] sm:$0xff]
  %v914 = vld [vmem:[%s1 + $0x19a8] sm:$0xff]
  %v915 = vld [vmem:[%s1 + $0x19b0] sm:$0xff]
  %v916 = vld [vmem:[%s1 + $0x19b8] sm:$0xff]
  %v917 = vld [vmem:[%s1 + $0x19c0] sm:$0xff]
  %v918 = vld [vmem:[%s1 + $0x19c8] sm:$0xff]
  %v919 = vld [vmem:[%s1 + $0x19d0] sm:$0xff]
  %v920 = vld [vmem:[%s1 + $0x19d8] sm:$0xff]
  %v921 = vld [vmem:[%s1 + $0x19e0] sm:$0xff]
  %v922 = vld [vmem:[%s1 + $0x19e8] sm:$0xff]
  %v923 = vld [vmem:[%s1 + $0x19f0] sm:$0xff]
  %v924 = vld [vmem:[%s1 + $0x19f8] sm:$0xff]
  %v925 = vld [vmem:[%s1 + $0x1a00] sm:$0xff]
  %v926 = vld [vmem:[%s1 + $0x1a08] sm:$0xff]
  %v927 = vld [vmem:[%s1 + $0x1a10] sm:$0xff]
  %v928 = vld [vmem:[%s1 + $0x1a18] sm:$0xff]
  %v929 = vld [vmem:[%s1 + $0x1a20] sm:$0xff]
  %v930 = vld [vmem:[%s1 + $0x1a28] sm:$0xff]
  %v931 = vld [vmem:[%s1 + $0x1a30] sm:$0xff]
  %v932 = vld [vmem:[%s1 + $0x1a38] sm:$0xff]
  %v933 = vld [vmem:[%s1 + $0x1a40] sm:$0xff]
  %v934 = vld [vmem:[%s1 + $0x1a48] sm:$0xff]
  %v935 = vld [vmem:[%s1 + $0x1a50] sm:$0xff]
  %v936 = vld [vmem:[%s1 + $0x1a58] sm:$0xff]
  %v937 = vld [vmem:[%s1 + $0x1a60] sm:$0xff]
  %v938 = vld [vmem:[%s1 + $0x1a68] sm:$0xff]
  %v939 = vld [vmem:[%s1 + $0x1a70] sm:$0xff]
  %v940 = vld [vmem:[%s1 + $0x1a78] sm:$0xff]
  %v941 = vld [vmem:[%s1 + $0x1a80] sm:$0xff]
  %v942 = vld [vmem:[%s1 + $0x1a88] sm:$0xff]
  %v943 = vld [vmem:[%s1 + $0x1a90] sm:$0xff]
  %v944 = vld [vmem:[%s1 + $0x1a98] sm:$0xff]
  %v945 = vld [vmem:[%s1 + $0x1aa0] sm:$0xff]
  %v946 = vld [vmem:[%s1 + $0x1aa8] sm:$0xff]
  %v947 = vld [vmem:[%s1 + $0x1ab0] sm:$0xff]
  %v948 = vld [vmem:[%s1 + $0x1ab8] sm:$0xff]
  %v949 = vld [vmem:[%s1 + $0x1ac0] sm:$0xff]
  %v950 = vld [vmem:[%s1 + $0x1ac8] sm:$0xff]
  %v951 = vld [vmem:[%s1 + $0x1ad0] sm:$0xff]
  %v952 = vld [vmem:[%s1 + $0x1ad8] sm:$0xff]
  %v953 = vld [vmem:[%s1 + $0x1ae0] sm:$0xff]
  %v954 = vld [vmem:[%s1 + $0x1ae8] sm:$0xff]
  %v955 = vld [vmem:[%s1 + $0x1af0] sm:$0xff]
  %v956 = vld [vmem:[%s1 + $0x1af8] sm:$0xff]
  %v957 = vld [vmem:[%s1 + $0x1b00] sm:$0xff]
  %v958 = vld [vmem:[%s1 + $0x1b08] sm:$0xff]
  %v959 = vld [vmem:[%s1 + $0x1b10] sm:$0xff]
  %v960 = vld [vmem:[%s1 + $0x1b18] sm:$0xff]
  %v961 = vld [vmem:[%s1 + $0x1b20] sm:$0xff]
  %v962 = vld [vmem:[%s1 + $0x1b28] sm:$0xff]
  %v963 = vld [vmem:[%s1 + $0x1b30] sm:$0xff]
  %v964 = vld [vmem:[%s1 + $0x1b38] sm:$0xff]
  %v965 = vld [vmem:[%s1 + $0x1b40] sm:$0xff]
  %v966 = vld [vmem:[%s1 + $0x1b48] sm:$0xff]
  %v967 = vld [vmem:[%s1 + $0x1b50] sm:$0xff]
  %v968 = vld [vmem:[%s1 + $0x1b58] sm:$0xff]
  %v969 = vld [vmem:[%s1 + $0x1b60] sm:$0xff]
  %v970 = vld [vmem:[%s1 + $0x1b68] sm:$0xff]
  %v971 = vld [vmem:[%s1 + $0x1b70] sm:$0xff]
  %v972 = vld [vmem:[%s1 + $0x1b78] sm:$0xff]
  %v973 = vld [vmem:[%s1 + $0x1b80] sm:$0xff]
  %v974 = vld [vmem:[%s1 + $0x1b88] sm:$0xff]
  %v975 = vld [vmem:[%s1 + $0x1b90] sm:$0xff]
  %v976 = vld [vmem:[%s1 + $0x1b98] sm:$0xff]
  %v977 = vld [vmem:[%s1 + $0x1ba0] sm:$0xff]
  %v978 = vld [vmem:[%s1 + $0x1ba8] sm:$0xff]
  %v979 = vld [vmem:[%s1 + $0x1bb0] sm:$0xff]
  %v980 = vld [vmem:[%s1 + $0x1bb8] sm:$0xff]
  %v981 = vld [vmem:[%s1 + $0x1bc0] sm:$0xff]
  %v982 = vld [vmem:[%s1 + $0x1bc8] sm:$0xff]
  %v983 = vld [vmem:[%s1 + $0x1bd0] sm:$0xff]
  %v984 = vld [vmem:[%s1 + $0x1bd8] sm:$0xff]
  %v985 = vld [vmem:[%s1 + $0x1be0] sm:$0xff]
  %v986 = vld [vmem:[%s1 + $0x1be8] sm:$0xff]
  %v987 = vld [vmem:[%s1 + $0x1bf0] sm:$0xff]
  %v988 = vld [vmem:[%s1 + $0x1bf8] sm:$0xff]
  %v989 = vld [vmem:[%s1 + $0x1c00] sm:$0xff]
  %v990 = vld [vmem:[%s1 + $0x1c08] sm:$0xff]
  %v991 = vld [vmem:[%s1 + $0x1c10] sm:$0xff]
  %v992 = vld [vmem:[%s1 + $0x1c18] sm:$0xff]
  %v993 = vld [vmem:[%s1 + $0x1c20] sm:$0xff]
  %v994 = vld [vmem:[%s1 + $0x1c28] sm:$0xff]
  %v995 = vld [vmem:[%s1 + $0x1c30] sm:$0xff]
  %v996 = vld [vmem:[%s1 + $0x1c38] sm:$0xff]
  %v997 = vld [vmem:[%s1 + $0x1c40] sm:$0xff]
  %v998 = vld [vmem:[%s1 + $0x1c48] sm:$0xff]
  %v999 = vld [vmem:[%s1 + $0x1c50] sm:$0xff]
  %v1000 = vld [vmem:[%s1 + $0x1c58] sm:$0xff]
  %v1001 = vld [vmem:[%s1 + $0x1c60] sm:$0xff]
  %v1002 = vld [vmem:[%s1 + $0x1c68] sm:$0xff]
  %v1003 = vld [vmem:[%s1 + $0x1c70] sm:$0xff]
  %v1004 = vld [vmem:[%s1 + $0x1c78] sm:$0xff]
  %v1005 = vld [vmem:[%s1 + $0x1c80] sm:$0xff]
  %v1006 = vld [vmem:[%s1 + $0x1c88] sm:$0xff]
  %v1007 = vld [vmem:[%s1 + $0x1c90] sm:$0xff]
  %v1008 = vld [vmem:[%s1 + $0x1c98] sm:$0xff]
  %v1009 = vld [vmem:[%s1 + $0x1ca0] sm:$0xff]
  %v1010 = vld [vmem:[%s1 + $0x1ca8] sm:$0xff]
  %v1011 = vld [vmem:[%s1 + $0x1cb0] sm:$0xff]
  %v1012 = vld [vmem:[%s1 + $0x1cb8] sm:$0xff]
  %v1013 = vld [vmem:[%s1 + $0x1cc0] sm:$0xff]
  %v1014 = vld [vmem:[%s1 + $0x1cc8] sm:$0xff]
  %v1015 = vld [vmem:[%s1 + $0x1cd0] sm:$0xff]
  %v1016 = vld [vmem:[%s1 + $0x1cd8] sm:$0xff]
  %v1017 = vld [vmem:[%s1 + $0x1ce0] sm:$0xff]
  %v1018 = vld [vmem:[%s1 + $0x1ce8] sm:$0xff]
  %v1019 = vld [vmem:[%s1 + $0x1cf0] sm:$0xff]
  %v1020 = vld [vmem:[%s1 + $0x1cf8] sm:$0xff]
  %v1021 = vld [vmem:[%s1 + $0x1d00] sm:$0xff]
  %v1022 = vld [vmem:[%s1 + $0x1d08] sm:$0xff]
  %v1023 = vld [vmem:[%s1 + $0x1d10] sm:$0xff]
  %v1024 = vld [vmem:[%s1 + $0x1d18] sm:$0xff]
  %v1025 = vld [vmem:[%s1 + $0x1d20] sm:$0xff]
  %v1026 = vld [vmem:[%s1 + $0x1d28] sm:$0xff]
  %v1027 = vld [vmem:[%s1 + $0x1d30] sm:$0xff]
  %v1028 = vld [vmem:[%s1 + $0x1d38] sm:$0xff]
  %v1029 = vld [vmem:[%s1 + $0x1d40] sm:$0x77]
  %v1030 = vld [vmem:[%s1 + $0x1d48] sm:$0x77]
  %v1091 = vunpack.c.l.b16 %v33
  %v1092 = vunpack.c.h.b16 %v33
  %v1093 = vunpack.c.l.b16 %v34
  %v1094 = vunpack.c.h.b16 %v34
  %v1095 = vunpack.c.l.b16 %v35
  %v1096 = vunpack.c.h.b16 %v35
  %v1097 = vunpack.c.l.b16 %v36
  %v1098 = vunpack.c.h.b16 %v36
  %v1099 = vunpack.c.l.b16 %v37
  %v1100 = vunpack.c.h.b16 %v37
  %v1101 = vunpack.c.l.b16 %v38
  %v1102 = vunpack.c.h.b16 %v38
  %v1103 = vunpack.c.l.b16 %v39
  %v1104 = vunpack.c.h.b16 %v39
  %v1105 = vunpack.c.l.b16 %v40
  %v1106 = vunpack.c.h.b16 %v40
  %v1107 = vunpack.c.l.b16 %v41
  %v1108 = vunpack.c.h.b16 %v41
  %v1109 = vunpack.c.l.b16 %v42
  %v1110 = vunpack.c.h.b16 %v42
  %v1111 = vunpack.c.l.b16 %v43
  %v1112 = vunpack.c.h.b16 %v43
  %v1113 = vunpack.c.l.b16 %v44
  %v1114 = vunpack.c.h.b16 %v44
  %v1115 = vunpack.c.l.b16 %v45
  %v1116 = vunpack.c.h.b16 %v45
  %v1117 = vunpack.c.l.b16 %v46
  %v1118 = vunpack.c.h.b16 %v46
  %v1119 = vunpack.c.l.b16 %v47
  %v1120 = vunpack.c.h.b16 %v47
  %v1121 = vunpack.c.l.b16 %v48
  %v1122 = vunpack.c.h.b16 %v48
  %v1123 = vunpack.c.l.b16 %v49
  %v1124 = vunpack.c.h.b16 %v49
  %v1125 = vunpack.c.l.b16 %v50
  %v1126 = vunpack.c.h.b16 %v50
  %v1127 = vunpack.c.l.b16 %v51
  %v1128 = vunpack.c.h.b16 %v51
  %v1129 = vunpack.c.l.b16 %v52
  %v1130 = vunpack.c.h.b16 %v52
  %v1131 = vunpack.c.l.b16 %v53
  %v1132 = vunpack.c.h.b16 %v53
  %v1133 = vunpack.c.l.b16 %v54
  %v1134 = vunpack.c.h.b16 %v54
  %v1135 = vunpack.c.l.b16 %v55
  %v1136 = vunpack.c.h.b16 %v55
  %v1137 = vunpack.c.l.b16 %v56
  %v1138 = vunpack.c.h.b16 %v56
  %v1139 = vunpack.c.l.b16 %v57
  %v1140 = vunpack.c.h.b16 %v57
  %v1141 = vunpack.c.l.b16 %v58
  %v1142 = vunpack.c.h.b16 %v58
  %v1143 = vunpack.c.l.b16 %v59
  %v1144 = vunpack.c.h.b16 %v59
  %v1145 = vunpack.c.l.b16 %v60
  %v1146 = vunpack.c.h.b16 %v60
  %v1147 = vunpack.c.l.b16 %v61
  %v1148 = vunpack.c.h.b16 %v61
  %v1149 = vunpack.c.l.b16 %v62
  %v1150 = vunpack.c.h.b16 %v62
  %v1151 = vunpack.c.l.b16 %v63
  %v1152 = vunpack.c.h.b16 %v63
  %v1153 = vunpack.c.l.b16 %v64
  %v1154 = vunpack.c.h.b16 %v64
  %v1155 = vunpack.c.l.b16 %v65
  %v1156 = vunpack.c.h.b16 %v65
  %v1157 = vunpack.c.l.b16 %v66
  %v1158 = vunpack.c.h.b16 %v66
  %v1159 = vunpack.c.l.b16 %v67
  %v1160 = vunpack.c.h.b16 %v67
  %v1161 = vunpack.c.l.b16 %v68
  %v1162 = vunpack.c.h.b16 %v68
  %v1163 = vunpack.c.l.b16 %v69
  %v1164 = vunpack.c.h.b16 %v69
  %v1165 = vunpack.c.l.b16 %v70
  %v1166 = vunpack.c.h.b16 %v70
  %v1167 = vunpack.c.l.b16 %v71
  %v1168 = vunpack.c.h.b16 %v71
  %v1169 = vunpack.c.l.b16 %v72
  %v1170 = vunpack.c.h.b16 %v72
  %v1171 = vunpack.c.l.b16 %v73
  %v1172 = vunpack.c.h.b16 %v73
  %v1173 = vunpack.c.l.b16 %v74
  %v1174 = vunpack.c.h.b16 %v74
  %v1175 = vunpack.c.l.b16 %v75
  %v1176 = vunpack.c.h.b16 %v75
  %v1177 = vunpack.c.l.b16 %v76
  %v1178 = vunpack.c.h.b16 %v76
  %v1179 = vunpack.c.l.b16 %v77
  %v1180 = vunpack.c.h.b16 %v77
  %v1181 = vunpack.c.l.b16 %v78
  %v1182 = vunpack.c.h.b16 %v78
  %v1183 = vunpack.c.l.b16 %v79
  %v1184 = vunpack.c.h.b16 %v79
  %v1185 = vunpack.c.l.b16 %v80
  %v1186 = vunpack.c.h.b16 %v80
  %v1187 = vunpack.c.l.b16 %v81
  %v1188 = vunpack.c.h.b16 %v81
  %v1189 = vunpack.c.l.b16 %v82
  %v1190 = vunpack.c.h.b16 %v82
  %v1191 = vunpack.c.l.b16 %v83
  %v1192 = vunpack.c.h.b16 %v83
  %v1193 = vunpack.c.l.b16 %v84
  %v1194 = vunpack.c.h.b16 %v84
  %v1195 = vunpack.c.l.b16 %v85
  %v1196 = vunpack.c.h.b16 %v85
  %v1197 = vunpack.c.l.b16 %v86
  %v1198 = vunpack.c.h.b16 %v86
  %v1199 = vunpack.c.l.b16 %v87
  %v1200 = vunpack.c.h.b16 %v87
  %v1201 = vunpack.c.l.b16 %v88
  %v1202 = vunpack.c.h.b16 %v88
  %v1203 = vunpack.c.l.b16 %v89
  %v1204 = vunpack.c.h.b16 %v89
  %v1205 = vunpack.c.l.b16 %v90
  %v1206 = vunpack.c.h.b16 %v90
  %v1207 = vunpack.c.l.b16 %v91
  %v1208 = vunpack.c.h.b16 %v91
  %v1209 = vunpack.c.l.b16 %v92
  %v1210 = vunpack.c.h.b16 %v92
  %v1211 = vpack.c.b16 %v1121, %v1091
  %v1212 = vpack.c.b16 %v1122, %v1092
  %v1213 = vpack.c.b16 %v1123, %v1093
  %v1214 = vpack.c.b16 %v1124, %v1094
  %v1215 = vpack.c.b16 %v1125, %v1095
  %v1216 = vpack.c.b16 %v1126, %v1096
  %v1217 = vpack.c.b16 %v1127, %v1097
  %v1218 = vpack.c.b16 %v1128, %v1098
  %v1219 = vpack.c.b16 %v1129, %v1099
  %v1220 = vpack.c.b16 %v1130, %v1100
  %v1221 = vpack.c.b16 %v1131, %v1101
  %v1222 = vpack.c.b16 %v1132, %v1102
  %v1223 = vpack.c.b16 %v1133, %v1103
  %v1224 = vpack.c.b16 %v1134, %v1104
  %v1225 = vpack.c.b16 %v1135, %v1105
  %v1226 = vpack.c.b16 %v1136, %v1106
  %v1227 = vpack.c.b16 %v1137, %v1107
  %v1228 = vpack.c.b16 %v1138, %v1108
  %v1229 = vpack.c.b16 %v1139, %v1109
  %v1230 = vpack.c.b16 %v1140, %v1110
  %v1231 = vpack.c.b16 %v1141, %v1111
  %v1232 = vpack.c.b16 %v1142, %v1112
  %v1233 = vpack.c.b16 %v1143, %v1113
  %v1234 = vpack.c.b16 %v1144, %v1114
  %v1235 = vpack.c.b16 %v1145, %v1115
  %v1236 = vpack.c.b16 %v1146, %v1116
  %v1237 = vpack.c.b16 %v1147, %v1117
  %v1238 = vpack.c.b16 %v1148, %v1118
  %v1239 = vpack.c.b16 %v1149, %v1119
  %v1240 = vpack.c.b16 %v1150, %v1120
  %v1241 = vpack.c.b16 %v1181, %v1151
  %v1242 = vpack.c.b16 %v1182, %v1152
  %v1243 = vpack.c.b16 %v1183, %v1153
  %v1244 = vpack.c.b16 %v1184, %v1154
  %v1245 = vpack.c.b16 %v1185, %v1155
  %v1246 = vpack.c.b16 %v1186, %v1156
  %v1247 = vpack.c.b16 %v1187, %v1157
  %v1248 = vpack.c.b16 %v1188, %v1158
  %v1249 = vpack.c.b16 %v1189, %v1159
  %v1250 = vpack.c.b16 %v1190, %v1160
  %v1251 = vpack.c.b16 %v1191, %v1161
  %v1252 = vpack.c.b16 %v1192, %v1162
  %v1253 = vpack.c.b16 %v1193, %v1163
  %v1254 = vpack.c.b16 %v1194, %v1164
  %v1255 = vpack.c.b16 %v1195, %v1165
  %v1256 = vpack.c.b16 %v1196, %v1166
  %v1257 = vpack.c.b16 %v1197, %v1167
  %v1258 = vpack.c.b16 %v1198, %v1168
  %v1259 = vpack.c.b16 %v1199, %v1169
  %v1260 = vpack.c.b16 %v1200, %v1170
  %v1261 = vpack.c.b16 %v1201, %v1171
  %v1262 = vpack.c.b16 %v1202, %v1172
  %v1263 = vpack.c.b16 %v1203, %v1173
  %v1264 = vpack.c.b16 %v1204, %v1174
  %v1265 = vpack.c.b16 %v1205, %v1175
  %v1266 = vpack.c.b16 %v1206, %v1176
  %v1267 = vpack.c.b16 %v1207, %v1177
  %v1268 = vpack.c.b16 %v1208, %v1178
  %v1269 = vpack.c.b16 %v1209, %v1179
  %v1270 = vpack.c.b16 %v1210, %v1180
  %v2267 = vunpack.c.l.b16 %v93
  %v2268 = vunpack.c.h.b16 %v93
  %v2269 = vunpack.c.l.b16 %v94
  %v2270 = vunpack.c.h.b16 %v94
  %v2271 = vunpack.c.l.b16 %v95
  %v2272 = vunpack.c.h.b16 %v95
  %v2273 = vunpack.c.l.b16 %v96
  %v2274 = vunpack.c.h.b16 %v96
  %v2275 = vunpack.c.l.b16 %v97
  %v2276 = vunpack.c.h.b16 %v97
  %v2277 = vunpack.c.l.b16 %v98
  %v2278 = vunpack.c.h.b16 %v98
  %v2279 = vunpack.c.l.b16 %v99
  %v2280 = vunpack.c.h.b16 %v99
  %v2281 = vunpack.c.l.b16 %v100
  %v2282 = vunpack.c.h.b16 %v100
  %v2283 = vunpack.c.l.b16 %v101
  %v2284 = vunpack.c.h.b16 %v101
  %v2285 = vunpack.c.l.b16 %v102
  %v2286 = vunpack.c.h.b16 %v102
  %v2287 = vunpack.c.l.b16 %v103
  %v2288 = vunpack.c.h.b16 %v103
  %v2289 = vunpack.c.l.b16 %v104
  %v2290 = vunpack.c.h.b16 %v104
  %v2291 = vunpack.c.l.b16 %v105
  %v2292 = vunpack.c.h.b16 %v105
  %v2293 = vunpack.c.l.b16 %v106
  %v2294 = vunpack.c.h.b16 %v106
  %v2295 = vunpack.c.l.b16 %v107
  %v2296 = vunpack.c.h.b16 %v107
  %v2297 = vunpack.c.l.b16 %v108
  %v2298 = vunpack.c.h.b16 %v108
  %v2299 = vunpack.c.l.b16 %v109
  %v2300 = vunpack.c.h.b16 %v109
  %v2301 = vunpack.c.l.b16 %v110
  %v2302 = vunpack.c.h.b16 %v110
  %v2303 = vunpack.c.l.b16 %v111
  %v2304 = vunpack.c.h.b16 %v111
  %v2305 = vunpack.c.l.b16 %v112
  %v2306 = vunpack.c.h.b16 %v112
  %v2307 = vunpack.c.l.b16 %v113
  %v2308 = vunpack.c.h.b16 %v113
  %v2309 = vunpack.c.l.b16 %v114
  %v2310 = vunpack.c.h.b16 %v114
  %v2311 = vunpack.c.l.b16 %v115
  %v2312 = vunpack.c.h.b16 %v115
  %v2313 = vunpack.c.l.b16 %v116
  %v2314 = vunpack.c.h.b16 %v116
  %v2315 = vunpack.c.l.b16 %v117
  %v2316 = vunpack.c.h.b16 %v117
  %v2317 = vunpack.c.l.b16 %v118
  %v2318 = vunpack.c.h.b16 %v118
  %v2319 = vunpack.c.l.b16 %v119
  %v2320 = vunpack.c.h.b16 %v119
  %v2321 = vunpack.c.l.b16 %v120
  %v2322 = vunpack.c.h.b16 %v120
  %v2323 = vunpack.c.l.b16 %v121
  %v2324 = vunpack.c.h.b16 %v121
  %v2325 = vunpack.c.l.b16 %v122
  %v2326 = vunpack.c.h.b16 %v122
  %v2327 = vunpack.c.l.b16 %v123
  %v2328 = vunpack.c.h.b16 %v123
  %v2329 = vunpack.c.l.b16 %v124
  %v2330 = vunpack.c.h.b16 %v124
  %v2331 = vunpack.c.l.b16 %v125
  %v2332 = vunpack.c.h.b16 %v125
  %v2333 = vunpack.c.l.b16 %v126
  %v2334 = vunpack.c.h.b16 %v126
  %v2335 = vunpack.c.l.b16 %v127
  %v2336 = vunpack.c.h.b16 %v127
  %v2337 = vunpack.c.l.b16 %v128
  %v2338 = vunpack.c.h.b16 %v128
  %v2339 = vunpack.c.l.b16 %v129
  %v2340 = vunpack.c.h.b16 %v129
  %v2341 = vunpack.c.l.b16 %v130
  %v2342 = vunpack.c.h.b16 %v130
  %v2343 = vunpack.c.l.b16 %v131
  %v2344 = vunpack.c.h.b16 %v131
  %v2345 = vunpack.c.l.b16 %v132
  %v2346 = vunpack.c.h.b16 %v132
  %v2347 = vunpack.c.l.b16 %v133
  %v2348 = vunpack.c.h.b16 %v133
  %v2349 = vunpack.c.l.b16 %v134
  %v2350 = vunpack.c.h.b16 %v134
  %v2351 = vunpack.c.l.b16 %v135
  %v2352 = vunpack.c.h.b16 %v135
  %v2353 = vunpack.c.l.b16 %v136
  %v2354 = vunpack.c.h.b16 %v136
  %v2355 = vunpack.c.l.b16 %v137
  %v2356 = vunpack.c.h.b16 %v137
  %v2357 = vunpack.c.l.b16 %v138
  %v2358 = vunpack.c.h.b16 %v138
  %v2359 = vunpack.c.l.b16 %v139
  %v2360 = vunpack.c.h.b16 %v139
  %v2361 = vunpack.c.l.b16 %v140
  %v2362 = vunpack.c.h.b16 %v140
  %v2363 = vunpack.c.l.b16 %v141
  %v2364 = vunpack.c.h.b16 %v141
  %v2365 = vunpack.c.l.b16 %v142
  %v2366 = vunpack.c.h.b16 %v142
  %v2367 = vunpack.c.l.b16 %v143
  %v2368 = vunpack.c.h.b16 %v143
  %v2369 = vunpack.c.l.b16 %v144
  %v2370 = vunpack.c.h.b16 %v144
  %v2371 = vunpack.c.l.b16 %v145
  %v2372 = vunpack.c.h.b16 %v145
  %v2373 = vunpack.c.l.b16 %v146
  %v2374 = vunpack.c.h.b16 %v146
  %v2375 = vunpack.c.l.b16 %v147
  %v2376 = vunpack.c.h.b16 %v147
  %v2377 = vunpack.c.l.b16 %v148
  %v2378 = vunpack.c.h.b16 %v148
  %v2379 = vunpack.c.l.b16 %v149
  %v2380 = vunpack.c.h.b16 %v149
  %v2381 = vunpack.c.l.b16 %v150
  %v2382 = vunpack.c.h.b16 %v150
  %v2383 = vunpack.c.l.b16 %v151
  %v2384 = vunpack.c.h.b16 %v151
  %v2385 = vunpack.c.l.b16 %v152
  %v2386 = vunpack.c.h.b16 %v152
  %v2387 = vunpack.c.l.b16 %v153
  %v2388 = vunpack.c.h.b16 %v153
  %v2389 = vunpack.c.l.b16 %v154
  %v2390 = vunpack.c.h.b16 %v154
  %v2391 = vunpack.c.l.b16 %v155
  %v2392 = vunpack.c.h.b16 %v155
  %v2393 = vunpack.c.l.b16 %v156
  %v2394 = vunpack.c.h.b16 %v156
  %v2395 = vunpack.c.l.b16 %v157
  %v2396 = vunpack.c.h.b16 %v157
  %v2397 = vunpack.c.l.b16 %v158
  %v2398 = vunpack.c.h.b16 %v158
  %v2399 = vunpack.c.l.b16 %v159
  %v2400 = vunpack.c.h.b16 %v159
  %v2401 = vunpack.c.l.b16 %v160
  %v2402 = vunpack.c.h.b16 %v160
  %v2403 = vunpack.c.l.b16 %v161
  %v2404 = vunpack.c.h.b16 %v161
  %v2405 = vunpack.c.l.b16 %v162
  %v2406 = vunpack.c.h.b16 %v162
  %v2407 = vunpack.c.l.b16 %v163
  %v2408 = vunpack.c.h.b16 %v163
  %v2409 = vunpack.c.l.b16 %v164
  %v2410 = vunpack.c.h.b16 %v164
  %v2411 = vunpack.c.l.b16 %v165
  %v2412 = vunpack.c.h.b16 %v165
  %v2413 = vunpack.c.l.b16 %v166
  %v2414 = vunpack.c.h.b16 %v166
  %v2415 = vunpack.c.l.b16 %v167
  %v2416 = vunpack.c.h.b16 %v167
  %v2417 = vunpack.c.l.b16 %v168
  %v2418 = vunpack.c.h.b16 %v168
  %v2419 = vunpack.c.l.b16 %v169
  %v2420 = vunpack.c.h.b16 %v169
  %v2421 = vunpack.c.l.b16 %v170
  %v2422 = vunpack.c.h.b16 %v170
  %v2423 = vunpack.c.l.b16 %v171
  %v2424 = vunpack.c.h.b16 %v171
  %v2425 = vunpack.c.l.b16 %v172
  %v2426 = vunpack.c.h.b16 %v172
  %v2427 = vunpack.c.l.b16 %v173
  %v2428 = vunpack.c.h.b16 %v173
  %v2429 = vunpack.c.l.b16 %v174
  %v2430 = vunpack.c.h.b16 %v174
  %v2431 = vunpack.c.l.b16 %v175
  %v2432 = vunpack.c.h.b16 %v175
  %v2433 = vunpack.c.l.b16 %v176
  %v2434 = vunpack.c.h.b16 %v176
  %v2435 = vunpack.c.l.b16 %v177
  %v2436 = vunpack.c.h.b16 %v177
  %v2437 = vunpack.c.l.b16 %v178
  %v2438 = vunpack.c.h.b16 %v178
  %v2439 = vunpack.c.l.b16 %v179
  %v2440 = vunpack.c.h.b16 %v179
  %v2441 = vunpack.c.l.b16 %v180
  %v2442 = vunpack.c.h.b16 %v180
  %v2443 = vunpack.c.l.b16 %v181
  %v2444 = vunpack.c.h.b16 %v181
  %v2445 = vunpack.c.l.b16 %v182
  %v2446 = vunpack.c.h.b16 %v182
  %v2447 = vunpack.c.l.b16 %v183
  %v2448 = vunpack.c.h.b16 %v183
  %v2449 = vunpack.c.l.b16 %v184
  %v2450 = vunpack.c.h.b16 %v184
  %v2451 = vunpack.c.l.b16 %v185
  %v2452 = vunpack.c.h.b16 %v185
  %v2453 = vunpack.c.l.b16 %v186
  %v2454 = vunpack.c.h.b16 %v186
  %v2455 = vunpack.c.l.b16 %v187
  %v2456 = vunpack.c.h.b16 %v187
  %v2457 = vunpack.c.l.b16 %v188
  %v2458 = vunpack.c.h.b16 %v188
  %v2459 = vunpack.c.l.b16 %v189
  %v2460 = vunpack.c.h.b16 %v189
  %v2461 = vunpack.c.l.b16 %v190
  %v2462 = vunpack.c.h.b16 %v190
  %v2463 = vunpack.c.l.b16 %v191
  %v2464 = vunpack.c.h.b16 %v191
  %v2465 = vunpack.c.l.b16 %v192
  %v2466 = vunpack.c.h.b16 %v192
  %v2467 = vunpack.c.l.b16 %v193
  %v2468 = vunpack.c.h.b16 %v193
  %v2469 = vunpack.c.l.b16 %v194
  %v2470 = vunpack.c.h.b16 %v194
  %v2471 = vunpack.c.l.b16 %v195
  %v2472 = vunpack.c.h.b16 %v195
  %v2473 = vunpack.c.l.b16 %v196
  %v2474 = vunpack.c.h.b16 %v196
  %v2475 = vunpack.c.l.b16 %v197
  %v2476 = vunpack.c.h.b16 %v197
  %v2477 = vunpack.c.l.b16 %v198
  %v2478 = vunpack.c.h.b16 %v198
  %v2479 = vunpack.c.l.b16 %v199
  %v2480 = vunpack.c.h.b16 %v199
  %v2481 = vunpack.c.l.b16 %v200
  %v2482 = vunpack.c.h.b16 %v200
  %v2483 = vunpack.c.l.b16 %v201
  %v2484 = vunpack.c.h.b16 %v201
  %v2485 = vunpack.c.l.b16 %v202
  %v2486 = vunpack.c.h.b16 %v202
  %v2487 = vunpack.c.l.b16 %v203
  %v2488 = vunpack.c.h.b16 %v203
  %v2489 = vunpack.c.l.b16 %v204
  %v2490 = vunpack.c.h.b16 %v204
  %v2491 = vunpack.c.l.b16 %v205
  %v2492 = vunpack.c.h.b16 %v205
  %v2493 = vunpack.c.l.b16 %v206
  %v2494 = vunpack.c.h.b16 %v206
  %v2495 = vunpack.c.l.b16 %v207
  %v2496 = vunpack.c.h.b16 %v207
  %v2497 = vunpack.c.l.b16 %v208
  %v2498 = vunpack.c.h.b16 %v208
  %v2499 = vunpack.c.l.b16 %v209
  %v2500 = vunpack.c.h.b16 %v209
  %v2501 = vunpack.c.l.b16 %v210
  %v2502 = vunpack.c.h.b16 %v210
  %v2503 = vunpack.c.l.b16 %v211
  %v2504 = vunpack.c.h.b16 %v211
  %v2505 = vunpack.c.l.b16 %v212
  %v2506 = vunpack.c.h.b16 %v212
  %v2507 = vunpack.c.l.b16 %v213
  %v2508 = vunpack.c.h.b16 %v213
  %v2509 = vunpack.c.l.b16 %v214
  %v2510 = vunpack.c.h.b16 %v214
  %v2511 = vunpack.c.l.b16 %v215
  %v2512 = vunpack.c.h.b16 %v215
  %v2513 = vunpack.c.l.b16 %v216
  %v2514 = vunpack.c.h.b16 %v216
  %v2515 = vunpack.c.l.b16 %v217
  %v2516 = vunpack.c.h.b16 %v217
  %v2517 = vunpack.c.l.b16 %v218
  %v2518 = vunpack.c.h.b16 %v218
  %v2519 = vunpack.c.l.b16 %v219
  %v2520 = vunpack.c.h.b16 %v219
  %v2521 = vunpack.c.l.b16 %v220
  %v2522 = vunpack.c.h.b16 %v220
  %v2523 = vunpack.c.l.b16 %v221
  %v2524 = vunpack.c.h.b16 %v221
  %v2525 = vunpack.c.l.b16 %v222
  %v2526 = vunpack.c.h.b16 %v222
  %v2527 = vunpack.c.l.b16 %v223
  %v2528 = vunpack.c.h.b16 %v223
  %v2529 = vunpack.c.l.b16 %v224
  %v2530 = vunpack.c.h.b16 %v224
  %v2531 = vunpack.c.l.b16 %v225
  %v2532 = vunpack.c.h.b16 %v225
  %v2533 = vunpack.c.l.b16 %v226
  %v2534 = vunpack.c.h.b16 %v226
  %v2535 = vunpack.c.l.b16 %v227
  %v2536 = vunpack.c.h.b16 %v227
  %v2537 = vunpack.c.l.b16 %v228
  %v2538 = vunpack.c.h.b16 %v228
  %v2539 = vunpack.c.l.b16 %v229
  %v2540 = vunpack.c.h.b16 %v229
  %v2541 = vunpack.c.l.b16 %v230
  %v2542 = vunpack.c.h.b16 %v230
  %v2543 = vunpack.c.l.b16 %v231
  %v2544 = vunpack.c.h.b16 %v231
  %v2545 = vunpack.c.l.b16 %v232
  %v2546 = vunpack.c.h.b16 %v232
  %v2547 = vunpack.c.l.b16 %v233
  %v2548 = vunpack.c.h.b16 %v233
  %v2549 = vunpack.c.l.b16 %v234
  %v2550 = vunpack.c.h.b16 %v234
  %v2551 = vunpack.c.l.b16 %v235
  %v2552 = vunpack.c.h.b16 %v235
  %v2553 = vunpack.c.l.b16 %v236
  %v2554 = vunpack.c.h.b16 %v236
  %v2555 = vunpack.c.l.b16 %v237
  %v2556 = vunpack.c.h.b16 %v237
  %v2557 = vunpack.c.l.b16 %v238
  %v2558 = vunpack.c.h.b16 %v238
  %v2559 = vunpack.c.l.b16 %v239
  %v2560 = vunpack.c.h.b16 %v239
  %v2561 = vunpack.c.l.b16 %v240
  %v2562 = vunpack.c.h.b16 %v240
  %v2563 = vunpack.c.l.b16 %v241
  %v2564 = vunpack.c.h.b16 %v241
  %v2565 = vunpack.c.l.b16 %v242
  %v2566 = vunpack.c.h.b16 %v242
  %v2567 = vunpack.c.l.b16 %v243
  %v2568 = vunpack.c.h.b16 %v243
  %v2569 = vunpack.c.l.b16 %v244
  %v2570 = vunpack.c.h.b16 %v244
  %v2571 = vunpack.c.l.b16 %v245
  %v2572 = vunpack.c.h.b16 %v245
  %v2573 = vunpack.c.l.b16 %v246
  %v2574 = vunpack.c.h.b16 %v246
  %v2575 = vunpack.c.l.b16 %v247
  %v2576 = vunpack.c.h.b16 %v247
  %v2577 = vunpack.c.l.b16 %v248
  %v2578 = vunpack.c.h.b16 %v248
  %v2579 = vunpack.c.l.b16 %v249
  %v2580 = vunpack.c.h.b16 %v249
  %v2581 = vunpack.c.l.b16 %v250
  %v2582 = vunpack.c.h.b16 %v250
  %v2583 = vunpack.c.l.b16 %v251
  %v2584 = vunpack.c.h.b16 %v251
  %v2585 = vunpack.c.l.b16 %v252
  %v2586 = vunpack.c.h.b16 %v252
  %v2587 = vunpack.c.l.b16 %v253
  %v2588 = vunpack.c.h.b16 %v253
  %v2589 = vunpack.c.l.b16 %v254
  %v2590 = vunpack.c.h.b16 %v254
  %v2591 = vunpack.c.l.b16 %v255
  %v2592 = vunpack.c.h.b16 %v255
  %v2593 = vunpack.c.l.b16 %v256
  %v2594 = vunpack.c.h.b16 %v256
  %v2595 = vunpack.c.l.b16 %v257
  %v2596 = vunpack.c.h.b16 %v257
  %v2597 = vunpack.c.l.b16 %v258
  %v2598 = vunpack.c.h.b16 %v258
  %v2599 = vunpack.c.l.b16 %v259
  %v2600 = vunpack.c.h.b16 %v259
  %v2601 = vunpack.c.l.b16 %v260
  %v2602 = vunpack.c.h.b16 %v260
  %v2603 = vunpack.c.l.b16 %v261
  %v2604 = vunpack.c.h.b16 %v261
  %v2605 = vunpack.c.l.b16 %v262
  %v2606 = vunpack.c.h.b16 %v262
  %v2607 = vunpack.c.l.b16 %v263
  %v2608 = vunpack.c.h.b16 %v263
  %v2609 = vunpack.c.l.b16 %v264
  %v2610 = vunpack.c.h.b16 %v264
  %v2611 = vunpack.c.l.b16 %v265
  %v2612 = vunpack.c.h.b16 %v265
  %v2613 = vunpack.c.l.b16 %v266
  %v2614 = vunpack.c.h.b16 %v266
  %v2615 = vunpack.c.l.b16 %v267
  %v2616 = vunpack.c.h.b16 %v267
  %v2617 = vunpack.c.l.b16 %v268
  %v2618 = vunpack.c.h.b16 %v268
  %v2619 = vunpack.c.l.b16 %v269
  %v2620 = vunpack.c.h.b16 %v269
  %v2621 = vunpack.c.l.b16 %v270
  %v2622 = vunpack.c.h.b16 %v270
  %v2623 = vunpack.c.l.b16 %v271
  %v2624 = vunpack.c.h.b16 %v271
  %v2625 = vunpack.c.l.b16 %v272
  %v2626 = vunpack.c.h.b16 %v272
  %v2627 = vunpack.c.l.b16 %v273
  %v2628 = vunpack.c.h.b16 %v273
  %v2629 = vunpack.c.l.b16 %v274
  %v2630 = vunpack.c.h.b16 %v274
  %v2631 = vunpack.c.l.b16 %v275
  %v2632 = vunpack.c.h.b16 %v275
  %v2633 = vunpack.c.l.b16 %v276
  %v2634 = vunpack.c.h.b16 %v276
  %v2635 = vunpack.c.l.b16 %v277
  %v2636 = vunpack.c.h.b16 %v277
  %v2637 = vunpack.c.l.b16 %v278
  %v2638 = vunpack.c.h.b16 %v278
  %v2639 = vunpack.c.l.b16 %v279
  %v2640 = vunpack.c.h.b16 %v279
  %v2641 = vunpack.c.l.b16 %v280
  %v2642 = vunpack.c.h.b16 %v280
  %v2643 = vunpack.c.l.b16 %v281
  %v2644 = vunpack.c.h.b16 %v281
  %v2645 = vunpack.c.l.b16 %v282
  %v2646 = vunpack.c.h.b16 %v282
  %v2647 = vunpack.c.l.b16 %v283
  %v2648 = vunpack.c.h.b16 %v283
  %v2649 = vunpack.c.l.b16 %v284
  %v2650 = vunpack.c.h.b16 %v284
  %v2651 = vunpack.c.l.b16 %v285
  %v2652 = vunpack.c.h.b16 %v285
  %v2653 = vunpack.c.l.b16 %v286
  %v2654 = vunpack.c.h.b16 %v286
  %v2655 = vunpack.c.l.b16 %v287
  %v2656 = vunpack.c.h.b16 %v287
  %v2657 = vunpack.c.l.b16 %v288
  %v2658 = vunpack.c.h.b16 %v288
  %v2659 = vunpack.c.l.b16 %v289
  %v2660 = vunpack.c.h.b16 %v289
  %v2661 = vunpack.c.l.b16 %v290
  %v2662 = vunpack.c.h.b16 %v290
  %v2663 = vunpack.c.l.b16 %v291
  %v2664 = vunpack.c.h.b16 %v291
  %v2665 = vunpack.c.l.b16 %v292
  %v2666 = vunpack.c.h.b16 %v292
  %v2667 = vunpack.c.l.b16 %v293
  %v2668 = vunpack.c.h.b16 %v293
  %v2669 = vunpack.c.l.b16 %v294
  %v2670 = vunpack.c.h.b16 %v294
  %v2671 = vunpack.c.l.b16 %v295
  %v2672 = vunpack.c.h.b16 %v295
  %v2673 = vunpack.c.l.b16 %v296
  %v2674 = vunpack.c.h.b16 %v296
  %v2675 = vunpack.c.l.b16 %v297
  %v2676 = vunpack.c.h.b16 %v297
  %v2677 = vunpack.c.l.b16 %v298
  %v2678 = vunpack.c.h.b16 %v298
  %v2679 = vunpack.c.l.b16 %v299
  %v2680 = vunpack.c.h.b16 %v299
  %v2681 = vunpack.c.l.b16 %v300
  %v2682 = vunpack.c.h.b16 %v300
  %v2683 = vunpack.c.l.b16 %v301
  %v2684 = vunpack.c.h.b16 %v301
  %v2685 = vunpack.c.l.b16 %v302
  %v2686 = vunpack.c.h.b16 %v302
  %v2687 = vunpack.c.l.b16 %v303
  %v2688 = vunpack.c.h.b16 %v303
  %v2689 = vunpack.c.l.b16 %v304
  %v2690 = vunpack.c.h.b16 %v304
  %v2691 = vunpack.c.l.b16 %v305
  %v2692 = vunpack.c.h.b16 %v305
  %v2693 = vunpack.c.l.b16 %v306
  %v2694 = vunpack.c.h.b16 %v306
  %v2695 = vunpack.c.l.b16 %v307
  %v2696 = vunpack.c.h.b16 %v307
  %v2697 = vunpack.c.l.b16 %v308
  %v2698 = vunpack.c.h.b16 %v308
  %v2699 = vunpack.c.l.b16 %v309
  %v2700 = vunpack.c.h.b16 %v309
  %v2701 = vunpack.c.l.b16 %v310
  %v2702 = vunpack.c.h.b16 %v310
  %v2703 = vunpack.c.l.b16 %v311
  %v2704 = vunpack.c.h.b16 %v311
  %v2705 = vunpack.c.l.b16 %v312
  %v2706 = vunpack.c.h.b16 %v312
  %v2707 = vunpack.c.l.b16 %v313
  %v2708 = vunpack.c.h.b16 %v313
  %v2709 = vunpack.c.l.b16 %v314
  %v2710 = vunpack.c.h.b16 %v314
  %v2711 = vunpack.c.l.b16 %v315
  %v2712 = vunpack.c.h.b16 %v315
  %v2713 = vunpack.c.l.b16 %v316
  %v2714 = vunpack.c.h.b16 %v316
  %v2715 = vunpack.c.l.b16 %v317
  %v2716 = vunpack.c.h.b16 %v317
  %v2717 = vunpack.c.l.b16 %v318
  %v2718 = vunpack.c.h.b16 %v318
  %v2719 = vunpack.c.l.b16 %v319
  %v2720 = vunpack.c.h.b16 %v319
  %v2721 = vunpack.c.l.b16 %v320
  %v2722 = vunpack.c.h.b16 %v320
  %v2723 = vunpack.c.l.b16 %v321
  %v2724 = vunpack.c.h.b16 %v321
  %v2725 = vunpack.c.l.b16 %v322
  %v2726 = vunpack.c.h.b16 %v322
  %v2727 = vunpack.c.l.b16 %v323
  %v2728 = vunpack.c.h.b16 %v323
  %v2729 = vunpack.c.l.b16 %v324
  %v2730 = vunpack.c.h.b16 %v324
  %v2731 = vunpack.c.l.b16 %v325
  %v2732 = vunpack.c.h.b16 %v325
  %v2733 = vunpack.c.l.b16 %v326
  %v2734 = vunpack.c.h.b16 %v326
  %v2735 = vunpack.c.l.b16 %v327
  %v2736 = vunpack.c.h.b16 %v327
  %v2737 = vunpack.c.l.b16 %v328
  %v2738 = vunpack.c.h.b16 %v328
  %v2739 = vunpack.c.l.b16 %v329
  %v2740 = vunpack.c.h.b16 %v329
  %v2741 = vunpack.c.l.b16 %v330
  %v2742 = vunpack.c.h.b16 %v330
  %v2743 = vunpack.c.l.b16 %v331
  %v2744 = vunpack.c.h.b16 %v331
  %v2745 = vunpack.c.l.b16 %v332
  %v2746 = vunpack.c.h.b16 %v332
  %v2747 = vunpack.c.l.b16 %v333
  %v2748 = vunpack.c.h.b16 %v333
  %v2749 = vunpack.c.l.b16 %v334
  %v2750 = vunpack.c.h.b16 %v334
  %v2751 = vunpack.c.l.b16 %v335
  %v2752 = vunpack.c.h.b16 %v335
  %v2753 = vunpack.c.l.b16 %v336
  %v2754 = vunpack.c.h.b16 %v336
  %v2755 = vunpack.c.l.b16 %v337
  %v2756 = vunpack.c.h.b16 %v337
  %v2757 = vunpack.c.l.b16 %v338
  %v2758 = vunpack.c.h.b16 %v338
  %v2759 = vunpack.c.l.b16 %v339
  %v2760 = vunpack.c.h.b16 %v339
  %v2761 = vunpack.c.l.b16 %v340
  %v2762 = vunpack.c.h.b16 %v340
  %v2763 = vunpack.c.l.b16 %v341
  %v2764 = vunpack.c.h.b16 %v341
  %v2765 = vunpack.c.l.b16 %v342
  %v2766 = vunpack.c.h.b16 %v342
  %v2767 = vunpack.c.l.b16 %v343
  %v2768 = vunpack.c.h.b16 %v343
  %v2769 = vunpack.c.l.b16 %v344
  %v2770 = vunpack.c.h.b16 %v344
  %v2771 = vunpack.c.l.b16 %v345
  %v2772 = vunpack.c.h.b16 %v345
  %v2773 = vunpack.c.l.b16 %v346
  %v2774 = vunpack.c.h.b16 %v346
  %v2775 = vunpack.c.l.b16 %v347
  %v2776 = vunpack.c.h.b16 %v347
  %v2777 = vunpack.c.l.b16 %v348
  %v2778 = vunpack.c.h.b16 %v348
  %v2779 = vunpack.c.l.b16 %v349
  %v2780 = vunpack.c.h.b16 %v349
  %v2781 = vunpack.c.l.b16 %v350
  %v2782 = vunpack.c.h.b16 %v350
  %v2783 = vunpack.c.l.b16 %v351
  %v2784 = vunpack.c.h.b16 %v351
  %v2785 = vunpack.c.l.b16 %v352
  %v2786 = vunpack.c.h.b16 %v352
  %v2787 = vunpack.c.l.b16 %v353
  %v2788 = vunpack.c.h.b16 %v353
  %v2789 = vunpack.c.l.b16 %v354
  %v2790 = vunpack.c.h.b16 %v354
  %v2791 = vunpack.c.l.b16 %v355
  %v2792 = vunpack.c.h.b16 %v355
  %v2793 = vunpack.c.l.b16 %v356
  %v2794 = vunpack.c.h.b16 %v356
  %v2795 = vunpack.c.l.b16 %v357
  %v2796 = vunpack.c.h.b16 %v357
  %v2797 = vunpack.c.l.b16 %v358
  %v2798 = vunpack.c.h.b16 %v358
  %v2799 = vunpack.c.l.b16 %v359
  %v2800 = vunpack.c.h.b16 %v359
  %v2801 = vunpack.c.l.b16 %v360
  %v2802 = vunpack.c.h.b16 %v360
  %v2803 = vunpack.c.l.b16 %v361
  %v2804 = vunpack.c.h.b16 %v361
  %v2805 = vunpack.c.l.b16 %v362
  %v2806 = vunpack.c.h.b16 %v362
  %v2807 = vunpack.c.l.b16 %v363
  %v2808 = vunpack.c.h.b16 %v363
  %v2809 = vunpack.c.l.b16 %v364
  %v2810 = vunpack.c.h.b16 %v364
  %v2811 = vunpack.c.l.b16 %v365
  %v2812 = vunpack.c.h.b16 %v365
  %v2813 = vunpack.c.l.b16 %v366
  %v2814 = vunpack.c.h.b16 %v366
  %v2815 = vunpack.c.l.b16 %v367
  %v2816 = vunpack.c.h.b16 %v367
  %v2817 = vunpack.c.l.b16 %v368
  %v2818 = vunpack.c.h.b16 %v368
  %v2819 = vunpack.c.l.b16 %v369
  %v2820 = vunpack.c.h.b16 %v369
  %v2821 = vunpack.c.l.b16 %v370
  %v2822 = vunpack.c.h.b16 %v370
  %v2823 = vunpack.c.l.b16 %v371
  %v2824 = vunpack.c.h.b16 %v371
  %v2825 = vunpack.c.l.b16 %v372
  %v2826 = vunpack.c.h.b16 %v372
  %v2827 = vunpack.c.l.b16 %v373
  %v2828 = vunpack.c.h.b16 %v373
  %v2829 = vunpack.c.l.b16 %v374
  %v2830 = vunpack.c.h.b16 %v374
  %v2831 = vunpack.c.l.b16 %v375
  %v2832 = vunpack.c.h.b16 %v375
  %v2833 = vunpack.c.l.b16 %v376
  %v2834 = vunpack.c.h.b16 %v376
  %v2835 = vunpack.c.l.b16 %v377
  %v2836 = vunpack.c.h.b16 %v377
  %v2837 = vunpack.c.l.b16 %v378
  %v2838 = vunpack.c.h.b16 %v378
  %v2839 = vunpack.c.l.b16 %v379
  %v2840 = vunpack.c.h.b16 %v379
  %v2841 = vunpack.c.l.b16 %v380
  %v2842 = vunpack.c.h.b16 %v380
  %v2843 = vunpack.c.l.b16 %v381
  %v2844 = vunpack.c.h.b16 %v381
  %v2845 = vunpack.c.l.b16 %v382
  %v2846 = vunpack.c.h.b16 %v382
  %v2847 = vunpack.c.l.b16 %v383
  %v2848 = vunpack.c.h.b16 %v383
  %v2849 = vunpack.c.l.b16 %v384
  %v2850 = vunpack.c.h.b16 %v384
  %v2851 = vunpack.c.l.b16 %v385
  %v2852 = vunpack.c.h.b16 %v385
  %v2853 = vunpack.c.l.b16 %v386
  %v2854 = vunpack.c.h.b16 %v386
  %v2855 = vunpack.c.l.b16 %v387
  %v2856 = vunpack.c.h.b16 %v387
  %v2857 = vunpack.c.l.b16 %v388
  %v2858 = vunpack.c.h.b16 %v388
  %v2859 = vunpack.c.l.b16 %v389
  %v2860 = vunpack.c.h.b16 %v389
  %v2861 = vunpack.c.l.b16 %v390
  %v2862 = vunpack.c.h.b16 %v390
  %v2863 = vunpack.c.l.b16 %v391
  %v2864 = vunpack.c.h.b16 %v391
  %v2865 = vunpack.c.l.b16 %v392
  %v2866 = vunpack.c.h.b16 %v392
  %v2867 = vunpack.c.l.b16 %v393
  %v2868 = vunpack.c.h.b16 %v393
  %v2869 = vunpack.c.l.b16 %v394
  %v2870 = vunpack.c.h.b16 %v394
  %v2871 = vunpack.c.l.b16 %v395
  %v2872 = vunpack.c.h.b16 %v395
  %v2873 = vunpack.c.l.b16 %v396
  %v2874 = vunpack.c.h.b16 %v396
  %v2875 = vunpack.c.l.b16 %v397
  %v2876 = vunpack.c.h.b16 %v397
  %v2877 = vunpack.c.l.b16 %v398
  %v2878 = vunpack.c.h.b16 %v398
  %v2879 = vunpack.c.l.b16 %v399
  %v2880 = vunpack.c.h.b16 %v399
  %v2881 = vunpack.c.l.b16 %v400
  %v2882 = vunpack.c.h.b16 %v400
  %v2883 = vunpack.c.l.b16 %v401
  %v2884 = vunpack.c.h.b16 %v401
  %v2885 = vunpack.c.l.b16 %v402
  %v2886 = vunpack.c.h.b16 %v402
  %v2887 = vunpack.c.l.b16 %v403
  %v2888 = vunpack.c.h.b16 %v403
  %v2889 = vunpack.c.l.b16 %v404
  %v2890 = vunpack.c.h.b16 %v404
  %v2891 = vunpack.c.l.b16 %v405
  %v2892 = vunpack.c.h.b16 %v405
  %v2893 = vunpack.c.l.b16 %v406
  %v2894 = vunpack.c.h.b16 %v406
  %v2895 = vunpack.c.l.b16 %v407
  %v2896 = vunpack.c.h.b16 %v407
  %v2897 = vunpack.c.l.b16 %v408
  %v2898 = vunpack.c.h.b16 %v408
  %v2899 = vunpack.c.l.b16 %v409
  %v2900 = vunpack.c.h.b16 %v409
  %v2901 = vunpack.c.l.b16 %v410
  %v2902 = vunpack.c.h.b16 %v410
  %v2903 = vunpack.c.l.b16 %v411
  %v2904 = vunpack.c.h.b16 %v411
  %v2905 = vunpack.c.l.b16 %v412
  %v2906 = vunpack.c.h.b16 %v412
  %v2907 = vunpack.c.l.b16 %v413
  %v2908 = vunpack.c.h.b16 %v413
  %v2909 = vunpack.c.l.b16 %v414
  %v2910 = vunpack.c.h.b16 %v414
  %v2911 = vunpack.c.l.b16 %v415
  %v2912 = vunpack.c.h.b16 %v415
  %v2913 = vunpack.c.l.b16 %v416
  %v2914 = vunpack.c.h.b16 %v416
  %v2915 = vunpack.c.l.b16 %v417
  %v2916 = vunpack.c.h.b16 %v417
  %v2917 = vunpack.c.l.b16 %v418
  %v2918 = vunpack.c.h.b16 %v418
  %v2919 = vunpack.c.l.b16 %v419
  %v2920 = vunpack.c.h.b16 %v419
  %v2921 = vunpack.c.l.b16 %v420
  %v2922 = vunpack.c.h.b16 %v420
  %v2923 = vunpack.c.l.b16 %v421
  %v2924 = vunpack.c.h.b16 %v421
  %v2925 = vunpack.c.l.b16 %v422
  %v2926 = vunpack.c.h.b16 %v422
  %v2927 = vunpack.c.l.b16 %v423
  %v2928 = vunpack.c.h.b16 %v423
  %v2929 = vunpack.c.l.b16 %v424
  %v2930 = vunpack.c.h.b16 %v424
  %v2931 = vunpack.c.l.b16 %v425
  %v2932 = vunpack.c.h.b16 %v425
  %v2933 = vunpack.c.l.b16 %v426
  %v2934 = vunpack.c.h.b16 %v426
  %v2935 = vunpack.c.l.b16 %v427
  %v2936 = vunpack.c.h.b16 %v427
  %v2937 = vunpack.c.l.b16 %v428
  %v2938 = vunpack.c.h.b16 %v428
  %v2939 = vunpack.c.l.b16 %v429
  %v2940 = vunpack.c.h.b16 %v429
  %v2941 = vunpack.c.l.b16 %v430
  %v2942 = vunpack.c.h.b16 %v430
  %v2943 = vunpack.c.l.b16 %v431
  %v2944 = vunpack.c.h.b16 %v431
  %v2945 = vunpack.c.l.b16 %v432
  %v2946 = vunpack.c.h.b16 %v432
  %v2947 = vunpack.c.l.b16 %v433
  %v2948 = vunpack.c.h.b16 %v433
  %v2949 = vunpack.c.l.b16 %v434
  %v2950 = vunpack.c.h.b16 %v434
  %v2951 = vunpack.c.l.b16 %v435
  %v2952 = vunpack.c.h.b16 %v435
  %v2953 = vunpack.c.l.b16 %v436
  %v2954 = vunpack.c.h.b16 %v436
  %v2955 = vunpack.c.l.b16 %v437
  %v2956 = vunpack.c.h.b16 %v437
  %v2957 = vunpack.c.l.b16 %v438
  %v2958 = vunpack.c.h.b16 %v438
  %v2959 = vunpack.c.l.b16 %v439
  %v2960 = vunpack.c.h.b16 %v439
  %v2961 = vunpack.c.l.b16 %v440
  %v2962 = vunpack.c.h.b16 %v440
  %v2963 = vunpack.c.l.b16 %v441
  %v2964 = vunpack.c.h.b16 %v441
  %v2965 = vunpack.c.l.b16 %v442
  %v2966 = vunpack.c.h.b16 %v442
  %v2967 = vunpack.c.l.b16 %v443
  %v2968 = vunpack.c.h.b16 %v443
  %v2969 = vunpack.c.l.b16 %v444
  %v2970 = vunpack.c.h.b16 %v444
  %v2971 = vunpack.c.l.b16 %v445
  %v2972 = vunpack.c.h.b16 %v445
  %v2973 = vunpack.c.l.b16 %v446
  %v2974 = vunpack.c.h.b16 %v446
  %v2975 = vunpack.c.l.b16 %v447
  %v2976 = vunpack.c.h.b16 %v447
  %v2977 = vunpack.c.l.b16 %v448
  %v2978 = vunpack.c.h.b16 %v448
  %v2979 = vunpack.c.l.b16 %v449
  %v2980 = vunpack.c.h.b16 %v449
  %v2981 = vunpack.c.l.b16 %v450
  %v2982 = vunpack.c.h.b16 %v450
  %v2983 = vunpack.c.l.b16 %v451
  %v2984 = vunpack.c.h.b16 %v451
  %v2985 = vunpack.c.l.b16 %v452
  %v2986 = vunpack.c.h.b16 %v452
  %v2987 = vunpack.c.l.b16 %v453
  %v2988 = vunpack.c.h.b16 %v453
  %v2989 = vunpack.c.l.b16 %v454
  %v2990 = vunpack.c.h.b16 %v454
  %v2991 = vunpack.c.l.b16 %v455
  %v2992 = vunpack.c.h.b16 %v455
  %v2993 = vunpack.c.l.b16 %v456
  %v2994 = vunpack.c.h.b16 %v456
  %v2995 = vunpack.c.l.b16 %v457
  %v2996 = vunpack.c.h.b16 %v457
  %v2997 = vunpack.c.l.b16 %v458
  %v2998 = vunpack.c.h.b16 %v458
  %v2999 = vunpack.c.l.b16 %v459
  %v3000 = vunpack.c.h.b16 %v459
  %v3001 = vunpack.c.l.b16 %v460
  %v3002 = vunpack.c.h.b16 %v460
  %v3003 = vunpack.c.l.b16 %v461
  %v3004 = vunpack.c.h.b16 %v461
  %v3005 = vunpack.c.l.b16 %v462
  %v3006 = vunpack.c.h.b16 %v462
  %v3007 = vunpack.c.l.b16 %v463
  %v3008 = vunpack.c.h.b16 %v463
  %v3009 = vunpack.c.l.b16 %v464
  %v3010 = vunpack.c.h.b16 %v464
  %v3011 = vunpack.c.l.b16 %v465
  %v3012 = vunpack.c.h.b16 %v465
  %v3013 = vunpack.c.l.b16 %v466
  %v3014 = vunpack.c.h.b16 %v466
  %v3015 = vunpack.c.l.b16 %v467
  %v3016 = vunpack.c.h.b16 %v467
  %v3017 = vunpack.c.l.b16 %v468
  %v3018 = vunpack.c.h.b16 %v468
  %v3019 = vunpack.c.l.b16 %v469
  %v3020 = vunpack.c.h.b16 %v469
  %v3021 = vunpack.c.l.b16 %v470
  %v3022 = vunpack.c.h.b16 %v470
  %v3023 = vunpack.c.l.b16 %v471
  %v3024 = vunpack.c.h.b16 %v471
  %v3025 = vunpack.c.l.b16 %v472
  %v3026 = vunpack.c.h.b16 %v472
  %v3027 = vunpack.c.l.b16 %v473
  %v3028 = vunpack.c.h.b16 %v473
  %v3029 = vunpack.c.l.b16 %v474
  %v3030 = vunpack.c.h.b16 %v474
  %v3031 = vunpack.c.l.b16 %v475
  %v3032 = vunpack.c.h.b16 %v475
  %v3033 = vunpack.c.l.b16 %v476
  %v3034 = vunpack.c.h.b16 %v476
  %v3035 = vunpack.c.l.b16 %v477
  %v3036 = vunpack.c.h.b16 %v477
  %v3037 = vunpack.c.l.b16 %v478
  %v3038 = vunpack.c.h.b16 %v478
  %v3039 = vunpack.c.l.b16 %v479
  %v3040 = vunpack.c.h.b16 %v479
  %v3041 = vunpack.c.l.b16 %v480
  %v3042 = vunpack.c.h.b16 %v480
  %v3043 = vunpack.c.l.b16 %v481
  %v3044 = vunpack.c.h.b16 %v481
  %v3045 = vunpack.c.l.b16 %v482
  %v3046 = vunpack.c.h.b16 %v482
  %v3047 = vunpack.c.l.b16 %v483
  %v3048 = vunpack.c.h.b16 %v483
  %v3049 = vunpack.c.l.b16 %v484
  %v3050 = vunpack.c.h.b16 %v484
  %v3051 = vunpack.c.l.b16 %v485
  %v3052 = vunpack.c.h.b16 %v485
  %v3053 = vunpack.c.l.b16 %v486
  %v3054 = vunpack.c.h.b16 %v486
  %v3055 = vunpack.c.l.b16 %v487
  %v3056 = vunpack.c.h.b16 %v487
  %v3057 = vunpack.c.l.b16 %v488
  %v3058 = vunpack.c.h.b16 %v488
  %v3059 = vunpack.c.l.b16 %v489
  %v3060 = vunpack.c.h.b16 %v489
  %v3061 = vunpack.c.l.b16 %v490
  %v3062 = vunpack.c.h.b16 %v490
  %v3063 = vunpack.c.l.b16 %v491
  %v3064 = vunpack.c.h.b16 %v491
  %v3065 = vunpack.c.l.b16 %v492
  %v3066 = vunpack.c.h.b16 %v492
  %v3067 = vunpack.c.l.b16 %v493
  %v3068 = vunpack.c.h.b16 %v493
  %v3069 = vunpack.c.l.b16 %v494
  %v3070 = vunpack.c.h.b16 %v494
  %v3071 = vunpack.c.l.b16 %v495
  %v3072 = vunpack.c.h.b16 %v495
  %v3073 = vunpack.c.l.b16 %v496
  %v3074 = vunpack.c.h.b16 %v496
  %v3075 = vunpack.c.l.b16 %v497
  %v3076 = vunpack.c.h.b16 %v497
  %v3077 = vunpack.c.l.b16 %v498
  %v3078 = vunpack.c.h.b16 %v498
  %v3079 = vunpack.c.l.b16 %v499
  %v3080 = vunpack.c.h.b16 %v499
  %v3081 = vunpack.c.l.b16 %v500
  %v3082 = vunpack.c.h.b16 %v500
  %v3083 = vunpack.c.l.b16 %v501
  %v3084 = vunpack.c.h.b16 %v501
  %v3085 = vunpack.c.l.b16 %v502
  %v3086 = vunpack.c.h.b16 %v502
  %v3087 = vunpack.c.l.b16 %v503
  %v3088 = vunpack.c.h.b16 %v503
  %v3089 = vunpack.c.l.b16 %v504
  %v3090 = vunpack.c.h.b16 %v504
  %v3091 = vunpack.c.l.b16 %v505
  %v3092 = vunpack.c.h.b16 %v505
  %v3093 = vunpack.c.l.b16 %v506
  %v3094 = vunpack.c.h.b16 %v506
  %v3095 = vunpack.c.l.b16 %v507
  %v3096 = vunpack.c.h.b16 %v507
  %v3097 = vunpack.c.l.b16 %v508
  %v3098 = vunpack.c.h.b16 %v508
  %v3099 = vunpack.c.l.b16 %v509
  %v3100 = vunpack.c.h.b16 %v509
  %v3101 = vunpack.c.l.b16 %v510
  %v3102 = vunpack.c.h.b16 %v510
  %v3103 = vunpack.c.l.b16 %v511
  %v3104 = vunpack.c.h.b16 %v511
  %v3105 = vunpack.c.l.b16 %v512
  %v3106 = vunpack.c.h.b16 %v512
  %v3107 = vunpack.c.l.b16 %v513
  %v3108 = vunpack.c.h.b16 %v513
  %v3109 = vunpack.c.l.b16 %v514
  %v3110 = vunpack.c.h.b16 %v514
  %v3111 = vunpack.c.l.b16 %v515
  %v3112 = vunpack.c.h.b16 %v515
  %v3113 = vunpack.c.l.b16 %v516
  %v3114 = vunpack.c.h.b16 %v516
  %v3115 = vunpack.c.l.b16 %v517
  %v3116 = vunpack.c.h.b16 %v517
  %v3117 = vunpack.c.l.b16 %v518
  %v3118 = vunpack.c.h.b16 %v518
  %v3119 = vunpack.c.l.b16 %v519
  %v3120 = vunpack.c.h.b16 %v519
  %v3121 = vunpack.c.l.b16 %v520
  %v3122 = vunpack.c.h.b16 %v520
  %v3123 = vunpack.c.l.b16 %v521
  %v3124 = vunpack.c.h.b16 %v521
  %v3125 = vunpack.c.l.b16 %v522
  %v3126 = vunpack.c.h.b16 %v522
  %v3127 = vunpack.c.l.b16 %v523
  %v3128 = vunpack.c.h.b16 %v523
  %v3129 = vunpack.c.l.b16 %v524
  %v3130 = vunpack.c.h.b16 %v524
  %v3131 = vunpack.c.l.b16 %v525
  %v3132 = vunpack.c.h.b16 %v525
  %v3133 = vunpack.c.l.b16 %v526
  %v3134 = vunpack.c.h.b16 %v526
  %v3135 = vunpack.c.l.b16 %v527
  %v3136 = vunpack.c.h.b16 %v527
  %v3137 = vunpack.c.l.b16 %v528
  %v3138 = vunpack.c.h.b16 %v528
  %v3139 = vunpack.c.l.b16 %v529
  %v3140 = vunpack.c.h.b16 %v529
  %v3141 = vunpack.c.l.b16 %v530
  %v3142 = vunpack.c.h.b16 %v530
  %v3143 = vunpack.c.l.b16 %v531
  %v3144 = vunpack.c.h.b16 %v531
  %v3145 = vunpack.c.l.b16 %v532
  %v3146 = vunpack.c.h.b16 %v532
  %v3147 = vunpack.c.l.b16 %v533
  %v3148 = vunpack.c.h.b16 %v533
  %v3149 = vunpack.c.l.b16 %v534
  %v3150 = vunpack.c.h.b16 %v534
  %v3151 = vunpack.c.l.b16 %v535
  %v3152 = vunpack.c.h.b16 %v535
  %v3153 = vunpack.c.l.b16 %v536
  %v3154 = vunpack.c.h.b16 %v536
  %v3155 = vunpack.c.l.b16 %v537
  %v3156 = vunpack.c.h.b16 %v537
  %v3157 = vunpack.c.l.b16 %v538
  %v3158 = vunpack.c.h.b16 %v538
  %v3159 = vunpack.c.l.b16 %v539
  %v3160 = vunpack.c.h.b16 %v539
  %v3161 = vunpack.c.l.b16 %v540
  %v3162 = vunpack.c.h.b16 %v540
  %v3163 = vunpack.c.l.b16 %v541
  %v3164 = vunpack.c.h.b16 %v541
  %v3165 = vunpack.c.l.b16 %v542
  %v3166 = vunpack.c.h.b16 %v542
  %v3167 = vunpack.c.l.b16 %v543
  %v3168 = vunpack.c.h.b16 %v543
  %v3169 = vunpack.c.l.b16 %v544
  %v3170 = vunpack.c.h.b16 %v544
  %v3171 = vunpack.c.l.b16 %v545
  %v3172 = vunpack.c.h.b16 %v545
  %v3173 = vunpack.c.l.b16 %v546
  %v3174 = vunpack.c.h.b16 %v546
  %v3175 = vunpack.c.l.b16 %v547
  %v3176 = vunpack.c.h.b16 %v547
  %v3177 = vunpack.c.l.b16 %v548
  %v3178 = vunpack.c.h.b16 %v548
  %v3179 = vunpack.c.l.b16 %v549
  %v3180 = vunpack.c.h.b16 %v549
  %v3181 = vunpack.c.l.b16 %v550
  %v3182 = vunpack.c.h.b16 %v550
  %v3183 = vunpack.c.l.b16 %v551
  %v3184 = vunpack.c.h.b16 %v551
  %v3185 = vunpack.c.l.b16 %v552
  %v3186 = vunpack.c.h.b16 %v552
  %v3187 = vunpack.c.l.b16 %v553
  %v3188 = vunpack.c.h.b16 %v553
  %v3189 = vunpack.c.l.b16 %v554
  %v3190 = vunpack.c.h.b16 %v554
  %v3191 = vunpack.c.l.b16 %v555
  %v3192 = vunpack.c.h.b16 %v555
  %v3193 = vunpack.c.l.b16 %v556
  %v3194 = vunpack.c.h.b16 %v556
  %v3195 = vunpack.c.l.b16 %v557
  %v3196 = vunpack.c.h.b16 %v557
  %v3197 = vunpack.c.l.b16 %v558
  %v3198 = vunpack.c.h.b16 %v558
  %v3199 = vunpack.c.l.b16 %v559
  %v3200 = vunpack.c.h.b16 %v559
  %v3201 = vunpack.c.l.b16 %v560
  %v3202 = vunpack.c.h.b16 %v560
  %v3203 = vunpack.c.l.b16 %v561
  %v3204 = vunpack.c.h.b16 %v561
  %v3205 = vunpack.c.l.b16 %v562
  %v3206 = vunpack.c.h.b16 %v562
  %v3207 = vunpack.c.l.b16 %v563
  %v3208 = vunpack.c.h.b16 %v563
  %v3209 = vunpack.c.l.b16 %v564
  %v3210 = vunpack.c.h.b16 %v564
  %v3211 = vunpack.c.l.b16 %v565
  %v3212 = vunpack.c.h.b16 %v565
  %v3213 = vunpack.c.l.b16 %v566
  %v3214 = vunpack.c.h.b16 %v566
  %v3215 = vunpack.c.l.b16 %v567
  %v3216 = vunpack.c.h.b16 %v567
  %v3217 = vunpack.c.l.b16 %v568
  %v3218 = vunpack.c.h.b16 %v568
  %v3219 = vunpack.c.l.b16 %v569
  %v3220 = vunpack.c.h.b16 %v569
  %v3221 = vunpack.c.l.b16 %v570
  %v3222 = vunpack.c.h.b16 %v570
  %v3223 = vunpack.c.l.b16 %v571
  %v3224 = vunpack.c.h.b16 %v571
  %v3225 = vunpack.c.l.b16 %v572
  %v3226 = vunpack.c.h.b16 %v572
  %v3227 = vunpack.c.l.b16 %v573
  %v3228 = vunpack.c.h.b16 %v573
  %v3229 = vunpack.c.l.b16 %v574
  %v3230 = vunpack.c.h.b16 %v574
  %v3231 = vunpack.c.l.b16 %v575
  %v3232 = vunpack.c.h.b16 %v575
  %v3233 = vunpack.c.l.b16 %v576
  %v3234 = vunpack.c.h.b16 %v576
  %v3235 = vunpack.c.l.b16 %v577
  %v3236 = vunpack.c.h.b16 %v577
  %v3237 = vunpack.c.l.b16 %v578
  %v3238 = vunpack.c.h.b16 %v578
  %v3239 = vunpack.c.l.b16 %v579
  %v3240 = vunpack.c.h.b16 %v579
  %v3241 = vunpack.c.l.b16 %v580
  %v3242 = vunpack.c.h.b16 %v580
  %v3243 = vunpack.c.l.b16 %v581
  %v3244 = vunpack.c.h.b16 %v581
  %v3245 = vunpack.c.l.b16 %v582
  %v3246 = vunpack.c.h.b16 %v582
  %v3247 = vunpack.c.l.b16 %v583
  %v3248 = vunpack.c.h.b16 %v583
  %v3249 = vunpack.c.l.b16 %v584
  %v3250 = vunpack.c.h.b16 %v584
  %v3251 = vunpack.c.l.b16 %v585
  %v3252 = vunpack.c.h.b16 %v585
  %v3253 = vunpack.c.l.b16 %v586
  %v3254 = vunpack.c.h.b16 %v586
  %v3255 = vunpack.c.l.b16 %v587
  %v3256 = vunpack.c.h.b16 %v587
  %v3257 = vunpack.c.l.b16 %v588
  %v3258 = vunpack.c.h.b16 %v588
  %v3259 = vunpack.c.l.b16 %v589
  %v3260 = vunpack.c.h.b16 %v589
  %v3261 = vunpack.c.l.b16 %v590
  %v3262 = vunpack.c.h.b16 %v590
  %v3263 = vunpack.c.l.b16 %v591
  %v3264 = vunpack.c.h.b16 %v591
  %v3265 = vunpack.c.l.b16 %v592
  %v3266 = vunpack.c.h.b16 %v592
  %v3267 = vunpack.c.l.b16 %v593
  %v3268 = vunpack.c.h.b16 %v593
  %v3269 = vunpack.c.l.b16 %v594
  %v3270 = vunpack.c.h.b16 %v594
  %v3271 = vunpack.c.l.b16 %v595
  %v3272 = vunpack.c.h.b16 %v595
  %v3273 = vunpack.c.l.b16 %v596
  %v3274 = vunpack.c.h.b16 %v596
  %v3275 = vunpack.c.l.b16 %v597
  %v3276 = vunpack.c.h.b16 %v597
  %v3277 = vunpack.c.l.b16 %v598
  %v3278 = vunpack.c.h.b16 %v598
  %v3279 = vunpack.c.l.b16 %v599
  %v3280 = vunpack.c.h.b16 %v599
  %v3281 = vunpack.c.l.b16 %v600
  %v3282 = vunpack.c.h.b16 %v600
  %v3283 = vunpack.c.l.b16 %v601
  %v3284 = vunpack.c.h.b16 %v601
  %v3285 = vunpack.c.l.b16 %v602
  %v3286 = vunpack.c.h.b16 %v602
  %v3287 = vunpack.c.l.b16 %v603
  %v3288 = vunpack.c.h.b16 %v603
  %v3289 = vunpack.c.l.b16 %v604
  %v3290 = vunpack.c.h.b16 %v604
  %v3291 = vunpack.c.l.b16 %v605
  %v3292 = vunpack.c.h.b16 %v605
  %v3293 = vunpack.c.l.b16 %v606
  %v3294 = vunpack.c.h.b16 %v606
  %v3295 = vunpack.c.l.b16 %v607
  %v3296 = vunpack.c.h.b16 %v607
  %v3297 = vunpack.c.l.b16 %v608
  %v3298 = vunpack.c.h.b16 %v608
  %v3299 = vunpack.c.l.b16 %v609
  %v3300 = vunpack.c.h.b16 %v609
  %v3301 = vunpack.c.l.b16 %v610
  %v3302 = vunpack.c.h.b16 %v610
  %v3303 = vunpack.c.l.b16 %v611
  %v3304 = vunpack.c.h.b16 %v611
  %v3305 = vunpack.c.l.b16 %v612
  %v3306 = vunpack.c.h.b16 %v612
  %v3307 = vunpack.c.l.b16 %v613
  %v3308 = vunpack.c.h.b16 %v613
  %v3309 = vunpack.c.l.b16 %v614
  %v3310 = vunpack.c.h.b16 %v614
  %v3311 = vunpack.c.l.b16 %v615
  %v3312 = vunpack.c.h.b16 %v615
  %v3313 = vunpack.c.l.b16 %v616
  %v3314 = vunpack.c.h.b16 %v616
  %v3315 = vunpack.c.l.b16 %v617
  %v3316 = vunpack.c.h.b16 %v617
  %v3317 = vunpack.c.l.b16 %v618
  %v3318 = vunpack.c.h.b16 %v618
  %v3319 = vunpack.c.l.b16 %v619
  %v3320 = vunpack.c.h.b16 %v619
  %v3321 = vunpack.c.l.b16 %v620
  %v3322 = vunpack.c.h.b16 %v620
  %v3323 = vunpack.c.l.b16 %v621
  %v3324 = vunpack.c.h.b16 %v621
  %v3325 = vunpack.c.l.b16 %v622
  %v3326 = vunpack.c.h.b16 %v622
  %v3327 = vunpack.c.l.b16 %v623
  %v3328 = vunpack.c.h.b16 %v623
  %v3329 = vunpack.c.l.b16 %v624
  %v3330 = vunpack.c.h.b16 %v624
  %v3331 = vunpack.c.l.b16 %v625
  %v3332 = vunpack.c.h.b16 %v625
  %v3333 = vunpack.c.l.b16 %v626
  %v3334 = vunpack.c.h.b16 %v626
  %v3335 = vunpack.c.l.b16 %v627
  %v3336 = vunpack.c.h.b16 %v627
  %v3337 = vunpack.c.l.b16 %v628
  %v3338 = vunpack.c.h.b16 %v628
  %v3339 = vunpack.c.l.b16 %v629
  %v3340 = vunpack.c.h.b16 %v629
  %v3341 = vunpack.c.l.b16 %v630
  %v3342 = vunpack.c.h.b16 %v630
  %v3343 = vunpack.c.l.b16 %v631
  %v3344 = vunpack.c.h.b16 %v631
  %v3345 = vunpack.c.l.b16 %v632
  %v3346 = vunpack.c.h.b16 %v632
  %v3347 = vunpack.c.l.b16 %v633
  %v3348 = vunpack.c.h.b16 %v633
  %v3349 = vunpack.c.l.b16 %v634
  %v3350 = vunpack.c.h.b16 %v634
  %v3351 = vunpack.c.l.b16 %v635
  %v3352 = vunpack.c.h.b16 %v635
  %v3353 = vunpack.c.l.b16 %v636
  %v3354 = vunpack.c.h.b16 %v636
  %v3355 = vunpack.c.l.b16 %v637
  %v3356 = vunpack.c.h.b16 %v637
  %v3357 = vunpack.c.l.b16 %v638
  %v3358 = vunpack.c.h.b16 %v638
  %v3359 = vunpack.c.l.b16 %v639
  %v3360 = vunpack.c.h.b16 %v639
  %v3361 = vunpack.c.l.b16 %v640
  %v3362 = vunpack.c.h.b16 %v640
  %v3363 = vunpack.c.l.b16 %v641
  %v3364 = vunpack.c.h.b16 %v641
  %v3365 = vunpack.c.l.b16 %v642
  %v3366 = vunpack.c.h.b16 %v642
  %v3367 = vunpack.c.l.b16 %v643
  %v3368 = vunpack.c.h.b16 %v643
  %v3369 = vunpack.c.l.b16 %v644
  %v3370 = vunpack.c.h.b16 %v644
  %v3371 = vunpack.c.l.b16 %v645
  %v3372 = vunpack.c.h.b16 %v645
  %v3373 = vunpack.c.l.b16 %v646
  %v3374 = vunpack.c.h.b16 %v646
  %v3375 = vunpack.c.l.b16 %v647
  %v3376 = vunpack.c.h.b16 %v647
  %v3377 = vunpack.c.l.b16 %v648
  %v3378 = vunpack.c.h.b16 %v648
  %v3379 = vunpack.c.l.b16 %v649
  %v3380 = vunpack.c.h.b16 %v649
  %v3381 = vunpack.c.l.b16 %v650
  %v3382 = vunpack.c.h.b16 %v650
  %v3383 = vunpack.c.l.b16 %v651
  %v3384 = vunpack.c.h.b16 %v651
  %v3385 = vunpack.c.l.b16 %v652
  %v3386 = vunpack.c.h.b16 %v652
  %v3387 = vunpack.c.l.b16 %v653
  %v3388 = vunpack.c.h.b16 %v653
  %v3389 = vunpack.c.l.b16 %v654
  %v3390 = vunpack.c.h.b16 %v654
  %v3391 = vunpack.c.l.b16 %v655
  %v3392 = vunpack.c.h.b16 %v655
  %v3393 = vunpack.c.l.b16 %v656
  %v3394 = vunpack.c.h.b16 %v656
  %v3395 = vunpack.c.l.b16 %v657
  %v3396 = vunpack.c.h.b16 %v657
  %v3397 = vunpack.c.l.b16 %v658
  %v3398 = vunpack.c.h.b16 %v658
  %v3399 = vunpack.c.l.b16 %v659
  %v3400 = vunpack.c.h.b16 %v659
  %v3401 = vunpack.c.l.b16 %v660
  %v3402 = vunpack.c.h.b16 %v660
  %v3403 = vunpack.c.l.b16 %v661
  %v3404 = vunpack.c.h.b16 %v661
  %v3405 = vunpack.c.l.b16 %v662
  %v3406 = vunpack.c.h.b16 %v662
  %v3407 = vunpack.c.l.b16 %v663
  %v3408 = vunpack.c.h.b16 %v663
  %v3409 = vunpack.c.l.b16 %v664
  %v3410 = vunpack.c.h.b16 %v664
  %v3411 = vunpack.c.l.b16 %v665
  %v3412 = vunpack.c.h.b16 %v665
  %v3413 = vunpack.c.l.b16 %v666
  %v3414 = vunpack.c.h.b16 %v666
  %v3415 = vunpack.c.l.b16 %v667
  %v3416 = vunpack.c.h.b16 %v667
  %v3417 = vunpack.c.l.b16 %v668
  %v3418 = vunpack.c.h.b16 %v668
  %v3419 = vunpack.c.l.b16 %v669
  %v3420 = vunpack.c.h.b16 %v669
  %v3421 = vunpack.c.l.b16 %v670
  %v3422 = vunpack.c.h.b16 %v670
  %v3423 = vunpack.c.l.b16 %v671
  %v3424 = vunpack.c.h.b16 %v671
  %v3425 = vunpack.c.l.b16 %v672
  %v3426 = vunpack.c.h.b16 %v672
  %v3427 = vunpack.c.l.b16 %v673
  %v3428 = vunpack.c.h.b16 %v673
  %v3429 = vunpack.c.l.b16 %v674
  %v3430 = vunpack.c.h.b16 %v674
  %v3431 = vunpack.c.l.b16 %v675
  %v3432 = vunpack.c.h.b16 %v675
  %v3433 = vunpack.c.l.b16 %v676
  %v3434 = vunpack.c.h.b16 %v676
  %v3435 = vunpack.c.l.b16 %v677
  %v3436 = vunpack.c.h.b16 %v677
  %v3437 = vunpack.c.l.b16 %v678
  %v3438 = vunpack.c.h.b16 %v678
  %v3439 = vunpack.c.l.b16 %v679
  %v3440 = vunpack.c.h.b16 %v679
  %v3441 = vunpack.c.l.b16 %v680
  %v3442 = vunpack.c.h.b16 %v680
  %v3443 = vunpack.c.l.b16 %v681
  %v3444 = vunpack.c.h.b16 %v681
  %v3445 = vunpack.c.l.b16 %v682
  %v3446 = vunpack.c.h.b16 %v682
  %v3447 = vunpack.c.l.b16 %v683
  %v3448 = vunpack.c.h.b16 %v683
  %v3449 = vunpack.c.l.b16 %v684
  %v3450 = vunpack.c.h.b16 %v684
  %v3451 = vunpack.c.l.b16 %v685
  %v3452 = vunpack.c.h.b16 %v685
  %v3453 = vunpack.c.l.b16 %v686
  %v3454 = vunpack.c.h.b16 %v686
  %v3455 = vunpack.c.l.b16 %v687
  %v3456 = vunpack.c.h.b16 %v687
  %v3457 = vunpack.c.l.b16 %v688
  %v3458 = vunpack.c.h.b16 %v688
  %v3459 = vunpack.c.l.b16 %v689
  %v3460 = vunpack.c.h.b16 %v689
  %v3461 = vunpack.c.l.b16 %v690
  %v3462 = vunpack.c.h.b16 %v690
  %v3463 = vunpack.c.l.b16 %v691
  %v3464 = vunpack.c.h.b16 %v691
  %v3465 = vunpack.c.l.b16 %v692
  %v3466 = vunpack.c.h.b16 %v692
  %v3467 = vunpack.c.l.b16 %v693
  %v3468 = vunpack.c.h.b16 %v693
  %v3469 = vunpack.c.l.b16 %v694
  %v3470 = vunpack.c.h.b16 %v694
  %v3471 = vunpack.c.l.b16 %v695
  %v3472 = vunpack.c.h.b16 %v695
  %v3473 = vunpack.c.l.b16 %v696
  %v3474 = vunpack.c.h.b16 %v696
  %v3475 = vunpack.c.l.b16 %v697
  %v3476 = vunpack.c.h.b16 %v697
  %v3477 = vunpack.c.l.b16 %v698
  %v3478 = vunpack.c.h.b16 %v698
  %v3479 = vunpack.c.l.b16 %v699
  %v3480 = vunpack.c.h.b16 %v699
  %v3481 = vunpack.c.l.b16 %v700
  %v3482 = vunpack.c.h.b16 %v700
  %v3483 = vunpack.c.l.b16 %v701
  %v3484 = vunpack.c.h.b16 %v701
  %v3485 = vunpack.c.l.b16 %v702
  %v3486 = vunpack.c.h.b16 %v702
  %v3487 = vunpack.c.l.b16 %v703
  %v3488 = vunpack.c.h.b16 %v703
  %v3489 = vunpack.c.l.b16 %v704
  %v3490 = vunpack.c.h.b16 %v704
  %v3491 = vunpack.c.l.b16 %v705
  %v3492 = vunpack.c.h.b16 %v705
  %v3493 = vunpack.c.l.b16 %v706
  %v3494 = vunpack.c.h.b16 %v706
  %v3495 = vunpack.c.l.b16 %v707
  %v3496 = vunpack.c.h.b16 %v707
  %v3497 = vunpack.c.l.b16 %v708
  %v3498 = vunpack.c.h.b16 %v708
  %v3499 = vunpack.c.l.b16 %v709
  %v3500 = vunpack.c.h.b16 %v709
  %v3501 = vunpack.c.l.b16 %v710
  %v3502 = vunpack.c.h.b16 %v710
  %v3503 = vunpack.c.l.b16 %v711
  %v3504 = vunpack.c.h.b16 %v711
  %v3505 = vunpack.c.l.b16 %v712
  %v3506 = vunpack.c.h.b16 %v712
  %v3507 = vunpack.c.l.b16 %v713
  %v3508 = vunpack.c.h.b16 %v713
  %v3509 = vunpack.c.l.b16 %v714
  %v3510 = vunpack.c.h.b16 %v714
  %v3511 = vunpack.c.l.b16 %v715
  %v3512 = vunpack.c.h.b16 %v715
  %v3513 = vunpack.c.l.b16 %v716
  %v3514 = vunpack.c.h.b16 %v716
  %v3515 = vunpack.c.l.b16 %v717
  %v3516 = vunpack.c.h.b16 %v717
  %v3517 = vunpack.c.l.b16 %v718
  %v3518 = vunpack.c.h.b16 %v718
  %v3519 = vunpack.c.l.b16 %v719
  %v3520 = vunpack.c.h.b16 %v719
  %v3521 = vunpack.c.l.b16 %v720
  %v3522 = vunpack.c.h.b16 %v720
  %v3523 = vunpack.c.l.b16 %v721
  %v3524 = vunpack.c.h.b16 %v721
  %v3525 = vunpack.c.l.b16 %v722
  %v3526 = vunpack.c.h.b16 %v722
  %v3527 = vunpack.c.l.b16 %v723
  %v3528 = vunpack.c.h.b16 %v723
  %v3529 = vunpack.c.l.b16 %v724
  %v3530 = vunpack.c.h.b16 %v724
  %v3531 = vunpack.c.l.b16 %v725
  %v3532 = vunpack.c.h.b16 %v725
  %v3533 = vunpack.c.l.b16 %v726
  %v3534 = vunpack.c.h.b16 %v726
  %v3535 = vunpack.c.l.b16 %v727
  %v3536 = vunpack.c.h.b16 %v727
  %v3537 = vunpack.c.l.b16 %v728
  %v3538 = vunpack.c.h.b16 %v728
  %v3539 = vunpack.c.l.b16 %v729
  %v3540 = vunpack.c.h.b16 %v729
  %v3541 = vunpack.c.l.b16 %v730
  %v3542 = vunpack.c.h.b16 %v730
  %v3543 = vunpack.c.l.b16 %v731
  %v3544 = vunpack.c.h.b16 %v731
  %v3545 = vunpack.c.l.b16 %v732
  %v3546 = vunpack.c.h.b16 %v732
  %v3547 = vunpack.c.l.b16 %v733
  %v3548 = vunpack.c.h.b16 %v733
  %v3549 = vunpack.c.l.b16 %v734
  %v3550 = vunpack.c.h.b16 %v734
  %v3551 = vunpack.c.l.b16 %v735
  %v3552 = vunpack.c.h.b16 %v735
  %v3553 = vunpack.c.l.b16 %v736
  %v3554 = vunpack.c.h.b16 %v736
  %v3555 = vunpack.c.l.b16 %v737
  %v3556 = vunpack.c.h.b16 %v737
  %v3557 = vunpack.c.l.b16 %v738
  %v3558 = vunpack.c.h.b16 %v738
  %v3559 = vunpack.c.l.b16 %v739
  %v3560 = vunpack.c.h.b16 %v739
  %v3561 = vunpack.c.l.b16 %v740
  %v3562 = vunpack.c.h.b16 %v740
  %v3563 = vunpack.c.l.b16 %v741
  %v3564 = vunpack.c.h.b16 %v741
  %v3565 = vunpack.c.l.b16 %v742
  %v3566 = vunpack.c.h.b16 %v742
  %v3567 = vunpack.c.l.b16 %v743
  %v3568 = vunpack.c.h.b16 %v743
  %v3569 = vunpack.c.l.b16 %v744
  %v3570 = vunpack.c.h.b16 %v744
  %v3571 = vunpack.c.l.b16 %v745
  %v3572 = vunpack.c.h.b16 %v745
  %v3573 = vunpack.c.l.b16 %v746
  %v3574 = vunpack.c.h.b16 %v746
  %v3575 = vunpack.c.l.b16 %v747
  %v3576 = vunpack.c.h.b16 %v747
  %v3577 = vunpack.c.l.b16 %v748
  %v3578 = vunpack.c.h.b16 %v748
  %v3579 = vunpack.c.l.b16 %v749
  %v3580 = vunpack.c.h.b16 %v749
  %v3581 = vunpack.c.l.b16 %v750
  %v3582 = vunpack.c.h.b16 %v750
  %v3583 = vunpack.c.l.b16 %v751
  %v3584 = vunpack.c.h.b16 %v751
  %v3585 = vunpack.c.l.b16 %v752
  %v3586 = vunpack.c.h.b16 %v752
  %v3587 = vunpack.c.l.b16 %v753
  %v3588 = vunpack.c.h.b16 %v753
  %v3589 = vunpack.c.l.b16 %v754
  %v3590 = vunpack.c.h.b16 %v754
  %v3591 = vunpack.c.l.b16 %v755
  %v3592 = vunpack.c.h.b16 %v755
  %v3593 = vunpack.c.l.b16 %v756
  %v3594 = vunpack.c.h.b16 %v756
  %v3595 = vunpack.c.l.b16 %v757
  %v3596 = vunpack.c.h.b16 %v757
  %v3597 = vunpack.c.l.b16 %v758
  %v3598 = vunpack.c.h.b16 %v758
  %v3599 = vunpack.c.l.b16 %v759
  %v3600 = vunpack.c.h.b16 %v759
  %v3601 = vunpack.c.l.b16 %v760
  %v3602 = vunpack.c.h.b16 %v760
  %v3603 = vunpack.c.l.b16 %v761
  %v3604 = vunpack.c.h.b16 %v761
  %v3605 = vunpack.c.l.b16 %v762
  %v3606 = vunpack.c.h.b16 %v762
  %v3607 = vunpack.c.l.b16 %v763
  %v3608 = vunpack.c.h.b16 %v763
  %v3609 = vunpack.c.l.b16 %v764
  %v3610 = vunpack.c.h.b16 %v764
  %v3611 = vunpack.c.l.b16 %v765
  %v3612 = vunpack.c.h.b16 %v765
  %v3613 = vunpack.c.l.b16 %v766
  %v3614 = vunpack.c.h.b16 %v766
  %v3615 = vunpack.c.l.b16 %v767
  %v3616 = vunpack.c.h.b16 %v767
  %v3617 = vunpack.c.l.b16 %v768
  %v3618 = vunpack.c.h.b16 %v768
  %v3619 = vunpack.c.l.b16 %v769
  %v3620 = vunpack.c.h.b16 %v769
  %v3621 = vunpack.c.l.b16 %v770
  %v3622 = vunpack.c.h.b16 %v770
  %v3623 = vunpack.c.l.b16 %v771
  %v3624 = vunpack.c.h.b16 %v771
  %v3625 = vunpack.c.l.b16 %v772
  %v3626 = vunpack.c.h.b16 %v772
  %v3627 = vunpack.c.l.b16 %v773
  %v3628 = vunpack.c.h.b16 %v773
  %v3629 = vunpack.c.l.b16 %v774
  %v3630 = vunpack.c.h.b16 %v774
  %v3631 = vunpack.c.l.b16 %v775
  %v3632 = vunpack.c.h.b16 %v775
  %v3633 = vunpack.c.l.b16 %v776
  %v3634 = vunpack.c.h.b16 %v776
  %v3635 = vunpack.c.l.b16 %v777
  %v3636 = vunpack.c.h.b16 %v777
  %v3637 = vunpack.c.l.b16 %v778
  %v3638 = vunpack.c.h.b16 %v778
  %v3639 = vunpack.c.l.b16 %v779
  %v3640 = vunpack.c.h.b16 %v779
  %v3641 = vunpack.c.l.b16 %v780
  %v3642 = vunpack.c.h.b16 %v780
  %v3643 = vunpack.c.l.b16 %v781
  %v3644 = vunpack.c.h.b16 %v781
  %v3645 = vunpack.c.l.b16 %v782
  %v3646 = vunpack.c.h.b16 %v782
  %v3647 = vunpack.c.l.b16 %v783
  %v3648 = vunpack.c.h.b16 %v783
  %v3649 = vunpack.c.l.b16 %v784
  %v3650 = vunpack.c.h.b16 %v784
  %v3651 = vunpack.c.l.b16 %v785
  %v3652 = vunpack.c.h.b16 %v785
  %v3653 = vunpack.c.l.b16 %v786
  %v3654 = vunpack.c.h.b16 %v786
  %v3655 = vunpack.c.l.b16 %v787
  %v3656 = vunpack.c.h.b16 %v787
  %v3657 = vunpack.c.l.b16 %v788
  %v3658 = vunpack.c.h.b16 %v788
  %v3659 = vunpack.c.l.b16 %v789
  %v3660 = vunpack.c.h.b16 %v789
  %v3661 = vunpack.c.l.b16 %v790
  %v3662 = vunpack.c.h.b16 %v790
  %v3663 = vunpack.c.l.b16 %v791
  %v3664 = vunpack.c.h.b16 %v791
  %v3665 = vunpack.c.l.b16 %v792
  %v3666 = vunpack.c.h.b16 %v792
  %v3667 = vunpack.c.l.b16 %v793
  %v3668 = vunpack.c.h.b16 %v793
  %v3669 = vunpack.c.l.b16 %v794
  %v3670 = vunpack.c.h.b16 %v794
  %v3671 = vunpack.c.l.b16 %v795
  %v3672 = vunpack.c.h.b16 %v795
  %v3673 = vunpack.c.l.b16 %v796
  %v3674 = vunpack.c.h.b16 %v796
  %v3675 = vunpack.c.l.b16 %v797
  %v3676 = vunpack.c.h.b16 %v797
  %v3677 = vunpack.c.l.b16 %v798
  %v3678 = vunpack.c.h.b16 %v798
  %v3679 = vunpack.c.l.b16 %v799
  %v3680 = vunpack.c.h.b16 %v799
  %v3681 = vunpack.c.l.b16 %v800
  %v3682 = vunpack.c.h.b16 %v800
  %v3683 = vunpack.c.l.b16 %v801
  %v3684 = vunpack.c.h.b16 %v801
  %v3685 = vunpack.c.l.b16 %v802
  %v3686 = vunpack.c.h.b16 %v802
  %v3687 = vunpack.c.l.b16 %v803
  %v3688 = vunpack.c.h.b16 %v803
  %v3689 = vunpack.c.l.b16 %v804
  %v3690 = vunpack.c.h.b16 %v804
  %v3691 = vunpack.c.l.b16 %v805
  %v3692 = vunpack.c.h.b16 %v805
  %v3693 = vunpack.c.l.b16 %v806
  %v3694 = vunpack.c.h.b16 %v806
  %v3695 = vunpack.c.l.b16 %v807
  %v3696 = vunpack.c.h.b16 %v807
  %v3697 = vunpack.c.l.b16 %v808
  %v3698 = vunpack.c.h.b16 %v808
  %v3699 = vunpack.c.l.b16 %v809
  %v3700 = vunpack.c.h.b16 %v809
  %v3701 = vunpack.c.l.b16 %v810
  %v3702 = vunpack.c.h.b16 %v810
  %v3703 = vunpack.c.l.b16 %v811
  %v3704 = vunpack.c.h.b16 %v811
  %v3705 = vunpack.c.l.b16 %v812
  %v3706 = vunpack.c.h.b16 %v812
  %v3707 = vunpack.c.l.b16 %v813
  %v3708 = vunpack.c.h.b16 %v813
  %v3709 = vunpack.c.l.b16 %v814
  %v3710 = vunpack.c.h.b16 %v814
  %v3711 = vunpack.c.l.b16 %v815
  %v3712 = vunpack.c.h.b16 %v815
  %v3713 = vunpack.c.l.b16 %v816
  %v3714 = vunpack.c.h.b16 %v816
  %v3715 = vunpack.c.l.b16 %v817
  %v3716 = vunpack.c.h.b16 %v817
  %v3717 = vunpack.c.l.b16 %v818
  %v3718 = vunpack.c.h.b16 %v818
  %v3719 = vunpack.c.l.b16 %v819
  %v3720 = vunpack.c.h.b16 %v819
  %v3721 = vunpack.c.l.b16 %v820
  %v3722 = vunpack.c.h.b16 %v820
  %v3723 = vunpack.c.l.b16 %v821
  %v3724 = vunpack.c.h.b16 %v821
  %v3725 = vunpack.c.l.b16 %v822
  %v3726 = vunpack.c.h.b16 %v822
  %v3727 = vunpack.c.l.b16 %v823
  %v3728 = vunpack.c.h.b16 %v823
  %v3729 = vunpack.c.l.b16 %v824
  %v3730 = vunpack.c.h.b16 %v824
  %v3731 = vunpack.c.l.b16 %v825
  %v3732 = vunpack.c.h.b16 %v825
  %v3733 = vunpack.c.l.b16 %v826
  %v3734 = vunpack.c.h.b16 %v826
  %v3735 = vunpack.c.l.b16 %v827
  %v3736 = vunpack.c.h.b16 %v827
  %v3737 = vunpack.c.l.b16 %v828
  %v3738 = vunpack.c.h.b16 %v828
  %v3739 = vunpack.c.l.b16 %v829
  %v3740 = vunpack.c.h.b16 %v829
  %v3741 = vunpack.c.l.b16 %v830
  %v3742 = vunpack.c.h.b16 %v830
  %v3743 = vunpack.c.l.b16 %v831
  %v3744 = vunpack.c.h.b16 %v831
  %v3745 = vunpack.c.l.b16 %v832
  %v3746 = vunpack.c.h.b16 %v832
  %v3747 = vunpack.c.l.b16 %v833
  %v3748 = vunpack.c.h.b16 %v833
  %v3749 = vunpack.c.l.b16 %v834
  %v3750 = vunpack.c.h.b16 %v834
  %v3751 = vunpack.c.l.b16 %v835
  %v3752 = vunpack.c.h.b16 %v835
  %v3753 = vunpack.c.l.b16 %v836
  %v3754 = vunpack.c.h.b16 %v836
  %v3755 = vunpack.c.l.b16 %v837
  %v3756 = vunpack.c.h.b16 %v837
  %v3757 = vunpack.c.l.b16 %v838
  %v3758 = vunpack.c.h.b16 %v838
  %v3759 = vunpack.c.l.b16 %v839
  %v3760 = vunpack.c.h.b16 %v839
  %v3761 = vunpack.c.l.b16 %v840
  %v3762 = vunpack.c.h.b16 %v840
  %v3763 = vunpack.c.l.b16 %v841
  %v3764 = vunpack.c.h.b16 %v841
  %v3765 = vunpack.c.l.b16 %v842
  %v3766 = vunpack.c.h.b16 %v842
  %v3767 = vunpack.c.l.b16 %v843
  %v3768 = vunpack.c.h.b16 %v843
  %v3769 = vunpack.c.l.b16 %v844
  %v3770 = vunpack.c.h.b16 %v844
  %v3771 = vunpack.c.l.b16 %v845
  %v3772 = vunpack.c.h.b16 %v845
  %v3773 = vunpack.c.l.b16 %v846
  %v3774 = vunpack.c.h.b16 %v846
  %v3775 = vunpack.c.l.b16 %v847
  %v3776 = vunpack.c.h.b16 %v847
  %v3777 = vunpack.c.l.b16 %v848
  %v3778 = vunpack.c.h.b16 %v848
  %v3779 = vunpack.c.l.b16 %v849
  %v3780 = vunpack.c.h.b16 %v849
  %v3781 = vunpack.c.l.b16 %v850
  %v3782 = vunpack.c.h.b16 %v850
  %v3783 = vunpack.c.l.b16 %v851
  %v3784 = vunpack.c.h.b16 %v851
  %v3785 = vunpack.c.l.b16 %v852
  %v3786 = vunpack.c.h.b16 %v852
  %v3787 = vunpack.c.l.b16 %v853
  %v3788 = vunpack.c.h.b16 %v853
  %v3789 = vunpack.c.l.b16 %v854
  %v3790 = vunpack.c.h.b16 %v854
  %v3791 = vunpack.c.l.b16 %v855
  %v3792 = vunpack.c.h.b16 %v855
  %v3793 = vunpack.c.l.b16 %v856
  %v3794 = vunpack.c.h.b16 %v856
  %v3795 = vunpack.c.l.b16 %v857
  %v3796 = vunpack.c.h.b16 %v857
  %v3797 = vunpack.c.l.b16 %v858
  %v3798 = vunpack.c.h.b16 %v858
  %v3799 = vunpack.c.l.b16 %v859
  %v3800 = vunpack.c.h.b16 %v859
  %v3801 = vunpack.c.l.b16 %v860
  %v3802 = vunpack.c.h.b16 %v860
  %v3803 = vunpack.c.l.b16 %v861
  %v3804 = vunpack.c.h.b16 %v861
  %v3805 = vunpack.c.l.b16 %v862
  %v3806 = vunpack.c.h.b16 %v862
  %v3807 = vunpack.c.l.b16 %v863
  %v3808 = vunpack.c.h.b16 %v863
  %v3809 = vunpack.c.l.b16 %v864
  %v3810 = vunpack.c.h.b16 %v864
  %v3811 = vunpack.c.l.b16 %v865
  %v3812 = vunpack.c.h.b16 %v865
  %v3813 = vunpack.c.l.b16 %v866
  %v3814 = vunpack.c.h.b16 %v866
  %v3815 = vunpack.c.l.b16 %v867
  %v3816 = vunpack.c.h.b16 %v867
  %v3817 = vunpack.c.l.b16 %v868
  %v3818 = vunpack.c.h.b16 %v868
  %v3819 = vunpack.c.l.b16 %v869
  %v3820 = vunpack.c.h.b16 %v869
  %v3821 = vunpack.c.l.b16 %v870
  %v3822 = vunpack.c.h.b16 %v870
  %v3823 = vunpack.c.l.b16 %v871
  %v3824 = vunpack.c.h.b16 %v871
  %v3825 = vunpack.c.l.b16 %v872
  %v3826 = vunpack.c.h.b16 %v872
  %v3827 = vunpack.c.l.b16 %v873
  %v3828 = vunpack.c.h.b16 %v873
  %v3829 = vunpack.c.l.b16 %v874
  %v3830 = vunpack.c.h.b16 %v874
  %v3831 = vunpack.c.l.b16 %v875
  %v3832 = vunpack.c.h.b16 %v875
  %v3833 = vunpack.c.l.b16 %v876
  %v3834 = vunpack.c.h.b16 %v876
  %v3835 = vunpack.c.l.b16 %v877
  %v3836 = vunpack.c.h.b16 %v877
  %v3837 = vunpack.c.l.b16 %v878
  %v3838 = vunpack.c.h.b16 %v878
  %v3839 = vunpack.c.l.b16 %v879
  %v3840 = vunpack.c.h.b16 %v879
  %v3841 = vunpack.c.l.b16 %v880
  %v3842 = vunpack.c.h.b16 %v880
  %v3843 = vunpack.c.l.b16 %v881
  %v3844 = vunpack.c.h.b16 %v881
  %v3845 = vunpack.c.l.b16 %v882
  %v3846 = vunpack.c.h.b16 %v882
  %v3847 = vunpack.c.l.b16 %v883
  %v3848 = vunpack.c.h.b16 %v883
  %v3849 = vunpack.c.l.b16 %v884
  %v3850 = vunpack.c.h.b16 %v884
  %v3851 = vunpack.c.l.b16 %v885
  %v3852 = vunpack.c.h.b16 %v885
  %v3853 = vunpack.c.l.b16 %v886
  %v3854 = vunpack.c.h.b16 %v886
  %v3855 = vunpack.c.l.b16 %v887
  %v3856 = vunpack.c.h.b16 %v887
  %v3857 = vunpack.c.l.b16 %v888
  %v3858 = vunpack.c.h.b16 %v888
  %v3859 = vunpack.c.l.b16 %v889
  %v3860 = vunpack.c.h.b16 %v889
  %v3861 = vunpack.c.l.b16 %v890
  %v3862 = vunpack.c.h.b16 %v890
  %v3863 = vunpack.c.l.b16 %v891
  %v3864 = vunpack.c.h.b16 %v891
  %v3865 = vunpack.c.l.b16 %v892
  %v3866 = vunpack.c.h.b16 %v892
  %v3867 = vunpack.c.l.b16 %v893
  %v3868 = vunpack.c.h.b16 %v893
  %v3869 = vunpack.c.l.b16 %v894
  %v3870 = vunpack.c.h.b16 %v894
  %v3871 = vunpack.c.l.b16 %v895
  %v3872 = vunpack.c.h.b16 %v895
  %v3873 = vunpack.c.l.b16 %v896
  %v3874 = vunpack.c.h.b16 %v896
  %v3875 = vunpack.c.l.b16 %v897
  %v3876 = vunpack.c.h.b16 %v897
  %v3877 = vunpack.c.l.b16 %v898
  %v3878 = vunpack.c.h.b16 %v898
  %v3879 = vunpack.c.l.b16 %v899
  %v3880 = vunpack.c.h.b16 %v899
  %v3881 = vunpack.c.l.b16 %v900
  %v3882 = vunpack.c.h.b16 %v900
  %v3883 = vunpack.c.l.b16 %v901
  %v3884 = vunpack.c.h.b16 %v901
  %v3885 = vunpack.c.l.b16 %v902
  %v3886 = vunpack.c.h.b16 %v902
  %v3887 = vunpack.c.l.b16 %v903
  %v3888 = vunpack.c.h.b16 %v903
  %v3889 = vunpack.c.l.b16 %v904
  %v3890 = vunpack.c.h.b16 %v904
  %v3891 = vunpack.c.l.b16 %v905
  %v3892 = vunpack.c.h.b16 %v905
  %v3893 = vunpack.c.l.b16 %v906
  %v3894 = vunpack.c.h.b16 %v906
  %v3895 = vunpack.c.l.b16 %v907
  %v3896 = vunpack.c.h.b16 %v907
  %v3897 = vunpack.c.l.b16 %v908
  %v3898 = vunpack.c.h.b16 %v908
  %v3899 = vunpack.c.l.b16 %v909
  %v3900 = vunpack.c.h.b16 %v909
  %v3901 = vunpack.c.l.b16 %v910
  %v3902 = vunpack.c.h.b16 %v910
  %v3903 = vunpack.c.l.b16 %v911
  %v3904 = vunpack.c.h.b16 %v911
  %v3905 = vunpack.c.l.b16 %v912
  %v3906 = vunpack.c.h.b16 %v912
  %v3907 = vunpack.c.l.b16 %v913
  %v3908 = vunpack.c.h.b16 %v913
  %v3909 = vunpack.c.l.b16 %v914
  %v3910 = vunpack.c.h.b16 %v914
  %v3911 = vunpack.c.l.b16 %v915
  %v3912 = vunpack.c.h.b16 %v915
  %v3913 = vunpack.c.l.b16 %v916
  %v3914 = vunpack.c.h.b16 %v916
  %v3915 = vunpack.c.l.b16 %v917
  %v3916 = vunpack.c.h.b16 %v917
  %v3917 = vunpack.c.l.b16 %v918
  %v3918 = vunpack.c.h.b16 %v918
  %v3919 = vunpack.c.l.b16 %v919
  %v3920 = vunpack.c.h.b16 %v919
  %v3921 = vunpack.c.l.b16 %v920
  %v3922 = vunpack.c.h.b16 %v920
  %v3923 = vunpack.c.l.b16 %v921
  %v3924 = vunpack.c.h.b16 %v921
  %v3925 = vunpack.c.l.b16 %v922
  %v3926 = vunpack.c.h.b16 %v922
  %v3927 = vunpack.c.l.b16 %v923
  %v3928 = vunpack.c.h.b16 %v923
  %v3929 = vunpack.c.l.b16 %v924
  %v3930 = vunpack.c.h.b16 %v924
  %v3931 = vunpack.c.l.b16 %v925
  %v3932 = vunpack.c.h.b16 %v925
  %v3933 = vunpack.c.l.b16 %v926
  %v3934 = vunpack.c.h.b16 %v926
  %v3935 = vunpack.c.l.b16 %v927
  %v3936 = vunpack.c.h.b16 %v927
  %v3937 = vunpack.c.l.b16 %v928
  %v3938 = vunpack.c.h.b16 %v928
  %v3939 = vunpack.c.l.b16 %v929
  %v3940 = vunpack.c.h.b16 %v929
  %v3941 = vunpack.c.l.b16 %v930
  %v3942 = vunpack.c.h.b16 %v930
  %v3943 = vunpack.c.l.b16 %v931
  %v3944 = vunpack.c.h.b16 %v931
  %v3945 = vunpack.c.l.b16 %v932
  %v3946 = vunpack.c.h.b16 %v932
  %v3947 = vunpack.c.l.b16 %v933
  %v3948 = vunpack.c.h.b16 %v933
  %v3949 = vunpack.c.l.b16 %v934
  %v3950 = vunpack.c.h.b16 %v934
  %v3951 = vunpack.c.l.b16 %v935
  %v3952 = vunpack.c.h.b16 %v935
  %v3953 = vunpack.c.l.b16 %v936
  %v3954 = vunpack.c.h.b16 %v936
  %v3955 = vunpack.c.l.b16 %v937
  %v3956 = vunpack.c.h.b16 %v937
  %v3957 = vunpack.c.l.b16 %v938
  %v3958 = vunpack.c.h.b16 %v938
  %v3959 = vunpack.c.l.b16 %v939
  %v3960 = vunpack.c.h.b16 %v939
  %v3961 = vunpack.c.l.b16 %v940
  %v3962 = vunpack.c.h.b16 %v940
  %v3963 = vunpack.c.l.b16 %v941
  %v3964 = vunpack.c.h.b16 %v941
  %v3965 = vunpack.c.l.b16 %v942
  %v3966 = vunpack.c.h.b16 %v942
  %v3967 = vunpack.c.l.b16 %v943
  %v3968 = vunpack.c.h.b16 %v943
  %v3969 = vunpack.c.l.b16 %v944
  %v3970 = vunpack.c.h.b16 %v944
  %v3971 = vunpack.c.l.b16 %v945
  %v3972 = vunpack.c.h.b16 %v945
  %v3973 = vunpack.c.l.b16 %v946
  %v3974 = vunpack.c.h.b16 %v946
  %v3975 = vunpack.c.l.b16 %v947
  %v3976 = vunpack.c.h.b16 %v947
  %v3977 = vunpack.c.l.b16 %v948
  %v3978 = vunpack.c.h.b16 %v948
  %v3979 = vunpack.c.l.b16 %v949
  %v3980 = vunpack.c.h.b16 %v949
  %v3981 = vunpack.c.l.b16 %v950
  %v3982 = vunpack.c.h.b16 %v950
  %v3983 = vunpack.c.l.b16 %v951
  %v3984 = vunpack.c.h.b16 %v951
  %v3985 = vunpack.c.l.b16 %v952
  %v3986 = vunpack.c.h.b16 %v952
  %v3987 = vunpack.c.l.b16 %v953
  %v3988 = vunpack.c.h.b16 %v953
  %v3989 = vunpack.c.l.b16 %v954
  %v3990 = vunpack.c.h.b16 %v954
  %v3991 = vunpack.c.l.b16 %v955
  %v3992 = vunpack.c.h.b16 %v955
  %v3993 = vunpack.c.l.b16 %v956
  %v3994 = vunpack.c.h.b16 %v956
  %v3995 = vunpack.c.l.b16 %v957
  %v3996 = vunpack.c.h.b16 %v957
  %v3997 = vunpack.c.l.b16 %v958
  %v3998 = vunpack.c.h.b16 %v958
  %v3999 = vunpack.c.l.b16 %v959
  %v4000 = vunpack.c.h.b16 %v959
  %v4001 = vunpack.c.l.b16 %v960
  %v4002 = vunpack.c.h.b16 %v960
  %v4003 = vunpack.c.l.b16 %v961
  %v4004 = vunpack.c.h.b16 %v961
  %v4005 = vunpack.c.l.b16 %v962
  %v4006 = vunpack.c.h.b16 %v962
  %v4007 = vunpack.c.l.b16 %v963
  %v4008 = vunpack.c.h.b16 %v963
  %v4009 = vunpack.c.l.b16 %v964
  %v4010 = vunpack.c.h.b16 %v964
  %v4011 = vunpack.c.l.b16 %v965
  %v4012 = vunpack.c.h.b16 %v965
  %v4013 = vunpack.c.l.b16 %v966
  %v4014 = vunpack.c.h.b16 %v966
  %v4015 = vunpack.c.l.b16 %v967
  %v4016 = vunpack.c.h.b16 %v967
  %v4017 = vunpack.c.l.b16 %v968
  %v4018 = vunpack.c.h.b16 %v968
  %v4019 = vunpack.c.l.b16 %v969
  %v4020 = vunpack.c.h.b16 %v969
  %v4021 = vunpack.c.l.b16 %v970
  %v4022 = vunpack.c.h.b16 %v970
  %v4023 = vunpack.c.l.b16 %v971
  %v4024 = vunpack.c.h.b16 %v971
  %v4025 = vunpack.c.l.b16 %v972
  %v4026 = vunpack.c.h.b16 %v972
  %v4027 = vunpack.c.l.b16 %v973
  %v4028 = vunpack.c.h.b16 %v973
  %v4029 = vunpack.c.l.b16 %v974
  %v4030 = vunpack.c.h.b16 %v974
  %v4031 = vunpack.c.l.b16 %v975
  %v4032 = vunpack.c.h.b16 %v975
  %v4033 = vunpack.c.l.b16 %v976
  %v4034 = vunpack.c.h.b16 %v976
  %v4035 = vunpack.c.l.b16 %v977
  %v4036 = vunpack.c.h.b16 %v977
  %v4037 = vunpack.c.l.b16 %v978
  %v4038 = vunpack.c.h.b16 %v978
  %v4039 = vunpack.c.l.b16 %v979
  %v4040 = vunpack.c.h.b16 %v979
  %v4041 = vunpack.c.l.b16 %v980
  %v4042 = vunpack.c.h.b16 %v980
  %v4043 = vunpack.c.l.b16 %v981
  %v4044 = vunpack.c.h.b16 %v981
  %v4045 = vunpack.c.l.b16 %v982
  %v4046 = vunpack.c.h.b16 %v982
  %v4047 = vunpack.c.l.b16 %v983
  %v4048 = vunpack.c.h.b16 %v983
  %v4049 = vunpack.c.l.b16 %v984
  %v4050 = vunpack.c.h.b16 %v984
  %v4051 = vunpack.c.l.b16 %v985
  %v4052 = vunpack.c.h.b16 %v985
  %v4053 = vunpack.c.l.b16 %v986
  %v4054 = vunpack.c.h.b16 %v986
  %v4055 = vunpack.c.l.b16 %v987
  %v4056 = vunpack.c.h.b16 %v987
  %v4057 = vunpack.c.l.b16 %v988
  %v4058 = vunpack.c.h.b16 %v988
  %v4059 = vunpack.c.l.b16 %v989
  %v4060 = vunpack.c.h.b16 %v989
  %v4061 = vunpack.c.l.b16 %v990
  %v4062 = vunpack.c.h.b16 %v990
  %v4063 = vunpack.c.l.b16 %v991
  %v4064 = vunpack.c.h.b16 %v991
  %v4065 = vunpack.c.l.b16 %v992
  %v4066 = vunpack.c.h.b16 %v992
  %v4067 = vunpack.c.l.b16 %v993
  %v4068 = vunpack.c.h.b16 %v993
  %v4069 = vunpack.c.l.b16 %v994
  %v4070 = vunpack.c.h.b16 %v994
  %v4071 = vunpack.c.l.b16 %v995
  %v4072 = vunpack.c.h.b16 %v995
  %v4073 = vunpack.c.l.b16 %v996
  %v4074 = vunpack.c.h.b16 %v996
  %v4075 = vunpack.c.l.b16 %v997
  %v4076 = vunpack.c.h.b16 %v997
  %v4077 = vunpack.c.l.b16 %v998
  %v4078 = vunpack.c.h.b16 %v998
  %v4079 = vunpack.c.l.b16 %v999
  %v4080 = vunpack.c.h.b16 %v999
  %v4081 = vunpack.c.l.b16 %v1000
  %v4082 = vunpack.c.h.b16 %v1000
  %v4083 = vunpack.c.l.b16 %v1001
  %v4084 = vunpack.c.h.b16 %v1001
  %v4085 = vunpack.c.l.b16 %v1002
  %v4086 = vunpack.c.h.b16 %v1002
  %v4087 = vunpack.c.l.b16 %v1003
  %v4088 = vunpack.c.h.b16 %v1003
  %v4089 = vunpack.c.l.b16 %v1004
  %v4090 = vunpack.c.h.b16 %v1004
  %v4091 = vunpack.c.l.b16 %v1005
  %v4092 = vunpack.c.h.b16 %v1005
  %v4093 = vunpack.c.l.b16 %v1006
  %v4094 = vunpack.c.h.b16 %v1006
  %v4095 = vunpack.c.l.b16 %v1007
  %v4096 = vunpack.c.h.b16 %v1007
  %v4097 = vunpack.c.l.b16 %v1008
  %v4098 = vunpack.c.h.b16 %v1008
  %v4099 = vunpack.c.l.b16 %v1009
  %v4100 = vunpack.c.h.b16 %v1009
  %v4101 = vunpack.c.l.b16 %v1010
  %v4102 = vunpack.c.h.b16 %v1010
  %v4103 = vunpack.c.l.b16 %v1011
  %v4104 = vunpack.c.h.b16 %v1011
  %v4105 = vunpack.c.l.b16 %v1012
  %v4106 = vunpack.c.h.b16 %v1012
  %v4107 = vunpack.c.l.b16 %v1013
  %v4108 = vunpack.c.h.b16 %v1013
  %v4109 = vunpack.c.l.b16 %v1014
  %v4110 = vunpack.c.h.b16 %v1014
  %v4111 = vunpack.c.l.b16 %v1015
  %v4112 = vunpack.c.h.b16 %v1015
  %v4113 = vunpack.c.l.b16 %v1016
  %v4114 = vunpack.c.h.b16 %v1016
  %v4115 = vunpack.c.l.b16 %v1017
  %v4116 = vunpack.c.h.b16 %v1017
  %v4117 = vunpack.c.l.b16 %v1018
  %v4118 = vunpack.c.h.b16 %v1018
  %v4119 = vunpack.c.l.b16 %v1019
  %v4120 = vunpack.c.h.b16 %v1019
  %v4121 = vunpack.c.l.b16 %v1020
  %v4122 = vunpack.c.h.b16 %v1020
  %v4123 = vunpack.c.l.b16 %v1021
  %v4124 = vunpack.c.h.b16 %v1021
  %v4125 = vunpack.c.l.b16 %v1022
  %v4126 = vunpack.c.h.b16 %v1022
  %v4127 = vunpack.c.l.b16 %v1023
  %v4128 = vunpack.c.h.b16 %v1023
  %v4129 = vunpack.c.l.b16 %v1024
  %v4130 = vunpack.c.h.b16 %v1024
  %v4131 = vunpack.c.l.b16 %v1025
  %v4132 = vunpack.c.h.b16 %v1025
  %v4133 = vunpack.c.l.b16 %v1026
  %v4134 = vunpack.c.h.b16 %v1026
  %v4135 = vunpack.c.l.b16 %v1027
  %v4136 = vunpack.c.h.b16 %v1027
  %v4137 = vunpack.c.l.b16 %v1028
  %v4138 = vunpack.c.h.b16 %v1028
  %v4139 = vunpack.c.l.b16 %v1029
  %v4140 = vunpack.c.h.b16 %v1029
  %v4141 = vunpack.c.l.b16 %v1030
  %v4142 = vunpack.c.h.b16 %v1030
  %v4143 = vpack.c.b16 %v2271, %v2267
  %v4144 = vpack.c.b16 %v2272, %v2268
  %v4145 = vpack.c.b16 %v2273, %v2269
  %v4146 = vpack.c.b16 %v2274, %v2270
  %v4147 = vpack.c.b16 %v2279, %v2275
  %v4148 = vpack.c.b16 %v2280, %v2276
  %v4149 = vpack.c.b16 %v2281, %v2277
  %v4150 = vpack.c.b16 %v2282, %v2278
  %v4151 = vpack.c.b16 %v2287, %v2283
  %v4152 = vpack.c.b16 %v2288, %v2284
  %v4153 = vpack.c.b16 %v2289, %v2285
  %v4154 = vpack.c.b16 %v2290, %v2286
  %v4155 = vpack.c.b16 %v2295, %v2291
  %v4156 = vpack.c.b16 %v2296, %v2292
  %v4157 = vpack.c.b16 %v2297, %v2293
  %v4158 = vpack.c.b16 %v2298, %v2294
  %v4159 = vpack.c.b16 %v2303, %v2299
  %v4160 = vpack.c.b16 %v2304, %v2300
  %v4161 = vpack.c.b16 %v2305, %v2301
  %v4162 = vpack.c.b16 %v2306, %v2302
  %v4163 = vpack.c.b16 %v2311, %v2307
  %v4164 = vpack.c.b16 %v2312, %v2308
  %v4165 = vpack.c.b16 %v2313, %v2309
  %v4166 = vpack.c.b16 %v2314, %v2310
  %v4167 = vpack.c.b16 %v2319, %v2315
  %v4168 = vpack.c.b16 %v2320, %v2316
  %v4169 = vpack.c.b16 %v2321, %v2317
  %v4170 = vpack.c.b16 %v2322, %v2318
  %v4171 = vpack.c.b16 %v2327, %v2323
  %v4172 = vpack.c.b16 %v2328, %v2324
  %v4173 = vpack.c.b16 %v2329, %v2325
  %v4174 = vpack.c.b16 %v2330, %v2326
  %v4175 = vpack.c.b16 %v2335, %v2331
  %v4176 = vpack.c.b16 %v2336, %v2332
  %v4177 = vpack.c.b16 %v2337, %v2333
  %v4178 = vpack.c.b16 %v2338, %v2334
  %v4179 = vpack.c.b16 %v2343, %v2339
  %v4180 = vpack.c.b16 %v2344, %v2340
  %v4181 = vpack.c.b16 %v2345, %v2341
  %v4182 = vpack.c.b16 %v2346, %v2342
  %v4183 = vpack.c.b16 %v2351, %v2347
  %v4184 = vpack.c.b16 %v2352, %v2348
  %v4185 = vpack.c.b16 %v2353, %v2349
  %v4186 = vpack.c.b16 %v2354, %v2350
  %v4187 = vpack.c.b16 %v2359, %v2355
  %v4188 = vpack.c.b16 %v2360, %v2356
  %v4189 = vpack.c.b16 %v2361, %v2357
  %v4190 = vpack.c.b16 %v2362, %v2358
  %v4191 = vpack.c.b16 %v2367, %v2363
  %v4192 = vpack.c.b16 %v2368, %v2364
  %v4193 = vpack.c.b16 %v2369, %v2365
  %v4194 = vpack.c.b16 %v2370, %v2366
  %v4195 = vpack.c.b16 %v2375, %v2371
  %v4196 = vpack.c.b16 %v2376, %v2372
  %v4197 = vpack.c.b16 %v2377, %v2373
  %v4198 = vpack.c.b16 %v2378, %v2374
  %v4199 = vpack.c.b16 %v2383, %v2379
  %v4200 = vpack.c.b16 %v2384, %v2380
  %v4201 = vpack.c.b16 %v2385, %v2381
  %v4202 = vpack.c.b16 %v2386, %v2382
  %v4203 = vpack.c.b16 %v2391, %v2387
  %v4204 = vpack.c.b16 %v2392, %v2388
  %v4205 = vpack.c.b16 %v2393, %v2389
  %v4206 = vpack.c.b16 %v2394, %v2390
  %v4207 = vpack.c.b16 %v2399, %v2395
  %v4208 = vpack.c.b16 %v2400, %v2396
  %v4209 = vpack.c.b16 %v2401, %v2397
  %v4210 = vpack.c.b16 %v2402, %v2398
  %v4211 = vpack.c.b16 %v2407, %v2403
  %v4212 = vpack.c.b16 %v2408, %v2404
  %v4213 = vpack.c.b16 %v2409, %v2405
  %v4214 = vpack.c.b16 %v2410, %v2406
  %v4215 = vpack.c.b16 %v2415, %v2411
  %v4216 = vpack.c.b16 %v2416, %v2412
  %v4217 = vpack.c.b16 %v2417, %v2413
  %v4218 = vpack.c.b16 %v2418, %v2414
  %v4219 = vpack.c.b16 %v2423, %v2419
  %v4220 = vpack.c.b16 %v2424, %v2420
  %v4221 = vpack.c.b16 %v2425, %v2421
  %v4222 = vpack.c.b16 %v2426, %v2422
  %v4223 = vpack.c.b16 %v2431, %v2427
  %v4224 = vpack.c.b16 %v2432, %v2428
  %v4225 = vpack.c.b16 %v2433, %v2429
  %v4226 = vpack.c.b16 %v2434, %v2430
  %v4227 = vpack.c.b16 %v2439, %v2435
  %v4228 = vpack.c.b16 %v2440, %v2436
  %v4229 = vpack.c.b16 %v2441, %v2437
  %v4230 = vpack.c.b16 %v2442, %v2438
  %v4231 = vpack.c.b16 %v2447, %v2443
  %v4232 = vpack.c.b16 %v2448, %v2444
  %v4233 = vpack.c.b16 %v2449, %v2445
  %v4234 = vpack.c.b16 %v2450, %v2446
  %v4235 = vpack.c.b16 %v2455, %v2451
  %v4236 = vpack.c.b16 %v2456, %v2452
  %v4237 = vpack.c.b16 %v2457, %v2453
  %v4238 = vpack.c.b16 %v2458, %v2454
  %v4239 = vpack.c.b16 %v2463, %v2459
  %v4240 = vpack.c.b16 %v2464, %v2460
  %v4241 = vpack.c.b16 %v2465, %v2461
  %v4242 = vpack.c.b16 %v2466, %v2462
  %v4243 = vpack.c.b16 %v2471, %v2467
  %v4244 = vpack.c.b16 %v2472, %v2468
  %v4245 = vpack.c.b16 %v2473, %v2469
  %v4246 = vpack.c.b16 %v2474, %v2470
  %v4247 = vpack.c.b16 %v2479, %v2475
  %v4248 = vpack.c.b16 %v2480, %v2476
  %v4249 = vpack.c.b16 %v2481, %v2477
  %v4250 = vpack.c.b16 %v2482, %v2478
  %v4251 = vpack.c.b16 %v2487, %v2483
  %v4252 = vpack.c.b16 %v2488, %v2484
  %v4253 = vpack.c.b16 %v2489, %v2485
  %v4254 = vpack.c.b16 %v2490, %v2486
  %v4255 = vpack.c.b16 %v2495, %v2491
  %v4256 = vpack.c.b16 %v2496, %v2492
  %v4257 = vpack.c.b16 %v2497, %v2493
  %v4258 = vpack.c.b16 %v2498, %v2494
  %v4259 = vpack.c.b16 %v2503, %v2499
  %v4260 = vpack.c.b16 %v2504, %v2500
  %v4261 = vpack.c.b16 %v2505, %v2501
  %v4262 = vpack.c.b16 %v2506, %v2502
  %v4263 = vpack.c.b16 %v2511, %v2507
  %v4264 = vpack.c.b16 %v2512, %v2508
  %v4265 = vpack.c.b16 %v2513, %v2509
  %v4266 = vpack.c.b16 %v2514, %v2510
  %v4267 = vpack.c.b16 %v2519, %v2515
  %v4268 = vpack.c.b16 %v2520, %v2516
  %v4269 = vpack.c.b16 %v2521, %v2517
  %v4270 = vpack.c.b16 %v2522, %v2518
  %v4271 = vpack.c.b16 %v2527, %v2523
  %v4272 = vpack.c.b16 %v2528, %v2524
  %v4273 = vpack.c.b16 %v2529, %v2525
  %v4274 = vpack.c.b16 %v2530, %v2526
  %v4275 = vpack.c.b16 %v2535, %v2531
  %v4276 = vpack.c.b16 %v2536, %v2532
  %v4277 = vpack.c.b16 %v2537, %v2533
  %v4278 = vpack.c.b16 %v2538, %v2534
  %v4279 = vpack.c.b16 %v2543, %v2539
  %v4280 = vpack.c.b16 %v2544, %v2540
  %v4281 = vpack.c.b16 %v2545, %v2541
  %v4282 = vpack.c.b16 %v2546, %v2542
  %v4283 = vpack.c.b16 %v2551, %v2547
  %v4284 = vpack.c.b16 %v2552, %v2548
  %v4285 = vpack.c.b16 %v2553, %v2549
  %v4286 = vpack.c.b16 %v2554, %v2550
  %v4287 = vpack.c.b16 %v2559, %v2555
  %v4288 = vpack.c.b16 %v2560, %v2556
  %v4289 = vpack.c.b16 %v2561, %v2557
  %v4290 = vpack.c.b16 %v2562, %v2558
  %v4291 = vpack.c.b16 %v2567, %v2563
  %v4292 = vpack.c.b16 %v2568, %v2564
  %v4293 = vpack.c.b16 %v2569, %v2565
  %v4294 = vpack.c.b16 %v2570, %v2566
  %v4295 = vpack.c.b16 %v2575, %v2571
  %v4296 = vpack.c.b16 %v2576, %v2572
  %v4297 = vpack.c.b16 %v2577, %v2573
  %v4298 = vpack.c.b16 %v2578, %v2574
  %v4299 = vpack.c.b16 %v2583, %v2579
  %v4300 = vpack.c.b16 %v2584, %v2580
  %v4301 = vpack.c.b16 %v2585, %v2581
  %v4302 = vpack.c.b16 %v2586, %v2582
  %v4303 = vpack.c.b16 %v2591, %v2587
  %v4304 = vpack.c.b16 %v2592, %v2588
  %v4305 = vpack.c.b16 %v2593, %v2589
  %v4306 = vpack.c.b16 %v2594, %v2590
  %v4307 = vpack.c.b16 %v2599, %v2595
  %v4308 = vpack.c.b16 %v2600, %v2596
  %v4309 = vpack.c.b16 %v2601, %v2597
  %v4310 = vpack.c.b16 %v2602, %v2598
  %v4311 = vpack.c.b16 %v2607, %v2603
  %v4312 = vpack.c.b16 %v2608, %v2604
  %v4313 = vpack.c.b16 %v2609, %v2605
  %v4314 = vpack.c.b16 %v2610, %v2606
  %v4315 = vpack.c.b16 %v2615, %v2611
  %v4316 = vpack.c.b16 %v2616, %v2612
  %v4317 = vpack.c.b16 %v2617, %v2613
  %v4318 = vpack.c.b16 %v2618, %v2614
  %v4319 = vpack.c.b16 %v2623, %v2619
  %v4320 = vpack.c.b16 %v2624, %v2620
  %v4321 = vpack.c.b16 %v2625, %v2621
  %v4322 = vpack.c.b16 %v2626, %v2622
  %v4323 = vpack.c.b16 %v2631, %v2627
  %v4324 = vpack.c.b16 %v2632, %v2628
  %v4325 = vpack.c.b16 %v2633, %v2629
  %v4326 = vpack.c.b16 %v2634, %v2630
  %v4327 = vpack.c.b16 %v2639, %v2635
  %v4328 = vpack.c.b16 %v2640, %v2636
  %v4329 = vpack.c.b16 %v2641, %v2637
  %v4330 = vpack.c.b16 %v2642, %v2638
  %v4331 = vpack.c.b16 %v2647, %v2643
  %v4332 = vpack.c.b16 %v2648, %v2644
  %v4333 = vpack.c.b16 %v2649, %v2645
  %v4334 = vpack.c.b16 %v2650, %v2646
  %v4335 = vpack.c.b16 %v2655, %v2651
  %v4336 = vpack.c.b16 %v2656, %v2652
  %v4337 = vpack.c.b16 %v2657, %v2653
  %v4338 = vpack.c.b16 %v2658, %v2654
  %v4339 = vpack.c.b16 %v2663, %v2659
  %v4340 = vpack.c.b16 %v2664, %v2660
  %v4341 = vpack.c.b16 %v2665, %v2661
  %v4342 = vpack.c.b16 %v2666, %v2662
  %v4343 = vpack.c.b16 %v2671, %v2667
  %v4344 = vpack.c.b16 %v2672, %v2668
  %v4345 = vpack.c.b16 %v2673, %v2669
  %v4346 = vpack.c.b16 %v2674, %v2670
  %v4347 = vpack.c.b16 %v2679, %v2675
  %v4348 = vpack.c.b16 %v2680, %v2676
  %v4349 = vpack.c.b16 %v2681, %v2677
  %v4350 = vpack.c.b16 %v2682, %v2678
  %v4351 = vpack.c.b16 %v2687, %v2683
  %v4352 = vpack.c.b16 %v2688, %v2684
  %v4353 = vpack.c.b16 %v2689, %v2685
  %v4354 = vpack.c.b16 %v2690, %v2686
  %v4355 = vpack.c.b16 %v2695, %v2691
  %v4356 = vpack.c.b16 %v2696, %v2692
  %v4357 = vpack.c.b16 %v2697, %v2693
  %v4358 = vpack.c.b16 %v2698, %v2694
  %v4359 = vpack.c.b16 %v2703, %v2699
  %v4360 = vpack.c.b16 %v2704, %v2700
  %v4361 = vpack.c.b16 %v2705, %v2701
  %v4362 = vpack.c.b16 %v2706, %v2702
  %v4363 = vpack.c.b16 %v2711, %v2707
  %v4364 = vpack.c.b16 %v2712, %v2708
  %v4365 = vpack.c.b16 %v2713, %v2709
  %v4366 = vpack.c.b16 %v2714, %v2710
  %v4367 = vpack.c.b16 %v2719, %v2715
  %v4368 = vpack.c.b16 %v2720, %v2716
  %v4369 = vpack.c.b16 %v2721, %v2717
  %v4370 = vpack.c.b16 %v2722, %v2718
  %v4371 = vpack.c.b16 %v2727, %v2723
  %v4372 = vpack.c.b16 %v2728, %v2724
  %v4373 = vpack.c.b16 %v2729, %v2725
  %v4374 = vpack.c.b16 %v2730, %v2726
  %v4375 = vpack.c.b16 %v2735, %v2731
  %v4376 = vpack.c.b16 %v2736, %v2732
  %v4377 = vpack.c.b16 %v2737, %v2733
  %v4378 = vpack.c.b16 %v2738, %v2734
  %v4379 = vpack.c.b16 %v2743, %v2739
  %v4380 = vpack.c.b16 %v2744, %v2740
  %v4381 = vpack.c.b16 %v2745, %v2741
  %v4382 = vpack.c.b16 %v2746, %v2742
  %v4383 = vpack.c.b16 %v2751, %v2747
  %v4384 = vpack.c.b16 %v2752, %v2748
  %v4385 = vpack.c.b16 %v2753, %v2749
  %v4386 = vpack.c.b16 %v2754, %v2750
  %v4387 = vpack.c.b16 %v2759, %v2755
  %v4388 = vpack.c.b16 %v2760, %v2756
  %v4389 = vpack.c.b16 %v2761, %v2757
  %v4390 = vpack.c.b16 %v2762, %v2758
  %v4391 = vpack.c.b16 %v2767, %v2763
  %v4392 = vpack.c.b16 %v2768, %v2764
  %v4393 = vpack.c.b16 %v2769, %v2765
  %v4394 = vpack.c.b16 %v2770, %v2766
  %v4395 = vpack.c.b16 %v2775, %v2771
  %v4396 = vpack.c.b16 %v2776, %v2772
  %v4397 = vpack.c.b16 %v2777, %v2773
  %v4398 = vpack.c.b16 %v2778, %v2774
  %v4399 = vpack.c.b16 %v2783, %v2779
  %v4400 = vpack.c.b16 %v2784, %v2780
  %v4401 = vpack.c.b16 %v2785, %v2781
  %v4402 = vpack.c.b16 %v2786, %v2782
  %v4403 = vpack.c.b16 %v2791, %v2787
  %v4404 = vpack.c.b16 %v2792, %v2788
  %v4405 = vpack.c.b16 %v2793, %v2789
  %v4406 = vpack.c.b16 %v2794, %v2790
  %v4407 = vpack.c.b16 %v2799, %v2795
  %v4408 = vpack.c.b16 %v2800, %v2796
  %v4409 = vpack.c.b16 %v2801, %v2797
  %v4410 = vpack.c.b16 %v2802, %v2798
  %v4411 = vpack.c.b16 %v2807, %v2803
  %v4412 = vpack.c.b16 %v2808, %v2804
  %v4413 = vpack.c.b16 %v2809, %v2805
  %v4414 = vpack.c.b16 %v2810, %v2806
  %v4415 = vpack.c.b16 %v2815, %v2811
  %v4416 = vpack.c.b16 %v2816, %v2812
  %v4417 = vpack.c.b16 %v2817, %v2813
  %v4418 = vpack.c.b16 %v2818, %v2814
  %v4419 = vpack.c.b16 %v2823, %v2819
  %v4420 = vpack.c.b16 %v2824, %v2820
  %v4421 = vpack.c.b16 %v2825, %v2821
  %v4422 = vpack.c.b16 %v2826, %v2822
  %v4423 = vpack.c.b16 %v2831, %v2827
  %v4424 = vpack.c.b16 %v2832, %v2828
  %v4425 = vpack.c.b16 %v2833, %v2829
  %v4426 = vpack.c.b16 %v2834, %v2830
  %v4427 = vpack.c.b16 %v2839, %v2835
  %v4428 = vpack.c.b16 %v2840, %v2836
  %v4429 = vpack.c.b16 %v2841, %v2837
  %v4430 = vpack.c.b16 %v2842, %v2838
  %v4431 = vpack.c.b16 %v2847, %v2843
  %v4432 = vpack.c.b16 %v2848, %v2844
  %v4433 = vpack.c.b16 %v2849, %v2845
  %v4434 = vpack.c.b16 %v2850, %v2846
  %v4435 = vpack.c.b16 %v2855, %v2851
  %v4436 = vpack.c.b16 %v2856, %v2852
  %v4437 = vpack.c.b16 %v2857, %v2853
  %v4438 = vpack.c.b16 %v2858, %v2854
  %v4439 = vpack.c.b16 %v2863, %v2859
  %v4440 = vpack.c.b16 %v2864, %v2860
  %v4441 = vpack.c.b16 %v2865, %v2861
  %v4442 = vpack.c.b16 %v2866, %v2862
  %v4443 = vpack.c.b16 %v2871, %v2867
  %v4444 = vpack.c.b16 %v2872, %v2868
  %v4445 = vpack.c.b16 %v2873, %v2869
  %v4446 = vpack.c.b16 %v2874, %v2870
  %v4447 = vpack.c.b16 %v2879, %v2875
  %v4448 = vpack.c.b16 %v2880, %v2876
  %v4449 = vpack.c.b16 %v2881, %v2877
  %v4450 = vpack.c.b16 %v2882, %v2878
  %v4451 = vpack.c.b16 %v2887, %v2883
  %v4452 = vpack.c.b16 %v2888, %v2884
  %v4453 = vpack.c.b16 %v2889, %v2885
  %v4454 = vpack.c.b16 %v2890, %v2886
  %v4455 = vpack.c.b16 %v2895, %v2891
  %v4456 = vpack.c.b16 %v2896, %v2892
  %v4457 = vpack.c.b16 %v2897, %v2893
  %v4458 = vpack.c.b16 %v2898, %v2894
  %v4459 = vpack.c.b16 %v2903, %v2899
  %v4460 = vpack.c.b16 %v2904, %v2900
  %v4461 = vpack.c.b16 %v2905, %v2901
  %v4462 = vpack.c.b16 %v2906, %v2902
  %v4463 = vpack.c.b16 %v2911, %v2907
  %v4464 = vpack.c.b16 %v2912, %v2908
  %v4465 = vpack.c.b16 %v2913, %v2909
  %v4466 = vpack.c.b16 %v2914, %v2910
  %v4467 = vpack.c.b16 %v2919, %v2915
  %v4468 = vpack.c.b16 %v2920, %v2916
  %v4469 = vpack.c.b16 %v2921, %v2917
  %v4470 = vpack.c.b16 %v2922, %v2918
  %v4471 = vpack.c.b16 %v2927, %v2923
  %v4472 = vpack.c.b16 %v2928, %v2924
  %v4473 = vpack.c.b16 %v2929, %v2925
  %v4474 = vpack.c.b16 %v2930, %v2926
  %v4475 = vpack.c.b16 %v2935, %v2931
  %v4476 = vpack.c.b16 %v2936, %v2932
  %v4477 = vpack.c.b16 %v2937, %v2933
  %v4478 = vpack.c.b16 %v2938, %v2934
  %v4479 = vpack.c.b16 %v2943, %v2939
  %v4480 = vpack.c.b16 %v2944, %v2940
  %v4481 = vpack.c.b16 %v2945, %v2941
  %v4482 = vpack.c.b16 %v2946, %v2942
  %v4483 = vpack.c.b16 %v2951, %v2947
  %v4484 = vpack.c.b16 %v2952, %v2948
  %v4485 = vpack.c.b16 %v2953, %v2949
  %v4486 = vpack.c.b16 %v2954, %v2950
  %v4487 = vpack.c.b16 %v2959, %v2955
  %v4488 = vpack.c.b16 %v2960, %v2956
  %v4489 = vpack.c.b16 %v2961, %v2957
  %v4490 = vpack.c.b16 %v2962, %v2958
  %v4491 = vpack.c.b16 %v2967, %v2963
  %v4492 = vpack.c.b16 %v2968, %v2964
  %v4493 = vpack.c.b16 %v2969, %v2965
  %v4494 = vpack.c.b16 %v2970, %v2966
  %v4495 = vpack.c.b16 %v2975, %v2971
  %v4496 = vpack.c.b16 %v2976, %v2972
  %v4497 = vpack.c.b16 %v2977, %v2973
  %v4498 = vpack.c.b16 %v2978, %v2974
  %v4499 = vpack.c.b16 %v2983, %v2979
  %v4500 = vpack.c.b16 %v2984, %v2980
  %v4501 = vpack.c.b16 %v2985, %v2981
  %v4502 = vpack.c.b16 %v2986, %v2982
  %v4503 = vpack.c.b16 %v2991, %v2987
  %v4504 = vpack.c.b16 %v2992, %v2988
  %v4505 = vpack.c.b16 %v2993, %v2989
  %v4506 = vpack.c.b16 %v2994, %v2990
  %v4507 = vpack.c.b16 %v2999, %v2995
  %v4508 = vpack.c.b16 %v3000, %v2996
  %v4509 = vpack.c.b16 %v3001, %v2997
  %v4510 = vpack.c.b16 %v3002, %v2998
  %v4511 = vpack.c.b16 %v3007, %v3003
  %v4512 = vpack.c.b16 %v3008, %v3004
  %v4513 = vpack.c.b16 %v3009, %v3005
  %v4514 = vpack.c.b16 %v3010, %v3006
  %v4515 = vpack.c.b16 %v3015, %v3011
  %v4516 = vpack.c.b16 %v3016, %v3012
  %v4517 = vpack.c.b16 %v3017, %v3013
  %v4518 = vpack.c.b16 %v3018, %v3014
  %v4519 = vpack.c.b16 %v3023, %v3019
  %v4520 = vpack.c.b16 %v3024, %v3020
  %v4521 = vpack.c.b16 %v3025, %v3021
  %v4522 = vpack.c.b16 %v3026, %v3022
  %v4523 = vpack.c.b16 %v3031, %v3027
  %v4524 = vpack.c.b16 %v3032, %v3028
  %v4525 = vpack.c.b16 %v3033, %v3029
  %v4526 = vpack.c.b16 %v3034, %v3030
  %v4527 = vpack.c.b16 %v3039, %v3035
  %v4528 = vpack.c.b16 %v3040, %v3036
  %v4529 = vpack.c.b16 %v3041, %v3037
  %v4530 = vpack.c.b16 %v3042, %v3038
  %v4531 = vpack.c.b16 %v3047, %v3043
  %v4532 = vpack.c.b16 %v3048, %v3044
  %v4533 = vpack.c.b16 %v3049, %v3045
  %v4534 = vpack.c.b16 %v3050, %v3046
  %v4535 = vpack.c.b16 %v3055, %v3051
  %v4536 = vpack.c.b16 %v3056, %v3052
  %v4537 = vpack.c.b16 %v3057, %v3053
  %v4538 = vpack.c.b16 %v3058, %v3054
  %v4539 = vpack.c.b16 %v3063, %v3059
  %v4540 = vpack.c.b16 %v3064, %v3060
  %v4541 = vpack.c.b16 %v3065, %v3061
  %v4542 = vpack.c.b16 %v3066, %v3062
  %v4543 = vpack.c.b16 %v3071, %v3067
  %v4544 = vpack.c.b16 %v3072, %v3068
  %v4545 = vpack.c.b16 %v3073, %v3069
  %v4546 = vpack.c.b16 %v3074, %v3070
  %v4547 = vpack.c.b16 %v3079, %v3075
  %v4548 = vpack.c.b16 %v3080, %v3076
  %v4549 = vpack.c.b16 %v3081, %v3077
  %v4550 = vpack.c.b16 %v3082, %v3078
  %v4551 = vpack.c.b16 %v3087, %v3083
  %v4552 = vpack.c.b16 %v3088, %v3084
  %v4553 = vpack.c.b16 %v3089, %v3085
  %v4554 = vpack.c.b16 %v3090, %v3086
  %v4555 = vpack.c.b16 %v3095, %v3091
  %v4556 = vpack.c.b16 %v3096, %v3092
  %v4557 = vpack.c.b16 %v3097, %v3093
  %v4558 = vpack.c.b16 %v3098, %v3094
  %v4559 = vpack.c.b16 %v3103, %v3099
  %v4560 = vpack.c.b16 %v3104, %v3100
  %v4561 = vpack.c.b16 %v3105, %v3101
  %v4562 = vpack.c.b16 %v3106, %v3102
  %v4563 = vpack.c.b16 %v3111, %v3107
  %v4564 = vpack.c.b16 %v3112, %v3108
  %v4565 = vpack.c.b16 %v3113, %v3109
  %v4566 = vpack.c.b16 %v3114, %v3110
  %v4567 = vpack.c.b16 %v3119, %v3115
  %v4568 = vpack.c.b16 %v3120, %v3116
  %v4569 = vpack.c.b16 %v3121, %v3117
  %v4570 = vpack.c.b16 %v3122, %v3118
  %v4571 = vpack.c.b16 %v3127, %v3123
  %v4572 = vpack.c.b16 %v3128, %v3124
  %v4573 = vpack.c.b16 %v3129, %v3125
  %v4574 = vpack.c.b16 %v3130, %v3126
  %v4575 = vpack.c.b16 %v3135, %v3131
  %v4576 = vpack.c.b16 %v3136, %v3132
  %v4577 = vpack.c.b16 %v3137, %v3133
  %v4578 = vpack.c.b16 %v3138, %v3134
  %v4579 = vpack.c.b16 %v3143, %v3139
  %v4580 = vpack.c.b16 %v3144, %v3140
  %v4581 = vpack.c.b16 %v3145, %v3141
  %v4582 = vpack.c.b16 %v3146, %v3142
  %v4583 = vpack.c.b16 %v3151, %v3147
  %v4584 = vpack.c.b16 %v3152, %v3148
  %v4585 = vpack.c.b16 %v3153, %v3149
  %v4586 = vpack.c.b16 %v3154, %v3150
  %v4587 = vpack.c.b16 %v3159, %v3155
  %v4588 = vpack.c.b16 %v3160, %v3156
  %v4589 = vpack.c.b16 %v3161, %v3157
  %v4590 = vpack.c.b16 %v3162, %v3158
  %v4591 = vpack.c.b16 %v3167, %v3163
  %v4592 = vpack.c.b16 %v3168, %v3164
  %v4593 = vpack.c.b16 %v3169, %v3165
  %v4594 = vpack.c.b16 %v3170, %v3166
  %v4595 = vpack.c.b16 %v3175, %v3171
  %v4596 = vpack.c.b16 %v3176, %v3172
  %v4597 = vpack.c.b16 %v3177, %v3173
  %v4598 = vpack.c.b16 %v3178, %v3174
  %v4599 = vpack.c.b16 %v3183, %v3179
  %v4600 = vpack.c.b16 %v3184, %v3180
  %v4601 = vpack.c.b16 %v3185, %v3181
  %v4602 = vpack.c.b16 %v3186, %v3182
  %v4603 = vpack.c.b16 %v3191, %v3187
  %v4604 = vpack.c.b16 %v3192, %v3188
  %v4605 = vpack.c.b16 %v3193, %v3189
  %v4606 = vpack.c.b16 %v3194, %v3190
  %v4607 = vpack.c.b16 %v3199, %v3195
  %v4608 = vpack.c.b16 %v3200, %v3196
  %v4609 = vpack.c.b16 %v3201, %v3197
  %v4610 = vpack.c.b16 %v3202, %v3198
  %v4611 = vpack.c.b16 %v3207, %v3203
  %v4612 = vpack.c.b16 %v3208, %v3204
  %v4613 = vpack.c.b16 %v3209, %v3205
  %v4614 = vpack.c.b16 %v3210, %v3206
  %v4615 = vpack.c.b16 %v3215, %v3211
  %v4616 = vpack.c.b16 %v3216, %v3212
  %v4617 = vpack.c.b16 %v3217, %v3213
  %v4618 = vpack.c.b16 %v3218, %v3214
  %v4619 = vpack.c.b16 %v3223, %v3219
  %v4620 = vpack.c.b16 %v3224, %v3220
  %v4621 = vpack.c.b16 %v3225, %v3221
  %v4622 = vpack.c.b16 %v3226, %v3222
  %v4623 = vpack.c.b16 %v3231, %v3227
  %v4624 = vpack.c.b16 %v3232, %v3228
  %v4625 = vpack.c.b16 %v3233, %v3229
  %v4626 = vpack.c.b16 %v3234, %v3230
  %v4627 = vpack.c.b16 %v3239, %v3235
  %v4628 = vpack.c.b16 %v3240, %v3236
  %v4629 = vpack.c.b16 %v3241, %v3237
  %v4630 = vpack.c.b16 %v3242, %v3238
  %v4631 = vpack.c.b16 %v3247, %v3243
  %v4632 = vpack.c.b16 %v3248, %v3244
  %v4633 = vpack.c.b16 %v3249, %v3245
  %v4634 = vpack.c.b16 %v3250, %v3246
  %v4635 = vpack.c.b16 %v3255, %v3251
  %v4636 = vpack.c.b16 %v3256, %v3252
  %v4637 = vpack.c.b16 %v3257, %v3253
  %v4638 = vpack.c.b16 %v3258, %v3254
  %v4639 = vpack.c.b16 %v3263, %v3259
  %v4640 = vpack.c.b16 %v3264, %v3260
  %v4641 = vpack.c.b16 %v3265, %v3261
  %v4642 = vpack.c.b16 %v3266, %v3262
  %v4643 = vpack.c.b16 %v3271, %v3267
  %v4644 = vpack.c.b16 %v3272, %v3268
  %v4645 = vpack.c.b16 %v3273, %v3269
  %v4646 = vpack.c.b16 %v3274, %v3270
  %v4647 = vpack.c.b16 %v3279, %v3275
  %v4648 = vpack.c.b16 %v3280, %v3276
  %v4649 = vpack.c.b16 %v3281, %v3277
  %v4650 = vpack.c.b16 %v3282, %v3278
  %v4651 = vpack.c.b16 %v3287, %v3283
  %v4652 = vpack.c.b16 %v3288, %v3284
  %v4653 = vpack.c.b16 %v3289, %v3285
  %v4654 = vpack.c.b16 %v3290, %v3286
  %v4655 = vpack.c.b16 %v3295, %v3291
  %v4656 = vpack.c.b16 %v3296, %v3292
  %v4657 = vpack.c.b16 %v3297, %v3293
  %v4658 = vpack.c.b16 %v3298, %v3294
  %v4659 = vpack.c.b16 %v3303, %v3299
  %v4660 = vpack.c.b16 %v3304, %v3300
  %v4661 = vpack.c.b16 %v3305, %v3301
  %v4662 = vpack.c.b16 %v3306, %v3302
  %v4663 = vpack.c.b16 %v3311, %v3307
  %v4664 = vpack.c.b16 %v3312, %v3308
  %v4665 = vpack.c.b16 %v3313, %v3309
  %v4666 = vpack.c.b16 %v3314, %v3310
  %v4667 = vpack.c.b16 %v3319, %v3315
  %v4668 = vpack.c.b16 %v3320, %v3316
  %v4669 = vpack.c.b16 %v3321, %v3317
  %v4670 = vpack.c.b16 %v3322, %v3318
  %v4671 = vpack.c.b16 %v3327, %v3323
  %v4672 = vpack.c.b16 %v3328, %v3324
  %v4673 = vpack.c.b16 %v3329, %v3325
  %v4674 = vpack.c.b16 %v3330, %v3326
  %v4675 = vpack.c.b16 %v3335, %v3331
  %v4676 = vpack.c.b16 %v3336, %v3332
  %v4677 = vpack.c.b16 %v3337, %v3333
  %v4678 = vpack.c.b16 %v3338, %v3334
  %v4679 = vpack.c.b16 %v3343, %v3339
  %v4680 = vpack.c.b16 %v3344, %v3340
  %v4681 = vpack.c.b16 %v3345, %v3341
  %v4682 = vpack.c.b16 %v3346, %v3342
  %v4683 = vpack.c.b16 %v3351, %v3347
  %v4684 = vpack.c.b16 %v3352, %v3348
  %v4685 = vpack.c.b16 %v3353, %v3349
  %v4686 = vpack.c.b16 %v3354, %v3350
  %v4687 = vpack.c.b16 %v3359, %v3355
  %v4688 = vpack.c.b16 %v3360, %v3356
  %v4689 = vpack.c.b16 %v3361, %v3357
  %v4690 = vpack.c.b16 %v3362, %v3358
  %v4691 = vpack.c.b16 %v3367, %v3363
  %v4692 = vpack.c.b16 %v3368, %v3364
  %v4693 = vpack.c.b16 %v3369, %v3365
  %v4694 = vpack.c.b16 %v3370, %v3366
  %v4695 = vpack.c.b16 %v3375, %v3371
  %v4696 = vpack.c.b16 %v3376, %v3372
  %v4697 = vpack.c.b16 %v3377, %v3373
  %v4698 = vpack.c.b16 %v3378, %v3374
  %v4699 = vpack.c.b16 %v3383, %v3379
  %v4700 = vpack.c.b16 %v3384, %v3380
  %v4701 = vpack.c.b16 %v3385, %v3381
  %v4702 = vpack.c.b16 %v3386, %v3382
  %v4703 = vpack.c.b16 %v3391, %v3387
  %v4704 = vpack.c.b16 %v3392, %v3388
  %v4705 = vpack.c.b16 %v3393, %v3389
  %v4706 = vpack.c.b16 %v3394, %v3390
  %v4707 = vpack.c.b16 %v3399, %v3395
  %v4708 = vpack.c.b16 %v3400, %v3396
  %v4709 = vpack.c.b16 %v3401, %v3397
  %v4710 = vpack.c.b16 %v3402, %v3398
  %v4711 = vpack.c.b16 %v3407, %v3403
  %v4712 = vpack.c.b16 %v3408, %v3404
  %v4713 = vpack.c.b16 %v3409, %v3405
  %v4714 = vpack.c.b16 %v3410, %v3406
  %v4715 = vpack.c.b16 %v3415, %v3411
  %v4716 = vpack.c.b16 %v3416, %v3412
  %v4717 = vpack.c.b16 %v3417, %v3413
  %v4718 = vpack.c.b16 %v3418, %v3414
  %v4719 = vpack.c.b16 %v3423, %v3419
  %v4720 = vpack.c.b16 %v3424, %v3420
  %v4721 = vpack.c.b16 %v3425, %v3421
  %v4722 = vpack.c.b16 %v3426, %v3422
  %v4723 = vpack.c.b16 %v3431, %v3427
  %v4724 = vpack.c.b16 %v3432, %v3428
  %v4725 = vpack.c.b16 %v3433, %v3429
  %v4726 = vpack.c.b16 %v3434, %v3430
  %v4727 = vpack.c.b16 %v3439, %v3435
  %v4728 = vpack.c.b16 %v3440, %v3436
  %v4729 = vpack.c.b16 %v3441, %v3437
  %v4730 = vpack.c.b16 %v3442, %v3438
  %v4731 = vpack.c.b16 %v3447, %v3443
  %v4732 = vpack.c.b16 %v3448, %v3444
  %v4733 = vpack.c.b16 %v3449, %v3445
  %v4734 = vpack.c.b16 %v3450, %v3446
  %v4735 = vpack.c.b16 %v3455, %v3451
  %v4736 = vpack.c.b16 %v3456, %v3452
  %v4737 = vpack.c.b16 %v3457, %v3453
  %v4738 = vpack.c.b16 %v3458, %v3454
  %v4739 = vpack.c.b16 %v3463, %v3459
  %v4740 = vpack.c.b16 %v3464, %v3460
  %v4741 = vpack.c.b16 %v3465, %v3461
  %v4742 = vpack.c.b16 %v3466, %v3462
  %v4743 = vpack.c.b16 %v3471, %v3467
  %v4744 = vpack.c.b16 %v3472, %v3468
  %v4745 = vpack.c.b16 %v3473, %v3469
  %v4746 = vpack.c.b16 %v3474, %v3470
  %v4747 = vpack.c.b16 %v3479, %v3475
  %v4748 = vpack.c.b16 %v3480, %v3476
  %v4749 = vpack.c.b16 %v3481, %v3477
  %v4750 = vpack.c.b16 %v3482, %v3478
  %v4751 = vpack.c.b16 %v3487, %v3483
  %v4752 = vpack.c.b16 %v3488, %v3484
  %v4753 = vpack.c.b16 %v3489, %v3485
  %v4754 = vpack.c.b16 %v3490, %v3486
  %v4755 = vpack.c.b16 %v3495, %v3491
  %v4756 = vpack.c.b16 %v3496, %v3492
  %v4757 = vpack.c.b16 %v3497, %v3493
  %v4758 = vpack.c.b16 %v3498, %v3494
  %v4759 = vpack.c.b16 %v3503, %v3499
  %v4760 = vpack.c.b16 %v3504, %v3500
  %v4761 = vpack.c.b16 %v3505, %v3501
  %v4762 = vpack.c.b16 %v3506, %v3502
  %v4763 = vpack.c.b16 %v3511, %v3507
  %v4764 = vpack.c.b16 %v3512, %v3508
  %v4765 = vpack.c.b16 %v3513, %v3509
  %v4766 = vpack.c.b16 %v3514, %v3510
  %v4767 = vpack.c.b16 %v3519, %v3515
  %v4768 = vpack.c.b16 %v3520, %v3516
  %v4769 = vpack.c.b16 %v3521, %v3517
  %v4770 = vpack.c.b16 %v3522, %v3518
  %v4771 = vpack.c.b16 %v3527, %v3523
  %v4772 = vpack.c.b16 %v3528, %v3524
  %v4773 = vpack.c.b16 %v3529, %v3525
  %v4774 = vpack.c.b16 %v3530, %v3526
  %v4775 = vpack.c.b16 %v3535, %v3531
  %v4776 = vpack.c.b16 %v3536, %v3532
  %v4777 = vpack.c.b16 %v3537, %v3533
  %v4778 = vpack.c.b16 %v3538, %v3534
  %v4779 = vpack.c.b16 %v3543, %v3539
  %v4780 = vpack.c.b16 %v3544, %v3540
  %v4781 = vpack.c.b16 %v3545, %v3541
  %v4782 = vpack.c.b16 %v3546, %v3542
  %v4783 = vpack.c.b16 %v3551, %v3547
  %v4784 = vpack.c.b16 %v3552, %v3548
  %v4785 = vpack.c.b16 %v3553, %v3549
  %v4786 = vpack.c.b16 %v3554, %v3550
  %v4787 = vpack.c.b16 %v3559, %v3555
  %v4788 = vpack.c.b16 %v3560, %v3556
  %v4789 = vpack.c.b16 %v3561, %v3557
  %v4790 = vpack.c.b16 %v3562, %v3558
  %v4791 = vpack.c.b16 %v3567, %v3563
  %v4792 = vpack.c.b16 %v3568, %v3564
  %v4793 = vpack.c.b16 %v3569, %v3565
  %v4794 = vpack.c.b16 %v3570, %v3566
  %v4795 = vpack.c.b16 %v3575, %v3571
  %v4796 = vpack.c.b16 %v3576, %v3572
  %v4797 = vpack.c.b16 %v3577, %v3573
  %v4798 = vpack.c.b16 %v3578, %v3574
  %v4799 = vpack.c.b16 %v3583, %v3579
  %v4800 = vpack.c.b16 %v3584, %v3580
  %v4801 = vpack.c.b16 %v3585, %v3581
  %v4802 = vpack.c.b16 %v3586, %v3582
  %v4803 = vpack.c.b16 %v3591, %v3587
  %v4804 = vpack.c.b16 %v3592, %v3588
  %v4805 = vpack.c.b16 %v3593, %v3589
  %v4806 = vpack.c.b16 %v3594, %v3590
  %v4807 = vpack.c.b16 %v3599, %v3595
  %v4808 = vpack.c.b16 %v3600, %v3596
  %v4809 = vpack.c.b16 %v3601, %v3597
  %v4810 = vpack.c.b16 %v3602, %v3598
  %v4811 = vpack.c.b16 %v3607, %v3603
  %v4812 = vpack.c.b16 %v3608, %v3604
  %v4813 = vpack.c.b16 %v3609, %v3605
  %v4814 = vpack.c.b16 %v3610, %v3606
  %v4815 = vpack.c.b16 %v3615, %v3611
  %v4816 = vpack.c.b16 %v3616, %v3612
  %v4817 = vpack.c.b16 %v3617, %v3613
  %v4818 = vpack.c.b16 %v3618, %v3614
  %v4819 = vpack.c.b16 %v3623, %v3619
  %v4820 = vpack.c.b16 %v3624, %v3620
  %v4821 = vpack.c.b16 %v3625, %v3621
  %v4822 = vpack.c.b16 %v3626, %v3622
  %v4823 = vpack.c.b16 %v3631, %v3627
  %v4824 = vpack.c.b16 %v3632, %v3628
  %v4825 = vpack.c.b16 %v3633, %v3629
  %v4826 = vpack.c.b16 %v3634, %v3630
  %v4827 = vpack.c.b16 %v3639, %v3635
  %v4828 = vpack.c.b16 %v3640, %v3636
  %v4829 = vpack.c.b16 %v3641, %v3637
  %v4830 = vpack.c.b16 %v3642, %v3638
  %v4831 = vpack.c.b16 %v3647, %v3643
  %v4832 = vpack.c.b16 %v3648, %v3644
  %v4833 = vpack.c.b16 %v3649, %v3645
  %v4834 = vpack.c.b16 %v3650, %v3646
  %v4835 = vpack.c.b16 %v3655, %v3651
  %v4836 = vpack.c.b16 %v3656, %v3652
  %v4837 = vpack.c.b16 %v3657, %v3653
  %v4838 = vpack.c.b16 %v3658, %v3654
  %v4839 = vpack.c.b16 %v3663, %v3659
  %v4840 = vpack.c.b16 %v3664, %v3660
  %v4841 = vpack.c.b16 %v3665, %v3661
  %v4842 = vpack.c.b16 %v3666, %v3662
  %v4843 = vpack.c.b16 %v3671, %v3667
  %v4844 = vpack.c.b16 %v3672, %v3668
  %v4845 = vpack.c.b16 %v3673, %v3669
  %v4846 = vpack.c.b16 %v3674, %v3670
  %v4847 = vpack.c.b16 %v3679, %v3675
  %v4848 = vpack.c.b16 %v3680, %v3676
  %v4849 = vpack.c.b16 %v3681, %v3677
  %v4850 = vpack.c.b16 %v3682, %v3678
  %v4851 = vpack.c.b16 %v3687, %v3683
  %v4852 = vpack.c.b16 %v3688, %v3684
  %v4853 = vpack.c.b16 %v3689, %v3685
  %v4854 = vpack.c.b16 %v3690, %v3686
  %v4855 = vpack.c.b16 %v3695, %v3691
  %v4856 = vpack.c.b16 %v3696, %v3692
  %v4857 = vpack.c.b16 %v3697, %v3693
  %v4858 = vpack.c.b16 %v3698, %v3694
  %v4859 = vpack.c.b16 %v3703, %v3699
  %v4860 = vpack.c.b16 %v3704, %v3700
  %v4861 = vpack.c.b16 %v3705, %v3701
  %v4862 = vpack.c.b16 %v3706, %v3702
  %v4863 = vpack.c.b16 %v3711, %v3707
  %v4864 = vpack.c.b16 %v3712, %v3708
  %v4865 = vpack.c.b16 %v3713, %v3709
  %v4866 = vpack.c.b16 %v3714, %v3710
  %v4867 = vpack.c.b16 %v3719, %v3715
  %v4868 = vpack.c.b16 %v3720, %v3716
  %v4869 = vpack.c.b16 %v3721, %v3717
  %v4870 = vpack.c.b16 %v3722, %v3718
  %v4871 = vpack.c.b16 %v3727, %v3723
  %v4872 = vpack.c.b16 %v3728, %v3724
  %v4873 = vpack.c.b16 %v3729, %v3725
  %v4874 = vpack.c.b16 %v3730, %v3726
  %v4875 = vpack.c.b16 %v3735, %v3731
  %v4876 = vpack.c.b16 %v3736, %v3732
  %v4877 = vpack.c.b16 %v3737, %v3733
  %v4878 = vpack.c.b16 %v3738, %v3734
  %v4879 = vpack.c.b16 %v3743, %v3739
  %v4880 = vpack.c.b16 %v3744, %v3740
  %v4881 = vpack.c.b16 %v3745, %v3741
  %v4882 = vpack.c.b16 %v3746, %v3742
  %v4883 = vpack.c.b16 %v3751, %v3747
  %v4884 = vpack.c.b16 %v3752, %v3748
  %v4885 = vpack.c.b16 %v3753, %v3749
  %v4886 = vpack.c.b16 %v3754, %v3750
  %v4887 = vpack.c.b16 %v3759, %v3755
  %v4888 = vpack.c.b16 %v3760, %v3756
  %v4889 = vpack.c.b16 %v3761, %v3757
  %v4890 = vpack.c.b16 %v3762, %v3758
  %v4891 = vpack.c.b16 %v3767, %v3763
  %v4892 = vpack.c.b16 %v3768, %v3764
  %v4893 = vpack.c.b16 %v3769, %v3765
  %v4894 = vpack.c.b16 %v3770, %v3766
  %v4895 = vpack.c.b16 %v3775, %v3771
  %v4896 = vpack.c.b16 %v3776, %v3772
  %v4897 = vpack.c.b16 %v3777, %v3773
  %v4898 = vpack.c.b16 %v3778, %v3774
  %v4899 = vpack.c.b16 %v3783, %v3779
  %v4900 = vpack.c.b16 %v3784, %v3780
  %v4901 = vpack.c.b16 %v3785, %v3781
  %v4902 = vpack.c.b16 %v3786, %v3782
  %v4903 = vpack.c.b16 %v3791, %v3787
  %v4904 = vpack.c.b16 %v3792, %v3788
  %v4905 = vpack.c.b16 %v3793, %v3789
  %v4906 = vpack.c.b16 %v3794, %v3790
  %v4907 = vpack.c.b16 %v3799, %v3795
  %v4908 = vpack.c.b16 %v3800, %v3796
  %v4909 = vpack.c.b16 %v3801, %v3797
  %v4910 = vpack.c.b16 %v3802, %v3798
  %v4911 = vpack.c.b16 %v3807, %v3803
  %v4912 = vpack.c.b16 %v3808, %v3804
  %v4913 = vpack.c.b16 %v3809, %v3805
  %v4914 = vpack.c.b16 %v3810, %v3806
  %v4915 = vpack.c.b16 %v3815, %v3811
  %v4916 = vpack.c.b16 %v3816, %v3812
  %v4917 = vpack.c.b16 %v3817, %v3813
  %v4918 = vpack.c.b16 %v3818, %v3814
  %v4919 = vpack.c.b16 %v3823, %v3819
  %v4920 = vpack.c.b16 %v3824, %v3820
  %v4921 = vpack.c.b16 %v3825, %v3821
  %v4922 = vpack.c.b16 %v3826, %v3822
  %v4923 = vpack.c.b16 %v3831, %v3827
  %v4924 = vpack.c.b16 %v3832, %v3828
  %v4925 = vpack.c.b16 %v3833, %v3829
  %v4926 = vpack.c.b16 %v3834, %v3830
  %v4927 = vpack.c.b16 %v3839, %v3835
  %v4928 = vpack.c.b16 %v3840, %v3836
  %v4929 = vpack.c.b16 %v3841, %v3837
  %v4930 = vpack.c.b16 %v3842, %v3838
  %v4931 = vpack.c.b16 %v3847, %v3843
  %v4932 = vpack.c.b16 %v3848, %v3844
  %v4933 = vpack.c.b16 %v3849, %v3845
  %v4934 = vpack.c.b16 %v3850, %v3846
  %v4935 = vpack.c.b16 %v3855, %v3851
  %v4936 = vpack.c.b16 %v3856, %v3852
  %v4937 = vpack.c.b16 %v3857, %v3853
  %v4938 = vpack.c.b16 %v3858, %v3854
  %v4939 = vpack.c.b16 %v3863, %v3859
  %v4940 = vpack.c.b16 %v3864, %v3860
  %v4941 = vpack.c.b16 %v3865, %v3861
  %v4942 = vpack.c.b16 %v3866, %v3862
  %v4943 = vpack.c.b16 %v3871, %v3867
  %v4944 = vpack.c.b16 %v3872, %v3868
  %v4945 = vpack.c.b16 %v3873, %v3869
  %v4946 = vpack.c.b16 %v3874, %v3870
  %v4947 = vpack.c.b16 %v3879, %v3875
  %v4948 = vpack.c.b16 %v3880, %v3876
  %v4949 = vpack.c.b16 %v3881, %v3877
  %v4950 = vpack.c.b16 %v3882, %v3878
  %v4951 = vpack.c.b16 %v3887, %v3883
  %v4952 = vpack.c.b16 %v3888, %v3884
  %v4953 = vpack.c.b16 %v3889, %v3885
  %v4954 = vpack.c.b16 %v3890, %v3886
  %v4955 = vpack.c.b16 %v3895, %v3891
  %v4956 = vpack.c.b16 %v3896, %v3892
  %v4957 = vpack.c.b16 %v3897, %v3893
  %v4958 = vpack.c.b16 %v3898, %v3894
  %v4959 = vpack.c.b16 %v3903, %v3899
  %v4960 = vpack.c.b16 %v3904, %v3900
  %v4961 = vpack.c.b16 %v3905, %v3901
  %v4962 = vpack.c.b16 %v3906, %v3902
  %v4963 = vpack.c.b16 %v3911, %v3907
  %v4964 = vpack.c.b16 %v3912, %v3908
  %v4965 = vpack.c.b16 %v3913, %v3909
  %v4966 = vpack.c.b16 %v3914, %v3910
  %v4967 = vpack.c.b16 %v3919, %v3915
  %v4968 = vpack.c.b16 %v3920, %v3916
  %v4969 = vpack.c.b16 %v3921, %v3917
  %v4970 = vpack.c.b16 %v3922, %v3918
  %v4971 = vpack.c.b16 %v3927, %v3923
  %v4972 = vpack.c.b16 %v3928, %v3924
  %v4973 = vpack.c.b16 %v3929, %v3925
  %v4974 = vpack.c.b16 %v3930, %v3926
  %v4975 = vpack.c.b16 %v3935, %v3931
  %v4976 = vpack.c.b16 %v3936, %v3932
  %v4977 = vpack.c.b16 %v3937, %v3933
  %v4978 = vpack.c.b16 %v3938, %v3934
  %v4979 = vpack.c.b16 %v3943, %v3939
  %v4980 = vpack.c.b16 %v3944, %v3940
  %v4981 = vpack.c.b16 %v3945, %v3941
  %v4982 = vpack.c.b16 %v3946, %v3942
  %v4983 = vpack.c.b16 %v3951, %v3947
  %v4984 = vpack.c.b16 %v3952, %v3948
  %v4985 = vpack.c.b16 %v3953, %v3949
  %v4986 = vpack.c.b16 %v3954, %v3950
  %v4987 = vpack.c.b16 %v3959, %v3955
  %v4988 = vpack.c.b16 %v3960, %v3956
  %v4989 = vpack.c.b16 %v3961, %v3957
  %v4990 = vpack.c.b16 %v3962, %v3958
  %v4991 = vpack.c.b16 %v3967, %v3963
  %v4992 = vpack.c.b16 %v3968, %v3964
  %v4993 = vpack.c.b16 %v3969, %v3965
  %v4994 = vpack.c.b16 %v3970, %v3966
  %v4995 = vpack.c.b16 %v3975, %v3971
  %v4996 = vpack.c.b16 %v3976, %v3972
  %v4997 = vpack.c.b16 %v3977, %v3973
  %v4998 = vpack.c.b16 %v3978, %v3974
  %v4999 = vpack.c.b16 %v3983, %v3979
  %v5000 = vpack.c.b16 %v3984, %v3980
  %v5001 = vpack.c.b16 %v3985, %v3981
  %v5002 = vpack.c.b16 %v3986, %v3982
  %v5003 = vpack.c.b16 %v3991, %v3987
  %v5004 = vpack.c.b16 %v3992, %v3988
  %v5005 = vpack.c.b16 %v3993, %v3989
  %v5006 = vpack.c.b16 %v3994, %v3990
  %v5007 = vpack.c.b16 %v3999, %v3995
  %v5008 = vpack.c.b16 %v4000, %v3996
  %v5009 = vpack.c.b16 %v4001, %v3997
  %v5010 = vpack.c.b16 %v4002, %v3998
  %v5011 = vpack.c.b16 %v4007, %v4003
  %v5012 = vpack.c.b16 %v4008, %v4004
  %v5013 = vpack.c.b16 %v4009, %v4005
  %v5014 = vpack.c.b16 %v4010, %v4006
  %v5015 = vpack.c.b16 %v4015, %v4011
  %v5016 = vpack.c.b16 %v4016, %v4012
  %v5017 = vpack.c.b16 %v4017, %v4013
  %v5018 = vpack.c.b16 %v4018, %v4014
  %v5019 = vpack.c.b16 %v4023, %v4019
  %v5020 = vpack.c.b16 %v4024, %v4020
  %v5021 = vpack.c.b16 %v4025, %v4021
  %v5022 = vpack.c.b16 %v4026, %v4022
  %v5023 = vpack.c.b16 %v4031, %v4027
  %v5024 = vpack.c.b16 %v4032, %v4028
  %v5025 = vpack.c.b16 %v4033, %v4029
  %v5026 = vpack.c.b16 %v4034, %v4030
  %v5027 = vpack.c.b16 %v4039, %v4035
  %v5028 = vpack.c.b16 %v4040, %v4036
  %v5029 = vpack.c.b16 %v4041, %v4037
  %v5030 = vpack.c.b16 %v4042, %v4038
  %v5031 = vpack.c.b16 %v4047, %v4043
  %v5032 = vpack.c.b16 %v4048, %v4044
  %v5033 = vpack.c.b16 %v4049, %v4045
  %v5034 = vpack.c.b16 %v4050, %v4046
  %v5035 = vpack.c.b16 %v4055, %v4051
  %v5036 = vpack.c.b16 %v4056, %v4052
  %v5037 = vpack.c.b16 %v4057, %v4053
  %v5038 = vpack.c.b16 %v4058, %v4054
  %v5039 = vpack.c.b16 %v4063, %v4059
  %v5040 = vpack.c.b16 %v4064, %v4060
  %v5041 = vpack.c.b16 %v4065, %v4061
  %v5042 = vpack.c.b16 %v4066, %v4062
  %v5043 = vpack.c.b16 %v4071, %v4067
  %v5044 = vpack.c.b16 %v4072, %v4068
  %v5045 = vpack.c.b16 %v4073, %v4069
  %v5046 = vpack.c.b16 %v4074, %v4070
  %v5047 = vpack.c.b16 %v4079, %v4075
  %v5048 = vpack.c.b16 %v4080, %v4076
  %v5049 = vpack.c.b16 %v4081, %v4077
  %v5050 = vpack.c.b16 %v4082, %v4078
  %v5051 = vpack.c.b16 %v4087, %v4083
  %v5052 = vpack.c.b16 %v4088, %v4084
  %v5053 = vpack.c.b16 %v4089, %v4085
  %v5054 = vpack.c.b16 %v4090, %v4086
  %v5055 = vpack.c.b16 %v4095, %v4091
  %v5056 = vpack.c.b16 %v4096, %v4092
  %v5057 = vpack.c.b16 %v4097, %v4093
  %v5058 = vpack.c.b16 %v4098, %v4094
  %v5059 = vpack.c.b16 %v4103, %v4099
  %v5060 = vpack.c.b16 %v4104, %v4100
  %v5061 = vpack.c.b16 %v4105, %v4101
  %v5062 = vpack.c.b16 %v4106, %v4102
  %v5063 = vpack.c.b16 %v4111, %v4107
  %v5064 = vpack.c.b16 %v4112, %v4108
  %v5065 = vpack.c.b16 %v4113, %v4109
  %v5066 = vpack.c.b16 %v4114, %v4110
  %v5067 = vpack.c.b16 %v4119, %v4115
  %v5068 = vpack.c.b16 %v4120, %v4116
  %v5069 = vpack.c.b16 %v4121, %v4117
  %v5070 = vpack.c.b16 %v4122, %v4118
  %v5071 = vpack.c.b16 %v4127, %v4123
  %v5072 = vpack.c.b16 %v4128, %v4124
  %v5073 = vpack.c.b16 %v4129, %v4125
  %v5074 = vpack.c.b16 %v4130, %v4126
  %v5075 = vpack.c.b16 %v4135, %v4131
  %v5076 = vpack.c.b16 %v4136, %v4132
  %v5077 = vpack.c.b16 %v4137, %v4133
  %v5078 = vpack.c.b16 %v4138, %v4134
  %v5079 = vpack.c.b16 %v4139, %v4139
  %v5080 = vpack.c.b16 %v4140, %v4140
  %v5081 = vpack.c.b16 %v4141, %v4141
  %v5082 = vpack.c.b16 %v4142, %v4142
  %vm6019 = vcmask 310272
  %v6021 = vsel %vm6019, %v1240, 0
  %v6024 = vsel %vm6019, %v1270, 0
  %vm6026 = vcmask 1042432
  %v6028 = vsel %vm6026, %v5079, 0
  %v6031 = vsel %vm6026, %v5080, 0
  %v6034 = vsel %vm6026, %v5081, 0
  %v6037 = vsel %vm6026, %v5082, 0
  %6039 = vmatprep.subr.bf16.mxu0 %v4172
  %6040 = vmatpush1.bf16.msra.mxu0 %v4171
  %6041 = vmatprep.subr.bf16.mxu0 %v4168
  %6042 = vmatpush1.bf16.msra.mxu0 %v4167
  %6043 = vmatprep.subr.bf16.mxu0 %v4164
  %6044 = vmatpush1.bf16.msra.mxu0 %v4163
  %6045 = vmatprep.subr.bf16.mxu0 %v4160
  %6046 = vmatpush1.bf16.msra.mxu0 %v4159
  %6047 = vmatprep.subr.bf16.mxu0 %v4156
  %6048 = vmatpush1.bf16.msra.mxu0 %v4155
  %6049 = vmatprep.subr.bf16.mxu0 %v4152
  %6050 = vmatpush1.bf16.msra.mxu0 %v4151
  %6051 = vmatprep.subr.bf16.mxu0 %v4148
  %6052 = vmatpush1.bf16.msra.mxu0 %v4147
  %6053 = vmatprep.subr.bf16.mxu0 %v4144
  %6054 = vmatpush1.bf16.msra.mxu0 %v4143
  %6055 = vmatprep.subr.bf16.mxu0 %v4204
  %6056 = vmatpush2.bf16.msra.mxu0 %v4203
  %6057 = vmatprep.subr.bf16.mxu0 %v4200
  %6058 = vmatpush2.bf16.msra.mxu0 %v4199
  %6059 = vmatprep.subr.bf16.mxu0 %v4196
  %6060 = vmatpush2.bf16.msra.mxu0 %v4195
  %6061 = vmatprep.subr.bf16.mxu0 %v4192
  %6062 = vmatpush2.bf16.msra.mxu0 %v4191
  %6063 = vmatprep.subr.bf16.mxu0 %v4188
  %6064 = vmatpush2.bf16.msra.mxu0 %v4187
  %6065 = vmatprep.subr.bf16.mxu0 %v4184
  %6066 = vmatpush2.bf16.msra.mxu0 %v4183
  %6067 = vmatprep.subr.bf16.mxu0 %v4180
  %6068 = vmatpush2.bf16.msra.mxu0 %v4179
  %6069 = vmatprep.subr.bf16.mxu0 %v4176
  %6070 = vmatpush2.bf16.msra.mxu0 %v4175
  %6071 = vmatprep.mubr.bf16.mxu0 %v1212
  %6072 = vmatmul.mubr.bf16.gmra.mxu0 %v1211
  %v6073 = vpop.f32.mrf.mxu0
  %v6074 = vadd.f32 0.0, %v6073
  %v6075 = vpop.f32.mrf.mxu0
  %v6076 = vadd.f32 0.0, %v6075
  %v6077 = vpop.f32.mrf.mxu0
  %v6078 = vadd.f32 0.0, %v6077
  %v6079 = vpop.f32.mrf.mxu0
  %v6080 = vadd.f32 0.0, %v6079
  %6081 = vmatprep.mubr.bf16.mxu0 %v1242
  %6082 = vmatmul.mubr.bf16.gmra.mxu0 %v1241
  %v6083 = vpop.f32.mrf.mxu0
  %v6084 = vadd.f32 0.0, %v6083
  %v6085 = vpop.f32.mrf.mxu0
  %v6086 = vadd.f32 0.0, %v6085
  %v6087 = vpop.f32.mrf.mxu0
  %v6088 = vadd.f32 0.0, %v6087
  %v6089 = vpop.f32.mrf.mxu0
  %v6090 = vadd.f32 0.0, %v6089
  %6091 = vdwg.mxu0
  %6092 = vmatprep.subr.bf16.mxu0 %v4236
  %6093 = vmatpush1.bf16.msra.mxu0 %v4235
  %6094 = vmatprep.subr.bf16.mxu0 %v4232
  %6095 = vmatpush1.bf16.msra.mxu0 %v4231
  %6096 = vmatprep.subr.bf16.mxu0 %v4228
  %6097 = vmatpush1.bf16.msra.mxu0 %v4227
  %6098 = vmatprep.subr.bf16.mxu0 %v4224
  %6099 = vmatpush1.bf16.msra.mxu0 %v4223
  %6100 = vmatprep.subr.bf16.mxu0 %v4220
  %6101 = vmatpush1.bf16.msra.mxu0 %v4219
  %6102 = vmatprep.subr.bf16.mxu0 %v4216
  %6103 = vmatpush1.bf16.msra.mxu0 %v4215
  %6104 = vmatprep.subr.bf16.mxu0 %v4212
  %6105 = vmatpush1.bf16.msra.mxu0 %v4211
  %6106 = vmatprep.subr.bf16.mxu0 %v4208
  %6107 = vmatpush1.bf16.msra.mxu0 %v4207
  %6108 = vmatprep.subr.bf16.mxu0 %v4268
  %6109 = vmatpush2.bf16.msra.mxu0 %v4267
  %6110 = vmatprep.subr.bf16.mxu0 %v4264
  %6111 = vmatpush2.bf16.msra.mxu0 %v4263
  %6112 = vmatprep.subr.bf16.mxu0 %v4260
  %6113 = vmatpush2.bf16.msra.mxu0 %v4259
  %6114 = vmatprep.subr.bf16.mxu0 %v4256
  %6115 = vmatpush2.bf16.msra.mxu0 %v4255
  %6116 = vmatprep.subr.bf16.mxu0 %v4252
  %6117 = vmatpush2.bf16.msra.mxu0 %v4251
  %6118 = vmatprep.subr.bf16.mxu0 %v4248
  %6119 = vmatpush2.bf16.msra.mxu0 %v4247
  %6120 = vmatprep.subr.bf16.mxu0 %v4244
  %6121 = vmatpush2.bf16.msra.mxu0 %v4243
  %6122 = vmatprep.subr.bf16.mxu0 %v4240
  %6123 = vmatpush2.bf16.msra.mxu0 %v4239
  %6124 = vmatprep.mubr.bf16.mxu0 %v1214
  %6125 = vmatmul.mubr.bf16.gmra.mxu0 %v1213
  %v6126 = vpop.f32.mrf.mxu0
  %v6127 = vadd.f32 %v6074, %v6126
  %v6128 = vpop.f32.mrf.mxu0
  %v6129 = vadd.f32 %v6076, %v6128
  %v6130 = vpop.f32.mrf.mxu0
  %v6131 = vadd.f32 %v6078, %v6130
  %v6132 = vpop.f32.mrf.mxu0
  %v6133 = vadd.f32 %v6080, %v6132
  %6134 = vmatprep.mubr.bf16.mxu0 %v1244
  %6135 = vmatmul.mubr.bf16.gmra.mxu0 %v1243
  %v6136 = vpop.f32.mrf.mxu0
  %v6137 = vadd.f32 %v6084, %v6136
  %v6138 = vpop.f32.mrf.mxu0
  %v6139 = vadd.f32 %v6086, %v6138
  %v6140 = vpop.f32.mrf.mxu0
  %v6141 = vadd.f32 %v6088, %v6140
  %v6142 = vpop.f32.mrf.mxu0
  %v6143 = vadd.f32 %v6090, %v6142
  %6144 = vdwg.mxu0
  %6145 = vmatprep.subr.bf16.mxu0 %v4300
  %6146 = vmatpush1.bf16.msra.mxu0 %v4299
  %6147 = vmatprep.subr.bf16.mxu0 %v4296
  %6148 = vmatpush1.bf16.msra.mxu0 %v4295
  %6149 = vmatprep.subr.bf16.mxu0 %v4292
  %6150 = vmatpush1.bf16.msra.mxu0 %v4291
  %6151 = vmatprep.subr.bf16.mxu0 %v4288
  %6152 = vmatpush1.bf16.msra.mxu0 %v4287
  %6153 = vmatprep.subr.bf16.mxu0 %v4284
  %6154 = vmatpush1.bf16.msra.mxu0 %v4283
  %6155 = vmatprep.subr.bf16.mxu0 %v4280
  %6156 = vmatpush1.bf16.msra.mxu0 %v4279
  %6157 = vmatprep.subr.bf16.mxu0 %v4276
  %6158 = vmatpush1.bf16.msra.mxu0 %v4275
  %6159 = vmatprep.subr.bf16.mxu0 %v4272
  %6160 = vmatpush1.bf16.msra.mxu0 %v4271
  %6161 = vmatprep.subr.bf16.mxu0 %v4332
  %6162 = vmatpush2.bf16.msra.mxu0 %v4331
  %6163 = vmatprep.subr.bf16.mxu0 %v4328
  %6164 = vmatpush2.bf16.msra.mxu0 %v4327
  %6165 = vmatprep.subr.bf16.mxu0 %v4324
  %6166 = vmatpush2.bf16.msra.mxu0 %v4323
  %6167 = vmatprep.subr.bf16.mxu0 %v4320
  %6168 = vmatpush2.bf16.msra.mxu0 %v4319
  %6169 = vmatprep.subr.bf16.mxu0 %v4316
  %6170 = vmatpush2.bf16.msra.mxu0 %v4315
  %6171 = vmatprep.subr.bf16.mxu0 %v4312
  %6172 = vmatpush2.bf16.msra.mxu0 %v4311
  %6173 = vmatprep.subr.bf16.mxu0 %v4308
  %6174 = vmatpush2.bf16.msra.mxu0 %v4307
  %6175 = vmatprep.subr.bf16.mxu0 %v4304
  %6176 = vmatpush2.bf16.msra.mxu0 %v4303
  %6177 = vmatprep.mubr.bf16.mxu0 %v1216
  %6178 = vmatmul.mubr.bf16.gmra.mxu0 %v1215
  %v6179 = vpop.f32.mrf.mxu0
  %v6180 = vadd.f32 %v6127, %v6179
  %v6181 = vpop.f32.mrf.mxu0
  %v6182 = vadd.f32 %v6129, %v6181
  %v6183 = vpop.f32.mrf.mxu0
  %v6184 = vadd.f32 %v6131, %v6183
  %v6185 = vpop.f32.mrf.mxu0
  %v6186 = vadd.f32 %v6133, %v6185
  %6187 = vmatprep.mubr.bf16.mxu0 %v1246
  %6188 = vmatmul.mubr.bf16.gmra.mxu0 %v1245
  %v6189 = vpop.f32.mrf.mxu0
  %v6190 = vadd.f32 %v6137, %v6189
  %v6191 = vpop.f32.mrf.mxu0
  %v6192 = vadd.f32 %v6139, %v6191
  %v6193 = vpop.f32.mrf.mxu0
  %v6194 = vadd.f32 %v6141, %v6193
  %v6195 = vpop.f32.mrf.mxu0
  %v6196 = vadd.f32 %v6143, %v6195
  %6197 = vdwg.mxu0
  %6198 = vmatprep.subr.bf16.mxu0 %v4364
  %6199 = vmatpush1.bf16.msra.mxu0 %v4363
  %6200 = vmatprep.subr.bf16.mxu0 %v4360
  %6201 = vmatpush1.bf16.msra.mxu0 %v4359
  %6202 = vmatprep.subr.bf16.mxu0 %v4356
  %6203 = vmatpush1.bf16.msra.mxu0 %v4355
  %6204 = vmatprep.subr.bf16.mxu0 %v4352
  %6205 = vmatpush1.bf16.msra.mxu0 %v4351
  %6206 = vmatprep.subr.bf16.mxu0 %v4348
  %6207 = vmatpush1.bf16.msra.mxu0 %v4347
  %6208 = vmatprep.subr.bf16.mxu0 %v4344
  %6209 = vmatpush1.bf16.msra.mxu0 %v4343
  %6210 = vmatprep.subr.bf16.mxu0 %v4340
  %6211 = vmatpush1.bf16.msra.mxu0 %v4339
  %6212 = vmatprep.subr.bf16.mxu0 %v4336
  %6213 = vmatpush1.bf16.msra.mxu0 %v4335
  %6214 = vmatprep.subr.bf16.mxu0 %v4396
  %6215 = vmatpush2.bf16.msra.mxu0 %v4395
  %6216 = vmatprep.subr.bf16.mxu0 %v4392
  %6217 = vmatpush2.bf16.msra.mxu0 %v4391
  %6218 = vmatprep.subr.bf16.mxu0 %v4388
  %6219 = vmatpush2.bf16.msra.mxu0 %v4387
  %6220 = vmatprep.subr.bf16.mxu0 %v4384
  %6221 = vmatpush2.bf16.msra.mxu0 %v4383
  %6222 = vmatprep.subr.bf16.mxu0 %v4380
  %6223 = vmatpush2.bf16.msra.mxu0 %v4379
  %6224 = vmatprep.subr.bf16.mxu0 %v4376
  %6225 = vmatpush2.bf16.msra.mxu0 %v4375
  %6226 = vmatprep.subr.bf16.mxu0 %v4372
  %6227 = vmatpush2.bf16.msra.mxu0 %v4371
  %6228 = vmatprep.subr.bf16.mxu0 %v4368
  %6229 = vmatpush2.bf16.msra.mxu0 %v4367
  %6230 = vmatprep.mubr.bf16.mxu0 %v1218
  %6231 = vmatmul.mubr.bf16.gmra.mxu0 %v1217
  %v6232 = vpop.f32.mrf.mxu0
  %v6233 = vadd.f32 %v6180, %v6232
  %v6234 = vpop.f32.mrf.mxu0
  %v6235 = vadd.f32 %v6182, %v6234
  %v6236 = vpop.f32.mrf.mxu0
  %v6237 = vadd.f32 %v6184, %v6236
  %v6238 = vpop.f32.mrf.mxu0
  %v6239 = vadd.f32 %v6186, %v6238
  %6240 = vmatprep.mubr.bf16.mxu0 %v1248
  %6241 = vmatmul.mubr.bf16.gmra.mxu0 %v1247
  %v6242 = vpop.f32.mrf.mxu0
  %v6243 = vadd.f32 %v6190, %v6242
  %v6244 = vpop.f32.mrf.mxu0
  %v6245 = vadd.f32 %v6192, %v6244
  %v6246 = vpop.f32.mrf.mxu0
  %v6247 = vadd.f32 %v6194, %v6246
  %v6248 = vpop.f32.mrf.mxu0
  %v6249 = vadd.f32 %v6196, %v6248
  %6250 = vdwg.mxu0
  %6251 = vmatprep.subr.bf16.mxu0 %v4428
  %6252 = vmatpush1.bf16.msra.mxu0 %v4427
  %6253 = vmatprep.subr.bf16.mxu0 %v4424
  %6254 = vmatpush1.bf16.msra.mxu0 %v4423
  %6255 = vmatprep.subr.bf16.mxu0 %v4420
  %6256 = vmatpush1.bf16.msra.mxu0 %v4419
  %6257 = vmatprep.subr.bf16.mxu0 %v4416
  %6258 = vmatpush1.bf16.msra.mxu0 %v4415
  %6259 = vmatprep.subr.bf16.mxu0 %v4412
  %6260 = vmatpush1.bf16.msra.mxu0 %v4411
  %6261 = vmatprep.subr.bf16.mxu0 %v4408
  %6262 = vmatpush1.bf16.msra.mxu0 %v4407
  %6263 = vmatprep.subr.bf16.mxu0 %v4404
  %6264 = vmatpush1.bf16.msra.mxu0 %v4403
  %6265 = vmatprep.subr.bf16.mxu0 %v4400
  %6266 = vmatpush1.bf16.msra.mxu0 %v4399
  %6267 = vmatprep.subr.bf16.mxu0 %v4460
  %6268 = vmatpush2.bf16.msra.mxu0 %v4459
  %6269 = vmatprep.subr.bf16.mxu0 %v4456
  %6270 = vmatpush2.bf16.msra.mxu0 %v4455
  %6271 = vmatprep.subr.bf16.mxu0 %v4452
  %6272 = vmatpush2.bf16.msra.mxu0 %v4451
  %6273 = vmatprep.subr.bf16.mxu0 %v4448
  %6274 = vmatpush2.bf16.msra.mxu0 %v4447
  %6275 = vmatprep.subr.bf16.mxu0 %v4444
  %6276 = vmatpush2.bf16.msra.mxu0 %v4443
  %6277 = vmatprep.subr.bf16.mxu0 %v4440
  %6278 = vmatpush2.bf16.msra.mxu0 %v4439
  %6279 = vmatprep.subr.bf16.mxu0 %v4436
  %6280 = vmatpush2.bf16.msra.mxu0 %v4435
  %6281 = vmatprep.subr.bf16.mxu0 %v4432
  %6282 = vmatpush2.bf16.msra.mxu0 %v4431
  %6283 = vmatprep.mubr.bf16.mxu0 %v1220
  %6284 = vmatmul.mubr.bf16.gmra.mxu0 %v1219
  %v6285 = vpop.f32.mrf.mxu0
  %v6286 = vadd.f32 %v6233, %v6285
  %v6287 = vpop.f32.mrf.mxu0
  %v6288 = vadd.f32 %v6235, %v6287
  %v6289 = vpop.f32.mrf.mxu0
  %v6290 = vadd.f32 %v6237, %v6289
  %v6291 = vpop.f32.mrf.mxu0
  %v6292 = vadd.f32 %v6239, %v6291
  %6293 = vmatprep.mubr.bf16.mxu0 %v1250
  %6294 = vmatmul.mubr.bf16.gmra.mxu0 %v1249
  %v6295 = vpop.f32.mrf.mxu0
  %v6296 = vadd.f32 %v6243, %v6295
  %v6297 = vpop.f32.mrf.mxu0
  %v6298 = vadd.f32 %v6245, %v6297
  %v6299 = vpop.f32.mrf.mxu0
  %v6300 = vadd.f32 %v6247, %v6299
  %v6301 = vpop.f32.mrf.mxu0
  %v6302 = vadd.f32 %v6249, %v6301
  %6303 = vdwg.mxu0
  %6304 = vmatprep.subr.bf16.mxu0 %v4492
  %6305 = vmatpush1.bf16.msra.mxu0 %v4491
  %6306 = vmatprep.subr.bf16.mxu0 %v4488
  %6307 = vmatpush1.bf16.msra.mxu0 %v4487
  %6308 = vmatprep.subr.bf16.mxu0 %v4484
  %6309 = vmatpush1.bf16.msra.mxu0 %v4483
  %6310 = vmatprep.subr.bf16.mxu0 %v4480
  %6311 = vmatpush1.bf16.msra.mxu0 %v4479
  %6312 = vmatprep.subr.bf16.mxu0 %v4476
  %6313 = vmatpush1.bf16.msra.mxu0 %v4475
  %6314 = vmatprep.subr.bf16.mxu0 %v4472
  %6315 = vmatpush1.bf16.msra.mxu0 %v4471
  %6316 = vmatprep.subr.bf16.mxu0 %v4468
  %6317 = vmatpush1.bf16.msra.mxu0 %v4467
  %6318 = vmatprep.subr.bf16.mxu0 %v4464
  %6319 = vmatpush1.bf16.msra.mxu0 %v4463
  %6320 = vmatprep.subr.bf16.mxu0 %v4524
  %6321 = vmatpush2.bf16.msra.mxu0 %v4523
  %6322 = vmatprep.subr.bf16.mxu0 %v4520
  %6323 = vmatpush2.bf16.msra.mxu0 %v4519
  %6324 = vmatprep.subr.bf16.mxu0 %v4516
  %6325 = vmatpush2.bf16.msra.mxu0 %v4515
  %6326 = vmatprep.subr.bf16.mxu0 %v4512
  %6327 = vmatpush2.bf16.msra.mxu0 %v4511
  %6328 = vmatprep.subr.bf16.mxu0 %v4508
  %6329 = vmatpush2.bf16.msra.mxu0 %v4507
  %6330 = vmatprep.subr.bf16.mxu0 %v4504
  %6331 = vmatpush2.bf16.msra.mxu0 %v4503
  %6332 = vmatprep.subr.bf16.mxu0 %v4500
  %6333 = vmatpush2.bf16.msra.mxu0 %v4499
  %6334 = vmatprep.subr.bf16.mxu0 %v4496
  %6335 = vmatpush2.bf16.msra.mxu0 %v4495
  %6336 = vmatprep.mubr.bf16.mxu0 %v1222
  %6337 = vmatmul.mubr.bf16.gmra.mxu0 %v1221
  %v6338 = vpop.f32.mrf.mxu0
  %v6339 = vadd.f32 %v6286, %v6338
  %v6340 = vpop.f32.mrf.mxu0
  %v6341 = vadd.f32 %v6288, %v6340
  %v6342 = vpop.f32.mrf.mxu0
  %v6343 = vadd.f32 %v6290, %v6342
  %v6344 = vpop.f32.mrf.mxu0
  %v6345 = vadd.f32 %v6292, %v6344
  %6346 = vmatprep.mubr.bf16.mxu0 %v1252
  %6347 = vmatmul.mubr.bf16.gmra.mxu0 %v1251
  %v6348 = vpop.f32.mrf.mxu0
  %v6349 = vadd.f32 %v6296, %v6348
  %v6350 = vpop.f32.mrf.mxu0
  %v6351 = vadd.f32 %v6298, %v6350
  %v6352 = vpop.f32.mrf.mxu0
  %v6353 = vadd.f32 %v6300, %v6352
  %v6354 = vpop.f32.mrf.mxu0
  %v6355 = vadd.f32 %v6302, %v6354
  %6356 = vdwg.mxu0
  %6357 = vmatprep.subr.bf16.mxu0 %v4556
  %6358 = vmatpush1.bf16.msra.mxu0 %v4555
  %6359 = vmatprep.subr.bf16.mxu0 %v4552
  %6360 = vmatpush1.bf16.msra.mxu0 %v4551
  %6361 = vmatprep.subr.bf16.mxu0 %v4548
  %6362 = vmatpush1.bf16.msra.mxu0 %v4547
  %6363 = vmatprep.subr.bf16.mxu0 %v4544
  %6364 = vmatpush1.bf16.msra.mxu0 %v4543
  %6365 = vmatprep.subr.bf16.mxu0 %v4540
  %6366 = vmatpush1.bf16.msra.mxu0 %v4539
  %6367 = vmatprep.subr.bf16.mxu0 %v4536
  %6368 = vmatpush1.bf16.msra.mxu0 %v4535
  %6369 = vmatprep.subr.bf16.mxu0 %v4532
  %6370 = vmatpush1.bf16.msra.mxu0 %v4531
  %6371 = vmatprep.subr.bf16.mxu0 %v4528
  %6372 = vmatpush1.bf16.msra.mxu0 %v4527
  %6373 = vmatprep.subr.bf16.mxu0 %v4588
  %6374 = vmatpush2.bf16.msra.mxu0 %v4587
  %6375 = vmatprep.subr.bf16.mxu0 %v4584
  %6376 = vmatpush2.bf16.msra.mxu0 %v4583
  %6377 = vmatprep.subr.bf16.mxu0 %v4580
  %6378 = vmatpush2.bf16.msra.mxu0 %v4579
  %6379 = vmatprep.subr.bf16.mxu0 %v4576
  %6380 = vmatpush2.bf16.msra.mxu0 %v4575
  %6381 = vmatprep.subr.bf16.mxu0 %v4572
  %6382 = vmatpush2.bf16.msra.mxu0 %v4571
  %6383 = vmatprep.subr.bf16.mxu0 %v4568
  %6384 = vmatpush2.bf16.msra.mxu0 %v4567
  %6385 = vmatprep.subr.bf16.mxu0 %v4564
  %6386 = vmatpush2.bf16.msra.mxu0 %v4563
  %6387 = vmatprep.subr.bf16.mxu0 %v4560
  %6388 = vmatpush2.bf16.msra.mxu0 %v4559
  %6389 = vmatprep.mubr.bf16.mxu0 %v1224
  %6390 = vmatmul.mubr.bf16.gmra.mxu0 %v1223
  %v6391 = vpop.f32.mrf.mxu0
  %v6392 = vadd.f32 %v6339, %v6391
  %v6393 = vpop.f32.mrf.mxu0
  %v6394 = vadd.f32 %v6341, %v6393
  %v6395 = vpop.f32.mrf.mxu0
  %v6396 = vadd.f32 %v6343, %v6395
  %v6397 = vpop.f32.mrf.mxu0
  %v6398 = vadd.f32 %v6345, %v6397
  %6399 = vmatprep.mubr.bf16.mxu0 %v1254
  %6400 = vmatmul.mubr.bf16.gmra.mxu0 %v1253
  %v6401 = vpop.f32.mrf.mxu0
  %v6402 = vadd.f32 %v6349, %v6401
  %v6403 = vpop.f32.mrf.mxu0
  %v6404 = vadd.f32 %v6351, %v6403
  %v6405 = vpop.f32.mrf.mxu0
  %v6406 = vadd.f32 %v6353, %v6405
  %v6407 = vpop.f32.mrf.mxu0
  %v6408 = vadd.f32 %v6355, %v6407
  %6409 = vdwg.mxu0
  %6410 = vmatprep.subr.bf16.mxu0 %v4620
  %6411 = vmatpush1.bf16.msra.mxu0 %v4619
  %6412 = vmatprep.subr.bf16.mxu0 %v4616
  %6413 = vmatpush1.bf16.msra.mxu0 %v4615
  %6414 = vmatprep.subr.bf16.mxu0 %v4612
  %6415 = vmatpush1.bf16.msra.mxu0 %v4611
  %6416 = vmatprep.subr.bf16.mxu0 %v4608
  %6417 = vmatpush1.bf16.msra.mxu0 %v4607
  %6418 = vmatprep.subr.bf16.mxu0 %v4604
  %6419 = vmatpush1.bf16.msra.mxu0 %v4603
  %6420 = vmatprep.subr.bf16.mxu0 %v4600
  %6421 = vmatpush1.bf16.msra.mxu0 %v4599
  %6422 = vmatprep.subr.bf16.mxu0 %v4596
  %6423 = vmatpush1.bf16.msra.mxu0 %v4595
  %6424 = vmatprep.subr.bf16.mxu0 %v4592
  %6425 = vmatpush1.bf16.msra.mxu0 %v4591
  %6426 = vmatprep.subr.bf16.mxu0 %v4652
  %6427 = vmatpush2.bf16.msra.mxu0 %v4651
  %6428 = vmatprep.subr.bf16.mxu0 %v4648
  %6429 = vmatpush2.bf16.msra.mxu0 %v4647
  %6430 = vmatprep.subr.bf16.mxu0 %v4644
  %6431 = vmatpush2.bf16.msra.mxu0 %v4643
  %6432 = vmatprep.subr.bf16.mxu0 %v4640
  %6433 = vmatpush2.bf16.msra.mxu0 %v4639
  %6434 = vmatprep.subr.bf16.mxu0 %v4636
  %6435 = vmatpush2.bf16.msra.mxu0 %v4635
  %6436 = vmatprep.subr.bf16.mxu0 %v4632
  %6437 = vmatpush2.bf16.msra.mxu0 %v4631
  %6438 = vmatprep.subr.bf16.mxu0 %v4628
  %6439 = vmatpush2.bf16.msra.mxu0 %v4627
  %6440 = vmatprep.subr.bf16.mxu0 %v4624
  %6441 = vmatpush2.bf16.msra.mxu0 %v4623
  %6442 = vmatprep.mubr.bf16.mxu0 %v1226
  %6443 = vmatmul.mubr.bf16.gmra.mxu0 %v1225
  %v6444 = vpop.f32.mrf.mxu0
  %v6445 = vadd.f32 %v6392, %v6444
  %v6446 = vpop.f32.mrf.mxu0
  %v6447 = vadd.f32 %v6394, %v6446
  %v6448 = vpop.f32.mrf.mxu0
  %v6449 = vadd.f32 %v6396, %v6448
  %v6450 = vpop.f32.mrf.mxu0
  %v6451 = vadd.f32 %v6398, %v6450
  %6452 = vmatprep.mubr.bf16.mxu0 %v1256
  %6453 = vmatmul.mubr.bf16.gmra.mxu0 %v1255
  %v6454 = vpop.f32.mrf.mxu0
  %v6455 = vadd.f32 %v6402, %v6454
  %v6456 = vpop.f32.mrf.mxu0
  %v6457 = vadd.f32 %v6404, %v6456
  %v6458 = vpop.f32.mrf.mxu0
  %v6459 = vadd.f32 %v6406, %v6458
  %v6460 = vpop.f32.mrf.mxu0
  %v6461 = vadd.f32 %v6408, %v6460
  %6462 = vdwg.mxu0
  %6463 = vmatprep.subr.bf16.mxu0 %v4684
  %6464 = vmatpush1.bf16.msra.mxu0 %v4683
  %6465 = vmatprep.subr.bf16.mxu0 %v4680
  %6466 = vmatpush1.bf16.msra.mxu0 %v4679
  %6467 = vmatprep.subr.bf16.mxu0 %v4676
  %6468 = vmatpush1.bf16.msra.mxu0 %v4675
  %6469 = vmatprep.subr.bf16.mxu0 %v4672
  %6470 = vmatpush1.bf16.msra.mxu0 %v4671
  %6471 = vmatprep.subr.bf16.mxu0 %v4668
  %6472 = vmatpush1.bf16.msra.mxu0 %v4667
  %6473 = vmatprep.subr.bf16.mxu0 %v4664
  %6474 = vmatpush1.bf16.msra.mxu0 %v4663
  %6475 = vmatprep.subr.bf16.mxu0 %v4660
  %6476 = vmatpush1.bf16.msra.mxu0 %v4659
  %6477 = vmatprep.subr.bf16.mxu0 %v4656
  %6478 = vmatpush1.bf16.msra.mxu0 %v4655
  %6479 = vmatprep.subr.bf16.mxu0 %v4716
  %6480 = vmatpush2.bf16.msra.mxu0 %v4715
  %6481 = vmatprep.subr.bf16.mxu0 %v4712
  %6482 = vmatpush2.bf16.msra.mxu0 %v4711
  %6483 = vmatprep.subr.bf16.mxu0 %v4708
  %6484 = vmatpush2.bf16.msra.mxu0 %v4707
  %6485 = vmatprep.subr.bf16.mxu0 %v4704
  %6486 = vmatpush2.bf16.msra.mxu0 %v4703
  %6487 = vmatprep.subr.bf16.mxu0 %v4700
  %6488 = vmatpush2.bf16.msra.mxu0 %v4699
  %6489 = vmatprep.subr.bf16.mxu0 %v4696
  %6490 = vmatpush2.bf16.msra.mxu0 %v4695
  %6491 = vmatprep.subr.bf16.mxu0 %v4692
  %6492 = vmatpush2.bf16.msra.mxu0 %v4691
  %6493 = vmatprep.subr.bf16.mxu0 %v4688
  %6494 = vmatpush2.bf16.msra.mxu0 %v4687
  %6495 = vmatprep.mubr.bf16.mxu0 %v1228
  %6496 = vmatmul.mubr.bf16.gmra.mxu0 %v1227
  %v6497 = vpop.f32.mrf.mxu0
  %v6498 = vadd.f32 %v6445, %v6497
  %v6499 = vpop.f32.mrf.mxu0
  %v6500 = vadd.f32 %v6447, %v6499
  %v6501 = vpop.f32.mrf.mxu0
  %v6502 = vadd.f32 %v6449, %v6501
  %v6503 = vpop.f32.mrf.mxu0
  %v6504 = vadd.f32 %v6451, %v6503
  %6505 = vmatprep.mubr.bf16.mxu0 %v1258
  %6506 = vmatmul.mubr.bf16.gmra.mxu0 %v1257
  %v6507 = vpop.f32.mrf.mxu0
  %v6508 = vadd.f32 %v6455, %v6507
  %v6509 = vpop.f32.mrf.mxu0
  %v6510 = vadd.f32 %v6457, %v6509
  %v6511 = vpop.f32.mrf.mxu0
  %v6512 = vadd.f32 %v6459, %v6511
  %v6513 = vpop.f32.mrf.mxu0
  %v6514 = vadd.f32 %v6461, %v6513
  %6515 = vdwg.mxu0
  %6516 = vmatprep.subr.bf16.mxu0 %v4748
  %6517 = vmatpush1.bf16.msra.mxu0 %v4747
  %6518 = vmatprep.subr.bf16.mxu0 %v4744
  %6519 = vmatpush1.bf16.msra.mxu0 %v4743
  %6520 = vmatprep.subr.bf16.mxu0 %v4740
  %6521 = vmatpush1.bf16.msra.mxu0 %v4739
  %6522 = vmatprep.subr.bf16.mxu0 %v4736
  %6523 = vmatpush1.bf16.msra.mxu0 %v4735
  %6524 = vmatprep.subr.bf16.mxu0 %v4732
  %6525 = vmatpush1.bf16.msra.mxu0 %v4731
  %6526 = vmatprep.subr.bf16.mxu0 %v4728
  %6527 = vmatpush1.bf16.msra.mxu0 %v4727
  %6528 = vmatprep.subr.bf16.mxu0 %v4724
  %6529 = vmatpush1.bf16.msra.mxu0 %v4723
  %6530 = vmatprep.subr.bf16.mxu0 %v4720
  %6531 = vmatpush1.bf16.msra.mxu0 %v4719
  %6532 = vmatprep.subr.bf16.mxu0 %v4780
  %6533 = vmatpush2.bf16.msra.mxu0 %v4779
  %6534 = vmatprep.subr.bf16.mxu0 %v4776
  %6535 = vmatpush2.bf16.msra.mxu0 %v4775
  %6536 = vmatprep.subr.bf16.mxu0 %v4772
  %6537 = vmatpush2.bf16.msra.mxu0 %v4771
  %6538 = vmatprep.subr.bf16.mxu0 %v4768
  %6539 = vmatpush2.bf16.msra.mxu0 %v4767
  %6540 = vmatprep.subr.bf16.mxu0 %v4764
  %6541 = vmatpush2.bf16.msra.mxu0 %v4763
  %6542 = vmatprep.subr.bf16.mxu0 %v4760
  %6543 = vmatpush2.bf16.msra.mxu0 %v4759
  %6544 = vmatprep.subr.bf16.mxu0 %v4756
  %6545 = vmatpush2.bf16.msra.mxu0 %v4755
  %6546 = vmatprep.subr.bf16.mxu0 %v4752
  %6547 = vmatpush2.bf16.msra.mxu0 %v4751
  %6548 = vmatprep.mubr.bf16.mxu0 %v1230
  %6549 = vmatmul.mubr.bf16.gmra.mxu0 %v1229
  %v6550 = vpop.f32.mrf.mxu0
  %v6551 = vadd.f32 %v6498, %v6550
  %v6552 = vpop.f32.mrf.mxu0
  %v6553 = vadd.f32 %v6500, %v6552
  %v6554 = vpop.f32.mrf.mxu0
  %v6555 = vadd.f32 %v6502, %v6554
  %v6556 = vpop.f32.mrf.mxu0
  %v6557 = vadd.f32 %v6504, %v6556
  %6558 = vmatprep.mubr.bf16.mxu0 %v1260
  %6559 = vmatmul.mubr.bf16.gmra.mxu0 %v1259
  %v6560 = vpop.f32.mrf.mxu0
  %v6561 = vadd.f32 %v6508, %v6560
  %v6562 = vpop.f32.mrf.mxu0
  %v6563 = vadd.f32 %v6510, %v6562
  %v6564 = vpop.f32.mrf.mxu0
  %v6565 = vadd.f32 %v6512, %v6564
  %v6566 = vpop.f32.mrf.mxu0
  %v6567 = vadd.f32 %v6514, %v6566
  %6568 = vdwg.mxu0
  %6569 = vmatprep.subr.bf16.mxu0 %v4812
  %6570 = vmatpush1.bf16.msra.mxu0 %v4811
  %6571 = vmatprep.subr.bf16.mxu0 %v4808
  %6572 = vmatpush1.bf16.msra.mxu0 %v4807
  %6573 = vmatprep.subr.bf16.mxu0 %v4804
  %6574 = vmatpush1.bf16.msra.mxu0 %v4803
  %6575 = vmatprep.subr.bf16.mxu0 %v4800
  %6576 = vmatpush1.bf16.msra.mxu0 %v4799
  %6577 = vmatprep.subr.bf16.mxu0 %v4796
  %6578 = vmatpush1.bf16.msra.mxu0 %v4795
  %6579 = vmatprep.subr.bf16.mxu0 %v4792
  %6580 = vmatpush1.bf16.msra.mxu0 %v4791
  %6581 = vmatprep.subr.bf16.mxu0 %v4788
  %6582 = vmatpush1.bf16.msra.mxu0 %v4787
  %6583 = vmatprep.subr.bf16.mxu0 %v4784
  %6584 = vmatpush1.bf16.msra.mxu0 %v4783
  %6585 = vmatprep.subr.bf16.mxu0 %v4844
  %6586 = vmatpush2.bf16.msra.mxu0 %v4843
  %6587 = vmatprep.subr.bf16.mxu0 %v4840
  %6588 = vmatpush2.bf16.msra.mxu0 %v4839
  %6589 = vmatprep.subr.bf16.mxu0 %v4836
  %6590 = vmatpush2.bf16.msra.mxu0 %v4835
  %6591 = vmatprep.subr.bf16.mxu0 %v4832
  %6592 = vmatpush2.bf16.msra.mxu0 %v4831
  %6593 = vmatprep.subr.bf16.mxu0 %v4828
  %6594 = vmatpush2.bf16.msra.mxu0 %v4827
  %6595 = vmatprep.subr.bf16.mxu0 %v4824
  %6596 = vmatpush2.bf16.msra.mxu0 %v4823
  %6597 = vmatprep.subr.bf16.mxu0 %v4820
  %6598 = vmatpush2.bf16.msra.mxu0 %v4819
  %6599 = vmatprep.subr.bf16.mxu0 %v4816
  %6600 = vmatpush2.bf16.msra.mxu0 %v4815
  %6601 = vmatprep.mubr.bf16.mxu0 %v1232
  %6602 = vmatmul.mubr.bf16.gmra.mxu0 %v1231
  %v6603 = vpop.f32.mrf.mxu0
  %v6604 = vadd.f32 %v6551, %v6603
  %v6605 = vpop.f32.mrf.mxu0
  %v6606 = vadd.f32 %v6553, %v6605
  %v6607 = vpop.f32.mrf.mxu0
  %v6608 = vadd.f32 %v6555, %v6607
  %v6609 = vpop.f32.mrf.mxu0
  %v6610 = vadd.f32 %v6557, %v6609
  %6611 = vmatprep.mubr.bf16.mxu0 %v1262
  %6612 = vmatmul.mubr.bf16.gmra.mxu0 %v1261
  %v6613 = vpop.f32.mrf.mxu0
  %v6614 = vadd.f32 %v6561, %v6613
  %v6615 = vpop.f32.mrf.mxu0
  %v6616 = vadd.f32 %v6563, %v6615
  %v6617 = vpop.f32.mrf.mxu0
  %v6618 = vadd.f32 %v6565, %v6617
  %v6619 = vpop.f32.mrf.mxu0
  %v6620 = vadd.f32 %v6567, %v6619
  %6621 = vdwg.mxu0
  %6622 = vmatprep.subr.bf16.mxu0 %v4876
  %6623 = vmatpush1.bf16.msra.mxu0 %v4875
  %6624 = vmatprep.subr.bf16.mxu0 %v4872
  %6625 = vmatpush1.bf16.msra.mxu0 %v4871
  %6626 = vmatprep.subr.bf16.mxu0 %v4868
  %6627 = vmatpush1.bf16.msra.mxu0 %v4867
  %6628 = vmatprep.subr.bf16.mxu0 %v4864
  %6629 = vmatpush1.bf16.msra.mxu0 %v4863
  %6630 = vmatprep.subr.bf16.mxu0 %v4860
  %6631 = vmatpush1.bf16.msra.mxu0 %v4859
  %6632 = vmatprep.subr.bf16.mxu0 %v4856
  %6633 = vmatpush1.bf16.msra.mxu0 %v4855
  %6634 = vmatprep.subr.bf16.mxu0 %v4852
  %6635 = vmatpush1.bf16.msra.mxu0 %v4851
  %6636 = vmatprep.subr.bf16.mxu0 %v4848
  %6637 = vmatpush1.bf16.msra.mxu0 %v4847
  %6638 = vmatprep.subr.bf16.mxu0 %v4908
  %6639 = vmatpush2.bf16.msra.mxu0 %v4907
  %6640 = vmatprep.subr.bf16.mxu0 %v4904
  %6641 = vmatpush2.bf16.msra.mxu0 %v4903
  %6642 = vmatprep.subr.bf16.mxu0 %v4900
  %6643 = vmatpush2.bf16.msra.mxu0 %v4899
  %6644 = vmatprep.subr.bf16.mxu0 %v4896
  %6645 = vmatpush2.bf16.msra.mxu0 %v4895
  %6646 = vmatprep.subr.bf16.mxu0 %v4892
  %6647 = vmatpush2.bf16.msra.mxu0 %v4891
  %6648 = vmatprep.subr.bf16.mxu0 %v4888
  %6649 = vmatpush2.bf16.msra.mxu0 %v4887
  %6650 = vmatprep.subr.bf16.mxu0 %v4884
  %6651 = vmatpush2.bf16.msra.mxu0 %v4883
  %6652 = vmatprep.subr.bf16.mxu0 %v4880
  %6653 = vmatpush2.bf16.msra.mxu0 %v4879
  %6654 = vmatprep.mubr.bf16.mxu0 %v1234
  %6655 = vmatmul.mubr.bf16.gmra.mxu0 %v1233
  %v6656 = vpop.f32.mrf.mxu0
  %v6657 = vadd.f32 %v6604, %v6656
  %v6658 = vpop.f32.mrf.mxu0
  %v6659 = vadd.f32 %v6606, %v6658
  %v6660 = vpop.f32.mrf.mxu0
  %v6661 = vadd.f32 %v6608, %v6660
  %v6662 = vpop.f32.mrf.mxu0
  %v6663 = vadd.f32 %v6610, %v6662
  %6664 = vmatprep.mubr.bf16.mxu0 %v1264
  %6665 = vmatmul.mubr.bf16.gmra.mxu0 %v1263
  %v6666 = vpop.f32.mrf.mxu0
  %v6667 = vadd.f32 %v6614, %v6666
  %v6668 = vpop.f32.mrf.mxu0
  %v6669 = vadd.f32 %v6616, %v6668
  %v6670 = vpop.f32.mrf.mxu0
  %v6671 = vadd.f32 %v6618, %v6670
  %v6672 = vpop.f32.mrf.mxu0
  %v6673 = vadd.f32 %v6620, %v6672
  %6674 = vdwg.mxu0
  %6675 = vmatprep.subr.bf16.mxu0 %v4940
  %6676 = vmatpush1.bf16.msra.mxu0 %v4939
  %6677 = vmatprep.subr.bf16.mxu0 %v4936
  %6678 = vmatpush1.bf16.msra.mxu0 %v4935
  %6679 = vmatprep.subr.bf16.mxu0 %v4932
  %6680 = vmatpush1.bf16.msra.mxu0 %v4931
  %6681 = vmatprep.subr.bf16.mxu0 %v4928
  %6682 = vmatpush1.bf16.msra.mxu0 %v4927
  %6683 = vmatprep.subr.bf16.mxu0 %v4924
  %6684 = vmatpush1.bf16.msra.mxu0 %v4923
  %6685 = vmatprep.subr.bf16.mxu0 %v4920
  %6686 = vmatpush1.bf16.msra.mxu0 %v4919
  %6687 = vmatprep.subr.bf16.mxu0 %v4916
  %6688 = vmatpush1.bf16.msra.mxu0 %v4915
  %6689 = vmatprep.subr.bf16.mxu0 %v4912
  %6690 = vmatpush1.bf16.msra.mxu0 %v4911
  %6691 = vmatprep.subr.bf16.mxu0 %v4972
  %6692 = vmatpush2.bf16.msra.mxu0 %v4971
  %6693 = vmatprep.subr.bf16.mxu0 %v4968
  %6694 = vmatpush2.bf16.msra.mxu0 %v4967
  %6695 = vmatprep.subr.bf16.mxu0 %v4964
  %6696 = vmatpush2.bf16.msra.mxu0 %v4963
  %6697 = vmatprep.subr.bf16.mxu0 %v4960
  %6698 = vmatpush2.bf16.msra.mxu0 %v4959
  %6699 = vmatprep.subr.bf16.mxu0 %v4956
  %6700 = vmatpush2.bf16.msra.mxu0 %v4955
  %6701 = vmatprep.subr.bf16.mxu0 %v4952
  %6702 = vmatpush2.bf16.msra.mxu0 %v4951
  %6703 = vmatprep.subr.bf16.mxu0 %v4948
  %6704 = vmatpush2.bf16.msra.mxu0 %v4947
  %6705 = vmatprep.subr.bf16.mxu0 %v4944
  %6706 = vmatpush2.bf16.msra.mxu0 %v4943
  %6707 = vmatprep.mubr.bf16.mxu0 %v1236
  %6708 = vmatmul.mubr.bf16.gmra.mxu0 %v1235
  %v6709 = vpop.f32.mrf.mxu0
  %v6710 = vadd.f32 %v6657, %v6709
  %v6711 = vpop.f32.mrf.mxu0
  %v6712 = vadd.f32 %v6659, %v6711
  %v6713 = vpop.f32.mrf.mxu0
  %v6714 = vadd.f32 %v6661, %v6713
  %v6715 = vpop.f32.mrf.mxu0
  %v6716 = vadd.f32 %v6663, %v6715
  %6717 = vmatprep.mubr.bf16.mxu0 %v1266
  %6718 = vmatmul.mubr.bf16.gmra.mxu0 %v1265
  %v6719 = vpop.f32.mrf.mxu0
  %v6720 = vadd.f32 %v6667, %v6719
  %v6721 = vpop.f32.mrf.mxu0
  %v6722 = vadd.f32 %v6669, %v6721
  %v6723 = vpop.f32.mrf.mxu0
  %v6724 = vadd.f32 %v6671, %v6723
  %v6725 = vpop.f32.mrf.mxu0
  %v6726 = vadd.f32 %v6673, %v6725
  %6727 = vdwg.mxu0
  %6728 = vmatprep.subr.bf16.mxu0 %v5004
  %6729 = vmatpush1.bf16.msra.mxu0 %v5003
  %6730 = vmatprep.subr.bf16.mxu0 %v5000
  %6731 = vmatpush1.bf16.msra.mxu0 %v4999
  %6732 = vmatprep.subr.bf16.mxu0 %v4996
  %6733 = vmatpush1.bf16.msra.mxu0 %v4995
  %6734 = vmatprep.subr.bf16.mxu0 %v4992
  %6735 = vmatpush1.bf16.msra.mxu0 %v4991
  %6736 = vmatprep.subr.bf16.mxu0 %v4988
  %6737 = vmatpush1.bf16.msra.mxu0 %v4987
  %6738 = vmatprep.subr.bf16.mxu0 %v4984
  %6739 = vmatpush1.bf16.msra.mxu0 %v4983
  %6740 = vmatprep.subr.bf16.mxu0 %v4980
  %6741 = vmatpush1.bf16.msra.mxu0 %v4979
  %6742 = vmatprep.subr.bf16.mxu0 %v4976
  %6743 = vmatpush1.bf16.msra.mxu0 %v4975
  %6744 = vmatprep.subr.bf16.mxu0 %v5036
  %6745 = vmatpush2.bf16.msra.mxu0 %v5035
  %6746 = vmatprep.subr.bf16.mxu0 %v5032
  %6747 = vmatpush2.bf16.msra.mxu0 %v5031
  %6748 = vmatprep.subr.bf16.mxu0 %v5028
  %6749 = vmatpush2.bf16.msra.mxu0 %v5027
  %6750 = vmatprep.subr.bf16.mxu0 %v5024
  %6751 = vmatpush2.bf16.msra.mxu0 %v5023
  %6752 = vmatprep.subr.bf16.mxu0 %v5020
  %6753 = vmatpush2.bf16.msra.mxu0 %v5019
  %6754 = vmatprep.subr.bf16.mxu0 %v5016
  %6755 = vmatpush2.bf16.msra.mxu0 %v5015
  %6756 = vmatprep.subr.bf16.mxu0 %v5012
  %6757 = vmatpush2.bf16.msra.mxu0 %v5011
  %6758 = vmatprep.subr.bf16.mxu0 %v5008
  %6759 = vmatpush2.bf16.msra.mxu0 %v5007
  %6760 = vmatprep.mubr.bf16.mxu0 %v1238
  %6761 = vmatmul.mubr.bf16.gmra.mxu0 %v1237
  %v6762 = vpop.f32.mrf.mxu0
  %v6763 = vadd.f32 %v6710, %v6762
  %v6764 = vpop.f32.mrf.mxu0
  %v6765 = vadd.f32 %v6712, %v6764
  %v6766 = vpop.f32.mrf.mxu0
  %v6767 = vadd.f32 %v6714, %v6766
  %v6768 = vpop.f32.mrf.mxu0
  %v6769 = vadd.f32 %v6716, %v6768
  %6770 = vmatprep.mubr.bf16.mxu0 %v1268
  %6771 = vmatmul.mubr.bf16.gmra.mxu0 %v1267
  %v6772 = vpop.f32.mrf.mxu0
  %v6773 = vadd.f32 %v6720, %v6772
  %v6774 = vpop.f32.mrf.mxu0
  %v6775 = vadd.f32 %v6722, %v6774
  %v6776 = vpop.f32.mrf.mxu0
  %v6777 = vadd.f32 %v6724, %v6776
  %v6778 = vpop.f32.mrf.mxu0
  %v6779 = vadd.f32 %v6726, %v6778
  %6780 = vdwg.mxu0
  %6781 = vmatprep.subr.bf16.mxu0 %v5068
  %6782 = vmatpush1.bf16.msra.mxu0 %v5067
  %6783 = vmatprep.subr.bf16.mxu0 %v5064
  %6784 = vmatpush1.bf16.msra.mxu0 %v5063
  %6785 = vmatprep.subr.bf16.mxu0 %v5060
  %6786 = vmatpush1.bf16.msra.mxu0 %v5059
  %6787 = vmatprep.subr.bf16.mxu0 %v5056
  %6788 = vmatpush1.bf16.msra.mxu0 %v5055
  %6789 = vmatprep.subr.bf16.mxu0 %v5052
  %6790 = vmatpush1.bf16.msra.mxu0 %v5051
  %6791 = vmatprep.subr.bf16.mxu0 %v5048
  %6792 = vmatpush1.bf16.msra.mxu0 %v5047
  %6793 = vmatprep.subr.bf16.mxu0 %v5044
  %6794 = vmatpush1.bf16.msra.mxu0 %v5043
  %6795 = vmatprep.subr.bf16.mxu0 %v5040
  %6796 = vmatpush1.bf16.msra.mxu0 %v5039
  %6797 = vmatprep.subr.bf16.mxu0 0
  %6798 = vmatpush2.bf16.msra.mxu0 0
  %6799 = vmatprep.subr.bf16.mxu0 0
  %6800 = vmatpush2.bf16.msra.mxu0 0
  %6801 = vmatprep.subr.bf16.mxu0 0
  %6802 = vmatpush2.bf16.msra.mxu0 0
  %6803 = vmatprep.subr.bf16.mxu0 0
  %6804 = vmatpush2.bf16.msra.mxu0 0
  %6805 = vmatprep.subr.bf16.mxu0 0
  %6806 = vmatpush2.bf16.msra.mxu0 0
  %6807 = vmatprep.subr.bf16.mxu0 %v6031
  %6808 = vmatpush2.bf16.msra.mxu0 %v6028
  %6809 = vmatprep.subr.bf16.mxu0 %v5076
  %6810 = vmatpush2.bf16.msra.mxu0 %v5075
  %6811 = vmatprep.subr.bf16.mxu0 %v5072
  %6812 = vmatpush2.bf16.msra.mxu0 %v5071
  %6813 = vmatprep.mubr.bf16.mxu0 %v6021
  %6814 = vmatmul.mubr.bf16.gmra.mxu0 %v1239
  %v6815 = vpop.f32.mrf.mxu0
  %v6816 = vadd.f32 %v6763, %v6815
  %v6817 = vpop.f32.mrf.mxu0
  %v6818 = vadd.f32 %v6765, %v6817
  %v6819 = vpop.f32.mrf.mxu0
  %v6820 = vadd.f32 %v6767, %v6819
  %v6821 = vpop.f32.mrf.mxu0
  %v6822 = vadd.f32 %v6769, %v6821
  %6823 = vmatprep.mubr.bf16.mxu0 %v6024
  %6824 = vmatmul.mubr.bf16.gmra.mxu0 %v1269
  %v6825 = vpop.f32.mrf.mxu0
  %v6826 = vadd.f32 %v6773, %v6825
  %v6827 = vpop.f32.mrf.mxu0
  %v6828 = vadd.f32 %v6775, %v6827
  %v6829 = vpop.f32.mrf.mxu0
  %v6830 = vadd.f32 %v6777, %v6829
  %v6831 = vpop.f32.mrf.mxu0
  %v6832 = vadd.f32 %v6779, %v6831
  %6833 = vdwg.mxu0
  %6834 = vmatprep.subr.bf16.mxu0 %v4174
  %6835 = vmatpush1.bf16.msra.mxu0 %v4173
  %6836 = vmatprep.subr.bf16.mxu0 %v4170
  %6837 = vmatpush1.bf16.msra.mxu0 %v4169
  %6838 = vmatprep.subr.bf16.mxu0 %v4166
  %6839 = vmatpush1.bf16.msra.mxu0 %v4165
  %6840 = vmatprep.subr.bf16.mxu0 %v4162
  %6841 = vmatpush1.bf16.msra.mxu0 %v4161
  %6842 = vmatprep.subr.bf16.mxu0 %v4158
  %6843 = vmatpush1.bf16.msra.mxu0 %v4157
  %6844 = vmatprep.subr.bf16.mxu0 %v4154
  %6845 = vmatpush1.bf16.msra.mxu0 %v4153
  %6846 = vmatprep.subr.bf16.mxu0 %v4150
  %6847 = vmatpush1.bf16.msra.mxu0 %v4149
  %6848 = vmatprep.subr.bf16.mxu0 %v4146
  %6849 = vmatpush1.bf16.msra.mxu0 %v4145
  %6850 = vmatprep.subr.bf16.mxu0 %v4206
  %6851 = vmatpush2.bf16.msra.mxu0 %v4205
  %6852 = vmatprep.subr.bf16.mxu0 %v4202
  %6853 = vmatpush2.bf16.msra.mxu0 %v4201
  %6854 = vmatprep.subr.bf16.mxu0 %v4198
  %6855 = vmatpush2.bf16.msra.mxu0 %v4197
  %6856 = vmatprep.subr.bf16.mxu0 %v4194
  %6857 = vmatpush2.bf16.msra.mxu0 %v4193
  %6858 = vmatprep.subr.bf16.mxu0 %v4190
  %6859 = vmatpush2.bf16.msra.mxu0 %v4189
  %6860 = vmatprep.subr.bf16.mxu0 %v4186
  %6861 = vmatpush2.bf16.msra.mxu0 %v4185
  %6862 = vmatprep.subr.bf16.mxu0 %v4182
  %6863 = vmatpush2.bf16.msra.mxu0 %v4181
  %6864 = vmatprep.subr.bf16.mxu0 %v4178
  %6865 = vmatpush2.bf16.msra.mxu0 %v4177
  %6866 = vmatprep.mubr.bf16.mxu0 %v1212
  %6867 = vmatmul.mubr.bf16.gmra.mxu0 %v1211
  %v6868 = vpop.f32.mrf.mxu0
  %v6869 = vadd.f32 0.0, %v6868
  %v6870 = vpop.f32.mrf.mxu0
  %v6871 = vadd.f32 0.0, %v6870
  %v6872 = vpop.f32.mrf.mxu0
  %v6873 = vadd.f32 0.0, %v6872
  %v6874 = vpop.f32.mrf.mxu0
  %v6875 = vadd.f32 0.0, %v6874
  %6876 = vmatprep.mubr.bf16.mxu0 %v1242
  %6877 = vmatmul.mubr.bf16.gmra.mxu0 %v1241
  %v6878 = vpop.f32.mrf.mxu0
  %v6879 = vadd.f32 0.0, %v6878
  %v6880 = vpop.f32.mrf.mxu0
  %v6881 = vadd.f32 0.0, %v6880
  %v6882 = vpop.f32.mrf.mxu0
  %v6883 = vadd.f32 0.0, %v6882
  %v6884 = vpop.f32.mrf.mxu0
  %v6885 = vadd.f32 0.0, %v6884
  %6886 = vdwg.mxu0
  %6887 = vmatprep.subr.bf16.mxu0 %v4238
  %6888 = vmatpush1.bf16.msra.mxu0 %v4237
  %6889 = vmatprep.subr.bf16.mxu0 %v4234
  %6890 = vmatpush1.bf16.msra.mxu0 %v4233
  %6891 = vmatprep.subr.bf16.mxu0 %v4230
  %6892 = vmatpush1.bf16.msra.mxu0 %v4229
  %6893 = vmatprep.subr.bf16.mxu0 %v4226
  %6894 = vmatpush1.bf16.msra.mxu0 %v4225
  %6895 = vmatprep.subr.bf16.mxu0 %v4222
  %6896 = vmatpush1.bf16.msra.mxu0 %v4221
  %6897 = vmatprep.subr.bf16.mxu0 %v4218
  %6898 = vmatpush1.bf16.msra.mxu0 %v4217
  %6899 = vmatprep.subr.bf16.mxu0 %v4214
  %6900 = vmatpush1.bf16.msra.mxu0 %v4213
  %6901 = vmatprep.subr.bf16.mxu0 %v4210
  %6902 = vmatpush1.bf16.msra.mxu0 %v4209
  %6903 = vmatprep.subr.bf16.mxu0 %v4270
  %6904 = vmatpush2.bf16.msra.mxu0 %v4269
  %6905 = vmatprep.subr.bf16.mxu0 %v4266
  %6906 = vmatpush2.bf16.msra.mxu0 %v4265
  %6907 = vmatprep.subr.bf16.mxu0 %v4262
  %6908 = vmatpush2.bf16.msra.mxu0 %v4261
  %6909 = vmatprep.subr.bf16.mxu0 %v4258
  %6910 = vmatpush2.bf16.msra.mxu0 %v4257
  %6911 = vmatprep.subr.bf16.mxu0 %v4254
  %6912 = vmatpush2.bf16.msra.mxu0 %v4253
  %6913 = vmatprep.subr.bf16.mxu0 %v4250
  %6914 = vmatpush2.bf16.msra.mxu0 %v4249
  %6915 = vmatprep.subr.bf16.mxu0 %v4246
  %6916 = vmatpush2.bf16.msra.mxu0 %v4245
  %6917 = vmatprep.subr.bf16.mxu0 %v4242
  %6918 = vmatpush2.bf16.msra.mxu0 %v4241
  %6919 = vmatprep.mubr.bf16.mxu0 %v1214
  %6920 = vmatmul.mubr.bf16.gmra.mxu0 %v1213
  %v6921 = vpop.f32.mrf.mxu0
  %v6922 = vadd.f32 %v6869, %v6921
  %v6923 = vpop.f32.mrf.mxu0
  %v6924 = vadd.f32 %v6871, %v6923
  %v6925 = vpop.f32.mrf.mxu0
  %v6926 = vadd.f32 %v6873, %v6925
  %v6927 = vpop.f32.mrf.mxu0
  %v6928 = vadd.f32 %v6875, %v6927
  %6929 = vmatprep.mubr.bf16.mxu0 %v1244
  %6930 = vmatmul.mubr.bf16.gmra.mxu0 %v1243
  %v6931 = vpop.f32.mrf.mxu0
  %v6932 = vadd.f32 %v6879, %v6931
  %v6933 = vpop.f32.mrf.mxu0
  %v6934 = vadd.f32 %v6881, %v6933
  %v6935 = vpop.f32.mrf.mxu0
  %v6936 = vadd.f32 %v6883, %v6935
  %v6937 = vpop.f32.mrf.mxu0
  %v6938 = vadd.f32 %v6885, %v6937
  %6939 = vdwg.mxu0
  %6940 = vmatprep.subr.bf16.mxu0 %v4302
  %6941 = vmatpush1.bf16.msra.mxu0 %v4301
  %6942 = vmatprep.subr.bf16.mxu0 %v4298
  %6943 = vmatpush1.bf16.msra.mxu0 %v4297
  %6944 = vmatprep.subr.bf16.mxu0 %v4294
  %6945 = vmatpush1.bf16.msra.mxu0 %v4293
  %6946 = vmatprep.subr.bf16.mxu0 %v4290
  %6947 = vmatpush1.bf16.msra.mxu0 %v4289
  %6948 = vmatprep.subr.bf16.mxu0 %v4286
  %6949 = vmatpush1.bf16.msra.mxu0 %v4285
  %6950 = vmatprep.subr.bf16.mxu0 %v4282
  %6951 = vmatpush1.bf16.msra.mxu0 %v4281
  %6952 = vmatprep.subr.bf16.mxu0 %v4278
  %6953 = vmatpush1.bf16.msra.mxu0 %v4277
  %6954 = vmatprep.subr.bf16.mxu0 %v4274
  %6955 = vmatpush1.bf16.msra.mxu0 %v4273
  %6956 = vmatprep.subr.bf16.mxu0 %v4334
  %6957 = vmatpush2.bf16.msra.mxu0 %v4333
  %6958 = vmatprep.subr.bf16.mxu0 %v4330
  %6959 = vmatpush2.bf16.msra.mxu0 %v4329
  %6960 = vmatprep.subr.bf16.mxu0 %v4326
  %6961 = vmatpush2.bf16.msra.mxu0 %v4325
  %6962 = vmatprep.subr.bf16.mxu0 %v4322
  %6963 = vmatpush2.bf16.msra.mxu0 %v4321
  %6964 = vmatprep.subr.bf16.mxu0 %v4318
  %6965 = vmatpush2.bf16.msra.mxu0 %v4317
  %6966 = vmatprep.subr.bf16.mxu0 %v4314
  %6967 = vmatpush2.bf16.msra.mxu0 %v4313
  %6968 = vmatprep.subr.bf16.mxu0 %v4310
  %6969 = vmatpush2.bf16.msra.mxu0 %v4309
  %6970 = vmatprep.subr.bf16.mxu0 %v4306
  %6971 = vmatpush2.bf16.msra.mxu0 %v4305
  %6972 = vmatprep.mubr.bf16.mxu0 %v1216
  %6973 = vmatmul.mubr.bf16.gmra.mxu0 %v1215
  %v6974 = vpop.f32.mrf.mxu0
  %v6975 = vadd.f32 %v6922, %v6974
  %v6976 = vpop.f32.mrf.mxu0
  %v6977 = vadd.f32 %v6924, %v6976
  %v6978 = vpop.f32.mrf.mxu0
  %v6979 = vadd.f32 %v6926, %v6978
  %v6980 = vpop.f32.mrf.mxu0
  %v6981 = vadd.f32 %v6928, %v6980
  %6982 = vmatprep.mubr.bf16.mxu0 %v1246
  %6983 = vmatmul.mubr.bf16.gmra.mxu0 %v1245
  %v6984 = vpop.f32.mrf.mxu0
  %v6985 = vadd.f32 %v6932, %v6984
  %v6986 = vpop.f32.mrf.mxu0
  %v6987 = vadd.f32 %v6934, %v6986
  %v6988 = vpop.f32.mrf.mxu0
  %v6989 = vadd.f32 %v6936, %v6988
  %v6990 = vpop.f32.mrf.mxu0
  %v6991 = vadd.f32 %v6938, %v6990
  %6992 = vdwg.mxu0
  %6993 = vmatprep.subr.bf16.mxu0 %v4366
  %6994 = vmatpush1.bf16.msra.mxu0 %v4365
  %6995 = vmatprep.subr.bf16.mxu0 %v4362
  %6996 = vmatpush1.bf16.msra.mxu0 %v4361
  %6997 = vmatprep.subr.bf16.mxu0 %v4358
  %6998 = vmatpush1.bf16.msra.mxu0 %v4357
  %6999 = vmatprep.subr.bf16.mxu0 %v4354
  %7000 = vmatpush1.bf16.msra.mxu0 %v4353
  %7001 = vmatprep.subr.bf16.mxu0 %v4350
  %7002 = vmatpush1.bf16.msra.mxu0 %v4349
  %7003 = vmatprep.subr.bf16.mxu0 %v4346
  %7004 = vmatpush1.bf16.msra.mxu0 %v4345
  %7005 = vmatprep.subr.bf16.mxu0 %v4342
  %7006 = vmatpush1.bf16.msra.mxu0 %v4341
  %7007 = vmatprep.subr.bf16.mxu0 %v4338
  %7008 = vmatpush1.bf16.msra.mxu0 %v4337
  %7009 = vmatprep.subr.bf16.mxu0 %v4398
  %7010 = vmatpush2.bf16.msra.mxu0 %v4397
  %7011 = vmatprep.subr.bf16.mxu0 %v4394
  %7012 = vmatpush2.bf16.msra.mxu0 %v4393
  %7013 = vmatprep.subr.bf16.mxu0 %v4390
  %7014 = vmatpush2.bf16.msra.mxu0 %v4389
  %7015 = vmatprep.subr.bf16.mxu0 %v4386
  %7016 = vmatpush2.bf16.msra.mxu0 %v4385
  %7017 = vmatprep.subr.bf16.mxu0 %v4382
  %7018 = vmatpush2.bf16.msra.mxu0 %v4381
  %7019 = vmatprep.subr.bf16.mxu0 %v4378
  %7020 = vmatpush2.bf16.msra.mxu0 %v4377
  %7021 = vmatprep.subr.bf16.mxu0 %v4374
  %7022 = vmatpush2.bf16.msra.mxu0 %v4373
  %7023 = vmatprep.subr.bf16.mxu0 %v4370
  %7024 = vmatpush2.bf16.msra.mxu0 %v4369
  %7025 = vmatprep.mubr.bf16.mxu0 %v1218
  %7026 = vmatmul.mubr.bf16.gmra.mxu0 %v1217
  %v7027 = vpop.f32.mrf.mxu0
  %v7028 = vadd.f32 %v6975, %v7027
  %v7029 = vpop.f32.mrf.mxu0
  %v7030 = vadd.f32 %v6977, %v7029
  %v7031 = vpop.f32.mrf.mxu0
  %v7032 = vadd.f32 %v6979, %v7031
  %v7033 = vpop.f32.mrf.mxu0
  %v7034 = vadd.f32 %v6981, %v7033
  %7035 = vmatprep.mubr.bf16.mxu0 %v1248
  %7036 = vmatmul.mubr.bf16.gmra.mxu0 %v1247
  %v7037 = vpop.f32.mrf.mxu0
  %v7038 = vadd.f32 %v6985, %v7037
  %v7039 = vpop.f32.mrf.mxu0
  %v7040 = vadd.f32 %v6987, %v7039
  %v7041 = vpop.f32.mrf.mxu0
  %v7042 = vadd.f32 %v6989, %v7041
  %v7043 = vpop.f32.mrf.mxu0
  %v7044 = vadd.f32 %v6991, %v7043
  %7045 = vdwg.mxu0
  %7046 = vmatprep.subr.bf16.mxu0 %v4430
  %7047 = vmatpush1.bf16.msra.mxu0 %v4429
  %7048 = vmatprep.subr.bf16.mxu0 %v4426
  %7049 = vmatpush1.bf16.msra.mxu0 %v4425
  %7050 = vmatprep.subr.bf16.mxu0 %v4422
  %7051 = vmatpush1.bf16.msra.mxu0 %v4421
  %7052 = vmatprep.subr.bf16.mxu0 %v4418
  %7053 = vmatpush1.bf16.msra.mxu0 %v4417
  %7054 = vmatprep.subr.bf16.mxu0 %v4414
  %7055 = vmatpush1.bf16.msra.mxu0 %v4413
  %7056 = vmatprep.subr.bf16.mxu0 %v4410
  %7057 = vmatpush1.bf16.msra.mxu0 %v4409
  %7058 = vmatprep.subr.bf16.mxu0 %v4406
  %7059 = vmatpush1.bf16.msra.mxu0 %v4405
  %7060 = vmatprep.subr.bf16.mxu0 %v4402
  %7061 = vmatpush1.bf16.msra.mxu0 %v4401
  %7062 = vmatprep.subr.bf16.mxu0 %v4462
  %7063 = vmatpush2.bf16.msra.mxu0 %v4461
  %7064 = vmatprep.subr.bf16.mxu0 %v4458
  %7065 = vmatpush2.bf16.msra.mxu0 %v4457
  %7066 = vmatprep.subr.bf16.mxu0 %v4454
  %7067 = vmatpush2.bf16.msra.mxu0 %v4453
  %7068 = vmatprep.subr.bf16.mxu0 %v4450
  %7069 = vmatpush2.bf16.msra.mxu0 %v4449
  %7070 = vmatprep.subr.bf16.mxu0 %v4446
  %7071 = vmatpush2.bf16.msra.mxu0 %v4445
  %7072 = vmatprep.subr.bf16.mxu0 %v4442
  %7073 = vmatpush2.bf16.msra.mxu0 %v4441
  %7074 = vmatprep.subr.bf16.mxu0 %v4438
  %7075 = vmatpush2.bf16.msra.mxu0 %v4437
  %7076 = vmatprep.subr.bf16.mxu0 %v4434
  %7077 = vmatpush2.bf16.msra.mxu0 %v4433
  %7078 = vmatprep.mubr.bf16.mxu0 %v1220
  %7079 = vmatmul.mubr.bf16.gmra.mxu0 %v1219
  %v7080 = vpop.f32.mrf.mxu0
  %v7081 = vadd.f32 %v7028, %v7080
  %v7082 = vpop.f32.mrf.mxu0
  %v7083 = vadd.f32 %v7030, %v7082
  %v7084 = vpop.f32.mrf.mxu0
  %v7085 = vadd.f32 %v7032, %v7084
  %v7086 = vpop.f32.mrf.mxu0
  %v7087 = vadd.f32 %v7034, %v7086
  %7088 = vmatprep.mubr.bf16.mxu0 %v1250
  %7089 = vmatmul.mubr.bf16.gmra.mxu0 %v1249
  %v7090 = vpop.f32.mrf.mxu0
  %v7091 = vadd.f32 %v7038, %v7090
  %v7092 = vpop.f32.mrf.mxu0
  %v7093 = vadd.f32 %v7040, %v7092
  %v7094 = vpop.f32.mrf.mxu0
  %v7095 = vadd.f32 %v7042, %v7094
  %v7096 = vpop.f32.mrf.mxu0
  %v7097 = vadd.f32 %v7044, %v7096
  %7098 = vdwg.mxu0
  %7099 = vmatprep.subr.bf16.mxu0 %v4494
  %7100 = vmatpush1.bf16.msra.mxu0 %v4493
  %7101 = vmatprep.subr.bf16.mxu0 %v4490
  %7102 = vmatpush1.bf16.msra.mxu0 %v4489
  %7103 = vmatprep.subr.bf16.mxu0 %v4486
  %7104 = vmatpush1.bf16.msra.mxu0 %v4485
  %7105 = vmatprep.subr.bf16.mxu0 %v4482
  %7106 = vmatpush1.bf16.msra.mxu0 %v4481
  %7107 = vmatprep.subr.bf16.mxu0 %v4478
  %7108 = vmatpush1.bf16.msra.mxu0 %v4477
  %7109 = vmatprep.subr.bf16.mxu0 %v4474
  %7110 = vmatpush1.bf16.msra.mxu0 %v4473
  %7111 = vmatprep.subr.bf16.mxu0 %v4470
  %7112 = vmatpush1.bf16.msra.mxu0 %v4469
  %7113 = vmatprep.subr.bf16.mxu0 %v4466
  %7114 = vmatpush1.bf16.msra.mxu0 %v4465
  %7115 = vmatprep.subr.bf16.mxu0 %v4526
  %7116 = vmatpush2.bf16.msra.mxu0 %v4525
  %7117 = vmatprep.subr.bf16.mxu0 %v4522
  %7118 = vmatpush2.bf16.msra.mxu0 %v4521
  %7119 = vmatprep.subr.bf16.mxu0 %v4518
  %7120 = vmatpush2.bf16.msra.mxu0 %v4517
  %7121 = vmatprep.subr.bf16.mxu0 %v4514
  %7122 = vmatpush2.bf16.msra.mxu0 %v4513
  %7123 = vmatprep.subr.bf16.mxu0 %v4510
  %7124 = vmatpush2.bf16.msra.mxu0 %v4509
  %7125 = vmatprep.subr.bf16.mxu0 %v4506
  %7126 = vmatpush2.bf16.msra.mxu0 %v4505
  %7127 = vmatprep.subr.bf16.mxu0 %v4502
  %7128 = vmatpush2.bf16.msra.mxu0 %v4501
  %7129 = vmatprep.subr.bf16.mxu0 %v4498
  %7130 = vmatpush2.bf16.msra.mxu0 %v4497
  %7131 = vmatprep.mubr.bf16.mxu0 %v1222
  %7132 = vmatmul.mubr.bf16.gmra.mxu0 %v1221
  %v7133 = vpop.f32.mrf.mxu0
  %v7134 = vadd.f32 %v7081, %v7133
  %v7135 = vpop.f32.mrf.mxu0
  %v7136 = vadd.f32 %v7083, %v7135
  %v7137 = vpop.f32.mrf.mxu0
  %v7138 = vadd.f32 %v7085, %v7137
  %v7139 = vpop.f32.mrf.mxu0
  %v7140 = vadd.f32 %v7087, %v7139
  %7141 = vmatprep.mubr.bf16.mxu0 %v1252
  %7142 = vmatmul.mubr.bf16.gmra.mxu0 %v1251
  %v7143 = vpop.f32.mrf.mxu0
  %v7144 = vadd.f32 %v7091, %v7143
  %v7145 = vpop.f32.mrf.mxu0
  %v7146 = vadd.f32 %v7093, %v7145
  %v7147 = vpop.f32.mrf.mxu0
  %v7148 = vadd.f32 %v7095, %v7147
  %v7149 = vpop.f32.mrf.mxu0
  %v7150 = vadd.f32 %v7097, %v7149
  %7151 = vdwg.mxu0
  %7152 = vmatprep.subr.bf16.mxu0 %v4558
  %7153 = vmatpush1.bf16.msra.mxu0 %v4557
  %7154 = vmatprep.subr.bf16.mxu0 %v4554
  %7155 = vmatpush1.bf16.msra.mxu0 %v4553
  %7156 = vmatprep.subr.bf16.mxu0 %v4550
  %7157 = vmatpush1.bf16.msra.mxu0 %v4549
  %7158 = vmatprep.subr.bf16.mxu0 %v4546
  %7159 = vmatpush1.bf16.msra.mxu0 %v4545
  %7160 = vmatprep.subr.bf16.mxu0 %v4542
  %7161 = vmatpush1.bf16.msra.mxu0 %v4541
  %7162 = vmatprep.subr.bf16.mxu0 %v4538
  %7163 = vmatpush1.bf16.msra.mxu0 %v4537
  %7164 = vmatprep.subr.bf16.mxu0 %v4534
  %7165 = vmatpush1.bf16.msra.mxu0 %v4533
  %7166 = vmatprep.subr.bf16.mxu0 %v4530
  %7167 = vmatpush1.bf16.msra.mxu0 %v4529
  %7168 = vmatprep.subr.bf16.mxu0 %v4590
  %7169 = vmatpush2.bf16.msra.mxu0 %v4589
  %7170 = vmatprep.subr.bf16.mxu0 %v4586
  %7171 = vmatpush2.bf16.msra.mxu0 %v4585
  %7172 = vmatprep.subr.bf16.mxu0 %v4582
  %7173 = vmatpush2.bf16.msra.mxu0 %v4581
  %7174 = vmatprep.subr.bf16.mxu0 %v4578
  %7175 = vmatpush2.bf16.msra.mxu0 %v4577
  %7176 = vmatprep.subr.bf16.mxu0 %v4574
  %7177 = vmatpush2.bf16.msra.mxu0 %v4573
  %7178 = vmatprep.subr.bf16.mxu0 %v4570
  %7179 = vmatpush2.bf16.msra.mxu0 %v4569
  %7180 = vmatprep.subr.bf16.mxu0 %v4566
  %7181 = vmatpush2.bf16.msra.mxu0 %v4565
  %7182 = vmatprep.subr.bf16.mxu0 %v4562
  %7183 = vmatpush2.bf16.msra.mxu0 %v4561
  %7184 = vmatprep.mubr.bf16.mxu0 %v1224
  %7185 = vmatmul.mubr.bf16.gmra.mxu0 %v1223
  %v7186 = vpop.f32.mrf.mxu0
  %v7187 = vadd.f32 %v7134, %v7186
  %v7188 = vpop.f32.mrf.mxu0
  %v7189 = vadd.f32 %v7136, %v7188
  %v7190 = vpop.f32.mrf.mxu0
  %v7191 = vadd.f32 %v7138, %v7190
  %v7192 = vpop.f32.mrf.mxu0
  %v7193 = vadd.f32 %v7140, %v7192
  %7194 = vmatprep.mubr.bf16.mxu0 %v1254
  %7195 = vmatmul.mubr.bf16.gmra.mxu0 %v1253
  %v7196 = vpop.f32.mrf.mxu0
  %v7197 = vadd.f32 %v7144, %v7196
  %v7198 = vpop.f32.mrf.mxu0
  %v7199 = vadd.f32 %v7146, %v7198
  %v7200 = vpop.f32.mrf.mxu0
  %v7201 = vadd.f32 %v7148, %v7200
  %v7202 = vpop.f32.mrf.mxu0
  %v7203 = vadd.f32 %v7150, %v7202
  %7204 = vdwg.mxu0
  %7205 = vmatprep.subr.bf16.mxu0 %v4622
  %7206 = vmatpush1.bf16.msra.mxu0 %v4621
  %7207 = vmatprep.subr.bf16.mxu0 %v4618
  %7208 = vmatpush1.bf16.msra.mxu0 %v4617
  %7209 = vmatprep.subr.bf16.mxu0 %v4614
  %7210 = vmatpush1.bf16.msra.mxu0 %v4613
  %7211 = vmatprep.subr.bf16.mxu0 %v4610
  %7212 = vmatpush1.bf16.msra.mxu0 %v4609
  %7213 = vmatprep.subr.bf16.mxu0 %v4606
  %7214 = vmatpush1.bf16.msra.mxu0 %v4605
  %7215 = vmatprep.subr.bf16.mxu0 %v4602
  %7216 = vmatpush1.bf16.msra.mxu0 %v4601
  %7217 = vmatprep.subr.bf16.mxu0 %v4598
  %7218 = vmatpush1.bf16.msra.mxu0 %v4597
  %7219 = vmatprep.subr.bf16.mxu0 %v4594
  %7220 = vmatpush1.bf16.msra.mxu0 %v4593
  %7221 = vmatprep.subr.bf16.mxu0 %v4654
  %7222 = vmatpush2.bf16.msra.mxu0 %v4653
  %7223 = vmatprep.subr.bf16.mxu0 %v4650
  %7224 = vmatpush2.bf16.msra.mxu0 %v4649
  %7225 = vmatprep.subr.bf16.mxu0 %v4646
  %7226 = vmatpush2.bf16.msra.mxu0 %v4645
  %7227 = vmatprep.subr.bf16.mxu0 %v4642
  %7228 = vmatpush2.bf16.msra.mxu0 %v4641
  %7229 = vmatprep.subr.bf16.mxu0 %v4638
  %7230 = vmatpush2.bf16.msra.mxu0 %v4637
  %7231 = vmatprep.subr.bf16.mxu0 %v4634
  %7232 = vmatpush2.bf16.msra.mxu0 %v4633
  %7233 = vmatprep.subr.bf16.mxu0 %v4630
  %7234 = vmatpush2.bf16.msra.mxu0 %v4629
  %7235 = vmatprep.subr.bf16.mxu0 %v4626
  %7236 = vmatpush2.bf16.msra.mxu0 %v4625
  %7237 = vmatprep.mubr.bf16.mxu0 %v1226
  %7238 = vmatmul.mubr.bf16.gmra.mxu0 %v1225
  %v7239 = vpop.f32.mrf.mxu0
  %v7240 = vadd.f32 %v7187, %v7239
  %v7241 = vpop.f32.mrf.mxu0
  %v7242 = vadd.f32 %v7189, %v7241
  %v7243 = vpop.f32.mrf.mxu0
  %v7244 = vadd.f32 %v7191, %v7243
  %v7245 = vpop.f32.mrf.mxu0
  %v7246 = vadd.f32 %v7193, %v7245
  %7247 = vmatprep.mubr.bf16.mxu0 %v1256
  %7248 = vmatmul.mubr.bf16.gmra.mxu0 %v1255
  %v7249 = vpop.f32.mrf.mxu0
  %v7250 = vadd.f32 %v7197, %v7249
  %v7251 = vpop.f32.mrf.mxu0
  %v7252 = vadd.f32 %v7199, %v7251
  %v7253 = vpop.f32.mrf.mxu0
  %v7254 = vadd.f32 %v7201, %v7253
  %v7255 = vpop.f32.mrf.mxu0
  %v7256 = vadd.f32 %v7203, %v7255
  %7257 = vdwg.mxu0
  %7258 = vmatprep.subr.bf16.mxu0 %v4686
  %7259 = vmatpush1.bf16.msra.mxu0 %v4685
  %7260 = vmatprep.subr.bf16.mxu0 %v4682
  %7261 = vmatpush1.bf16.msra.mxu0 %v4681
  %7262 = vmatprep.subr.bf16.mxu0 %v4678
  %7263 = vmatpush1.bf16.msra.mxu0 %v4677
  %7264 = vmatprep.subr.bf16.mxu0 %v4674
  %7265 = vmatpush1.bf16.msra.mxu0 %v4673
  %7266 = vmatprep.subr.bf16.mxu0 %v4670
  %7267 = vmatpush1.bf16.msra.mxu0 %v4669
  %7268 = vmatprep.subr.bf16.mxu0 %v4666
  %7269 = vmatpush1.bf16.msra.mxu0 %v4665
  %7270 = vmatprep.subr.bf16.mxu0 %v4662
  %7271 = vmatpush1.bf16.msra.mxu0 %v4661
  %7272 = vmatprep.subr.bf16.mxu0 %v4658
  %7273 = vmatpush1.bf16.msra.mxu0 %v4657
  %7274 = vmatprep.subr.bf16.mxu0 %v4718
  %7275 = vmatpush2.bf16.msra.mxu0 %v4717
  %7276 = vmatprep.subr.bf16.mxu0 %v4714
  %7277 = vmatpush2.bf16.msra.mxu0 %v4713
  %7278 = vmatprep.subr.bf16.mxu0 %v4710
  %7279 = vmatpush2.bf16.msra.mxu0 %v4709
  %7280 = vmatprep.subr.bf16.mxu0 %v4706
  %7281 = vmatpush2.bf16.msra.mxu0 %v4705
  %7282 = vmatprep.subr.bf16.mxu0 %v4702
  %7283 = vmatpush2.bf16.msra.mxu0 %v4701
  %7284 = vmatprep.subr.bf16.mxu0 %v4698
  %7285 = vmatpush2.bf16.msra.mxu0 %v4697
  %7286 = vmatprep.subr.bf16.mxu0 %v4694
  %7287 = vmatpush2.bf16.msra.mxu0 %v4693
  %7288 = vmatprep.subr.bf16.mxu0 %v4690
  %7289 = vmatpush2.bf16.msra.mxu0 %v4689
  %7290 = vmatprep.mubr.bf16.mxu0 %v1228
  %7291 = vmatmul.mubr.bf16.gmra.mxu0 %v1227
  %v7292 = vpop.f32.mrf.mxu0
  %v7293 = vadd.f32 %v7240, %v7292
  %v7294 = vpop.f32.mrf.mxu0
  %v7295 = vadd.f32 %v7242, %v7294
  %v7296 = vpop.f32.mrf.mxu0
  %v7297 = vadd.f32 %v7244, %v7296
  %v7298 = vpop.f32.mrf.mxu0
  %v7299 = vadd.f32 %v7246, %v7298
  %7300 = vmatprep.mubr.bf16.mxu0 %v1258
  %7301 = vmatmul.mubr.bf16.gmra.mxu0 %v1257
  %v7302 = vpop.f32.mrf.mxu0
  %v7303 = vadd.f32 %v7250, %v7302
  %v7304 = vpop.f32.mrf.mxu0
  %v7305 = vadd.f32 %v7252, %v7304
  %v7306 = vpop.f32.mrf.mxu0
  %v7307 = vadd.f32 %v7254, %v7306
  %v7308 = vpop.f32.mrf.mxu0
  %v7309 = vadd.f32 %v7256, %v7308
  %7310 = vdwg.mxu0
  %7311 = vmatprep.subr.bf16.mxu0 %v4750
  %7312 = vmatpush1.bf16.msra.mxu0 %v4749
  %7313 = vmatprep.subr.bf16.mxu0 %v4746
  %7314 = vmatpush1.bf16.msra.mxu0 %v4745
  %7315 = vmatprep.subr.bf16.mxu0 %v4742
  %7316 = vmatpush1.bf16.msra.mxu0 %v4741
  %7317 = vmatprep.subr.bf16.mxu0 %v4738
  %7318 = vmatpush1.bf16.msra.mxu0 %v4737
  %7319 = vmatprep.subr.bf16.mxu0 %v4734
  %7320 = vmatpush1.bf16.msra.mxu0 %v4733
  %7321 = vmatprep.subr.bf16.mxu0 %v4730
  %7322 = vmatpush1.bf16.msra.mxu0 %v4729
  %7323 = vmatprep.subr.bf16.mxu0 %v4726
  %7324 = vmatpush1.bf16.msra.mxu0 %v4725
  %7325 = vmatprep.subr.bf16.mxu0 %v4722
  %7326 = vmatpush1.bf16.msra.mxu0 %v4721
  %7327 = vmatprep.subr.bf16.mxu0 %v4782
  %7328 = vmatpush2.bf16.msra.mxu0 %v4781
  %7329 = vmatprep.subr.bf16.mxu0 %v4778
  %7330 = vmatpush2.bf16.msra.mxu0 %v4777
  %7331 = vmatprep.subr.bf16.mxu0 %v4774
  %7332 = vmatpush2.bf16.msra.mxu0 %v4773
  %7333 = vmatprep.subr.bf16.mxu0 %v4770
  %7334 = vmatpush2.bf16.msra.mxu0 %v4769
  %7335 = vmatprep.subr.bf16.mxu0 %v4766
  %7336 = vmatpush2.bf16.msra.mxu0 %v4765
  %7337 = vmatprep.subr.bf16.mxu0 %v4762
  %7338 = vmatpush2.bf16.msra.mxu0 %v4761
  %7339 = vmatprep.subr.bf16.mxu0 %v4758
  %7340 = vmatpush2.bf16.msra.mxu0 %v4757
  %7341 = vmatprep.subr.bf16.mxu0 %v4754
  %7342 = vmatpush2.bf16.msra.mxu0 %v4753
  %7343 = vmatprep.mubr.bf16.mxu0 %v1230
  %7344 = vmatmul.mubr.bf16.gmra.mxu0 %v1229
  %v7345 = vpop.f32.mrf.mxu0
  %v7346 = vadd.f32 %v7293, %v7345
  %v7347 = vpop.f32.mrf.mxu0
  %v7348 = vadd.f32 %v7295, %v7347
  %v7349 = vpop.f32.mrf.mxu0
  %v7350 = vadd.f32 %v7297, %v7349
  %v7351 = vpop.f32.mrf.mxu0
  %v7352 = vadd.f32 %v7299, %v7351
  %7353 = vmatprep.mubr.bf16.mxu0 %v1260
  %7354 = vmatmul.mubr.bf16.gmra.mxu0 %v1259
  %v7355 = vpop.f32.mrf.mxu0
  %v7356 = vadd.f32 %v7303, %v7355
  %v7357 = vpop.f32.mrf.mxu0
  %v7358 = vadd.f32 %v7305, %v7357
  %v7359 = vpop.f32.mrf.mxu0
  %v7360 = vadd.f32 %v7307, %v7359
  %v7361 = vpop.f32.mrf.mxu0
  %v7362 = vadd.f32 %v7309, %v7361
  %7363 = vdwg.mxu0
  %7364 = vmatprep.subr.bf16.mxu0 %v4814
  %7365 = vmatpush1.bf16.msra.mxu0 %v4813
  %7366 = vmatprep.subr.bf16.mxu0 %v4810
  %7367 = vmatpush1.bf16.msra.mxu0 %v4809
  %7368 = vmatprep.subr.bf16.mxu0 %v4806
  %7369 = vmatpush1.bf16.msra.mxu0 %v4805
  %7370 = vmatprep.subr.bf16.mxu0 %v4802
  %7371 = vmatpush1.bf16.msra.mxu0 %v4801
  %7372 = vmatprep.subr.bf16.mxu0 %v4798
  %7373 = vmatpush1.bf16.msra.mxu0 %v4797
  %7374 = vmatprep.subr.bf16.mxu0 %v4794
  %7375 = vmatpush1.bf16.msra.mxu0 %v4793
  %7376 = vmatprep.subr.bf16.mxu0 %v4790
  %7377 = vmatpush1.bf16.msra.mxu0 %v4789
  %7378 = vmatprep.subr.bf16.mxu0 %v4786
  %7379 = vmatpush1.bf16.msra.mxu0 %v4785
  %7380 = vmatprep.subr.bf16.mxu0 %v4846
  %7381 = vmatpush2.bf16.msra.mxu0 %v4845
  %7382 = vmatprep.subr.bf16.mxu0 %v4842
  %7383 = vmatpush2.bf16.msra.mxu0 %v4841
  %7384 = vmatprep.subr.bf16.mxu0 %v4838
  %7385 = vmatpush2.bf16.msra.mxu0 %v4837
  %7386 = vmatprep.subr.bf16.mxu0 %v4834
  %7387 = vmatpush2.bf16.msra.mxu0 %v4833
  %7388 = vmatprep.subr.bf16.mxu0 %v4830
  %7389 = vmatpush2.bf16.msra.mxu0 %v4829
  %7390 = vmatprep.subr.bf16.mxu0 %v4826
  %7391 = vmatpush2.bf16.msra.mxu0 %v4825
  %7392 = vmatprep.subr.bf16.mxu0 %v4822
  %7393 = vmatpush2.bf16.msra.mxu0 %v4821
  %7394 = vmatprep.subr.bf16.mxu0 %v4818
  %7395 = vmatpush2.bf16.msra.mxu0 %v4817
  %7396 = vmatprep.mubr.bf16.mxu0 %v1232
  %7397 = vmatmul.mubr.bf16.gmra.mxu0 %v1231
  %v7398 = vpop.f32.mrf.mxu0
  %v7399 = vadd.f32 %v7346, %v7398
  %v7400 = vpop.f32.mrf.mxu0
  %v7401 = vadd.f32 %v7348, %v7400
  %v7402 = vpop.f32.mrf.mxu0
  %v7403 = vadd.f32 %v7350, %v7402
  %v7404 = vpop.f32.mrf.mxu0
  %v7405 = vadd.f32 %v7352, %v7404
  %7406 = vmatprep.mubr.bf16.mxu0 %v1262
  %7407 = vmatmul.mubr.bf16.gmra.mxu0 %v1261
  %v7408 = vpop.f32.mrf.mxu0
  %v7409 = vadd.f32 %v7356, %v7408
  %v7410 = vpop.f32.mrf.mxu0
  %v7411 = vadd.f32 %v7358, %v7410
  %v7412 = vpop.f32.mrf.mxu0
  %v7413 = vadd.f32 %v7360, %v7412
  %v7414 = vpop.f32.mrf.mxu0
  %v7415 = vadd.f32 %v7362, %v7414
  %7416 = vdwg.mxu0
  %7417 = vmatprep.subr.bf16.mxu0 %v4878
  %7418 = vmatpush1.bf16.msra.mxu0 %v4877
  %7419 = vmatprep.subr.bf16.mxu0 %v4874
  %7420 = vmatpush1.bf16.msra.mxu0 %v4873
  %7421 = vmatprep.subr.bf16.mxu0 %v4870
  %7422 = vmatpush1.bf16.msra.mxu0 %v4869
  %7423 = vmatprep.subr.bf16.mxu0 %v4866
  %7424 = vmatpush1.bf16.msra.mxu0 %v4865
  %7425 = vmatprep.subr.bf16.mxu0 %v4862
  %7426 = vmatpush1.bf16.msra.mxu0 %v4861
  %7427 = vmatprep.subr.bf16.mxu0 %v4858
  %7428 = vmatpush1.bf16.msra.mxu0 %v4857
  %7429 = vmatprep.subr.bf16.mxu0 %v4854
  %7430 = vmatpush1.bf16.msra.mxu0 %v4853
  %7431 = vmatprep.subr.bf16.mxu0 %v4850
  %7432 = vmatpush1.bf16.msra.mxu0 %v4849
  %7433 = vmatprep.subr.bf16.mxu0 %v4910
  %7434 = vmatpush2.bf16.msra.mxu0 %v4909
  %7435 = vmatprep.subr.bf16.mxu0 %v4906
  %7436 = vmatpush2.bf16.msra.mxu0 %v4905
  %7437 = vmatprep.subr.bf16.mxu0 %v4902
  %7438 = vmatpush2.bf16.msra.mxu0 %v4901
  %7439 = vmatprep.subr.bf16.mxu0 %v4898
  %7440 = vmatpush2.bf16.msra.mxu0 %v4897
  %7441 = vmatprep.subr.bf16.mxu0 %v4894
  %7442 = vmatpush2.bf16.msra.mxu0 %v4893
  %7443 = vmatprep.subr.bf16.mxu0 %v4890
  %7444 = vmatpush2.bf16.msra.mxu0 %v4889
  %7445 = vmatprep.subr.bf16.mxu0 %v4886
  %7446 = vmatpush2.bf16.msra.mxu0 %v4885
  %7447 = vmatprep.subr.bf16.mxu0 %v4882
  %7448 = vmatpush2.bf16.msra.mxu0 %v4881
  %7449 = vmatprep.mubr.bf16.mxu0 %v1234
  %7450 = vmatmul.mubr.bf16.gmra.mxu0 %v1233
  %v7451 = vpop.f32.mrf.mxu0
  %v7452 = vadd.f32 %v7399, %v7451
  %v7453 = vpop.f32.mrf.mxu0
  %v7454 = vadd.f32 %v7401, %v7453
  %v7455 = vpop.f32.mrf.mxu0
  %v7456 = vadd.f32 %v7403, %v7455
  %v7457 = vpop.f32.mrf.mxu0
  %v7458 = vadd.f32 %v7405, %v7457
  %7459 = vmatprep.mubr.bf16.mxu0 %v1264
  %7460 = vmatmul.mubr.bf16.gmra.mxu0 %v1263
  %v7461 = vpop.f32.mrf.mxu0
  %v7462 = vadd.f32 %v7409, %v7461
  %v7463 = vpop.f32.mrf.mxu0
  %v7464 = vadd.f32 %v7411, %v7463
  %v7465 = vpop.f32.mrf.mxu0
  %v7466 = vadd.f32 %v7413, %v7465
  %v7467 = vpop.f32.mrf.mxu0
  %v7468 = vadd.f32 %v7415, %v7467
  %7469 = vdwg.mxu0
  %7470 = vmatprep.subr.bf16.mxu0 %v4942
  %7471 = vmatpush1.bf16.msra.mxu0 %v4941
  %7472 = vmatprep.subr.bf16.mxu0 %v4938
  %7473 = vmatpush1.bf16.msra.mxu0 %v4937
  %7474 = vmatprep.subr.bf16.mxu0 %v4934
  %7475 = vmatpush1.bf16.msra.mxu0 %v4933
  %7476 = vmatprep.subr.bf16.mxu0 %v4930
  %7477 = vmatpush1.bf16.msra.mxu0 %v4929
  %7478 = vmatprep.subr.bf16.mxu0 %v4926
  %7479 = vmatpush1.bf16.msra.mxu0 %v4925
  %7480 = vmatprep.subr.bf16.mxu0 %v4922
  %7481 = vmatpush1.bf16.msra.mxu0 %v4921
  %7482 = vmatprep.subr.bf16.mxu0 %v4918
  %7483 = vmatpush1.bf16.msra.mxu0 %v4917
  %7484 = vmatprep.subr.bf16.mxu0 %v4914
  %7485 = vmatpush1.bf16.msra.mxu0 %v4913
  %7486 = vmatprep.subr.bf16.mxu0 %v4974
  %7487 = vmatpush2.bf16.msra.mxu0 %v4973
  %7488 = vmatprep.subr.bf16.mxu0 %v4970
  %7489 = vmatpush2.bf16.msra.mxu0 %v4969
  %7490 = vmatprep.subr.bf16.mxu0 %v4966
  %7491 = vmatpush2.bf16.msra.mxu0 %v4965
  %7492 = vmatprep.subr.bf16.mxu0 %v4962
  %7493 = vmatpush2.bf16.msra.mxu0 %v4961
  %7494 = vmatprep.subr.bf16.mxu0 %v4958
  %7495 = vmatpush2.bf16.msra.mxu0 %v4957
  %7496 = vmatprep.subr.bf16.mxu0 %v4954
  %7497 = vmatpush2.bf16.msra.mxu0 %v4953
  %7498 = vmatprep.subr.bf16.mxu0 %v4950
  %7499 = vmatpush2.bf16.msra.mxu0 %v4949
  %7500 = vmatprep.subr.bf16.mxu0 %v4946
  %7501 = vmatpush2.bf16.msra.mxu0 %v4945
  %7502 = vmatprep.mubr.bf16.mxu0 %v1236
  %7503 = vmatmul.mubr.bf16.gmra.mxu0 %v1235
  %v7504 = vpop.f32.mrf.mxu0
  %v7505 = vadd.f32 %v7452, %v7504
  %v7506 = vpop.f32.mrf.mxu0
  %v7507 = vadd.f32 %v7454, %v7506
  %v7508 = vpop.f32.mrf.mxu0
  %v7509 = vadd.f32 %v7456, %v7508
  %v7510 = vpop.f32.mrf.mxu0
  %v7511 = vadd.f32 %v7458, %v7510
  %7512 = vmatprep.mubr.bf16.mxu0 %v1266
  %7513 = vmatmul.mubr.bf16.gmra.mxu0 %v1265
  %v7514 = vpop.f32.mrf.mxu0
  %v7515 = vadd.f32 %v7462, %v7514
  %v7516 = vpop.f32.mrf.mxu0
  %v7517 = vadd.f32 %v7464, %v7516
  %v7518 = vpop.f32.mrf.mxu0
  %v7519 = vadd.f32 %v7466, %v7518
  %v7520 = vpop.f32.mrf.mxu0
  %v7521 = vadd.f32 %v7468, %v7520
  %7522 = vdwg.mxu0
  %7523 = vmatprep.subr.bf16.mxu0 %v5006
  %7524 = vmatpush1.bf16.msra.mxu0 %v5005
  %7525 = vmatprep.subr.bf16.mxu0 %v5002
  %7526 = vmatpush1.bf16.msra.mxu0 %v5001
  %7527 = vmatprep.subr.bf16.mxu0 %v4998
  %7528 = vmatpush1.bf16.msra.mxu0 %v4997
  %7529 = vmatprep.subr.bf16.mxu0 %v4994
  %7530 = vmatpush1.bf16.msra.mxu0 %v4993
  %7531 = vmatprep.subr.bf16.mxu0 %v4990
  %7532 = vmatpush1.bf16.msra.mxu0 %v4989
  %7533 = vmatprep.subr.bf16.mxu0 %v4986
  %7534 = vmatpush1.bf16.msra.mxu0 %v4985
  %7535 = vmatprep.subr.bf16.mxu0 %v4982
  %7536 = vmatpush1.bf16.msra.mxu0 %v4981
  %7537 = vmatprep.subr.bf16.mxu0 %v4978
  %7538 = vmatpush1.bf16.msra.mxu0 %v4977
  %7539 = vmatprep.subr.bf16.mxu0 %v5038
  %7540 = vmatpush2.bf16.msra.mxu0 %v5037
  %7541 = vmatprep.subr.bf16.mxu0 %v5034
  %7542 = vmatpush2.bf16.msra.mxu0 %v5033
  %7543 = vmatprep.subr.bf16.mxu0 %v5030
  %7544 = vmatpush2.bf16.msra.mxu0 %v5029
  %7545 = vmatprep.subr.bf16.mxu0 %v5026
  %7546 = vmatpush2.bf16.msra.mxu0 %v5025
  %7547 = vmatprep.subr.bf16.mxu0 %v5022
  %7548 = vmatpush2.bf16.msra.mxu0 %v5021
  %7549 = vmatprep.subr.bf16.mxu0 %v5018
  %7550 = vmatpush2.bf16.msra.mxu0 %v5017
  %7551 = vmatprep.subr.bf16.mxu0 %v5014
  %7552 = vmatpush2.bf16.msra.mxu0 %v5013
  %7553 = vmatprep.subr.bf16.mxu0 %v5010
  %7554 = vmatpush2.bf16.msra.mxu0 %v5009
  %7555 = vmatprep.mubr.bf16.mxu0 %v1238
  %7556 = vmatmul.mubr.bf16.gmra.mxu0 %v1237
  %v7557 = vpop.f32.mrf.mxu0
  %v7558 = vadd.f32 %v7505, %v7557
  %v7559 = vpop.f32.mrf.mxu0
  %v7560 = vadd.f32 %v7507, %v7559
  %v7561 = vpop.f32.mrf.mxu0
  %v7562 = vadd.f32 %v7509, %v7561
  %v7563 = vpop.f32.mrf.mxu0
  %v7564 = vadd.f32 %v7511, %v7563
  %7565 = vmatprep.mubr.bf16.mxu0 %v1268
  %7566 = vmatmul.mubr.bf16.gmra.mxu0 %v1267
  %v7567 = vpop.f32.mrf.mxu0
  %v7568 = vadd.f32 %v7515, %v7567
  %v7569 = vpop.f32.mrf.mxu0
  %v7570 = vadd.f32 %v7517, %v7569
  %v7571 = vpop.f32.mrf.mxu0
  %v7572 = vadd.f32 %v7519, %v7571
  %v7573 = vpop.f32.mrf.mxu0
  %v7574 = vadd.f32 %v7521, %v7573
  %7575 = vdwg.mxu0
  %7576 = vmatprep.subr.bf16.mxu0 %v5070
  %7577 = vmatpush1.bf16.msra.mxu0 %v5069
  %7578 = vmatprep.subr.bf16.mxu0 %v5066
  %7579 = vmatpush1.bf16.msra.mxu0 %v5065
  %7580 = vmatprep.subr.bf16.mxu0 %v5062
  %7581 = vmatpush1.bf16.msra.mxu0 %v5061
  %7582 = vmatprep.subr.bf16.mxu0 %v5058
  %7583 = vmatpush1.bf16.msra.mxu0 %v5057
  %7584 = vmatprep.subr.bf16.mxu0 %v5054
  %7585 = vmatpush1.bf16.msra.mxu0 %v5053
  %7586 = vmatprep.subr.bf16.mxu0 %v5050
  %7587 = vmatpush1.bf16.msra.mxu0 %v5049
  %7588 = vmatprep.subr.bf16.mxu0 %v5046
  %7589 = vmatpush1.bf16.msra.mxu0 %v5045
  %7590 = vmatprep.subr.bf16.mxu0 %v5042
  %7591 = vmatpush1.bf16.msra.mxu0 %v5041
  %7592 = vmatprep.subr.bf16.mxu0 0
  %7593 = vmatpush2.bf16.msra.mxu0 0
  %7594 = vmatprep.subr.bf16.mxu0 0
  %7595 = vmatpush2.bf16.msra.mxu0 0
  %7596 = vmatprep.subr.bf16.mxu0 0
  %7597 = vmatpush2.bf16.msra.mxu0 0
  %7598 = vmatprep.subr.bf16.mxu0 0
  %7599 = vmatpush2.bf16.msra.mxu0 0
  %7600 = vmatprep.subr.bf16.mxu0 0
  %7601 = vmatpush2.bf16.msra.mxu0 0
  %7602 = vmatprep.subr.bf16.mxu0 %v6037
  %7603 = vmatpush2.bf16.msra.mxu0 %v6034
  %7604 = vmatprep.subr.bf16.mxu0 %v5078
  %7605 = vmatpush2.bf16.msra.mxu0 %v5077
  %7606 = vmatprep.subr.bf16.mxu0 %v5074
  %7607 = vmatpush2.bf16.msra.mxu0 %v5073
  %7608 = vmatprep.mubr.bf16.mxu0 %v6021
  %7609 = vmatmul.mubr.bf16.gmra.mxu0 %v1239
  %v7610 = vpop.f32.mrf.mxu0
  %v7611 = vadd.f32 %v7558, %v7610
  %v7612 = vpop.f32.mrf.mxu0
  %v7613 = vadd.f32 %v7560, %v7612
  %v7614 = vpop.f32.mrf.mxu0
  %v7615 = vadd.f32 %v7562, %v7614
  %v7616 = vpop.f32.mrf.mxu0
  %v7617 = vadd.f32 %v7564, %v7616
  %7618 = vmatprep.mubr.bf16.mxu0 %v6024
  %7619 = vmatmul.mubr.bf16.gmra.mxu0 %v1269
  %v7620 = vpop.f32.mrf.mxu0
  %v7621 = vadd.f32 %v7568, %v7620
  %v7622 = vpop.f32.mrf.mxu0
  %v7623 = vadd.f32 %v7570, %v7622
  %v7624 = vpop.f32.mrf.mxu0
  %v7625 = vadd.f32 %v7572, %v7624
  %v7626 = vpop.f32.mrf.mxu0
  %v7627 = vadd.f32 %v7574, %v7626
  %7628 = vdwg.mxu0
  %v7629 = vmax.f32 %v6816, %v6820
  %v7630 = vmax.f32 %v6818, %v6822
  %v7631 = vmax.f32 %v7611, %v7615
  %v7632 = vmax.f32 %v7613, %v7617
  %v7633 = vmax.f32 %v6826, %v6830
  %v7634 = vmax.f32 %v6828, %v6832
  %v7635 = vmax.f32 %v7621, %v7625
  %v7636 = vmax.f32 %v7623, %v7627
  %v7637 = vmax.f32 %v7629, %v7633
  %v7638 = vmax.f32 %v7630, %v7634
  %v7639 = vmax.f32 %v7631, %v7635
  %v7640 = vmax.f32 %v7632, %v7636
  %v7641 = vld [vmem:[%s2] sm:$0xf]
  %v7643 = vlaneseq
  %v7644 = vshrl.u32 %v7643, 7
  %v7645 = vsub.s32 0, %v7644
  %v7646 = vrot.slane %v7641, %v7645
  %v7647 = vlaneseq
  %v7648 = vshrl.u32 %v7647, 7
  %v7649 = vsub.s32 1, %v7648
  %v7650 = vrot.slane %v7641, %v7649
  %v7651 = vlaneseq
  %v7652 = vshrl.u32 %v7651, 7
  %v7653 = vsub.s32 2, %v7652
  %v7654 = vrot.slane %v7641, %v7653
  %v7655 = vlaneseq
  %v7656 = vshrl.u32 %v7655, 7
  %v7657 = vsub.s32 3, %v7656
  %v7658 = vrot.slane %v7641, %v7657
  %v7663 = vadd.f32 %v7637, %v7646
  %v7664 = vadd.f32 %v7638, %v7650
  %v7665 = vadd.f32 %v7639, %v7654
  %v7666 = vadd.f32 %v7640, %v7658
  %v7667 = vmax.f32 %v7663, 0.0
  %v7668 = vmax.f32 %v7664, 0.0
  %v7669 = vmax.f32 %v7665, 0.0
  %v7670 = vmax.f32 %v7666, 0.0
  %v7671 = vpack.c.bf16 %v7667, %v7667
  %v7672 = vpack.c.bf16 %v7668, %v7668
  %v7673 = vpack.c.bf16 %v7669, %v7669
  %v7674 = vpack.c.bf16 %v7670, %v7670
  %v7675 = vld [vmem:[%s3] sm:$0xf]
  %v7676 = vld [vmem:[%s3 + $0x4] sm:$0xf]
  %v7677 = vld [vmem:[%s3 + $0x8] sm:$0xf]
  %v7678 = vld [vmem:[%s3 + $0xc] sm:$0xf]
  %v7679 = vld [vmem:[%s3 + $0x10] sm:$0xf]
  %v7680 = vld [vmem:[%s3 + $0x14] sm:$0xf]
  %v7681 = vld [vmem:[%s3 + $0x18] sm:$0xf]
  %v7682 = vld [vmem:[%s3 + $0x1c] sm:$0xf]
  %v7683 = vld [vmem:[%s3 + $0x20] sm:$0xf]
  %v7684 = vld [vmem:[%s3 + $0x24] sm:$0xf]
  %v7685 = vld [vmem:[%s3 + $0x28] sm:$0xf]
  %v7686 = vld [vmem:[%s3 + $0x2c] sm:$0xf]
  %v7687 = vld [vmem:[%s3 + $0x30] sm:$0xf]
  %v7688 = vld [vmem:[%s3 + $0x34] sm:$0xf]
  %v7689 = vld [vmem:[%s3 + $0x38] sm:$0xf]
  %v7690 = vld [vmem:[%s3 + $0x3c] sm:$0xf]
  %v7691 = vld [vmem:[%s3 + $0x40] sm:$0xf]
  %v7692 = vld [vmem:[%s3 + $0x44] sm:$0xf]
  %v7693 = vld [vmem:[%s3 + $0x48] sm:$0xf]
  %v7694 = vld [vmem:[%s3 + $0x4c] sm:$0xf]
  %v7695 = vld [vmem:[%s3 + $0x50] sm:$0xf]
  %v7696 = vld [vmem:[%s3 + $0x54] sm:$0xf]
  %v7697 = vld [vmem:[%s3 + $0x58] sm:$0xf]
  %v7698 = vld [vmem:[%s3 + $0x5c] sm:$0xf]
  %v7699 = vld [vmem:[%s3 + $0x60] sm:$0xf]
  %v7700 = vld [vmem:[%s3 + $0x64] sm:$0xf]
  %v7701 = vld [vmem:[%s3 + $0x68] sm:$0xf]
  %v7702 = vld [vmem:[%s3 + $0x6c] sm:$0xf]
  %v7703 = vld [vmem:[%s3 + $0x70] sm:$0xf]
  %v7704 = vld [vmem:[%s3 + $0x74] sm:$0xf]
  %v7705 = vld [vmem:[%s3 + $0x78] sm:$0xf]
  %v7706 = vld [vmem:[%s3 + $0x7c] sm:$0xf]
  %v7707 = vld [vmem:[%s3 + $0x80] sm:$0xf]
  %v7708 = vld [vmem:[%s3 + $0x84] sm:$0xf]
  %v7709 = vld [vmem:[%s3 + $0x88] sm:$0xf]
  %v7710 = vld [vmem:[%s3 + $0x8c] sm:$0xf]
  %v7711 = vld [vmem:[%s3 + $0x90] sm:$0xf]
  %v7712 = vld [vmem:[%s3 + $0x94] sm:$0xf]
  %v7713 = vld [vmem:[%s3 + $0x98] sm:$0xf]
  %v7714 = vld [vmem:[%s3 + $0x9c] sm:$0xf]
  %v7715 = vld [vmem:[%s3 + $0xa0] sm:$0xf]
  %v7716 = vld [vmem:[%s3 + $0xa4] sm:$0xf]
  %v7717 = vld [vmem:[%s3 + $0xa8] sm:$0xf]
  %v7718 = vld [vmem:[%s3 + $0xac] sm:$0xf]
  %v7719 = vld [vmem:[%s3 + $0xb0] sm:$0xf]
  %v7720 = vld [vmem:[%s3 + $0xb4] sm:$0xf]
  %v7721 = vld [vmem:[%s3 + $0xb8] sm:$0xf]
  %v7722 = vld [vmem:[%s3 + $0xbc] sm:$0xf]
  %v7723 = vld [vmem:[%s3 + $0xc0] sm:$0xf]
  %v7724 = vld [vmem:[%s3 + $0xc4] sm:$0xf]
  %v7725 = vld [vmem:[%s4] sm:$0x1]
  %v7727 = vlaneseq
  %v7728 = vshrl.u32 %v7727, 7
  %v7729 = vsub.s32 0, %v7728
  %v7730 = vrot.slane %v7725, %v7729
  %v7782 = vunpack.c.l.b16 %v7675
  %v7783 = vunpack.c.l.b16 %v7676
  %v7784 = vunpack.c.l.b16 %v7677
  %v7785 = vunpack.c.l.b16 %v7678
  %v7786 = vunpack.c.l.b16 %v7679
  %v7787 = vunpack.c.l.b16 %v7680
  %v7788 = vunpack.c.l.b16 %v7681
  %v7789 = vunpack.c.l.b16 %v7682
  %v7790 = vunpack.c.l.b16 %v7683
  %v7791 = vunpack.c.l.b16 %v7684
  %v7792 = vunpack.c.l.b16 %v7685
  %v7793 = vunpack.c.l.b16 %v7686
  %v7794 = vunpack.c.l.b16 %v7687
  %v7795 = vunpack.c.l.b16 %v7688
  %v7796 = vunpack.c.l.b16 %v7689
  %v7797 = vunpack.c.l.b16 %v7690
  %v7798 = vunpack.c.l.b16 %v7691
  %v7799 = vunpack.c.l.b16 %v7692
  %v7800 = vunpack.c.l.b16 %v7693
  %v7801 = vunpack.c.l.b16 %v7694
  %v7802 = vunpack.c.l.b16 %v7695
  %v7803 = vunpack.c.l.b16 %v7696
  %v7804 = vunpack.c.l.b16 %v7697
  %v7805 = vunpack.c.l.b16 %v7698
  %v7806 = vunpack.c.l.b16 %v7699
  %v7807 = vunpack.c.l.b16 %v7700
  %v7808 = vunpack.c.l.b16 %v7701
  %v7809 = vunpack.c.l.b16 %v7702
  %v7810 = vunpack.c.l.b16 %v7703
  %v7811 = vunpack.c.l.b16 %v7704
  %v7812 = vunpack.c.l.b16 %v7705
  %v7813 = vunpack.c.l.b16 %v7706
  %v7814 = vunpack.c.l.b16 %v7707
  %v7815 = vunpack.c.l.b16 %v7708
  %v7816 = vunpack.c.l.b16 %v7709
  %v7817 = vunpack.c.l.b16 %v7710
  %v7818 = vunpack.c.l.b16 %v7711
  %v7819 = vunpack.c.l.b16 %v7712
  %v7820 = vunpack.c.l.b16 %v7713
  %v7821 = vunpack.c.l.b16 %v7714
  %v7822 = vunpack.c.l.b16 %v7715
  %v7823 = vunpack.c.l.b16 %v7716
  %v7824 = vunpack.c.l.b16 %v7717
  %v7825 = vunpack.c.l.b16 %v7718
  %v7826 = vunpack.c.l.b16 %v7719
  %v7827 = vunpack.c.l.b16 %v7720
  %v7828 = vunpack.c.l.b16 %v7721
  %v7829 = vunpack.c.l.b16 %v7722
  %v7830 = vunpack.c.l.b16 %v7723
  %v7831 = vunpack.c.l.b16 %v7724
  %v7832 = vpack.c.b16 %v7783, %v7782
  %v7833 = vpack.c.b16 %v7785, %v7784
  %v7834 = vpack.c.b16 %v7787, %v7786
  %v7835 = vpack.c.b16 %v7789, %v7788
  %v7836 = vpack.c.b16 %v7791, %v7790
  %v7837 = vpack.c.b16 %v7793, %v7792
  %v7838 = vpack.c.b16 %v7795, %v7794
  %v7839 = vpack.c.b16 %v7797, %v7796
  %v7840 = vpack.c.b16 %v7799, %v7798
  %v7841 = vpack.c.b16 %v7801, %v7800
  %v7842 = vpack.c.b16 %v7803, %v7802
  %v7843 = vpack.c.b16 %v7805, %v7804
  %v7844 = vpack.c.b16 %v7807, %v7806
  %v7845 = vpack.c.b16 %v7809, %v7808
  %v7846 = vpack.c.b16 %v7811, %v7810
  %v7847 = vpack.c.b16 %v7813, %v7812
  %v7848 = vpack.c.b16 %v7815, %v7814
  %v7849 = vpack.c.b16 %v7817, %v7816
  %v7850 = vpack.c.b16 %v7819, %v7818
  %v7851 = vpack.c.b16 %v7821, %v7820
  %v7852 = vpack.c.b16 %v7823, %v7822
  %v7853 = vpack.c.b16 %v7825, %v7824
  %v7854 = vpack.c.b16 %v7827, %v7826
  %v7855 = vpack.c.b16 %v7829, %v7828
  %v7856 = vpack.c.b16 %v7831, %v7830
  %vm7882 = vcmask 130048
  %v7884 = vsel %vm7882, %v7674, 0
  %7886 = vmatprep.subr.bf16.mxu0 0
  %7887 = vmatpush1.bf16.msra.mxu0 %v7839
  %7888 = vmatprep.subr.bf16.mxu0 0
  %7889 = vmatpush1.bf16.msra.mxu0 %v7838
  %7890 = vmatprep.subr.bf16.mxu0 0
  %7891 = vmatpush1.bf16.msra.mxu0 %v7837
  %7892 = vmatprep.subr.bf16.mxu0 0
  %7893 = vmatpush1.bf16.msra.mxu0 %v7836
  %7894 = vmatprep.subr.bf16.mxu0 0
  %7895 = vmatpush1.bf16.msra.mxu0 %v7835
  %7896 = vmatprep.subr.bf16.mxu0 0
  %7897 = vmatpush1.bf16.msra.mxu0 %v7834
  %7898 = vmatprep.subr.bf16.mxu0 0
  %7899 = vmatpush1.bf16.msra.mxu0 %v7833
  %7900 = vmatprep.subr.bf16.mxu0 0
  %7901 = vmatpush1.bf16.msra.mxu0 %v7832
  %7902 = vmatprep.subr.bf16.mxu0 0
  %7903 = vmatpush2.bf16.msra.mxu0 %v7847
  %7904 = vmatprep.subr.bf16.mxu0 0
  %7905 = vmatpush2.bf16.msra.mxu0 %v7846
  %7906 = vmatprep.subr.bf16.mxu0 0
  %7907 = vmatpush2.bf16.msra.mxu0 %v7845
  %7908 = vmatprep.subr.bf16.mxu0 0
  %7909 = vmatpush2.bf16.msra.mxu0 %v7844
  %7910 = vmatprep.subr.bf16.mxu0 0
  %7911 = vmatpush2.bf16.msra.mxu0 %v7843
  %7912 = vmatprep.subr.bf16.mxu0 0
  %7913 = vmatpush2.bf16.msra.mxu0 %v7842
  %7914 = vmatprep.subr.bf16.mxu0 0
  %7915 = vmatpush2.bf16.msra.mxu0 %v7841
  %7916 = vmatprep.subr.bf16.mxu0 0
  %7917 = vmatpush2.bf16.msra.mxu0 %v7840
  %7918 = vmatprep.mubr.bf16.mxu0 %v7672
  %7919 = vmatmul.mubr.bf16.gmra.mxu0 %v7671
  %v7920 = vpop.f32.mrf.mxu0
  %v7921 = vadd.f32 %v7730, %v7920
  %v7922 = vpop.f32.mrf.mxu0
  %v7923 = vpop.f32.mrf.mxu0
  %v7924 = vpop.f32.mrf.mxu0
  %7925 = vdwg.mxu0
  %7926 = vmatprep.subr.bf16.mxu0 0
  %7927 = vmatpush1.bf16.msra.mxu0 %v7855
  %7928 = vmatprep.subr.bf16.mxu0 0
  %7929 = vmatpush1.bf16.msra.mxu0 %v7854
  %7930 = vmatprep.subr.bf16.mxu0 0
  %7931 = vmatpush1.bf16.msra.mxu0 %v7853
  %7932 = vmatprep.subr.bf16.mxu0 0
  %7933 = vmatpush1.bf16.msra.mxu0 %v7852
  %7934 = vmatprep.subr.bf16.mxu0 0
  %7935 = vmatpush1.bf16.msra.mxu0 %v7851
  %7936 = vmatprep.subr.bf16.mxu0 0
  %7937 = vmatpush1.bf16.msra.mxu0 %v7850
  %7938 = vmatprep.subr.bf16.mxu0 0
  %7939 = vmatpush1.bf16.msra.mxu0 %v7849
  %7940 = vmatprep.subr.bf16.mxu0 0
  %7941 = vmatpush1.bf16.msra.mxu0 %v7848
  %7942 = vmatprep.subr.bf16.mxu0 0
  %7943 = vmatpush2.bf16.msra.mxu0 0
  %7944 = vmatprep.subr.bf16.mxu0 0
  %7945 = vmatpush2.bf16.msra.mxu0 0
  %7946 = vmatprep.subr.bf16.mxu0 0
  %7947 = vmatpush2.bf16.msra.mxu0 0
  %7948 = vmatprep.subr.bf16.mxu0 0
  %7949 = vmatpush2.bf16.msra.mxu0 0
  %7950 = vmatprep.subr.bf16.mxu0 0
  %7951 = vmatpush2.bf16.msra.mxu0 0
  %7952 = vmatprep.subr.bf16.mxu0 0
  %7953 = vmatpush2.bf16.msra.mxu0 0
  %7954 = vmatprep.subr.bf16.mxu0 0
  %7955 = vmatpush2.bf16.msra.mxu0 0
  %7956 = vmatprep.subr.bf16.mxu0 0
  %7957 = vmatpush2.bf16.msra.mxu0 %v7856
  %7958 = vmatprep.mubr.bf16.mxu0 %v7884
  %7959 = vmatmul.mubr.bf16.gmra.mxu0 %v7673
  %v7960 = vpop.f32.mrf.mxu0
  %v7961 = vadd.f32 %v7921, %v7960
  %v7962 = vpop.f32.mrf.mxu0
  %v7963 = vpop.f32.mrf.mxu0
  %v7964 = vpop.f32.mrf.mxu0
  %7965 = vdwg.mxu0
  %v7966 = vmax.f32 %v7961, 0.0
  %v7967 = vpack.c.bf16 %v7966, %v7966
  %v7968 = vld [vmem:[%s5] sm:$0xf]
  %v7969 = vld [vmem:[%s5 + $0x4] sm:$0xf]
  %v7970 = vld [vmem:[%s5 + $0x8] sm:$0xf]
  %v7971 = vld [vmem:[%s5 + $0xc] sm:$0xf]
  %v7972 = vld [vmem:[%s5 + $0x10] sm:$0xf]
  %v7973 = vld [vmem:[%s5 + $0x14] sm:$0xf]
  %v7974 = vld [vmem:[%s5 + $0x18] sm:$0xf]
  %v7975 = vld [vmem:[%s5 + $0x1c] sm:$0xf]
  %v7976 = vld [vmem:[%s5 + $0x20] sm:$0xf]
  %v7977 = vld [vmem:[%s5 + $0x24] sm:$0xf]
  %v7978 = vld [vmem:[%s5 + $0x28] sm:$0xf]
  %v7979 = vld [vmem:[%s5 + $0x2c] sm:$0xf]
  %v7980 = vld [vmem:[%s5 + $0x30] sm:$0xf]
  %v7981 = vld [vmem:[%s5 + $0x34] sm:$0xf]
  %v7982 = vld [vmem:[%s5 + $0x38] sm:$0xf]
  %v7983 = vld [vmem:[%s6] sm:$0x1]
  %v7985 = vlaneseq
  %v7986 = vshrl.u32 %v7985, 7
  %v7987 = vsub.s32 0, %v7986
  %v7988 = vrot.slane %v7983, %v7987
  %v8005 = vunpack.c.l.b16 %v7968
  %v8006 = vunpack.c.l.b16 %v7969
  %v8007 = vunpack.c.l.b16 %v7970
  %v8008 = vunpack.c.l.b16 %v7971
  %v8009 = vunpack.c.l.b16 %v7972
  %v8010 = vunpack.c.l.b16 %v7973
  %v8011 = vunpack.c.l.b16 %v7974
  %v8012 = vunpack.c.l.b16 %v7975
  %v8013 = vunpack.c.l.b16 %v7976
  %v8014 = vunpack.c.l.b16 %v7977
  %v8015 = vunpack.c.l.b16 %v7978
  %v8016 = vunpack.c.l.b16 %v7979
  %v8017 = vunpack.c.l.b16 %v7980
  %v8018 = vunpack.c.l.b16 %v7981
  %v8019 = vunpack.c.l.b16 %v7982
  %v8020 = vpack.c.b16 %v8006, %v8005
  %v8021 = vpack.c.b16 %v8008, %v8007
  %v8022 = vpack.c.b16 %v8010, %v8009
  %v8023 = vpack.c.b16 %v8012, %v8011
  %v8024 = vpack.c.b16 %v8014, %v8013
  %v8025 = vpack.c.b16 %v8016, %v8015
  %v8026 = vpack.c.b16 %v8018, %v8017
  %v8027 = vpack.c.b16 %v8019, %v8019
  %vm8035 = vcmask 982016
  %v8037 = vsel %vm8035, %v7967, 0
  %vm8039 = vcmask 1043456
  %v8041 = vsel %vm8039, %v8027, 0
  %8043 = vmatprep.subr.bf16.mxu0 0
  %8044 = vmatpush1.bf16.msra.mxu0 %v8041
  %8045 = vmatprep.subr.bf16.mxu0 0
  %8046 = vmatpush1.bf16.msra.mxu0 %v8026
  %8047 = vmatprep.subr.bf16.mxu0 0
  %8048 = vmatpush1.bf16.msra.mxu0 %v8025
  %8049 = vmatprep.subr.bf16.mxu0 0
  %8050 = vmatpush1.bf16.msra.mxu0 %v8024
  %8051 = vmatprep.subr.bf16.mxu0 0
  %8052 = vmatpush1.bf16.msra.mxu0 %v8023
  %8053 = vmatprep.subr.bf16.mxu0 0
  %8054 = vmatpush1.bf16.msra.mxu0 %v8022
  %8055 = vmatprep.subr.bf16.mxu0 0
  %8056 = vmatpush1.bf16.msra.mxu0 %v8021
  %8057 = vmatprep.subr.bf16.mxu0 0
  %8058 = vmatpush1.bf16.msra.mxu0 %v8020
  %8059 = vmatprep.subr.bf16.mxu0 0
  %8060 = vmatpush2.bf16.msra.mxu0 0
  %8061 = vmatprep.subr.bf16.mxu0 0
  %8062 = vmatpush2.bf16.msra.mxu0 0
  %8063 = vmatprep.subr.bf16.mxu0 0
  %8064 = vmatpush2.bf16.msra.mxu0 0
  %8065 = vmatprep.subr.bf16.mxu0 0
  %8066 = vmatpush2.bf16.msra.mxu0 0
  %8067 = vmatprep.subr.bf16.mxu0 0
  %8068 = vmatpush2.bf16.msra.mxu0 0
  %8069 = vmatprep.subr.bf16.mxu0 0
  %8070 = vmatpush2.bf16.msra.mxu0 0
  %8071 = vmatprep.subr.bf16.mxu0 0
  %8072 = vmatpush2.bf16.msra.mxu0 0
  %8073 = vmatprep.subr.bf16.mxu0 0
  %8074 = vmatpush2.bf16.msra.mxu0 0
  %8075 = vmatprep.mubr.bf16.mxu0 0
  %8076 = vmatmul.mubr.bf16.gmra.mxu0 %v8037
  %v8077 = vpop.f32.mrf.mxu0
  %v8078 = vadd.f32 %v7988, %v8077
  %v8079 = vpop.f32.mrf.mxu0
  %v8080 = vpop.f32.mrf.mxu0
  %v8081 = vpop.f32.mrf.mxu0
  %8082 = vdwg.mxu0
  %v8083 = vmax.f32 %v8078, 0.0
  %v8084 = vpack.c.bf16 %v8083, %v8083
  %v8085 = vld [vmem:[%s7] sm:$0xf]
  %v8086 = vld [vmem:[%s7 + $0x4] sm:$0xf]
  %v8087 = vld [vmem:[%s7 + $0x8] sm:$0xf]
  %v8088 = vld [vmem:[%s7 + $0xc] sm:$0xf]
  %v8089 = vld [vmem:[%s7 + $0x10] sm:$0xf]
  %v8090 = vld [vmem:[%s7 + $0x14] sm:$0xf]
  %v8091 = vld [vmem:[%s7 + $0x18] sm:$0xf]
  %v8092 = vld [vmem:[%s7 + $0x1c] sm:$0xf]
  %v8093 = vld [vmem:[%s7 + $0x20] sm:$0xf]
  %v8094 = vld [vmem:[%s7 + $0x24] sm:$0xf]
  %v8095 = vld [vmem:[%s7 + $0x28] sm:$0x3]
  %v8096 = vld [vmem:[%s8] sm:$0x1]
  %v8098 = vlaneseq
  %v8099 = vshrl.u32 %v8098, 7
  %v8100 = vsub.s32 0, %v8099
  %v8101 = vrot.slane %v8096, %v8100
  %v8114 = vunpack.c.l.b16 %v8085
  %v8115 = vunpack.c.l.b16 %v8086
  %v8116 = vunpack.c.l.b16 %v8087
  %v8117 = vunpack.c.l.b16 %v8088
  %v8118 = vunpack.c.l.b16 %v8089
  %v8119 = vunpack.c.l.b16 %v8090
  %v8120 = vunpack.c.l.b16 %v8091
  %v8121 = vunpack.c.l.b16 %v8092
  %v8122 = vunpack.c.l.b16 %v8093
  %v8123 = vunpack.c.l.b16 %v8094
  %v8124 = vunpack.c.l.b16 %v8095
  %v8125 = vpack.c.b16 %v8115, %v8114
  %v8126 = vpack.c.b16 %v8117, %v8116
  %v8127 = vpack.c.b16 %v8119, %v8118
  %v8128 = vpack.c.b16 %v8121, %v8120
  %v8129 = vpack.c.b16 %v8123, %v8122
  %v8130 = vpack.c.b16 %v8124, %v8124
  %vm8136 = vcmask 687104
  %v8138 = vsel %vm8136, %v8084, 0
  %vm8140 = vcmask 1041408
  %v8142 = vsel %vm8140, %v8130, 0
  %8144 = vmatprep.subr.bf16.mxu0 0
  %8145 = vmatpush1.bf16.msra.mxu0 0
  %8146 = vmatprep.subr.bf16.mxu0 0
  %8147 = vmatpush1.bf16.msra.mxu0 0
  %8148 = vmatprep.subr.bf16.mxu0 0
  %8149 = vmatpush1.bf16.msra.mxu0 %v8142
  %8150 = vmatprep.subr.bf16.mxu0 0
  %8151 = vmatpush1.bf16.msra.mxu0 %v8129
  %8152 = vmatprep.subr.bf16.mxu0 0
  %8153 = vmatpush1.bf16.msra.mxu0 %v8128
  %8154 = vmatprep.subr.bf16.mxu0 0
  %8155 = vmatpush1.bf16.msra.mxu0 %v8127
  %8156 = vmatprep.subr.bf16.mxu0 0
  %8157 = vmatpush1.bf16.msra.mxu0 %v8126
  %8158 = vmatprep.subr.bf16.mxu0 0
  %8159 = vmatpush1.bf16.msra.mxu0 %v8125
  %8160 = vmatprep.subr.bf16.mxu0 0
  %8161 = vmatpush2.bf16.msra.mxu0 0
  %8162 = vmatprep.subr.bf16.mxu0 0
  %8163 = vmatpush2.bf16.msra.mxu0 0
  %8164 = vmatprep.subr.bf16.mxu0 0
  %8165 = vmatpush2.bf16.msra.mxu0 0
  %8166 = vmatprep.subr.bf16.mxu0 0
  %8167 = vmatpush2.bf16.msra.mxu0 0
  %8168 = vmatprep.subr.bf16.mxu0 0
  %8169 = vmatpush2.bf16.msra.mxu0 0
  %8170 = vmatprep.subr.bf16.mxu0 0
  %8171 = vmatpush2.bf16.msra.mxu0 0
  %8172 = vmatprep.subr.bf16.mxu0 0
  %8173 = vmatpush2.bf16.msra.mxu0 0
  %8174 = vmatprep.subr.bf16.mxu0 0
  %8175 = vmatpush2.bf16.msra.mxu0 0
  %8176 = vmatprep.mubr.bf16.mxu0 0
  %8177 = vmatmul.mubr.bf16.gmra.mxu0 %v8138
  %v8178 = vpop.f32.mrf.mxu0
  %v8179 = vadd.f32 %v8101, %v8178
  %v8180 = vpop.f32.mrf.mxu0
  %v8181 = vpop.f32.mrf.mxu0
  %v8182 = vpop.f32.mrf.mxu0
  %8183 = vdwg.mxu0
  %vm8184 = vcmask 80896
  %8185 = vst.msk [vmem:[%s9] sm:$0xff] %vm8184, %v8179
  // Predicated region
  $region38: #{net_forward.3} parent=0 // pred_check
    _
  $region39: #{net_forward.3} parent=0 // pred_check_branch
    %8187 = sbr.rel (0) target = $region41
  $region40: #{net_forward.3} parent=0 // pred_region
    _
  $region41: #{net_forward.3} parent=0 // pred_fallthru
    _
  // Predicated region
  $region42: #{net_forward.3} parent=0 // pred_check
    _
  $region43: #{net_forward.3} parent=0 // pred_check_branch
    %8189 = sbr.rel (0) target = $region45
  $region44: #{net_forward.3} parent=0 // pred_region
    _
  $region45: #{net_forward.3} parent=0 // pred_fallthru
    _

</llo_original>
